<compile_context>
chip_gen: v6e
topology: v6e:2x2x1
jax: 0.10.0
libtpu: 0.0.40
codegen_flags: <defaults>
</compile_context>

<pallas_src>
import numpy as np
import jax
import jax.numpy as jnp
from jax import lax
from jax.experimental import pallas as pl
from jax.experimental.pallas import tpu as pltpu


def _round_up(n, m):
    return ((n + m - 1) // m) * m


# ---- fixed geometry (28x28 input is required by fc1's 320 input features) ----
_IH = 28                               # input spatial
_K, _P = 5, 2                          # conv kernel, pool size
_C1 = 10                               # conv1 out channels (= conv2 in channels)
_PH1 = (_IH - _K + 1) // _P            # 12 pooled rows/cols after conv1+pool
_ROW1 = 128                            # 12*10 = 120 cols per pooled row, lane-padded
_BAND = (_P + _K - 1) * _IH            # 6 input rows * 28 = 168 elements per band
_G1 = _PH1 * _ROW1                     # 1536  (conv1 activation width)
_C2 = 20                               # conv2 out channels
_PH2 = (_PH1 - _K + 1) // _P           # 4
_COLS2 = _PH2 * _PH2 * _C2             # 320
_G2 = _round_up(_COLS2, 128)           # 384
_H1 = 128                              # fc hidden 60 -> 128
_NCLS = 128                            # logits 10 -> 128


# ---------------------------------------------------------------------------
# Pallas kernel: whole network = banded conv1 + expanded conv2 + fc head
# ---------------------------------------------------------------------------
def fused_forward_kernel(x_ref, w1_ref, b1_ref, w2_ref, b2_ref,
                         wf1_ref, bf1_ref, wf2_ref, bf2_ref,
                         o_ref, y1_ref):
    f32, bf16 = jnp.float32, jnp.bfloat16

    # ---- conv1 + MaxPool(2,2) + ReLU, banded per pooled output row ----------
    # band ph covers input rows [2*ph, 2*ph+6); the (168, 4*128) weight is shared
    # across bands; groups of 128 lanes = the four 2x2-pool sub-positions.
    # Bias added AFTER the max (valid: constant over the pooling window).
    w1 = w1_ref[...]                                            # (168, 512) bf16
    b1 = b1_ref[...]                                            # (1, 128)   f32
    for ph in range(_PH1):                                      # 12 unrolled bands
        band = x_ref[:, 2 * ph * _IH: 2 * ph * _IH + _BAND].astype(bf16)  # (bn,168)
        s = jnp.dot(band, w1, preferred_element_type=f32)       # (bn, 512) f32
        m = jnp.maximum(jnp.maximum(s[:, 0:128], s[:, 128:256]),
                        jnp.maximum(s[:, 256:384], s[:, 384:512]))
        y1_ref[:, _ROW1 * ph: _ROW1 * (ph + 1)] = (
            jnp.maximum(m + b1, 0.0).astype(bf16))              # lane-dense store

    # ---- conv2 + Dropout2d(eval=identity) + MaxPool + ReLU ------------------
    # Expanded dense matmul, split into 4 group-matmuls with a running max so the
    # peak pre-pool f32 temporary is (bn, 384) instead of (bn, 1536).
    y1 = y1_ref[...]                                            # (bn, 1536) bf16
    m2 = jnp.dot(y1, w2_ref[:, 0:_G2], preferred_element_type=f32)
    for q in range(1, 4):
        m2 = jnp.maximum(
            m2, jnp.dot(y1, w2_ref[:, q * _G2:(q + 1) * _G2],
                        preferred_element_type=f32))
    y2 = jnp.maximum(m2 + b2_ref[...], 0.0).astype(bf16)        # (bn, 384)

    # ---- fc1 (320->60, padded 384->128) + ReLU; flatten perm folded offline --
    h = jnp.maximum(jnp.dot(y2, wf1_ref[...], preferred_element_type=f32)
                    + bf1_ref[...], 0.0)                        # (bn, 128) f32

    # ---- fc2 (60->10, padded 128->128) + LogSoftmax; pad-logit bias = -1e9 ---
    logits = jnp.dot(h.astype(bf16), wf2_ref[...],
                     preferred_element_type=f32) + bf2_ref[...]  # (bn, 128) f32
    zmax = jnp.max(logits, axis=1, keepdims=True)
    z = logits - zmax
    lse = jnp.log(jnp.sum(jnp.exp(z), axis=1, keepdims=True))
    o_ref[...] = z - lse                                         # lane-dense store


# ---------------------------------------------------------------------------
# Wrapper: one gridded pallas_call; weights are whole-array VMEM residents
# ---------------------------------------------------------------------------
_VMEM = pl.BlockSpec(memory_space=pltpu.MemorySpace.VMEM)


def _default_block_n():
    # v5e's MXU is 128 rows -> M=128 is the natural fill; v6e/v7x are 256-wide.
    try:
        kind = jax.devices()[0].device_kind.lower()
    except Exception:
        kind = ""
    return 128 if "v5" in kind else 256


def forward(x_nchw, packed, block_n=None):
    """x_nchw: (N, 1, 28, 28) float32; packed = prepare_params(params)."""
    N = x_nchw.shape[0]
    x = x_nchw.reshape(N, _IH * _IH)           # keep f32; bf16 cast happens in-kernel
    if block_n is None:
        block_n = _default_block_n()
    bn = min(block_n, _round_up(N, 16))        # >=16: bf16 sublane packing
    Np = _round_up(N, bn)
    if Np != N:
        x = jnp.pad(x, ((0, Np - N), (0, 0)))

    flops_per_img = 2 * (_PH1 * _BAND * 4 * _ROW1   # conv1 bands
                         + _G1 * 4 * _G2            # conv2
                         + _G2 * _H1 + _H1 * _NCLS)  # fc1, fc2
    weight_bytes = (2 * (_BAND * 4 * _ROW1 + _G1 * 4 * _G2 + _G2 * _H1 + _H1 * _NCLS)
                    + 4 * (_ROW1 + _G2 + _H1 + _NCLS))
    cost = pl.CostEstimate(
        flops=Np * flops_per_img,
        transcendentals=Np * (_NCLS + 1),
        bytes_accessed=weight_bytes + Np * (_IH * _IH * 4 + _NCLS * 4))

    # TODO(synk): for many small inference calls, keep weights persistent across
    # calls (cross-call residency) instead of re-staging ~5 MB HBM->VMEM per call.
    out = pl.pallas_call(
        fused_forward_kernel,
        out_shape=jax.ShapeDtypeStruct((Np, _NCLS), jnp.float32),
        grid_spec=pltpu.PrefetchScalarGridSpec(
            num_scalar_prefetch=0,
            grid=(Np // bn,),
            in_specs=[pl.BlockSpec((bn, _IH * _IH), lambda i: (i, 0))] + [_VMEM] * 8,
            out_specs=pl.BlockSpec((bn, _NCLS), lambda i: (i, 0)),
            scratch_shapes=[pltpu.VMEM((bn, _G1), jnp.bfloat16)]),
        compiler_params=pltpu.CompilerParams(
            dimension_semantics=("parallel",),
            vmem_limit_bytes=48 * 1024 * 1024),   # safe on v7x's 64 MiB VMEM
        cost_estimate=cost,
    )(x, *packed)
    return out[:N, :10]


# ---------------------------------------------------------------------------
# Offline weight preprocessing (host-side numpy): fold conv banding / im2col,
# pooling duplication, NCHW-flatten permutation and lane padding into matrices.
# ---------------------------------------------------------------------------
def prepare_params(params):
    w1, b1, w2, b2, wf1, bf1, wf2, bf2 = [np.asarray(p, np.float32) for p in params]

    # ---- conv1 banded weight (168, 4*128), shared across the 12 bands ----
    # band element j = rh*28 + iw holds x[2*ph + rh, iw]; group q = (a,b) is the
    # 2x2-pool sub-position; output col within a group = pw*10 + co.
    w1b = np.zeros((_BAND, 4 * _ROW1), np.float32)
    for a in range(_P):
        for b in range(_P):
            q = a * _P + b
            for kh in range(_K):
                rh = a + kh
                for kw in range(_K):
                    wv = w1[:, 0, kh, kw]                              # (10,)
                    for pw in range(_PH1):
                        iw = _P * pw + b + kw
                        col = q * _ROW1 + pw * _C1
                        w1b[rh * _IH + iw, col:col + _C1] = wv
    b1e = np.zeros((1, _ROW1), np.float32)
    b1e[0, :_PH1 * _C1] = np.tile(b1, _PH1)

    # ---- conv2 expanded (1536, 4*384); rows indexed ih*128 + iw*10 + ci ----
    w2e = np.zeros((_G1, 4 * _G2), np.float32)
    w2_t = np.transpose(w2, (2, 3, 1, 0))                              # (kh,kw,ci,co)
    for a in range(_P):
        for b in range(_P):
            q = a * _P + b
            for kh in range(_K):
                for kw in range(_K):
                    blk = w2_t[kh, kw]                                 # (10, 20)
                    for qh in range(_PH2):
                        ih = _P * qh + a + kh
                        for qw in range(_PH2):
                            iw = _P * qw + b + kw
                            row = ih * _ROW1 + iw * _C1
                            col = q * _G2 + (qh * _PH2 + qw) * _C2
                            w2e[row:row + _C1, col:col + _C2] = blk
    b2e = np.zeros((1, _G2), np.float32)
    b2e[0, :_COLS2] = np.tile(b2, _PH2 * _PH2)

    # ---- fc1: permute cols from our (qh,qw,co) order to PyTorch's (co,qh,qw) ----
    ours_to_torch = np.array([(i % _C2) * (_PH2 * _PH2) + (i // _C2)
                              for i in range(_COLS2)])
    wf1e = np.zeros((_G2, _H1), np.float32)
    wf1e[:_COLS2, :60] = wf1[:, ours_to_torch].T
    bf1e = np.zeros((1, _H1), np.float32)
    bf1e[0, :60] = bf1

    # ---- fc2: 10 logits padded to 128; pad bias -1e9 so softmax ignores pads ----
    wf2e = np.zeros((_H1, _NCLS), np.float32)
    wf2e[:60, :10] = wf2.T
    bf2e = np.full((1, _NCLS), -1e9, np.float32)
    bf2e[0, :10] = bf2

    bf16 = lambda a: jnp.asarray(a, jnp.bfloat16)
    f32 = lambda a: jnp.asarray(a, jnp.float32)
    return (bf16(w1b), f32(b1e), bf16(w2e), f32(b2e),
            bf16(wf1e), f32(bf1e), bf16(wf2e), f32(bf2e))


# ---------------------------------------------------------------------------
# Deterministic parameter init (PyTorch-default-style uniform(+-1/sqrt(fan_in)))
# ---------------------------------------------------------------------------
def init_params(key):
    ks = jax.random.split(key, 8)

    def u(k, shape, fan_in):
        bound = 1.0 / np.sqrt(fan_in)
        return jax.random.uniform(k, shape, jnp.float32, -bound, bound)

    w1 = u(ks[0], (10, 1, 5, 5), 1 * 5 * 5)
    b1 = u(ks[1], (10,), 1 * 5 * 5)
    w2 = u(ks[2], (20, 10, 5, 5), 10 * 5 * 5)
    b2 = u(ks[3], (20,), 10 * 5 * 5)
    wf1 = u(ks[4], (60, 320), 320)
    bf1 = u(ks[5], (60,), 320)
    wf2 = u(ks[6], (10, 60), 60)
    bf2 = u(ks[7], (10,), 60)
    return (w1, b1, w2, b2, wf1, bf1, wf2, bf2)


# ---------------------------------------------------------------------------
# Pure-JAX f32 reference (silent numerical sanity check)
# ---------------------------------------------------------------------------
def reference_forward(x_nchw, params):
    (w1, b1, w2, b2, wf1, bf1, wf2, bf2) = params
    dn = ("NCHW", "OIHW", "NCHW")
    y = lax.conv_general_dilated(x_nchw, w1, (1, 1), "VALID", dimension_numbers=dn)
    y = y + b1[None, :, None, None]
    y = lax.reduce_window(y, -jnp.inf, lax.max, (1, 1, 2, 2), (1, 1, 2, 2), "VALID")
    y = jnp.maximum(y, 0.0)
    # TODO(synk): Dropout2d is identity in eval mode; training-mode channel dropout not implemented.
    y = lax.conv_general_dilated(y, w2, (1, 1), "VALID", dimension_numbers=dn)
    y = y + b2[None, :, None, None]
    y = lax.reduce_window(y, -jnp.inf, lax.max, (1, 1, 2, 2), (1, 1, 2, 2), "VALID")
    y = jnp.maximum(y, 0.0)
    f = y.reshape(y.shape[0], -1)
    h = jnp.maximum(f @ wf1.T + bf1, 0.0)
    logits = h @ wf2.T + bf2
    return jax.nn.log_softmax(logits, axis=1)


if __name__ == "__main__":
    key = jax.random.PRNGKey(0)
    kx, kp = jax.random.split(key)
    x = jax.random.normal(kx, (2, 1, 28, 28), jnp.float32)  # fc1(320) requires 28x28 input
    params = init_params(kp)
    packed = prepare_params(params)          # one-time host-side weight preprocessing

    out = jax.jit(forward)(x, packed)
    out = jax.block_until_ready(out)
    assert out.shape == (2, 10) and out.dtype == jnp.float32

    ref = reference_forward(x, params)
    np.testing.assert_allclose(np.asarray(out), np.asarray(ref), rtol=5e-2, atol=5e-2)

    print("KERNEL_OK")
</pallas_src>

<mosaic_0001>
module attributes {stable_mosaic.version = 11 : i64} {
  func.func @fused_forward_kernel(%arg0: i32, %arg1: memref<16x784xf32, #tpu.memory_space<vmem>>, %arg2: memref<168x512xbf16, #tpu.memory_space<vmem>>, %arg3: memref<1x128xf32, #tpu.memory_space<vmem>>, %arg4: memref<1536x1536xbf16, #tpu.memory_space<vmem>>, %arg5: memref<1x384xf32, #tpu.memory_space<vmem>>, %arg6: memref<384x128xbf16, #tpu.memory_space<vmem>>, %arg7: memref<1x128xf32, #tpu.memory_space<vmem>>, %arg8: memref<128x128xbf16, #tpu.memory_space<vmem>>, %arg9: memref<1x128xf32, #tpu.memory_space<vmem>>, %arg10: memref<16x128xf32, #tpu.memory_space<vmem>>, %arg11: memref<16x1536xbf16, #tpu.memory_space<vmem>>) attributes {dimension_semantics = [#tpu.dimension_semantics<parallel>], iteration_bounds = array<i64: 1>, scalar_prefetch = 0 : i64, scratch_operands = 1 : i64, tpu.core_type = #tpu.core_type<tc>, window_params = [{transform_indices = @transform_0, window_bounds = array<i64: 16, 784>}, {pipeline_mode = #tpu.pipeline_mode<synchronous>, transform_indices = @transform_1, window_bounds = array<i64: 168, 512>}, {pipeline_mode = #tpu.pipeline_mode<synchronous>, transform_indices = @transform_2, window_bounds = array<i64: 1, 128>}, {pipeline_mode = #tpu.pipeline_mode<synchronous>, transform_indices = @transform_3, window_bounds = array<i64: 1536, 1536>}, {pipeline_mode = #tpu.pipeline_mode<synchronous>, transform_indices = @transform_4, window_bounds = array<i64: 1, 384>}, {pipeline_mode = #tpu.pipeline_mode<synchronous>, transform_indices = @transform_5, window_bounds = array<i64: 384, 128>}, {pipeline_mode = #tpu.pipeline_mode<synchronous>, transform_indices = @transform_6, window_bounds = array<i64: 1, 128>}, {pipeline_mode = #tpu.pipeline_mode<synchronous>, transform_indices = @transform_7, window_bounds = array<i64: 128, 128>}, {pipeline_mode = #tpu.pipeline_mode<synchronous>, transform_indices = @transform_8, window_bounds = array<i64: 1, 128>}, {transform_indices = @transform_9, window_bounds = array<i64: 16, 128>}]} {
    %c0 = arith.constant 0 : index
    %c0_0 = arith.constant 0 : index
    %0 = vector.load %arg2[%c0, %c0_0] : memref<168x512xbf16, #tpu.memory_space<vmem>>, vector<168x512xbf16>
    %c0_1 = arith.constant 0 : index
    %c0_2 = arith.constant 0 : index
    %1 = vector.load %arg3[%c0_1, %c0_2] : memref<1x128xf32, #tpu.memory_space<vmem>>, vector<1x128xf32>
    %c0_3 = arith.constant 0 : index
    %c0_4 = arith.constant 0 : index
    %2 = vector.load %arg1[%c0_3, %c0_4] : memref<16x784xf32, #tpu.memory_space<vmem>>, vector<16x168xf32>
    %3 = arith.truncf %2 : vector<16x168xf32> to vector<16x168xbf16>
    %cst = arith.constant dense<0.000000e+00> : vector<16x512xf32>
    %4 = tpu.matmul %3, %0, %cst {dimension_numbers = #tpu.dot_dimension_numbers<[1], [0], [0], [1], [0, 0, 1, 1], [], []>} : vector<16x168xbf16>, vector<168x512xbf16>, vector<16x512xf32> -> vector<16x512xf32>
    %5 = vector.extract_strided_slice %4 {offsets = [0, 0], sizes = [16, 128], strides = [1, 1]} : vector<16x512xf32> to vector<16x128xf32>
    %6 = vector.extract_strided_slice %4 {offsets = [0, 128], sizes = [16, 128], strides = [1, 1]} : vector<16x512xf32> to vector<16x128xf32>
    %7 = arith.maximumf %5, %6 : vector<16x128xf32>
    %8 = vector.extract_strided_slice %4 {offsets = [0, 256], sizes = [16, 128], strides = [1, 1]} : vector<16x512xf32> to vector<16x128xf32>
    %9 = vector.extract_strided_slice %4 {offsets = [0, 384], sizes = [16, 128], strides = [1, 1]} : vector<16x512xf32> to vector<16x128xf32>
    %10 = arith.maximumf %8, %9 : vector<16x128xf32>
    %11 = arith.maximumf %7, %10 : vector<16x128xf32>
    %12 = vector.broadcast %1 : vector<1x128xf32> to vector<16x128xf32>
    %13 = arith.addf %11, %12 : vector<16x128xf32>
    %cst_5 = arith.constant 0.000000e+00 : f32
    %14 = vector.broadcast %cst_5 : f32 to vector<16x128xf32>
    %15 = arith.maximumf %13, %14 : vector<16x128xf32>
    %16 = arith.truncf %15 : vector<16x128xf32> to vector<16x128xbf16>
    %c0_6 = arith.constant 0 : index
    %c0_7 = arith.constant 0 : index
    %17 = vector.load %arg11[%c0_6, %c0_7] : memref<16x1536xbf16, #tpu.memory_space<vmem>>, vector<16x128xbf16>
    tpu.vector_store %arg11[%c0_6, %c0_7], %16 {strides = array<i32>} : memref<16x1536xbf16, #tpu.memory_space<vmem>>, vector<16x128xbf16>,
    %c0_8 = arith.constant 0 : index
    %c56 = arith.constant 56 : index
    %18 = vector.load %arg1[%c0_8, %c56] : memref<16x784xf32, #tpu.memory_space<vmem>>, vector<16x168xf32>
    %19 = arith.truncf %18 : vector<16x168xf32> to vector<16x168xbf16>
    %cst_9 = arith.constant dense<0.000000e+00> : vector<16x512xf32>
    %20 = tpu.matmul %19, %0, %cst_9 {dimension_numbers = #tpu.dot_dimension_numbers<[1], [0], [0], [1], [0, 0, 1, 1], [], []>} : vector<16x168xbf16>, vector<168x512xbf16>, vector<16x512xf32> -> vector<16x512xf32>
    %21 = vector.extract_strided_slice %20 {offsets = [0, 0], sizes = [16, 128], strides = [1, 1]} : vector<16x512xf32> to vector<16x128xf32>
    %22 = vector.extract_strided_slice %20 {offsets = [0, 128], sizes = [16, 128], strides = [1, 1]} : vector<16x512xf32> to vector<16x128xf32>
    %23 = arith.maximumf %21, %22 : vector<16x128xf32>
    %24 = vector.extract_strided_slice %20 {offsets = [0, 256], sizes = [16, 128], strides = [1, 1]} : vector<16x512xf32> to vector<16x128xf32>
    %25 = vector.extract_strided_slice %20 {offsets = [0, 384], sizes = [16, 128], strides = [1, 1]} : vector<16x512xf32> to vector<16x128xf32>
    %26 = arith.maximumf %24, %25 : vector<16x128xf32>
    %27 = arith.maximumf %23, %26 : vector<16x128xf32>
    %28 = vector.broadcast %1 : vector<1x128xf32> to vector<16x128xf32>
    %29 = arith.addf %27, %28 : vector<16x128xf32>
    %cst_10 = arith.constant 0.000000e+00 : f32
    %30 = vector.broadcast %cst_10 : f32 to vector<16x128xf32>
    %31 = arith.maximumf %29, %30 : vector<16x128xf32>
    %32 = arith.truncf %31 : vector<16x128xf32> to vector<16x128xbf16>
    %c0_11 = arith.constant 0 : index
    %c128 = arith.constant 128 : index
    %33 = vector.load %arg11[%c0_11, %c128] : memref<16x1536xbf16, #tpu.memory_space<vmem>>, vector<16x128xbf16>
    tpu.vector_store %arg11[%c0_11, %c128], %32 {strides = array<i32>} : memref<16x1536xbf16, #tpu.memory_space<vmem>>, vector<16x128xbf16>,
    %c0_12 = arith.constant 0 : index
    %c112 = arith.constant 112 : index
    %34 = vector.load %arg1[%c0_12, %c112] : memref<16x784xf32, #tpu.memory_space<vmem>>, vector<16x168xf32>
    %35 = arith.truncf %34 : vector<16x168xf32> to vector<16x168xbf16>
    %cst_13 = arith.constant dense<0.000000e+00> : vector<16x512xf32>
    %36 = tpu.matmul %35, %0, %cst_13 {dimension_numbers = #tpu.dot_dimension_numbers<[1], [0], [0], [1], [0, 0, 1, 1], [], []>} : vector<16x168xbf16>, vector<168x512xbf16>, vector<16x512xf32> -> vector<16x512xf32>
    %37 = vector.extract_strided_slice %36 {offsets = [0, 0], sizes = [16, 128], strides = [1, 1]} : vector<16x512xf32> to vector<16x128xf32>
    %38 = vector.extract_strided_slice %36 {offsets = [0, 128], sizes = [16, 128], strides = [1, 1]} : vector<16x512xf32> to vector<16x128xf32>
    %39 = arith.maximumf %37, %38 : vector<16x128xf32>
    %40 = vector.extract_strided_slice %36 {offsets = [0, 256], sizes = [16, 128], strides = [1, 1]} : vector<16x512xf32> to vector<16x128xf32>
    %41 = vector.extract_strided_slice %36 {offsets = [0, 384], sizes = [16, 128], strides = [1, 1]} : vector<16x512xf32> to vector<16x128xf32>
    %42 = arith.maximumf %40, %41 : vector<16x128xf32>
    %43 = arith.maximumf %39, %42 : vector<16x128xf32>
    %44 = vector.broadcast %1 : vector<1x128xf32> to vector<16x128xf32>
    %45 = arith.addf %43, %44 : vector<16x128xf32>
    %cst_14 = arith.constant 0.000000e+00 : f32
    %46 = vector.broadcast %cst_14 : f32 to vector<16x128xf32>
    %47 = arith.maximumf %45, %46 : vector<16x128xf32>
    %48 = arith.truncf %47 : vector<16x128xf32> to vector<16x128xbf16>
    %c0_15 = arith.constant 0 : index
    %c256 = arith.constant 256 : index
    %49 = vector.load %arg11[%c0_15, %c256] : memref<16x1536xbf16, #tpu.memory_space<vmem>>, vector<16x128xbf16>
    tpu.vector_store %arg11[%c0_15, %c256], %48 {strides = array<i32>} : memref<16x1536xbf16, #tpu.memory_space<vmem>>, vector<16x128xbf16>,
    %c0_16 = arith.constant 0 : index
    %c168 = arith.constant 168 : index
    %50 = vector.load %arg1[%c0_16, %c168] : memref<16x784xf32, #tpu.memory_space<vmem>>, vector<16x168xf32>
    %51 = arith.truncf %50 : vector<16x168xf32> to vector<16x168xbf16>
    %cst_17 = arith.constant dense<0.000000e+00> : vector<16x512xf32>
    %52 = tpu.matmul %51, %0, %cst_17 {dimension_numbers = #tpu.dot_dimension_numbers<[1], [0], [0], [1], [0, 0, 1, 1], [], []>} : vector<16x168xbf16>, vector<168x512xbf16>, vector<16x512xf32> -> vector<16x512xf32>
    %53 = vector.extract_strided_slice %52 {offsets = [0, 0], sizes = [16, 128], strides = [1, 1]} : vector<16x512xf32> to vector<16x128xf32>
    %54 = vector.extract_strided_slice %52 {offsets = [0, 128], sizes = [16, 128], strides = [1, 1]} : vector<16x512xf32> to vector<16x128xf32>
    %55 = arith.maximumf %53, %54 : vector<16x128xf32>
    %56 = vector.extract_strided_slice %52 {offsets = [0, 256], sizes = [16, 128], strides = [1, 1]} : vector<16x512xf32> to vector<16x128xf32>
    %57 = vector.extract_strided_slice %52 {offsets = [0, 384], sizes = [16, 128], strides = [1, 1]} : vector<16x512xf32> to vector<16x128xf32>
    %58 = arith.maximumf %56, %57 : vector<16x128xf32>
    %59 = arith.maximumf %55, %58 : vector<16x128xf32>
    %60 = vector.broadcast %1 : vector<1x128xf32> to vector<16x128xf32>
    %61 = arith.addf %59, %60 : vector<16x128xf32>
    %cst_18 = arith.constant 0.000000e+00 : f32
    %62 = vector.broadcast %cst_18 : f32 to vector<16x128xf32>
    %63 = arith.maximumf %61, %62 : vector<16x128xf32>
    %64 = arith.truncf %63 : vector<16x128xf32> to vector<16x128xbf16>
    %c0_19 = arith.constant 0 : index
    %c384 = arith.constant 384 : index
    %65 = vector.load %arg11[%c0_19, %c384] : memref<16x1536xbf16, #tpu.memory_space<vmem>>, vector<16x128xbf16>
    tpu.vector_store %arg11[%c0_19, %c384], %64 {strides = array<i32>} : memref<16x1536xbf16, #tpu.memory_space<vmem>>, vector<16x128xbf16>,
    %c0_20 = arith.constant 0 : index
    %c224 = arith.constant 224 : index
    %66 = vector.load %arg1[%c0_20, %c224] : memref<16x784xf32, #tpu.memory_space<vmem>>, vector<16x168xf32>
    %67 = arith.truncf %66 : vector<16x168xf32> to vector<16x168xbf16>
    %cst_21 = arith.constant dense<0.000000e+00> : vector<16x512xf32>
    %68 = tpu.matmul %67, %0, %cst_21 {dimension_numbers = #tpu.dot_dimension_numbers<[1], [0], [0], [1], [0, 0, 1, 1], [], []>} : vector<16x168xbf16>, vector<168x512xbf16>, vector<16x512xf32> -> vector<16x512xf32>
    %69 = vector.extract_strided_slice %68 {offsets = [0, 0], sizes = [16, 128], strides = [1, 1]} : vector<16x512xf32> to vector<16x128xf32>
    %70 = vector.extract_strided_slice %68 {offsets = [0, 128], sizes = [16, 128], strides = [1, 1]} : vector<16x512xf32> to vector<16x128xf32>
    %71 = arith.maximumf %69, %70 : vector<16x128xf32>
    %72 = vector.extract_strided_slice %68 {offsets = [0, 256], sizes = [16, 128], strides = [1, 1]} : vector<16x512xf32> to vector<16x128xf32>
    %73 = vector.extract_strided_slice %68 {offsets = [0, 384], sizes = [16, 128], strides = [1, 1]} : vector<16x512xf32> to vector<16x128xf32>
    %74 = arith.maximumf %72, %73 : vector<16x128xf32>
    %75 = arith.maximumf %71, %74 : vector<16x128xf32>
    %76 = vector.broadcast %1 : vector<1x128xf32> to vector<16x128xf32>
    %77 = arith.addf %75, %76 : vector<16x128xf32>
    %cst_22 = arith.constant 0.000000e+00 : f32
    %78 = vector.broadcast %cst_22 : f32 to vector<16x128xf32>
    %79 = arith.maximumf %77, %78 : vector<16x128xf32>
    %80 = arith.truncf %79 : vector<16x128xf32> to vector<16x128xbf16>
    %c0_23 = arith.constant 0 : index
    %c512 = arith.constant 512 : index
    %81 = vector.load %arg11[%c0_23, %c512] : memref<16x1536xbf16, #tpu.memory_space<vmem>>, vector<16x128xbf16>
    tpu.vector_store %arg11[%c0_23, %c512], %80 {strides = array<i32>} : memref<16x1536xbf16, #tpu.memory_space<vmem>>, vector<16x128xbf16>,
    %c0_24 = arith.constant 0 : index
    %c280 = arith.constant 280 : index
    %82 = vector.load %arg1[%c0_24, %c280] : memref<16x784xf32, #tpu.memory_space<vmem>>, vector<16x168xf32>
    %83 = arith.truncf %82 : vector<16x168xf32> to vector<16x168xbf16>
    %cst_25 = arith.constant dense<0.000000e+00> : vector<16x512xf32>
    %84 = tpu.matmul %83, %0, %cst_25 {dimension_numbers = #tpu.dot_dimension_numbers<[1], [0], [0], [1], [0, 0, 1, 1], [], []>} : vector<16x168xbf16>, vector<168x512xbf16>, vector<16x512xf32> -> vector<16x512xf32>
    %85 = vector.extract_strided_slice %84 {offsets = [0, 0], sizes = [16, 128], strides = [1, 1]} : vector<16x512xf32> to vector<16x128xf32>
    %86 = vector.extract_strided_slice %84 {offsets = [0, 128], sizes = [16, 128], strides = [1, 1]} : vector<16x512xf32> to vector<16x128xf32>
    %87 = arith.maximumf %85, %86 : vector<16x128xf32>
    %88 = vector.extract_strided_slice %84 {offsets = [0, 256], sizes = [16, 128], strides = [1, 1]} : vector<16x512xf32> to vector<16x128xf32>
    %89 = vector.extract_strided_slice %84 {offsets = [0, 384], sizes = [16, 128], strides = [1, 1]} : vector<16x512xf32> to vector<16x128xf32>
    %90 = arith.maximumf %88, %89 : vector<16x128xf32>
    %91 = arith.maximumf %87, %90 : vector<16x128xf32>
    %92 = vector.broadcast %1 : vector<1x128xf32> to vector<16x128xf32>
    %93 = arith.addf %91, %92 : vector<16x128xf32>
    %cst_26 = arith.constant 0.000000e+00 : f32
    %94 = vector.broadcast %cst_26 : f32 to vector<16x128xf32>
    %95 = arith.maximumf %93, %94 : vector<16x128xf32>
    %96 = arith.truncf %95 : vector<16x128xf32> to vector<16x128xbf16>
    %c0_27 = arith.constant 0 : index
    %c640 = arith.constant 640 : index
    %97 = vector.load %arg11[%c0_27, %c640] : memref<16x1536xbf16, #tpu.memory_space<vmem>>, vector<16x128xbf16>
    tpu.vector_store %arg11[%c0_27, %c640], %96 {strides = array<i32>} : memref<16x1536xbf16, #tpu.memory_space<vmem>>, vector<16x128xbf16>,
    %c0_28 = arith.constant 0 : index
    %c336 = arith.constant 336 : index
    %98 = vector.load %arg1[%c0_28, %c336] : memref<16x784xf32, #tpu.memory_space<vmem>>, vector<16x168xf32>
    %99 = arith.truncf %98 : vector<16x168xf32> to vector<16x168xbf16>
    %cst_29 = arith.constant dense<0.000000e+00> : vector<16x512xf32>
    %100 = tpu.matmul %99, %0, %cst_29 {dimension_numbers = #tpu.dot_dimension_numbers<[1], [0], [0], [1], [0, 0, 1, 1], [], []>} : vector<16x168xbf16>, vector<168x512xbf16>, vector<16x512xf32> -> vector<16x512xf32>
    %101 = vector.extract_strided_slice %100 {offsets = [0, 0], sizes = [16, 128], strides = [1, 1]} : vector<16x512xf32> to vector<16x128xf32>
    %102 = vector.extract_strided_slice %100 {offsets = [0, 128], sizes = [16, 128], strides = [1, 1]} : vector<16x512xf32> to vector<16x128xf32>
    %103 = arith.maximumf %101, %102 : vector<16x128xf32>
    %104 = vector.extract_strided_slice %100 {offsets = [0, 256], sizes = [16, 128], strides = [1, 1]} : vector<16x512xf32> to vector<16x128xf32>
    %105 = vector.extract_strided_slice %100 {offsets = [0, 384], sizes = [16, 128], strides = [1, 1]} : vector<16x512xf32> to vector<16x128xf32>
    %106 = arith.maximumf %104, %105 : vector<16x128xf32>
    %107 = arith.maximumf %103, %106 : vector<16x128xf32>
    %108 = vector.broadcast %1 : vector<1x128xf32> to vector<16x128xf32>
    %109 = arith.addf %107, %108 : vector<16x128xf32>
    %cst_30 = arith.constant 0.000000e+00 : f32
    %110 = vector.broadcast %cst_30 : f32 to vector<16x128xf32>
    %111 = arith.maximumf %109, %110 : vector<16x128xf32>
    %112 = arith.truncf %111 : vector<16x128xf32> to vector<16x128xbf16>
    %c0_31 = arith.constant 0 : index
    %c768 = arith.constant 768 : index
    %113 = vector.load %arg11[%c0_31, %c768] : memref<16x1536xbf16, #tpu.memory_space<vmem>>, vector<16x128xbf16>
    tpu.vector_store %arg11[%c0_31, %c768], %112 {strides = array<i32>} : memref<16x1536xbf16, #tpu.memory_space<vmem>>, vector<16x128xbf16>,
    %c0_32 = arith.constant 0 : index
    %c392 = arith.constant 392 : index
    %114 = vector.load %arg1[%c0_32, %c392] : memref<16x784xf32, #tpu.memory_space<vmem>>, vector<16x168xf32>
    %115 = arith.truncf %114 : vector<16x168xf32> to vector<16x168xbf16>
    %cst_33 = arith.constant dense<0.000000e+00> : vector<16x512xf32>
    %116 = tpu.matmul %115, %0, %cst_33 {dimension_numbers = #tpu.dot_dimension_numbers<[1], [0], [0], [1], [0, 0, 1, 1], [], []>} : vector<16x168xbf16>, vector<168x512xbf16>, vector<16x512xf32> -> vector<16x512xf32>
    %117 = vector.extract_strided_slice %116 {offsets = [0, 0], sizes = [16, 128], strides = [1, 1]} : vector<16x512xf32> to vector<16x128xf32>
    %118 = vector.extract_strided_slice %116 {offsets = [0, 128], sizes = [16, 128], strides = [1, 1]} : vector<16x512xf32> to vector<16x128xf32>
    %119 = arith.maximumf %117, %118 : vector<16x128xf32>
    %120 = vector.extract_strided_slice %116 {offsets = [0, 256], sizes = [16, 128], strides = [1, 1]} : vector<16x512xf32> to vector<16x128xf32>
    %121 = vector.extract_strided_slice %116 {offsets = [0, 384], sizes = [16, 128], strides = [1, 1]} : vector<16x512xf32> to vector<16x128xf32>
    %122 = arith.maximumf %120, %121 : vector<16x128xf32>
    %123 = arith.maximumf %119, %122 : vector<16x128xf32>
    %124 = vector.broadcast %1 : vector<1x128xf32> to vector<16x128xf32>
    %125 = arith.addf %123, %124 : vector<16x128xf32>
    %cst_34 = arith.constant 0.000000e+00 : f32
    %126 = vector.broadcast %cst_34 : f32 to vector<16x128xf32>
    %127 = arith.maximumf %125, %126 : vector<16x128xf32>
    %128 = arith.truncf %127 : vector<16x128xf32> to vector<16x128xbf16>
    %c0_35 = arith.constant 0 : index
    %c896 = arith.constant 896 : index
    %129 = vector.load %arg11[%c0_35, %c896] : memref<16x1536xbf16, #tpu.memory_space<vmem>>, vector<16x128xbf16>
    tpu.vector_store %arg11[%c0_35, %c896], %128 {strides = array<i32>} : memref<16x1536xbf16, #tpu.memory_space<vmem>>, vector<16x128xbf16>,
    %c0_36 = arith.constant 0 : index
    %c448 = arith.constant 448 : index
    %130 = vector.load %arg1[%c0_36, %c448] : memref<16x784xf32, #tpu.memory_space<vmem>>, vector<16x168xf32>
    %131 = arith.truncf %130 : vector<16x168xf32> to vector<16x168xbf16>
    %cst_37 = arith.constant dense<0.000000e+00> : vector<16x512xf32>
    %132 = tpu.matmul %131, %0, %cst_37 {dimension_numbers = #tpu.dot_dimension_numbers<[1], [0], [0], [1], [0, 0, 1, 1], [], []>} : vector<16x168xbf16>, vector<168x512xbf16>, vector<16x512xf32> -> vector<16x512xf32>
    %133 = vector.extract_strided_slice %132 {offsets = [0, 0], sizes = [16, 128], strides = [1, 1]} : vector<16x512xf32> to vector<16x128xf32>
    %134 = vector.extract_strided_slice %132 {offsets = [0, 128], sizes = [16, 128], strides = [1, 1]} : vector<16x512xf32> to vector<16x128xf32>
    %135 = arith.maximumf %133, %134 : vector<16x128xf32>
    %136 = vector.extract_strided_slice %132 {offsets = [0, 256], sizes = [16, 128], strides = [1, 1]} : vector<16x512xf32> to vector<16x128xf32>
    %137 = vector.extract_strided_slice %132 {offsets = [0, 384], sizes = [16, 128], strides = [1, 1]} : vector<16x512xf32> to vector<16x128xf32>
    %138 = arith.maximumf %136, %137 : vector<16x128xf32>
    %139 = arith.maximumf %135, %138 : vector<16x128xf32>
    %140 = vector.broadcast %1 : vector<1x128xf32> to vector<16x128xf32>
    %141 = arith.addf %139, %140 : vector<16x128xf32>
    %cst_38 = arith.constant 0.000000e+00 : f32
    %142 = vector.broadcast %cst_38 : f32 to vector<16x128xf32>
    %143 = arith.maximumf %141, %142 : vector<16x128xf32>
    %144 = arith.truncf %143 : vector<16x128xf32> to vector<16x128xbf16>
    %c0_39 = arith.constant 0 : index
    %c1024 = arith.constant 1024 : index
    %145 = vector.load %arg11[%c0_39, %c1024] : memref<16x1536xbf16, #tpu.memory_space<vmem>>, vector<16x128xbf16>
    tpu.vector_store %arg11[%c0_39, %c1024], %144 {strides = array<i32>} : memref<16x1536xbf16, #tpu.memory_space<vmem>>, vector<16x128xbf16>,
    %c0_40 = arith.constant 0 : index
    %c504 = arith.constant 504 : index
    %146 = vector.load %arg1[%c0_40, %c504] : memref<16x784xf32, #tpu.memory_space<vmem>>, vector<16x168xf32>
    %147 = arith.truncf %146 : vector<16x168xf32> to vector<16x168xbf16>
    %cst_41 = arith.constant dense<0.000000e+00> : vector<16x512xf32>
    %148 = tpu.matmul %147, %0, %cst_41 {dimension_numbers = #tpu.dot_dimension_numbers<[1], [0], [0], [1], [0, 0, 1, 1], [], []>} : vector<16x168xbf16>, vector<168x512xbf16>, vector<16x512xf32> -> vector<16x512xf32>
    %149 = vector.extract_strided_slice %148 {offsets = [0, 0], sizes = [16, 128], strides = [1, 1]} : vector<16x512xf32> to vector<16x128xf32>
    %150 = vector.extract_strided_slice %148 {offsets = [0, 128], sizes = [16, 128], strides = [1, 1]} : vector<16x512xf32> to vector<16x128xf32>
    %151 = arith.maximumf %149, %150 : vector<16x128xf32>
    %152 = vector.extract_strided_slice %148 {offsets = [0, 256], sizes = [16, 128], strides = [1, 1]} : vector<16x512xf32> to vector<16x128xf32>
    %153 = vector.extract_strided_slice %148 {offsets = [0, 384], sizes = [16, 128], strides = [1, 1]} : vector<16x512xf32> to vector<16x128xf32>
    %154 = arith.maximumf %152, %153 : vector<16x128xf32>
    %155 = arith.maximumf %151, %154 : vector<16x128xf32>
    %156 = vector.broadcast %1 : vector<1x128xf32> to vector<16x128xf32>
    %157 = arith.addf %155, %156 : vector<16x128xf32>
    %cst_42 = arith.constant 0.000000e+00 : f32
    %158 = vector.broadcast %cst_42 : f32 to vector<16x128xf32>
    %159 = arith.maximumf %157, %158 : vector<16x128xf32>
    %160 = arith.truncf %159 : vector<16x128xf32> to vector<16x128xbf16>
    %c0_43 = arith.constant 0 : index
    %c1152 = arith.constant 1152 : index
    %161 = vector.load %arg11[%c0_43, %c1152] : memref<16x1536xbf16, #tpu.memory_space<vmem>>, vector<16x128xbf16>
    tpu.vector_store %arg11[%c0_43, %c1152], %160 {strides = array<i32>} : memref<16x1536xbf16, #tpu.memory_space<vmem>>, vector<16x128xbf16>,
    %c0_44 = arith.constant 0 : index
    %c560 = arith.constant 560 : index
    %162 = vector.load %arg1[%c0_44, %c560] : memref<16x784xf32, #tpu.memory_space<vmem>>, vector<16x168xf32>
    %163 = arith.truncf %162 : vector<16x168xf32> to vector<16x168xbf16>
    %cst_45 = arith.constant dense<0.000000e+00> : vector<16x512xf32>
    %164 = tpu.matmul %163, %0, %cst_45 {dimension_numbers = #tpu.dot_dimension_numbers<[1], [0], [0], [1], [0, 0, 1, 1], [], []>} : vector<16x168xbf16>, vector<168x512xbf16>, vector<16x512xf32> -> vector<16x512xf32>
    %165 = vector.extract_strided_slice %164 {offsets = [0, 0], sizes = [16, 128], strides = [1, 1]} : vector<16x512xf32> to vector<16x128xf32>
    %166 = vector.extract_strided_slice %164 {offsets = [0, 128], sizes = [16, 128], strides = [1, 1]} : vector<16x512xf32> to vector<16x128xf32>
    %167 = arith.maximumf %165, %166 : vector<16x128xf32>
    %168 = vector.extract_strided_slice %164 {offsets = [0, 256], sizes = [16, 128], strides = [1, 1]} : vector<16x512xf32> to vector<16x128xf32>
    %169 = vector.extract_strided_slice %164 {offsets = [0, 384], sizes = [16, 128], strides = [1, 1]} : vector<16x512xf32> to vector<16x128xf32>
    %170 = arith.maximumf %168, %169 : vector<16x128xf32>
    %171 = arith.maximumf %167, %170 : vector<16x128xf32>
    %172 = vector.broadcast %1 : vector<1x128xf32> to vector<16x128xf32>
    %173 = arith.addf %171, %172 : vector<16x128xf32>
    %cst_46 = arith.constant 0.000000e+00 : f32
    %174 = vector.broadcast %cst_46 : f32 to vector<16x128xf32>
    %175 = arith.maximumf %173, %174 : vector<16x128xf32>
    %176 = arith.truncf %175 : vector<16x128xf32> to vector<16x128xbf16>
    %c0_47 = arith.constant 0 : index
    %c1280 = arith.constant 1280 : index
    %177 = vector.load %arg11[%c0_47, %c1280] : memref<16x1536xbf16, #tpu.memory_space<vmem>>, vector<16x128xbf16>
    tpu.vector_store %arg11[%c0_47, %c1280], %176 {strides = array<i32>} : memref<16x1536xbf16, #tpu.memory_space<vmem>>, vector<16x128xbf16>,
    %c0_48 = arith.constant 0 : index
    %c616 = arith.constant 616 : index
    %178 = vector.load %arg1[%c0_48, %c616] : memref<16x784xf32, #tpu.memory_space<vmem>>, vector<16x168xf32>
    %179 = arith.truncf %178 : vector<16x168xf32> to vector<16x168xbf16>
    %cst_49 = arith.constant dense<0.000000e+00> : vector<16x512xf32>
    %180 = tpu.matmul %179, %0, %cst_49 {dimension_numbers = #tpu.dot_dimension_numbers<[1], [0], [0], [1], [0, 0, 1, 1], [], []>} : vector<16x168xbf16>, vector<168x512xbf16>, vector<16x512xf32> -> vector<16x512xf32>
    %181 = vector.extract_strided_slice %180 {offsets = [0, 0], sizes = [16, 128], strides = [1, 1]} : vector<16x512xf32> to vector<16x128xf32>
    %182 = vector.extract_strided_slice %180 {offsets = [0, 128], sizes = [16, 128], strides = [1, 1]} : vector<16x512xf32> to vector<16x128xf32>
    %183 = arith.maximumf %181, %182 : vector<16x128xf32>
    %184 = vector.extract_strided_slice %180 {offsets = [0, 256], sizes = [16, 128], strides = [1, 1]} : vector<16x512xf32> to vector<16x128xf32>
    %185 = vector.extract_strided_slice %180 {offsets = [0, 384], sizes = [16, 128], strides = [1, 1]} : vector<16x512xf32> to vector<16x128xf32>
    %186 = arith.maximumf %184, %185 : vector<16x128xf32>
    %187 = arith.maximumf %183, %186 : vector<16x128xf32>
    %188 = vector.broadcast %1 : vector<1x128xf32> to vector<16x128xf32>
    %189 = arith.addf %187, %188 : vector<16x128xf32>
    %cst_50 = arith.constant 0.000000e+00 : f32
    %190 = vector.broadcast %cst_50 : f32 to vector<16x128xf32>
    %191 = arith.maximumf %189, %190 : vector<16x128xf32>
    %192 = arith.truncf %191 : vector<16x128xf32> to vector<16x128xbf16>
    %c0_51 = arith.constant 0 : index
    %c1408 = arith.constant 1408 : index
    %193 = vector.load %arg11[%c0_51, %c1408] : memref<16x1536xbf16, #tpu.memory_space<vmem>>, vector<16x128xbf16>
    tpu.vector_store %arg11[%c0_51, %c1408], %192 {strides = array<i32>} : memref<16x1536xbf16, #tpu.memory_space<vmem>>, vector<16x128xbf16>,
    %c0_52 = arith.constant 0 : index
    %c0_53 = arith.constant 0 : index
    %194 = vector.load %arg11[%c0_52, %c0_53] : memref<16x1536xbf16, #tpu.memory_space<vmem>>, vector<16x1536xbf16>
    %c0_54 = arith.constant 0 : index
    %c0_55 = arith.constant 0 : index
    %195 = vector.load %arg4[%c0_54, %c0_55] : memref<1536x1536xbf16, #tpu.memory_space<vmem>>, vector<1536x384xbf16>
    %cst_56 = arith.constant dense<0.000000e+00> : vector<16x384xf32>
    %196 = tpu.matmul %194, %195, %cst_56 {dimension_numbers = #tpu.dot_dimension_numbers<[1], [0], [0], [1], [0, 0, 1, 1], [], []>} : vector<16x1536xbf16>, vector<1536x384xbf16>, vector<16x384xf32> -> vector<16x384xf32>
    %c0_57 = arith.constant 0 : index
    %c384_58 = arith.constant 384 : index
    %197 = vector.load %arg4[%c0_57, %c384_58] : memref<1536x1536xbf16, #tpu.memory_space<vmem>>, vector<1536x384xbf16>
    %cst_59 = arith.constant dense<0.000000e+00> : vector<16x384xf32>
    %198 = tpu.matmul %194, %197, %cst_59 {dimension_numbers = #tpu.dot_dimension_numbers<[1], [0], [0], [1], [0, 0, 1, 1], [], []>} : vector<16x1536xbf16>, vector<1536x384xbf16>, vector<16x384xf32> -> vector<16x384xf32>
    %199 = arith.maximumf %196, %198 : vector<16x384xf32>
    %c0_60 = arith.constant 0 : index
    %c768_61 = arith.constant 768 : index
    %200 = vector.load %arg4[%c0_60, %c768_61] : memref<1536x1536xbf16, #tpu.memory_space<vmem>>, vector<1536x384xbf16>
    %cst_62 = arith.constant dense<0.000000e+00> : vector<16x384xf32>
    %201 = tpu.matmul %194, %200, %cst_62 {dimension_numbers = #tpu.dot_dimension_numbers<[1], [0], [0], [1], [0, 0, 1, 1], [], []>} : vector<16x1536xbf16>, vector<1536x384xbf16>, vector<16x384xf32> -> vector<16x384xf32>
    %202 = arith.maximumf %199, %201 : vector<16x384xf32>
    %c0_63 = arith.constant 0 : index
    %c1152_64 = arith.constant 1152 : index
    %203 = vector.load %arg4[%c0_63, %c1152_64] : memref<1536x1536xbf16, #tpu.memory_space<vmem>>, vector<1536x384xbf16>
    %cst_65 = arith.constant dense<0.000000e+00> : vector<16x384xf32>
    %204 = tpu.matmul %194, %203, %cst_65 {dimension_numbers = #tpu.dot_dimension_numbers<[1], [0], [0], [1], [0, 0, 1, 1], [], []>} : vector<16x1536xbf16>, vector<1536x384xbf16>, vector<16x384xf32> -> vector<16x384xf32>
    %205 = arith.maximumf %202, %204 : vector<16x384xf32>
    %c0_66 = arith.constant 0 : index
    %c0_67 = arith.constant 0 : index
    %206 = vector.load %arg5[%c0_66, %c0_67] : memref<1x384xf32, #tpu.memory_space<vmem>>, vector<1x384xf32>
    %207 = vector.broadcast %206 : vector<1x384xf32> to vector<16x384xf32>
    %208 = arith.addf %205, %207 : vector<16x384xf32>
    %cst_68 = arith.constant 0.000000e+00 : f32
    %209 = vector.broadcast %cst_68 : f32 to vector<16x384xf32>
    %210 = arith.maximumf %208, %209 : vector<16x384xf32>
    %211 = arith.truncf %210 : vector<16x384xf32> to vector<16x384xbf16>
    %c0_69 = arith.constant 0 : index
    %c0_70 = arith.constant 0 : index
    %212 = vector.load %arg6[%c0_69, %c0_70] : memref<384x128xbf16, #tpu.memory_space<vmem>>, vector<384x128xbf16>
    %cst_71 = arith.constant dense<0.000000e+00> : vector<16x128xf32>
    %213 = tpu.matmul %211, %212, %cst_71 {dimension_numbers = #tpu.dot_dimension_numbers<[1], [0], [0], [1], [0, 0, 1, 1], [], []>} : vector<16x384xbf16>, vector<384x128xbf16>, vector<16x128xf32> -> vector<16x128xf32>
    %c0_72 = arith.constant 0 : index
    %c0_73 = arith.constant 0 : index
    %214 = vector.load %arg7[%c0_72, %c0_73] : memref<1x128xf32, #tpu.memory_space<vmem>>, vector<1x128xf32>
    %215 = vector.broadcast %214 : vector<1x128xf32> to vector<16x128xf32>
    %216 = arith.addf %213, %215 : vector<16x128xf32>
    %cst_74 = arith.constant 0.000000e+00 : f32
    %217 = vector.broadcast %cst_74 : f32 to vector<16x128xf32>
    %218 = arith.maximumf %216, %217 : vector<16x128xf32>
    %219 = arith.truncf %218 : vector<16x128xf32> to vector<16x128xbf16>
    %c0_75 = arith.constant 0 : index
    %c0_76 = arith.constant 0 : index
    %220 = vector.load %arg8[%c0_75, %c0_76] : memref<128x128xbf16, #tpu.memory_space<vmem>>, vector<128x128xbf16>
    %cst_77 = arith.constant dense<0.000000e+00> : vector<16x128xf32>
    %221 = tpu.matmul %219, %220, %cst_77 {dimension_numbers = #tpu.dot_dimension_numbers<[1], [0], [0], [1], [0, 0, 1, 1], [], []>} : vector<16x128xbf16>, vector<128x128xbf16>, vector<16x128xf32> -> vector<16x128xf32>
    %c0_78 = arith.constant 0 : index
    %c0_79 = arith.constant 0 : index
    %222 = vector.load %arg9[%c0_78, %c0_79] : memref<1x128xf32, #tpu.memory_space<vmem>>, vector<1x128xf32>
    %223 = vector.broadcast %222 : vector<1x128xf32> to vector<16x128xf32>
    %224 = arith.addf %221, %223 : vector<16x128xf32>
    %cst_80 = arith.constant dense<0xFF800000> : vector<16xf32>
    %225 = vector.multi_reduction <maximumf>, %224, %cst_80 [1] : vector<16x128xf32> to vector<16xf32>
    %226 = vector.shape_cast %225 : vector<16xf32> to vector<16x1xf32>
    %227 = vector.broadcast %226 : vector<16x1xf32> to vector<16x128xf32>
    %228 = arith.subf %224, %227 : vector<16x128xf32>
    %229 = math.exp %228 : vector<16x128xf32>
    %cst_81 = arith.constant dense<0.000000e+00> : vector<16xf32>
    %230 = vector.multi_reduction <add>, %229, %cst_81 [1] : vector<16x128xf32> to vector<16xf32>
    %231 = vector.shape_cast %230 : vector<16xf32> to vector<16x1xf32>
    %232 = math.log %231 : vector<16x1xf32>
    %233 = vector.broadcast %232 : vector<16x1xf32> to vector<16x128xf32>
    %234 = arith.subf %228, %233 : vector<16x128xf32>
    %c0_82 = arith.constant 0 : index
    %c0_83 = arith.constant 0 : index
    %235 = vector.load %arg10[%c0_82, %c0_83] : memref<16x128xf32, #tpu.memory_space<vmem>>, vector<16x128xf32>
    tpu.vector_store %arg10[%c0_82, %c0_83], %234 {strides = array<i32>} : memref<16x128xf32, #tpu.memory_space<vmem>>, vector<16x128xf32>,
    return
  }
  func.func @transform_0(%arg0: i32) -> (i32, i32) {
    %c0_i32 = arith.constant 0 : i32
    %c0_i32_0 = arith.constant 0 : i32
    return %arg0, %c0_i32 : i32, i32
  }
  func.func @transform_1(%arg0: i32) -> (i32, i32) {
    %c0_i32 = arith.constant 0 : i32
    %c0_i32_0 = arith.constant 0 : i32
    %c0_i32_1 = arith.constant 0 : i32
    return %c0_i32, %c0_i32_0 : i32, i32
  }
  func.func @transform_2(%arg0: i32) -> (i32, i32) {
    %c0_i32 = arith.constant 0 : i32
    %c0_i32_0 = arith.constant 0 : i32
    %c0_i32_1 = arith.constant 0 : i32
    return %c0_i32, %c0_i32_0 : i32, i32
  }
  func.func @transform_3(%arg0: i32) -> (i32, i32) {
    %c0_i32 = arith.constant 0 : i32
    %c0_i32_0 = arith.constant 0 : i32
    %c0_i32_1 = arith.constant 0 : i32
    return %c0_i32, %c0_i32_0 : i32, i32
  }
  func.func @transform_4(%arg0: i32) -> (i32, i32) {
    %c0_i32 = arith.constant 0 : i32
    %c0_i32_0 = arith.constant 0 : i32
    %c0_i32_1 = arith.constant 0 : i32
    return %c0_i32, %c0_i32_0 : i32, i32
  }
  func.func @transform_5(%arg0: i32) -> (i32, i32) {
    %c0_i32 = arith.constant 0 : i32
    %c0_i32_0 = arith.constant 0 : i32
    %c0_i32_1 = arith.constant 0 : i32
    return %c0_i32, %c0_i32_0 : i32, i32
  }
  func.func @transform_6(%arg0: i32) -> (i32, i32) {
    %c0_i32 = arith.constant 0 : i32
    %c0_i32_0 = arith.constant 0 : i32
    %c0_i32_1 = arith.constant 0 : i32
    return %c0_i32, %c0_i32_0 : i32, i32
  }
  func.func @transform_7(%arg0: i32) -> (i32, i32) {
    %c0_i32 = arith.constant 0 : i32
    %c0_i32_0 = arith.constant 0 : i32
    %c0_i32_1 = arith.constant 0 : i32
    return %c0_i32, %c0_i32_0 : i32, i32
  }
  func.func @transform_8(%arg0: i32) -> (i32, i32) {
    %c0_i32 = arith.constant 0 : i32
    %c0_i32_0 = arith.constant 0 : i32
    %c0_i32_1 = arith.constant 0 : i32
    return %c0_i32, %c0_i32_0 : i32, i32
  }
  func.func @transform_9(%arg0: i32) -> (i32, i32) {
    %c0_i32 = arith.constant 0 : i32
    %c0_i32_0 = arith.constant 0 : i32
    return %arg0, %c0_i32 : i32, i32
  }
}

</mosaic_0001>

<llo_original>
// kernel: forward.1
$region0: #{forward.1}
  #allocation0 [shape = 'u32[]', space=smem, size = 0x4, offset = 0x4, fixed_abs, tag = 'smem constant byte address 0x4 - core index']
  #allocation1 [shape = 'u32[144,128]{1,0:T(1,128)}', space=vmem, size = 0x12000, scoped, tag = 'internal scratch']
  #allocation2 [shape = 'bf16[16,1536]{1,0:T(8,128)(2,1)}', space=vmem, size = 0xc000, scoped, tag = 'scratch operand']
  %s0 = inlined_call_operand.vmem [shape: f32[16,784], index: 0, kind: input, shape index: {}]
  %s1 = inlined_call_operand.hbm [shape: bf16[168,512], index: 1, kind: input, shape index: {}]
  %s2 = inlined_call_operand.hbm [shape: f32[1,128], index: 2, kind: input, shape index: {}]
  %s3 = inlined_call_operand.hbm [shape: bf16[1536,1536], index: 3, kind: input, shape index: {}]
  %s4 = inlined_call_operand.hbm [shape: f32[1,384], index: 4, kind: input, shape index: {}]
  %s5 = inlined_call_operand.hbm [shape: bf16[384,128], index: 5, kind: input, shape index: {}]
  %s6 = inlined_call_operand.hbm [shape: f32[1,128], index: 6, kind: input, shape index: {}]
  %s7 = inlined_call_operand.hbm [shape: bf16[128,128], index: 7, kind: input, shape index: {}]
  %s8 = inlined_call_operand.hbm [shape: f32[1,128], index: 8, kind: input, shape index: {}]
  %s9 = inlined_call_operand.vmem [shape: f32[16,128], index: 9, kind: output, shape index: {}]
  %s10 = sld [smem:[#allocation0]]
  $region78: #{forward.1} parent=0
    _
  %s12 = ssub.s32 1, %s10
  %s13 = scalar_select 0, %s12, %s10
  $region1: #{forward.1} parent=0
    #allocation3 [shape = 'u8[172032]{0}', space=vmem, size = 0x2a000, scoped, tag = 'input window, operand 1, single buffered']
    #allocation4 [shape = 's32[1]{0}', space=sflag, size = 0x4, scoped, tag = 'scoped memory for forward.1']
    #allocation5 [shape = 'u8[512]{0}', space=vmem, size = 0x400, scoped, tag = 'input window, operand 2, single buffered']
    #allocation6 [shape = 's32[1]{0}', space=sflag, size = 0x4, scoped, tag = 'scoped memory for forward.1']
    #allocation7 [shape = 'u8[4718592]{0}', space=vmem, size = 0x480000, scoped, tag = 'input window, operand 3, single buffered']
    #allocation8 [shape = 'u8[1536]{0}', space=vmem, size = 0x800, scoped, tag = 'input window, operand 4, single buffered']
    #allocation9 [shape = 's32[1]{0}', space=sflag, size = 0x4, scoped, tag = 'scoped memory for forward.1']
    #allocation10 [shape = 'u8[98304]{0}', space=vmem, size = 0x18000, scoped, tag = 'input window, operand 5, single buffered']
    #allocation11 [shape = 'u8[512]{0}', space=vmem, size = 0x400, scoped, tag = 'input window, operand 6, single buffered']
    #allocation12 [shape = 's32[1]{0}', space=sflag, size = 0x4, scoped, tag = 'scoped memory for forward.1']
    #allocation13 [shape = 'u8[32768]{0}', space=vmem, size = 0x8000, scoped, tag = 'input window, operand 7, single buffered']
    #allocation14 [shape = 'u8[512]{0}', space=vmem, size = 0x400, scoped, tag = 'input window, operand 8, single buffered']
    #allocation15 [shape = 's32[1]{0}', space=sflag, size = 0x4, scoped, tag = 'scoped memory for forward.1']
    %14 = vsyncpa [#allocation4], 0
    %15 = vsyncpa [#allocation6], 0
    %16 = vsyncpa [#allocation9], 0
    %17 = vsyncpa [#allocation12], 0
    %18 = vsyncpa [#allocation15], 0
    // Predicated region
    $region2: #{forward.1} parent=1 // pred_check
      _
    $region3: #{forward.1} parent=1 // pred_check_branch
      %20 = sbr.rel (0) target = $region5
    $region4: #{forward.1} parent=1 // pred_region
      _
    $region5: #{forward.1} parent=1 // pred_fallthru
      _
    // Predicated region
    $region6: #{forward.1} parent=1 // pred_check
      _
    $region7: #{forward.1} parent=1 // pred_check_branch
      %22 = sbr.rel (0) target = $region9
    $region8: #{forward.1} parent=1 // pred_region
      %s24 = ssub.s32 5376, 5376
      %25 = vsyncadd [#allocation4], %s24
      %s26 = sshll.u32 [#allocation3], 4
      %s27 = int_to_ptr.vmem [resolvable:$true] %s26
      %32 = dma.hbm_to_vmem [thread:$0]  %s1, 5376, %s27, [#allocation4], 256, 256, 16
    $region9: #{forward.1} parent=1 // pred_fallthru
      _
    // Predicated region
    $region10: #{forward.1} parent=1 // pred_check
      _
    $region11: #{forward.1} parent=1 // pred_check_branch
      %34 = sbr.rel (0) target = $region13
    $region12: #{forward.1} parent=1 // pred_region
      %s36 = ssub.s32 16, 16
      %37 = vsyncadd [#allocation6], %s36
      %s39 = sshll.u32 [#allocation5], 4
      %s40 = int_to_ptr.vmem [resolvable:$true] %s39
      %42 = dma.hbm_to_vmem [thread:$0]  %s2, 16, %s40, [#allocation6]
    $region13: #{forward.1} parent=1 // pred_fallthru
      _
    // Predicated region
    $region14: #{forward.1} parent=1 // pred_check
      _
    $region15: #{forward.1} parent=1 // pred_check_branch
      %44 = sbr.rel (0) target = $region17
    $region16: #{forward.1} parent=1 // pred_region
      %s46 = ssub.s32 147456, 147456
      %47 = vsyncadd [#allocation6], %s46
      %s48 = sshll.u32 [#allocation7], 4
      %s49 = int_to_ptr.vmem [resolvable:$true] %s48
      %54 = dma.hbm_to_vmem [thread:$0]  %s3, 147456, %s49, [#allocation6], 768, 768, 48
    $region17: #{forward.1} parent=1 // pred_fallthru
      _
    // Predicated region
    $region18: #{forward.1} parent=1 // pred_check
      _
    $region19: #{forward.1} parent=1 // pred_check_branch
      %56 = sbr.rel (0) target = $region21
    $region20: #{forward.1} parent=1 // pred_region
      %s58 = ssub.s32 48, 48
      %59 = vsyncadd [#allocation9], %s58
      %s61 = sshll.u32 [#allocation8], 4
      %s62 = int_to_ptr.vmem [resolvable:$true] %s61
      %64 = dma.hbm_to_vmem [thread:$0]  %s4, 48, %s62, [#allocation9]
    $region21: #{forward.1} parent=1 // pred_fallthru
      _
    // Predicated region
    $region22: #{forward.1} parent=1 // pred_check
      _
    $region23: #{forward.1} parent=1 // pred_check_branch
      %66 = sbr.rel (0) target = $region25
    $region24: #{forward.1} parent=1 // pred_region
      %s68 = ssub.s32 3072, 3072
      %69 = vsyncadd [#allocation9], %s68
      %s70 = sshll.u32 [#allocation10], 4
      %s71 = int_to_ptr.vmem [resolvable:$true] %s70
      %76 = dma.hbm_to_vmem [thread:$0]  %s5, 3072, %s71, [#allocation9], 64, 64, 4
    $region25: #{forward.1} parent=1 // pred_fallthru
      _
    // Predicated region
    $region26: #{forward.1} parent=1 // pred_check
      _
    $region27: #{forward.1} parent=1 // pred_check_branch
      %78 = sbr.rel (0) target = $region29
    $region28: #{forward.1} parent=1 // pred_region
      %s80 = ssub.s32 16, 16
      %81 = vsyncadd [#allocation12], %s80
      %s83 = sshll.u32 [#allocation11], 4
      %s84 = int_to_ptr.vmem [resolvable:$true] %s83
      %86 = dma.hbm_to_vmem [thread:$0]  %s6, 16, %s84, [#allocation12]
    $region29: #{forward.1} parent=1 // pred_fallthru
      _
    // Predicated region
    $region30: #{forward.1} parent=1 // pred_check
      _
    $region31: #{forward.1} parent=1 // pred_check_branch
      %88 = sbr.rel (0) target = $region33
    $region32: #{forward.1} parent=1 // pred_region
      %s90 = ssub.s32 1024, 1024
      %91 = vsyncadd [#allocation12], %s90
      %s92 = sshll.u32 [#allocation13], 4
      %s93 = int_to_ptr.vmem [resolvable:$true] %s92
      %98 = dma.hbm_to_vmem [thread:$0]  %s7, 1024, %s93, [#allocation12], 64, 64, 4
    $region33: #{forward.1} parent=1 // pred_fallthru
      _
    // Predicated region
    $region34: #{forward.1} parent=1 // pred_check
      _
    $region35: #{forward.1} parent=1 // pred_check_branch
      %100 = sbr.rel (0) target = $region37
    $region36: #{forward.1} parent=1 // pred_region
      %s102 = ssub.s32 16, 16
      %103 = vsyncadd [#allocation15], %s102
      %s105 = sshll.u32 [#allocation14], 4
      %s106 = int_to_ptr.vmem [resolvable:$true] %s105
      %108 = dma.hbm_to_vmem [thread:$0]  %s8, 16, %s106, [#allocation15]
    $region37: #{forward.1} parent=1 // pred_fallthru
      _
    // Predicated region
    $region38: #{forward.1} parent=1 // pred_check
      _
    $region39: #{forward.1} parent=1 // pred_check_branch
      %110 = sbr.rel (0) target = $region41
    $region40: #{forward.1} parent=1 // pred_region
      %111 = dma.done [#allocation4], 5376
    $region41: #{forward.1} parent=1 // pred_fallthru
      _
    // Predicated region
    $region42: #{forward.1} parent=1 // pred_check
      _
    $region43: #{forward.1} parent=1 // pred_check_branch
      %113 = sbr.rel (0) target = $region45
    $region44: #{forward.1} parent=1 // pred_region
      %114 = dma.done [#allocation6], 16
    $region45: #{forward.1} parent=1 // pred_fallthru
      _
    // Predicated region
    $region46: #{forward.1} parent=1 // pred_check
      _
    $region47: #{forward.1} parent=1 // pred_check_branch
      %116 = sbr.rel (0) target = $region49
    $region48: #{forward.1} parent=1 // pred_region
      %117 = dma.done [#allocation6], 147456
    $region49: #{forward.1} parent=1 // pred_fallthru
      _
    // Predicated region
    $region50: #{forward.1} parent=1 // pred_check
      _
    $region51: #{forward.1} parent=1 // pred_check_branch
      %119 = sbr.rel (0) target = $region53
    $region52: #{forward.1} parent=1 // pred_region
      %120 = dma.done [#allocation9], 48
    $region53: #{forward.1} parent=1 // pred_fallthru
      _
    // Predicated region
    $region54: #{forward.1} parent=1 // pred_check
      _
    $region55: #{forward.1} parent=1 // pred_check_branch
      %122 = sbr.rel (0) target = $region57
    $region56: #{forward.1} parent=1 // pred_region
      %123 = dma.done [#allocation9], 3072
    $region57: #{forward.1} parent=1 // pred_fallthru
      _
    // Predicated region
    $region58: #{forward.1} parent=1 // pred_check
      _
    $region59: #{forward.1} parent=1 // pred_check_branch
      %125 = sbr.rel (0) target = $region61
    $region60: #{forward.1} parent=1 // pred_region
      %126 = dma.done [#allocation12], 16
    $region61: #{forward.1} parent=1 // pred_fallthru
      _
    // Predicated region
    $region62: #{forward.1} parent=1 // pred_check
      _
    $region63: #{forward.1} parent=1 // pred_check_branch
      %128 = sbr.rel (0) target = $region65
    $region64: #{forward.1} parent=1 // pred_region
      %129 = dma.done [#allocation12], 1024
    $region65: #{forward.1} parent=1 // pred_fallthru
      _
    // Predicated region
    $region66: #{forward.1} parent=1 // pred_check
      _
    $region67: #{forward.1} parent=1 // pred_check_branch
      %131 = sbr.rel (0) target = $region69
    $region68: #{forward.1} parent=1 // pred_region
      %132 = dma.done [#allocation15], 16
    $region69: #{forward.1} parent=1 // pred_fallthru
      _
    %v134 = vld [vmem:[#allocation3] sm:$0xff]
    %v135 = vld [vmem:[#allocation3 + $0x8] sm:$0xff]
    %v136 = vld [vmem:[#allocation3 + $0x10] sm:$0xff]
    %v137 = vld [vmem:[#allocation3 + $0x18] sm:$0xff]
    %v138 = vld [vmem:[#allocation3 + $0x20] sm:$0xff]
    %v139 = vld [vmem:[#allocation3 + $0x28] sm:$0xff]
    %v140 = vld [vmem:[#allocation3 + $0x30] sm:$0xff]
    %v141 = vld [vmem:[#allocation3 + $0x38] sm:$0xff]
    %v142 = vld [vmem:[#allocation3 + $0x40] sm:$0xff]
    %v143 = vld [vmem:[#allocation3 + $0x48] sm:$0xff]
    %v144 = vld [vmem:[#allocation3 + $0x50] sm:$0xff]
    %v145 = vld [vmem:[#allocation3 + $0x58] sm:$0xff]
    %v146 = vld [vmem:[#allocation3 + $0x60] sm:$0xff]
    %v147 = vld [vmem:[#allocation3 + $0x68] sm:$0xff]
    %v148 = vld [vmem:[#allocation3 + $0x70] sm:$0xff]
    %v149 = vld [vmem:[#allocation3 + $0x78] sm:$0xff]
    %v150 = vld [vmem:[#allocation3 + $0x80] sm:$0xff]
    %v151 = vld [vmem:[#allocation3 + $0x88] sm:$0xff]
    %v152 = vld [vmem:[#allocation3 + $0x90] sm:$0xff]
    %v153 = vld [vmem:[#allocation3 + $0x98] sm:$0xff]
    %v154 = vld [vmem:[#allocation3 + $0xa0] sm:$0xff]
    %v155 = vld [vmem:[#allocation3 + $0xa8] sm:$0xff]
    %v156 = vld [vmem:[#allocation3 + $0xb0] sm:$0xff]
    %v157 = vld [vmem:[#allocation3 + $0xb8] sm:$0xff]
    %v158 = vld [vmem:[#allocation3 + $0xc0] sm:$0xff]
    %v159 = vld [vmem:[#allocation3 + $0xc8] sm:$0xff]
    %v160 = vld [vmem:[#allocation3 + $0xd0] sm:$0xff]
    %v161 = vld [vmem:[#allocation3 + $0xd8] sm:$0xff]
    %v162 = vld [vmem:[#allocation3 + $0xe0] sm:$0xff]
    %v163 = vld [vmem:[#allocation3 + $0xe8] sm:$0xff]
    %v164 = vld [vmem:[#allocation3 + $0xf0] sm:$0xff]
    %v165 = vld [vmem:[#allocation3 + $0xf8] sm:$0xff]
    %v166 = vld [vmem:[#allocation3 + $0x100] sm:$0xff]
    %v167 = vld [vmem:[#allocation3 + $0x108] sm:$0xff]
    %v168 = vld [vmem:[#allocation3 + $0x110] sm:$0xff]
    %v169 = vld [vmem:[#allocation3 + $0x118] sm:$0xff]
    %v170 = vld [vmem:[#allocation3 + $0x120] sm:$0xff]
    %v171 = vld [vmem:[#allocation3 + $0x128] sm:$0xff]
    %v172 = vld [vmem:[#allocation3 + $0x130] sm:$0xff]
    %v173 = vld [vmem:[#allocation3 + $0x138] sm:$0xff]
    %v174 = vld [vmem:[#allocation3 + $0x140] sm:$0xff]
    %v175 = vld [vmem:[#allocation3 + $0x148] sm:$0xff]
    %v176 = vld [vmem:[#allocation5] sm:$0x1]
    %v177 = vld [vmem:[%s0] sm:$0xff]
    %v178 = vld [vmem:[%s0 + $0x8] sm:$0xff]
    %v179 = vld [vmem:[%s0 + $0x38] sm:$0xff]
    %v180 = vld [vmem:[%s0 + $0x40] sm:$0xff]
    %v181 = vpack.c.bf16 %v179, %v177
    %v182 = vpack.c.bf16 %v180, %v178
    %v225 = vunpack.c.l.b16 %v134
    %v226 = vunpack.c.h.b16 %v134
    %v227 = vunpack.c.l.b16 %v135
    %v228 = vunpack.c.h.b16 %v135
    %v229 = vunpack.c.l.b16 %v136
    %v230 = vunpack.c.h.b16 %v136
    %v231 = vunpack.c.l.b16 %v137
    %v232 = vunpack.c.h.b16 %v137
    %v233 = vunpack.c.l.b16 %v138
    %v234 = vunpack.c.h.b16 %v138
    %v235 = vunpack.c.l.b16 %v139
    %v236 = vunpack.c.h.b16 %v139
    %v237 = vunpack.c.l.b16 %v140
    %v238 = vunpack.c.h.b16 %v140
    %v239 = vunpack.c.l.b16 %v141
    %v240 = vunpack.c.h.b16 %v141
    %v241 = vunpack.c.l.b16 %v142
    %v242 = vunpack.c.h.b16 %v142
    %v243 = vunpack.c.l.b16 %v143
    %v244 = vunpack.c.h.b16 %v143
    %v245 = vunpack.c.l.b16 %v144
    %v246 = vunpack.c.h.b16 %v144
    %v247 = vunpack.c.l.b16 %v145
    %v248 = vunpack.c.h.b16 %v145
    %v249 = vunpack.c.l.b16 %v146
    %v250 = vunpack.c.h.b16 %v146
    %v251 = vunpack.c.l.b16 %v147
    %v252 = vunpack.c.h.b16 %v147
    %v253 = vunpack.c.l.b16 %v148
    %v254 = vunpack.c.h.b16 %v148
    %v255 = vunpack.c.l.b16 %v149
    %v256 = vunpack.c.h.b16 %v149
    %v257 = vunpack.c.l.b16 %v150
    %v258 = vunpack.c.h.b16 %v150
    %v259 = vunpack.c.l.b16 %v151
    %v260 = vunpack.c.h.b16 %v151
    %v261 = vunpack.c.l.b16 %v152
    %v262 = vunpack.c.h.b16 %v152
    %v263 = vunpack.c.l.b16 %v153
    %v264 = vunpack.c.h.b16 %v153
    %v265 = vunpack.c.l.b16 %v154
    %v266 = vunpack.c.h.b16 %v154
    %v267 = vunpack.c.l.b16 %v155
    %v268 = vunpack.c.h.b16 %v155
    %v269 = vunpack.c.l.b16 %v156
    %v270 = vunpack.c.h.b16 %v156
    %v271 = vunpack.c.l.b16 %v157
    %v272 = vunpack.c.h.b16 %v157
    %v273 = vunpack.c.l.b16 %v158
    %v274 = vunpack.c.h.b16 %v158
    %v275 = vunpack.c.l.b16 %v159
    %v276 = vunpack.c.h.b16 %v159
    %v277 = vunpack.c.l.b16 %v160
    %v278 = vunpack.c.h.b16 %v160
    %v279 = vunpack.c.l.b16 %v161
    %v280 = vunpack.c.h.b16 %v161
    %v281 = vunpack.c.l.b16 %v162
    %v282 = vunpack.c.h.b16 %v162
    %v283 = vunpack.c.l.b16 %v163
    %v284 = vunpack.c.h.b16 %v163
    %v285 = vunpack.c.l.b16 %v164
    %v286 = vunpack.c.h.b16 %v164
    %v287 = vunpack.c.l.b16 %v165
    %v288 = vunpack.c.h.b16 %v165
    %v289 = vunpack.c.l.b16 %v166
    %v290 = vunpack.c.h.b16 %v166
    %v291 = vunpack.c.l.b16 %v167
    %v292 = vunpack.c.h.b16 %v167
    %v293 = vunpack.c.l.b16 %v168
    %v294 = vunpack.c.h.b16 %v168
    %v295 = vunpack.c.l.b16 %v169
    %v296 = vunpack.c.h.b16 %v169
    %v297 = vunpack.c.l.b16 %v170
    %v298 = vunpack.c.h.b16 %v170
    %v299 = vunpack.c.l.b16 %v171
    %v300 = vunpack.c.h.b16 %v171
    %v301 = vunpack.c.l.b16 %v172
    %v302 = vunpack.c.h.b16 %v172
    %v303 = vunpack.c.l.b16 %v173
    %v304 = vunpack.c.h.b16 %v173
    %v305 = vunpack.c.l.b16 %v174
    %v306 = vunpack.c.h.b16 %v174
    %v307 = vunpack.c.l.b16 %v175
    %v308 = vunpack.c.h.b16 %v175
    %v309 = vpack.c.b16 %v229, %v225
    %v310 = vpack.c.b16 %v230, %v226
    %v311 = vpack.c.b16 %v231, %v227
    %v312 = vpack.c.b16 %v232, %v228
    %v313 = vpack.c.b16 %v237, %v233
    %v314 = vpack.c.b16 %v238, %v234
    %v315 = vpack.c.b16 %v239, %v235
    %v316 = vpack.c.b16 %v240, %v236
    %v317 = vpack.c.b16 %v245, %v241
    %v318 = vpack.c.b16 %v246, %v242
    %v319 = vpack.c.b16 %v247, %v243
    %v320 = vpack.c.b16 %v248, %v244
    %v321 = vpack.c.b16 %v253, %v249
    %v322 = vpack.c.b16 %v254, %v250
    %v323 = vpack.c.b16 %v255, %v251
    %v324 = vpack.c.b16 %v256, %v252
    %v325 = vpack.c.b16 %v261, %v257
    %v326 = vpack.c.b16 %v262, %v258
    %v327 = vpack.c.b16 %v263, %v259
    %v328 = vpack.c.b16 %v264, %v260
    %v329 = vpack.c.b16 %v269, %v265
    %v330 = vpack.c.b16 %v270, %v266
    %v331 = vpack.c.b16 %v271, %v267
    %v332 = vpack.c.b16 %v272, %v268
    %v333 = vpack.c.b16 %v277, %v273
    %v334 = vpack.c.b16 %v278, %v274
    %v335 = vpack.c.b16 %v279, %v275
    %v336 = vpack.c.b16 %v280, %v276
    %v337 = vpack.c.b16 %v285, %v281
    %v338 = vpack.c.b16 %v286, %v282
    %v339 = vpack.c.b16 %v287, %v283
    %v340 = vpack.c.b16 %v288, %v284
    %v341 = vpack.c.b16 %v293, %v289
    %v342 = vpack.c.b16 %v294, %v290
    %v343 = vpack.c.b16 %v295, %v291
    %v344 = vpack.c.b16 %v296, %v292
    %v345 = vpack.c.b16 %v301, %v297
    %v346 = vpack.c.b16 %v302, %v298
    %v347 = vpack.c.b16 %v303, %v299
    %v348 = vpack.c.b16 %v304, %v300
    %v349 = vpack.c.b16 %v305, %v305
    %v350 = vpack.c.b16 %v306, %v306
    %v351 = vpack.c.b16 %v307, %v307
    %v352 = vpack.c.b16 %v308, %v308
    %vm393 = vcmask 326656
    %v395 = vsel %vm393, %v182, 0
    %vm397 = vcmask 1043456
    %v399 = vsel %vm397, %v349, 0
    %v402 = vsel %vm397, %v350, 0
    %v405 = vsel %vm397, %v351, 0
    %v408 = vsel %vm397, %v352, 0
    %410 = vmatprep.subr.bf16.mxu0 %v338
    %411 = vmatpush1.bf16.msra.mxu0 %v337
    %412 = vmatprep.subr.bf16.mxu0 %v334
    %413 = vmatpush1.bf16.msra.mxu0 %v333
    %414 = vmatprep.subr.bf16.mxu0 %v330
    %415 = vmatpush1.bf16.msra.mxu0 %v329
    %416 = vmatprep.subr.bf16.mxu0 %v326
    %417 = vmatpush1.bf16.msra.mxu0 %v325
    %418 = vmatprep.subr.bf16.mxu0 %v322
    %419 = vmatpush1.bf16.msra.mxu0 %v321
    %420 = vmatprep.subr.bf16.mxu0 %v318
    %421 = vmatpush1.bf16.msra.mxu0 %v317
    %422 = vmatprep.subr.bf16.mxu0 %v314
    %423 = vmatpush1.bf16.msra.mxu0 %v313
    %424 = vmatprep.subr.bf16.mxu0 %v310
    %425 = vmatpush1.bf16.msra.mxu0 %v309
    %426 = vmatprep.subr.bf16.mxu0 0
    %427 = vmatpush2.bf16.msra.mxu0 0
    %428 = vmatprep.subr.bf16.mxu0 0
    %429 = vmatpush2.bf16.msra.mxu0 0
    %430 = vmatprep.subr.bf16.mxu0 0
    %431 = vmatpush2.bf16.msra.mxu0 0
    %432 = vmatprep.subr.bf16.mxu0 0
    %433 = vmatpush2.bf16.msra.mxu0 0
    %434 = vmatprep.subr.bf16.mxu0 0
    %435 = vmatpush2.bf16.msra.mxu0 0
    %436 = vmatprep.subr.bf16.mxu0 %v402
    %437 = vmatpush2.bf16.msra.mxu0 %v399
    %438 = vmatprep.subr.bf16.mxu0 %v346
    %439 = vmatpush2.bf16.msra.mxu0 %v345
    %440 = vmatprep.subr.bf16.mxu0 %v342
    %441 = vmatpush2.bf16.msra.mxu0 %v341
    %442 = vmatprep.mubr.bf16.mxu0 %v395
    %443 = vmatmul.mubr.bf16.gmra.mxu0 %v181
    %v444 = vpop.f32.mrf.mxu0
    %v445 = vadd.f32 0.0, %v444
    %v446 = vpop.f32.mrf.mxu0
    %v447 = vadd.f32 0.0, %v446
    %v448 = vpop.f32.mrf.mxu0
    %v449 = vadd.f32 0.0, %v448
    %v450 = vpop.f32.mrf.mxu0
    %v451 = vadd.f32 0.0, %v450
    %452 = vdwg.mxu0
    %453 = vmatprep.subr.bf16.mxu0 %v340
    %454 = vmatpush1.bf16.msra.mxu0 %v339
    %455 = vmatprep.subr.bf16.mxu0 %v336
    %456 = vmatpush1.bf16.msra.mxu0 %v335
    %457 = vmatprep.subr.bf16.mxu0 %v332
    %458 = vmatpush1.bf16.msra.mxu0 %v331
    %459 = vmatprep.subr.bf16.mxu0 %v328
    %460 = vmatpush1.bf16.msra.mxu0 %v327
    %461 = vmatprep.subr.bf16.mxu0 %v324
    %462 = vmatpush1.bf16.msra.mxu0 %v323
    %463 = vmatprep.subr.bf16.mxu0 %v320
    %464 = vmatpush1.bf16.msra.mxu0 %v319
    %465 = vmatprep.subr.bf16.mxu0 %v316
    %466 = vmatpush1.bf16.msra.mxu0 %v315
    %467 = vmatprep.subr.bf16.mxu0 %v312
    %468 = vmatpush1.bf16.msra.mxu0 %v311
    %469 = vmatprep.subr.bf16.mxu0 0
    %470 = vmatpush2.bf16.msra.mxu0 0
    %471 = vmatprep.subr.bf16.mxu0 0
    %472 = vmatpush2.bf16.msra.mxu0 0
    %473 = vmatprep.subr.bf16.mxu0 0
    %474 = vmatpush2.bf16.msra.mxu0 0
    %475 = vmatprep.subr.bf16.mxu0 0
    %476 = vmatpush2.bf16.msra.mxu0 0
    %477 = vmatprep.subr.bf16.mxu0 0
    %478 = vmatpush2.bf16.msra.mxu0 0
    %479 = vmatprep.subr.bf16.mxu0 %v408
    %480 = vmatpush2.bf16.msra.mxu0 %v405
    %481 = vmatprep.subr.bf16.mxu0 %v348
    %482 = vmatpush2.bf16.msra.mxu0 %v347
    %483 = vmatprep.subr.bf16.mxu0 %v344
    %484 = vmatpush2.bf16.msra.mxu0 %v343
    %485 = vmatprep.mubr.bf16.mxu0 %v395
    %486 = vmatmul.mubr.bf16.gmra.mxu0 %v181
    %v487 = vpop.f32.mrf.mxu0
    %v488 = vadd.f32 0.0, %v487
    %v489 = vpop.f32.mrf.mxu0
    %v490 = vadd.f32 0.0, %v489
    %v491 = vpop.f32.mrf.mxu0
    %v492 = vadd.f32 0.0, %v491
    %v493 = vpop.f32.mrf.mxu0
    %v494 = vadd.f32 0.0, %v493
    %495 = vdwg.mxu0
    %v496 = vmax.f32 %v445, %v447
    %v497 = vmax.f32 %v449, %v451
    %v498 = vmax.f32 %v488, %v490
    %v499 = vmax.f32 %v492, %v494
    %v500 = vmax.f32 %v496, %v498
    %v501 = vmax.f32 %v497, %v499
    %v503 = vlaneseq
    %v504 = vshrl.u32 %v503, 7
    %v505 = vsub.s32 0, %v504
    %v506 = vrot.slane %v176, %v505
    %v508 = vadd.f32 %v500, %v506
    %v509 = vadd.f32 %v501, %v506
    %v510 = vmax.f32 %v508, 0.0
    %v511 = vmax.f32 %v509, 0.0
    %v512 = vpack.c.bf16 %v511, %v510
    %v514 = vunpack.c.l.b16 %v512
    %v515 = vunpack.c.h.b16 %v512
    %v516 = vpack.c.b16 %v514, %v514
    %v517 = vpack.c.b16 %v515, %v515
    %520 = vst [vmem:[#allocation2] sm:$0xf] %v516
    %521 = vst [vmem:[#allocation2 + $0x30] sm:$0xf] %v517
    %v522 = vld [vmem:[%s0] sm:$0xff]
    %v523 = vld [vmem:[%s0 + $0x8] sm:$0xff]
    %v524 = vld [vmem:[%s0 + $0x38] sm:$0xff]
    %v525 = vld [vmem:[%s0 + $0x40] sm:$0xff]
    %v526 = vpack.c.bf16 %v524, %v522
    %v527 = vpack.c.bf16 %v525, %v523
    %530 = vrot.lane.b32.xlu0 %v526, 72
    %v531 = vpop.permute.xlu0 %530
    %532 = vrot.lane.b32.xlu0 %v527, 72
    %v533 = vpop.permute.xlu0 %532
    %vm534 = vcmask 588800
    %v535 = vsel %vm534, %v531, %v533
    %v538 = vsel %vm393, %v533, 0
    %540 = vmatprep.subr.bf16.mxu0 %v338
    %541 = vmatpush1.bf16.msra.mxu0 %v337
    %542 = vmatprep.subr.bf16.mxu0 %v334
    %543 = vmatpush1.bf16.msra.mxu0 %v333
    %544 = vmatprep.subr.bf16.mxu0 %v330
    %545 = vmatpush1.bf16.msra.mxu0 %v329
    %546 = vmatprep.subr.bf16.mxu0 %v326
    %547 = vmatpush1.bf16.msra.mxu0 %v325
    %548 = vmatprep.subr.bf16.mxu0 %v322
    %549 = vmatpush1.bf16.msra.mxu0 %v321
    %550 = vmatprep.subr.bf16.mxu0 %v318
    %551 = vmatpush1.bf16.msra.mxu0 %v317
    %552 = vmatprep.subr.bf16.mxu0 %v314
    %553 = vmatpush1.bf16.msra.mxu0 %v313
    %554 = vmatprep.subr.bf16.mxu0 %v310
    %555 = vmatpush1.bf16.msra.mxu0 %v309
    %556 = vmatprep.subr.bf16.mxu0 0
    %557 = vmatpush2.bf16.msra.mxu0 0
    %558 = vmatprep.subr.bf16.mxu0 0
    %559 = vmatpush2.bf16.msra.mxu0 0
    %560 = vmatprep.subr.bf16.mxu0 0
    %561 = vmatpush2.bf16.msra.mxu0 0
    %562 = vmatprep.subr.bf16.mxu0 0
    %563 = vmatpush2.bf16.msra.mxu0 0
    %564 = vmatprep.subr.bf16.mxu0 0
    %565 = vmatpush2.bf16.msra.mxu0 0
    %566 = vmatprep.subr.bf16.mxu0 %v402
    %567 = vmatpush2.bf16.msra.mxu0 %v399
    %568 = vmatprep.subr.bf16.mxu0 %v346
    %569 = vmatpush2.bf16.msra.mxu0 %v345
    %570 = vmatprep.subr.bf16.mxu0 %v342
    %571 = vmatpush2.bf16.msra.mxu0 %v341
    %572 = vmatprep.mubr.bf16.mxu0 %v538
    %573 = vmatmul.mubr.bf16.gmra.mxu0 %v535
    %v574 = vpop.f32.mrf.mxu0
    %v575 = vadd.f32 0.0, %v574
    %v576 = vpop.f32.mrf.mxu0
    %v577 = vadd.f32 0.0, %v576
    %v578 = vpop.f32.mrf.mxu0
    %v579 = vadd.f32 0.0, %v578
    %v580 = vpop.f32.mrf.mxu0
    %v581 = vadd.f32 0.0, %v580
    %582 = vdwg.mxu0
    %583 = vmatprep.subr.bf16.mxu0 %v340
    %584 = vmatpush1.bf16.msra.mxu0 %v339
    %585 = vmatprep.subr.bf16.mxu0 %v336
    %586 = vmatpush1.bf16.msra.mxu0 %v335
    %587 = vmatprep.subr.bf16.mxu0 %v332
    %588 = vmatpush1.bf16.msra.mxu0 %v331
    %589 = vmatprep.subr.bf16.mxu0 %v328
    %590 = vmatpush1.bf16.msra.mxu0 %v327
    %591 = vmatprep.subr.bf16.mxu0 %v324
    %592 = vmatpush1.bf16.msra.mxu0 %v323
    %593 = vmatprep.subr.bf16.mxu0 %v320
    %594 = vmatpush1.bf16.msra.mxu0 %v319
    %595 = vmatprep.subr.bf16.mxu0 %v316
    %596 = vmatpush1.bf16.msra.mxu0 %v315
    %597 = vmatprep.subr.bf16.mxu0 %v312
    %598 = vmatpush1.bf16.msra.mxu0 %v311
    %599 = vmatprep.subr.bf16.mxu0 0
    %600 = vmatpush2.bf16.msra.mxu0 0
    %601 = vmatprep.subr.bf16.mxu0 0
    %602 = vmatpush2.bf16.msra.mxu0 0
    %603 = vmatprep.subr.bf16.mxu0 0
    %604 = vmatpush2.bf16.msra.mxu0 0
    %605 = vmatprep.subr.bf16.mxu0 0
    %606 = vmatpush2.bf16.msra.mxu0 0
    %607 = vmatprep.subr.bf16.mxu0 0
    %608 = vmatpush2.bf16.msra.mxu0 0
    %609 = vmatprep.subr.bf16.mxu0 %v408
    %610 = vmatpush2.bf16.msra.mxu0 %v405
    %611 = vmatprep.subr.bf16.mxu0 %v348
    %612 = vmatpush2.bf16.msra.mxu0 %v347
    %613 = vmatprep.subr.bf16.mxu0 %v344
    %614 = vmatpush2.bf16.msra.mxu0 %v343
    %615 = vmatprep.mubr.bf16.mxu0 %v538
    %616 = vmatmul.mubr.bf16.gmra.mxu0 %v535
    %v617 = vpop.f32.mrf.mxu0
    %v618 = vadd.f32 0.0, %v617
    %v619 = vpop.f32.mrf.mxu0
    %v620 = vadd.f32 0.0, %v619
    %v621 = vpop.f32.mrf.mxu0
    %v622 = vadd.f32 0.0, %v621
    %v623 = vpop.f32.mrf.mxu0
    %v624 = vadd.f32 0.0, %v623
    %625 = vdwg.mxu0
    %v626 = vmax.f32 %v575, %v577
    %v627 = vmax.f32 %v579, %v581
    %v628 = vmax.f32 %v618, %v620
    %v629 = vmax.f32 %v622, %v624
    %v630 = vmax.f32 %v626, %v628
    %v631 = vmax.f32 %v627, %v629
    %v632 = vadd.f32 %v630, %v506
    %v633 = vadd.f32 %v631, %v506
    %v634 = vmax.f32 %v632, 0.0
    %v635 = vmax.f32 %v633, 0.0
    %v636 = vpack.c.bf16 %v635, %v634
    %v638 = vunpack.c.l.b16 %v636
    %v639 = vunpack.c.h.b16 %v636
    %v640 = vpack.c.b16 %v638, %v638
    %v641 = vpack.c.b16 %v639, %v639
    %644 = vst [vmem:[#allocation2 + $0x4] sm:$0xf] %v640
    %645 = vst [vmem:[#allocation2 + $0x34] sm:$0xf] %v641
    %v646 = vld [vmem:[%s0] sm:$0xff]
    %v647 = vld [vmem:[%s0 + $0x8] sm:$0xff]
    %v648 = vld [vmem:[%s0 + $0x10] sm:$0xff]
    %v649 = vld [vmem:[%s0 + $0x38] sm:$0xff]
    %v650 = vld [vmem:[%s0 + $0x40] sm:$0xff]
    %v651 = vld [vmem:[%s0 + $0x48] sm:$0xff]
    %v652 = vpack.c.bf16 %v649, %v646
    %v653 = vpack.c.bf16 %v650, %v647
    %v654 = vpack.c.bf16 %v651, %v648
    %658 = vrot.lane.b32.xlu0 %v652, 16
    %v659 = vpop.permute.xlu0 %658
    %660 = vrot.lane.b32.xlu0 %v653, 16
    %v661 = vpop.permute.xlu0 %660
    %662 = vrot.lane.b32.xlu0 %v654, 16
    %v663 = vpop.permute.xlu0 %662
    %vm664 = vcmask 130048
    %v665 = vsel %vm664, %v659, %v661
    %v666 = vsel %vm664, %v661, %v663
    %v669 = vsel %vm393, %v666, 0
    %671 = vmatprep.subr.bf16.mxu0 %v338
    %672 = vmatpush1.bf16.msra.mxu0 %v337
    %673 = vmatprep.subr.bf16.mxu0 %v334
    %674 = vmatpush1.bf16.msra.mxu0 %v333
    %675 = vmatprep.subr.bf16.mxu0 %v330
    %676 = vmatpush1.bf16.msra.mxu0 %v329
    %677 = vmatprep.subr.bf16.mxu0 %v326
    %678 = vmatpush1.bf16.msra.mxu0 %v325
    %679 = vmatprep.subr.bf16.mxu0 %v322
    %680 = vmatpush1.bf16.msra.mxu0 %v321
    %681 = vmatprep.subr.bf16.mxu0 %v318
    %682 = vmatpush1.bf16.msra.mxu0 %v317
    %683 = vmatprep.subr.bf16.mxu0 %v314
    %684 = vmatpush1.bf16.msra.mxu0 %v313
    %685 = vmatprep.subr.bf16.mxu0 %v310
    %686 = vmatpush1.bf16.msra.mxu0 %v309
    %687 = vmatprep.subr.bf16.mxu0 0
    %688 = vmatpush2.bf16.msra.mxu0 0
    %689 = vmatprep.subr.bf16.mxu0 0
    %690 = vmatpush2.bf16.msra.mxu0 0
    %691 = vmatprep.subr.bf16.mxu0 0
    %692 = vmatpush2.bf16.msra.mxu0 0
    %693 = vmatprep.subr.bf16.mxu0 0
    %694 = vmatpush2.bf16.msra.mxu0 0
    %695 = vmatprep.subr.bf16.mxu0 0
    %696 = vmatpush2.bf16.msra.mxu0 0
    %697 = vmatprep.subr.bf16.mxu0 %v402
    %698 = vmatpush2.bf16.msra.mxu0 %v399
    %699 = vmatprep.subr.bf16.mxu0 %v346
    %700 = vmatpush2.bf16.msra.mxu0 %v345
    %701 = vmatprep.subr.bf16.mxu0 %v342
    %702 = vmatpush2.bf16.msra.mxu0 %v341
    %703 = vmatprep.mubr.bf16.mxu0 %v669
    %704 = vmatmul.mubr.bf16.gmra.mxu0 %v665
    %v705 = vpop.f32.mrf.mxu0
    %v706 = vadd.f32 0.0, %v705
    %v707 = vpop.f32.mrf.mxu0
    %v708 = vadd.f32 0.0, %v707
    %v709 = vpop.f32.mrf.mxu0
    %v710 = vadd.f32 0.0, %v709
    %v711 = vpop.f32.mrf.mxu0
    %v712 = vadd.f32 0.0, %v711
    %713 = vdwg.mxu0
    %714 = vmatprep.subr.bf16.mxu0 %v340
    %715 = vmatpush1.bf16.msra.mxu0 %v339
    %716 = vmatprep.subr.bf16.mxu0 %v336
    %717 = vmatpush1.bf16.msra.mxu0 %v335
    %718 = vmatprep.subr.bf16.mxu0 %v332
    %719 = vmatpush1.bf16.msra.mxu0 %v331
    %720 = vmatprep.subr.bf16.mxu0 %v328
    %721 = vmatpush1.bf16.msra.mxu0 %v327
    %722 = vmatprep.subr.bf16.mxu0 %v324
    %723 = vmatpush1.bf16.msra.mxu0 %v323
    %724 = vmatprep.subr.bf16.mxu0 %v320
    %725 = vmatpush1.bf16.msra.mxu0 %v319
    %726 = vmatprep.subr.bf16.mxu0 %v316
    %727 = vmatpush1.bf16.msra.mxu0 %v315
    %728 = vmatprep.subr.bf16.mxu0 %v312
    %729 = vmatpush1.bf16.msra.mxu0 %v311
    %730 = vmatprep.subr.bf16.mxu0 0
    %731 = vmatpush2.bf16.msra.mxu0 0
    %732 = vmatprep.subr.bf16.mxu0 0
    %733 = vmatpush2.bf16.msra.mxu0 0
    %734 = vmatprep.subr.bf16.mxu0 0
    %735 = vmatpush2.bf16.msra.mxu0 0
    %736 = vmatprep.subr.bf16.mxu0 0
    %737 = vmatpush2.bf16.msra.mxu0 0
    %738 = vmatprep.subr.bf16.mxu0 0
    %739 = vmatpush2.bf16.msra.mxu0 0
    %740 = vmatprep.subr.bf16.mxu0 %v408
    %741 = vmatpush2.bf16.msra.mxu0 %v405
    %742 = vmatprep.subr.bf16.mxu0 %v348
    %743 = vmatpush2.bf16.msra.mxu0 %v347
    %744 = vmatprep.subr.bf16.mxu0 %v344
    %745 = vmatpush2.bf16.msra.mxu0 %v343
    %746 = vmatprep.mubr.bf16.mxu0 %v669
    %747 = vmatmul.mubr.bf16.gmra.mxu0 %v665
    %v748 = vpop.f32.mrf.mxu0
    %v749 = vadd.f32 0.0, %v748
    %v750 = vpop.f32.mrf.mxu0
    %v751 = vadd.f32 0.0, %v750
    %v752 = vpop.f32.mrf.mxu0
    %v753 = vadd.f32 0.0, %v752
    %v754 = vpop.f32.mrf.mxu0
    %v755 = vadd.f32 0.0, %v754
    %756 = vdwg.mxu0
    %v757 = vmax.f32 %v706, %v708
    %v758 = vmax.f32 %v710, %v712
    %v759 = vmax.f32 %v749, %v751
    %v760 = vmax.f32 %v753, %v755
    %v761 = vmax.f32 %v757, %v759
    %v762 = vmax.f32 %v758, %v760
    %v763 = vadd.f32 %v761, %v506
    %v764 = vadd.f32 %v762, %v506
    %v765 = vmax.f32 %v763, 0.0
    %v766 = vmax.f32 %v764, 0.0
    %v767 = vpack.c.bf16 %v766, %v765
    %v769 = vunpack.c.l.b16 %v767
    %v770 = vunpack.c.h.b16 %v767
    %v771 = vpack.c.b16 %v769, %v769
    %v772 = vpack.c.b16 %v770, %v770
    %775 = vst [vmem:[#allocation2 + $0x8] sm:$0xf] %v771
    %776 = vst [vmem:[#allocation2 + $0x38] sm:$0xf] %v772
    %v777 = vld [vmem:[%s0 + $0x8] sm:$0xff]
    %v778 = vld [vmem:[%s0 + $0x10] sm:$0xff]
    %v779 = vld [vmem:[%s0 + $0x40] sm:$0xff]
    %v780 = vld [vmem:[%s0 + $0x48] sm:$0xff]
    %v781 = vpack.c.bf16 %v779, %v777
    %v782 = vpack.c.bf16 %v780, %v778
    %785 = vrot.lane.b32.xlu0 %v781, 88
    %v786 = vpop.permute.xlu0 %785
    %787 = vrot.lane.b32.xlu0 %v782, 88
    %v788 = vpop.permute.xlu0 %787
    %vm789 = vcmask 719872
    %v790 = vsel %vm789, %v786, %v788
    %v793 = vsel %vm393, %v788, 0
    %795 = vmatprep.subr.bf16.mxu0 %v338
    %796 = vmatpush1.bf16.msra.mxu0 %v337
    %797 = vmatprep.subr.bf16.mxu0 %v334
    %798 = vmatpush1.bf16.msra.mxu0 %v333
    %799 = vmatprep.subr.bf16.mxu0 %v330
    %800 = vmatpush1.bf16.msra.mxu0 %v329
    %801 = vmatprep.subr.bf16.mxu0 %v326
    %802 = vmatpush1.bf16.msra.mxu0 %v325
    %803 = vmatprep.subr.bf16.mxu0 %v322
    %804 = vmatpush1.bf16.msra.mxu0 %v321
    %805 = vmatprep.subr.bf16.mxu0 %v318
    %806 = vmatpush1.bf16.msra.mxu0 %v317
    %807 = vmatprep.subr.bf16.mxu0 %v314
    %808 = vmatpush1.bf16.msra.mxu0 %v313
    %809 = vmatprep.subr.bf16.mxu0 %v310
    %810 = vmatpush1.bf16.msra.mxu0 %v309
    %811 = vmatprep.subr.bf16.mxu0 0
    %812 = vmatpush2.bf16.msra.mxu0 0
    %813 = vmatprep.subr.bf16.mxu0 0
    %814 = vmatpush2.bf16.msra.mxu0 0
    %815 = vmatprep.subr.bf16.mxu0 0
    %816 = vmatpush2.bf16.msra.mxu0 0
    %817 = vmatprep.subr.bf16.mxu0 0
    %818 = vmatpush2.bf16.msra.mxu0 0
    %819 = vmatprep.subr.bf16.mxu0 0
    %820 = vmatpush2.bf16.msra.mxu0 0
    %821 = vmatprep.subr.bf16.mxu0 %v402
    %822 = vmatpush2.bf16.msra.mxu0 %v399
    %823 = vmatprep.subr.bf16.mxu0 %v346
    %824 = vmatpush2.bf16.msra.mxu0 %v345
    %825 = vmatprep.subr.bf16.mxu0 %v342
    %826 = vmatpush2.bf16.msra.mxu0 %v341
    %827 = vmatprep.mubr.bf16.mxu0 %v793
    %828 = vmatmul.mubr.bf16.gmra.mxu0 %v790
    %v829 = vpop.f32.mrf.mxu0
    %v830 = vadd.f32 0.0, %v829
    %v831 = vpop.f32.mrf.mxu0
    %v832 = vadd.f32 0.0, %v831
    %v833 = vpop.f32.mrf.mxu0
    %v834 = vadd.f32 0.0, %v833
    %v835 = vpop.f32.mrf.mxu0
    %v836 = vadd.f32 0.0, %v835
    %837 = vdwg.mxu0
    %838 = vmatprep.subr.bf16.mxu0 %v340
    %839 = vmatpush1.bf16.msra.mxu0 %v339
    %840 = vmatprep.subr.bf16.mxu0 %v336
    %841 = vmatpush1.bf16.msra.mxu0 %v335
    %842 = vmatprep.subr.bf16.mxu0 %v332
    %843 = vmatpush1.bf16.msra.mxu0 %v331
    %844 = vmatprep.subr.bf16.mxu0 %v328
    %845 = vmatpush1.bf16.msra.mxu0 %v327
    %846 = vmatprep.subr.bf16.mxu0 %v324
    %847 = vmatpush1.bf16.msra.mxu0 %v323
    %848 = vmatprep.subr.bf16.mxu0 %v320
    %849 = vmatpush1.bf16.msra.mxu0 %v319
    %850 = vmatprep.subr.bf16.mxu0 %v316
    %851 = vmatpush1.bf16.msra.mxu0 %v315
    %852 = vmatprep.subr.bf16.mxu0 %v312
    %853 = vmatpush1.bf16.msra.mxu0 %v311
    %854 = vmatprep.subr.bf16.mxu0 0
    %855 = vmatpush2.bf16.msra.mxu0 0
    %856 = vmatprep.subr.bf16.mxu0 0
    %857 = vmatpush2.bf16.msra.mxu0 0
    %858 = vmatprep.subr.bf16.mxu0 0
    %859 = vmatpush2.bf16.msra.mxu0 0
    %860 = vmatprep.subr.bf16.mxu0 0
    %861 = vmatpush2.bf16.msra.mxu0 0
    %862 = vmatprep.subr.bf16.mxu0 0
    %863 = vmatpush2.bf16.msra.mxu0 0
    %864 = vmatprep.subr.bf16.mxu0 %v408
    %865 = vmatpush2.bf16.msra.mxu0 %v405
    %866 = vmatprep.subr.bf16.mxu0 %v348
    %867 = vmatpush2.bf16.msra.mxu0 %v347
    %868 = vmatprep.subr.bf16.mxu0 %v344
    %869 = vmatpush2.bf16.msra.mxu0 %v343
    %870 = vmatprep.mubr.bf16.mxu0 %v793
    %871 = vmatmul.mubr.bf16.gmra.mxu0 %v790
    %v872 = vpop.f32.mrf.mxu0
    %v873 = vadd.f32 0.0, %v872
    %v874 = vpop.f32.mrf.mxu0
    %v875 = vadd.f32 0.0, %v874
    %v876 = vpop.f32.mrf.mxu0
    %v877 = vadd.f32 0.0, %v876
    %v878 = vpop.f32.mrf.mxu0
    %v879 = vadd.f32 0.0, %v878
    %880 = vdwg.mxu0
    %v881 = vmax.f32 %v830, %v832
    %v882 = vmax.f32 %v834, %v836
    %v883 = vmax.f32 %v873, %v875
    %v884 = vmax.f32 %v877, %v879
    %v885 = vmax.f32 %v881, %v883
    %v886 = vmax.f32 %v882, %v884
    %v887 = vadd.f32 %v885, %v506
    %v888 = vadd.f32 %v886, %v506
    %v889 = vmax.f32 %v887, 0.0
    %v890 = vmax.f32 %v888, 0.0
    %v891 = vpack.c.bf16 %v890, %v889
    %v893 = vunpack.c.l.b16 %v891
    %v894 = vunpack.c.h.b16 %v891
    %v895 = vpack.c.b16 %v893, %v893
    %v896 = vpack.c.b16 %v894, %v894
    %899 = vst [vmem:[#allocation2 + $0xc] sm:$0xf] %v895
    %900 = vst [vmem:[#allocation2 + $0x3c] sm:$0xf] %v896
    %v901 = vld [vmem:[%s0 + $0x8] sm:$0xff]
    %v902 = vld [vmem:[%s0 + $0x10] sm:$0xff]
    %v903 = vld [vmem:[%s0 + $0x18] sm:$0xff]
    %v904 = vld [vmem:[%s0 + $0x40] sm:$0xff]
    %v905 = vld [vmem:[%s0 + $0x48] sm:$0xff]
    %v906 = vld [vmem:[%s0 + $0x50] sm:$0xff]
    %v907 = vpack.c.bf16 %v904, %v901
    %v908 = vpack.c.bf16 %v905, %v902
    %v909 = vpack.c.bf16 %v906, %v903
    %913 = vrot.lane.b32.xlu0 %v907, 32
    %v914 = vpop.permute.xlu0 %913
    %915 = vrot.lane.b32.xlu0 %v908, 32
    %v916 = vpop.permute.xlu0 %915
    %917 = vrot.lane.b32.xlu0 %v909, 32
    %v918 = vpop.permute.xlu0 %917
    %vm919 = vcmask 261120
    %v920 = vsel %vm919, %v914, %v916
    %v921 = vsel %vm919, %v916, %v918
    %v924 = vsel %vm393, %v921, 0
    %926 = vmatprep.subr.bf16.mxu0 %v338
    %927 = vmatpush1.bf16.msra.mxu0 %v337
    %928 = vmatprep.subr.bf16.mxu0 %v334
    %929 = vmatpush1.bf16.msra.mxu0 %v333
    %930 = vmatprep.subr.bf16.mxu0 %v330
    %931 = vmatpush1.bf16.msra.mxu0 %v329
    %932 = vmatprep.subr.bf16.mxu0 %v326
    %933 = vmatpush1.bf16.msra.mxu0 %v325
    %934 = vmatprep.subr.bf16.mxu0 %v322
    %935 = vmatpush1.bf16.msra.mxu0 %v321
    %936 = vmatprep.subr.bf16.mxu0 %v318
    %937 = vmatpush1.bf16.msra.mxu0 %v317
    %938 = vmatprep.subr.bf16.mxu0 %v314
    %939 = vmatpush1.bf16.msra.mxu0 %v313
    %940 = vmatprep.subr.bf16.mxu0 %v310
    %941 = vmatpush1.bf16.msra.mxu0 %v309
    %942 = vmatprep.subr.bf16.mxu0 0
    %943 = vmatpush2.bf16.msra.mxu0 0
    %944 = vmatprep.subr.bf16.mxu0 0
    %945 = vmatpush2.bf16.msra.mxu0 0
    %946 = vmatprep.subr.bf16.mxu0 0
    %947 = vmatpush2.bf16.msra.mxu0 0
    %948 = vmatprep.subr.bf16.mxu0 0
    %949 = vmatpush2.bf16.msra.mxu0 0
    %950 = vmatprep.subr.bf16.mxu0 0
    %951 = vmatpush2.bf16.msra.mxu0 0
    %952 = vmatprep.subr.bf16.mxu0 %v402
    %953 = vmatpush2.bf16.msra.mxu0 %v399
    %954 = vmatprep.subr.bf16.mxu0 %v346
    %955 = vmatpush2.bf16.msra.mxu0 %v345
    %956 = vmatprep.subr.bf16.mxu0 %v342
    %957 = vmatpush2.bf16.msra.mxu0 %v341
    %958 = vmatprep.mubr.bf16.mxu0 %v924
    %959 = vmatmul.mubr.bf16.gmra.mxu0 %v920
    %v960 = vpop.f32.mrf.mxu0
    %v961 = vadd.f32 0.0, %v960
    %v962 = vpop.f32.mrf.mxu0
    %v963 = vadd.f32 0.0, %v962
    %v964 = vpop.f32.mrf.mxu0
    %v965 = vadd.f32 0.0, %v964
    %v966 = vpop.f32.mrf.mxu0
    %v967 = vadd.f32 0.0, %v966
    %968 = vdwg.mxu0
    %969 = vmatprep.subr.bf16.mxu0 %v340
    %970 = vmatpush1.bf16.msra.mxu0 %v339
    %971 = vmatprep.subr.bf16.mxu0 %v336
    %972 = vmatpush1.bf16.msra.mxu0 %v335
    %973 = vmatprep.subr.bf16.mxu0 %v332
    %974 = vmatpush1.bf16.msra.mxu0 %v331
    %975 = vmatprep.subr.bf16.mxu0 %v328
    %976 = vmatpush1.bf16.msra.mxu0 %v327
    %977 = vmatprep.subr.bf16.mxu0 %v324
    %978 = vmatpush1.bf16.msra.mxu0 %v323
    %979 = vmatprep.subr.bf16.mxu0 %v320
    %980 = vmatpush1.bf16.msra.mxu0 %v319
    %981 = vmatprep.subr.bf16.mxu0 %v316
    %982 = vmatpush1.bf16.msra.mxu0 %v315
    %983 = vmatprep.subr.bf16.mxu0 %v312
    %984 = vmatpush1.bf16.msra.mxu0 %v311
    %985 = vmatprep.subr.bf16.mxu0 0
    %986 = vmatpush2.bf16.msra.mxu0 0
    %987 = vmatprep.subr.bf16.mxu0 0
    %988 = vmatpush2.bf16.msra.mxu0 0
    %989 = vmatprep.subr.bf16.mxu0 0
    %990 = vmatpush2.bf16.msra.mxu0 0
    %991 = vmatprep.subr.bf16.mxu0 0
    %992 = vmatpush2.bf16.msra.mxu0 0
    %993 = vmatprep.subr.bf16.mxu0 0
    %994 = vmatpush2.bf16.msra.mxu0 0
    %995 = vmatprep.subr.bf16.mxu0 %v408
    %996 = vmatpush2.bf16.msra.mxu0 %v405
    %997 = vmatprep.subr.bf16.mxu0 %v348
    %998 = vmatpush2.bf16.msra.mxu0 %v347
    %999 = vmatprep.subr.bf16.mxu0 %v344
    %1000 = vmatpush2.bf16.msra.mxu0 %v343
    %1001 = vmatprep.mubr.bf16.mxu0 %v924
    %1002 = vmatmul.mubr.bf16.gmra.mxu0 %v920
    %v1003 = vpop.f32.mrf.mxu0
    %v1004 = vadd.f32 0.0, %v1003
    %v1005 = vpop.f32.mrf.mxu0
    %v1006 = vadd.f32 0.0, %v1005
    %v1007 = vpop.f32.mrf.mxu0
    %v1008 = vadd.f32 0.0, %v1007
    %v1009 = vpop.f32.mrf.mxu0
    %v1010 = vadd.f32 0.0, %v1009
    %1011 = vdwg.mxu0
    %v1012 = vmax.f32 %v961, %v963
    %v1013 = vmax.f32 %v965, %v967
    %v1014 = vmax.f32 %v1004, %v1006
    %v1015 = vmax.f32 %v1008, %v1010
    %v1016 = vmax.f32 %v1012, %v1014
    %v1017 = vmax.f32 %v1013, %v1015
    %v1018 = vadd.f32 %v1016, %v506
    %v1019 = vadd.f32 %v1017, %v506
    %v1020 = vmax.f32 %v1018, 0.0
    %v1021 = vmax.f32 %v1019, 0.0
    %v1022 = vpack.c.bf16 %v1021, %v1020
    %v1024 = vunpack.c.l.b16 %v1022
    %v1025 = vunpack.c.h.b16 %v1022
    %v1026 = vpack.c.b16 %v1024, %v1024
    %v1027 = vpack.c.b16 %v1025, %v1025
    %1030 = vst [vmem:[#allocation2 + $0x10] sm:$0xf] %v1026
    %1031 = vst [vmem:[#allocation2 + $0x40] sm:$0xf] %v1027
    %v1032 = vld [vmem:[%s0 + $0x10] sm:$0xff]
    %v1033 = vld [vmem:[%s0 + $0x18] sm:$0xff]
    %v1034 = vld [vmem:[%s0 + $0x48] sm:$0xff]
    %v1035 = vld [vmem:[%s0 + $0x50] sm:$0xff]
    %v1036 = vpack.c.bf16 %v1034, %v1032
    %v1037 = vpack.c.bf16 %v1035, %v1033
    %1040 = vrot.lane.b32.xlu0 %v1036, 104
    %v1041 = vpop.permute.xlu0 %1040
    %1042 = vrot.lane.b32.xlu0 %v1037, 104
    %v1043 = vpop.permute.xlu0 %1042
    %vm1044 = vcmask 850944
    %v1045 = vsel %vm1044, %v1041, %v1043
    %v1048 = vsel %vm393, %v1043, 0
    %1050 = vmatprep.subr.bf16.mxu0 %v338
    %1051 = vmatpush1.bf16.msra.mxu0 %v337
    %1052 = vmatprep.subr.bf16.mxu0 %v334
    %1053 = vmatpush1.bf16.msra.mxu0 %v333
    %1054 = vmatprep.subr.bf16.mxu0 %v330
    %1055 = vmatpush1.bf16.msra.mxu0 %v329
    %1056 = vmatprep.subr.bf16.mxu0 %v326
    %1057 = vmatpush1.bf16.msra.mxu0 %v325
    %1058 = vmatprep.subr.bf16.mxu0 %v322
    %1059 = vmatpush1.bf16.msra.mxu0 %v321
    %1060 = vmatprep.subr.bf16.mxu0 %v318
    %1061 = vmatpush1.bf16.msra.mxu0 %v317
    %1062 = vmatprep.subr.bf16.mxu0 %v314
    %1063 = vmatpush1.bf16.msra.mxu0 %v313
    %1064 = vmatprep.subr.bf16.mxu0 %v310
    %1065 = vmatpush1.bf16.msra.mxu0 %v309
    %1066 = vmatprep.subr.bf16.mxu0 0
    %1067 = vmatpush2.bf16.msra.mxu0 0
    %1068 = vmatprep.subr.bf16.mxu0 0
    %1069 = vmatpush2.bf16.msra.mxu0 0
    %1070 = vmatprep.subr.bf16.mxu0 0
    %1071 = vmatpush2.bf16.msra.mxu0 0
    %1072 = vmatprep.subr.bf16.mxu0 0
    %1073 = vmatpush2.bf16.msra.mxu0 0
    %1074 = vmatprep.subr.bf16.mxu0 0
    %1075 = vmatpush2.bf16.msra.mxu0 0
    %1076 = vmatprep.subr.bf16.mxu0 %v402
    %1077 = vmatpush2.bf16.msra.mxu0 %v399
    %1078 = vmatprep.subr.bf16.mxu0 %v346
    %1079 = vmatpush2.bf16.msra.mxu0 %v345
    %1080 = vmatprep.subr.bf16.mxu0 %v342
    %1081 = vmatpush2.bf16.msra.mxu0 %v341
    %1082 = vmatprep.mubr.bf16.mxu0 %v1048
    %1083 = vmatmul.mubr.bf16.gmra.mxu0 %v1045
    %v1084 = vpop.f32.mrf.mxu0
    %v1085 = vadd.f32 0.0, %v1084
    %v1086 = vpop.f32.mrf.mxu0
    %v1087 = vadd.f32 0.0, %v1086
    %v1088 = vpop.f32.mrf.mxu0
    %v1089 = vadd.f32 0.0, %v1088
    %v1090 = vpop.f32.mrf.mxu0
    %v1091 = vadd.f32 0.0, %v1090
    %1092 = vdwg.mxu0
    %1093 = vmatprep.subr.bf16.mxu0 %v340
    %1094 = vmatpush1.bf16.msra.mxu0 %v339
    %1095 = vmatprep.subr.bf16.mxu0 %v336
    %1096 = vmatpush1.bf16.msra.mxu0 %v335
    %1097 = vmatprep.subr.bf16.mxu0 %v332
    %1098 = vmatpush1.bf16.msra.mxu0 %v331
    %1099 = vmatprep.subr.bf16.mxu0 %v328
    %1100 = vmatpush1.bf16.msra.mxu0 %v327
    %1101 = vmatprep.subr.bf16.mxu0 %v324
    %1102 = vmatpush1.bf16.msra.mxu0 %v323
    %1103 = vmatprep.subr.bf16.mxu0 %v320
    %1104 = vmatpush1.bf16.msra.mxu0 %v319
    %1105 = vmatprep.subr.bf16.mxu0 %v316
    %1106 = vmatpush1.bf16.msra.mxu0 %v315
    %1107 = vmatprep.subr.bf16.mxu0 %v312
    %1108 = vmatpush1.bf16.msra.mxu0 %v311
    %1109 = vmatprep.subr.bf16.mxu0 0
    %1110 = vmatpush2.bf16.msra.mxu0 0
    %1111 = vmatprep.subr.bf16.mxu0 0
    %1112 = vmatpush2.bf16.msra.mxu0 0
    %1113 = vmatprep.subr.bf16.mxu0 0
    %1114 = vmatpush2.bf16.msra.mxu0 0
    %1115 = vmatprep.subr.bf16.mxu0 0
    %1116 = vmatpush2.bf16.msra.mxu0 0
    %1117 = vmatprep.subr.bf16.mxu0 0
    %1118 = vmatpush2.bf16.msra.mxu0 0
    %1119 = vmatprep.subr.bf16.mxu0 %v408
    %1120 = vmatpush2.bf16.msra.mxu0 %v405
    %1121 = vmatprep.subr.bf16.mxu0 %v348
    %1122 = vmatpush2.bf16.msra.mxu0 %v347
    %1123 = vmatprep.subr.bf16.mxu0 %v344
    %1124 = vmatpush2.bf16.msra.mxu0 %v343
    %1125 = vmatprep.mubr.bf16.mxu0 %v1048
    %1126 = vmatmul.mubr.bf16.gmra.mxu0 %v1045
    %v1127 = vpop.f32.mrf.mxu0
    %v1128 = vadd.f32 0.0, %v1127
    %v1129 = vpop.f32.mrf.mxu0
    %v1130 = vadd.f32 0.0, %v1129
    %v1131 = vpop.f32.mrf.mxu0
    %v1132 = vadd.f32 0.0, %v1131
    %v1133 = vpop.f32.mrf.mxu0
    %v1134 = vadd.f32 0.0, %v1133
    %1135 = vdwg.mxu0
    %v1136 = vmax.f32 %v1085, %v1087
    %v1137 = vmax.f32 %v1089, %v1091
    %v1138 = vmax.f32 %v1128, %v1130
    %v1139 = vmax.f32 %v1132, %v1134
    %v1140 = vmax.f32 %v1136, %v1138
    %v1141 = vmax.f32 %v1137, %v1139
    %v1142 = vadd.f32 %v1140, %v506
    %v1143 = vadd.f32 %v1141, %v506
    %v1144 = vmax.f32 %v1142, 0.0
    %v1145 = vmax.f32 %v1143, 0.0
    %v1146 = vpack.c.bf16 %v1145, %v1144
    %v1148 = vunpack.c.l.b16 %v1146
    %v1149 = vunpack.c.h.b16 %v1146
    %v1150 = vpack.c.b16 %v1148, %v1148
    %v1151 = vpack.c.b16 %v1149, %v1149
    %1154 = vst [vmem:[#allocation2 + $0x14] sm:$0xf] %v1150
    %1155 = vst [vmem:[#allocation2 + $0x44] sm:$0xf] %v1151
    %v1156 = vld [vmem:[%s0 + $0x10] sm:$0xff]
    %v1157 = vld [vmem:[%s0 + $0x18] sm:$0xff]
    %v1158 = vld [vmem:[%s0 + $0x48] sm:$0xff]
    %v1159 = vld [vmem:[%s0 + $0x50] sm:$0xff]
    %v1160 = vpack.c.bf16 %v1158, %v1156
    %v1161 = vpack.c.bf16 %v1159, %v1157
    %1164 = vrot.lane.b32.xlu0 %v1160, 48
    %v1165 = vpop.permute.xlu0 %1164
    %1166 = vrot.lane.b32.xlu0 %v1161, 48
    %v1167 = vpop.permute.xlu0 %1166
    %vm1168 = vcmask 392192
    %v1169 = vsel %vm1168, %v1165, %v1167
    %v1172 = vsel %vm393, %v1167, 0
    %1174 = vmatprep.subr.bf16.mxu0 %v338
    %1175 = vmatpush1.bf16.msra.mxu0 %v337
    %1176 = vmatprep.subr.bf16.mxu0 %v334
    %1177 = vmatpush1.bf16.msra.mxu0 %v333
    %1178 = vmatprep.subr.bf16.mxu0 %v330
    %1179 = vmatpush1.bf16.msra.mxu0 %v329
    %1180 = vmatprep.subr.bf16.mxu0 %v326
    %1181 = vmatpush1.bf16.msra.mxu0 %v325
    %1182 = vmatprep.subr.bf16.mxu0 %v322
    %1183 = vmatpush1.bf16.msra.mxu0 %v321
    %1184 = vmatprep.subr.bf16.mxu0 %v318
    %1185 = vmatpush1.bf16.msra.mxu0 %v317
    %1186 = vmatprep.subr.bf16.mxu0 %v314
    %1187 = vmatpush1.bf16.msra.mxu0 %v313
    %1188 = vmatprep.subr.bf16.mxu0 %v310
    %1189 = vmatpush1.bf16.msra.mxu0 %v309
    %1190 = vmatprep.subr.bf16.mxu0 0
    %1191 = vmatpush2.bf16.msra.mxu0 0
    %1192 = vmatprep.subr.bf16.mxu0 0
    %1193 = vmatpush2.bf16.msra.mxu0 0
    %1194 = vmatprep.subr.bf16.mxu0 0
    %1195 = vmatpush2.bf16.msra.mxu0 0
    %1196 = vmatprep.subr.bf16.mxu0 0
    %1197 = vmatpush2.bf16.msra.mxu0 0
    %1198 = vmatprep.subr.bf16.mxu0 0
    %1199 = vmatpush2.bf16.msra.mxu0 0
    %1200 = vmatprep.subr.bf16.mxu0 %v402
    %1201 = vmatpush2.bf16.msra.mxu0 %v399
    %1202 = vmatprep.subr.bf16.mxu0 %v346
    %1203 = vmatpush2.bf16.msra.mxu0 %v345
    %1204 = vmatprep.subr.bf16.mxu0 %v342
    %1205 = vmatpush2.bf16.msra.mxu0 %v341
    %1206 = vmatprep.mubr.bf16.mxu0 %v1172
    %1207 = vmatmul.mubr.bf16.gmra.mxu0 %v1169
    %v1208 = vpop.f32.mrf.mxu0
    %v1209 = vadd.f32 0.0, %v1208
    %v1210 = vpop.f32.mrf.mxu0
    %v1211 = vadd.f32 0.0, %v1210
    %v1212 = vpop.f32.mrf.mxu0
    %v1213 = vadd.f32 0.0, %v1212
    %v1214 = vpop.f32.mrf.mxu0
    %v1215 = vadd.f32 0.0, %v1214
    %1216 = vdwg.mxu0
    %1217 = vmatprep.subr.bf16.mxu0 %v340
    %1218 = vmatpush1.bf16.msra.mxu0 %v339
    %1219 = vmatprep.subr.bf16.mxu0 %v336
    %1220 = vmatpush1.bf16.msra.mxu0 %v335
    %1221 = vmatprep.subr.bf16.mxu0 %v332
    %1222 = vmatpush1.bf16.msra.mxu0 %v331
    %1223 = vmatprep.subr.bf16.mxu0 %v328
    %1224 = vmatpush1.bf16.msra.mxu0 %v327
    %1225 = vmatprep.subr.bf16.mxu0 %v324
    %1226 = vmatpush1.bf16.msra.mxu0 %v323
    %1227 = vmatprep.subr.bf16.mxu0 %v320
    %1228 = vmatpush1.bf16.msra.mxu0 %v319
    %1229 = vmatprep.subr.bf16.mxu0 %v316
    %1230 = vmatpush1.bf16.msra.mxu0 %v315
    %1231 = vmatprep.subr.bf16.mxu0 %v312
    %1232 = vmatpush1.bf16.msra.mxu0 %v311
    %1233 = vmatprep.subr.bf16.mxu0 0
    %1234 = vmatpush2.bf16.msra.mxu0 0
    %1235 = vmatprep.subr.bf16.mxu0 0
    %1236 = vmatpush2.bf16.msra.mxu0 0
    %1237 = vmatprep.subr.bf16.mxu0 0
    %1238 = vmatpush2.bf16.msra.mxu0 0
    %1239 = vmatprep.subr.bf16.mxu0 0
    %1240 = vmatpush2.bf16.msra.mxu0 0
    %1241 = vmatprep.subr.bf16.mxu0 0
    %1242 = vmatpush2.bf16.msra.mxu0 0
    %1243 = vmatprep.subr.bf16.mxu0 %v408
    %1244 = vmatpush2.bf16.msra.mxu0 %v405
    %1245 = vmatprep.subr.bf16.mxu0 %v348
    %1246 = vmatpush2.bf16.msra.mxu0 %v347
    %1247 = vmatprep.subr.bf16.mxu0 %v344
    %1248 = vmatpush2.bf16.msra.mxu0 %v343
    %1249 = vmatprep.mubr.bf16.mxu0 %v1172
    %1250 = vmatmul.mubr.bf16.gmra.mxu0 %v1169
    %v1251 = vpop.f32.mrf.mxu0
    %v1252 = vadd.f32 0.0, %v1251
    %v1253 = vpop.f32.mrf.mxu0
    %v1254 = vadd.f32 0.0, %v1253
    %v1255 = vpop.f32.mrf.mxu0
    %v1256 = vadd.f32 0.0, %v1255
    %v1257 = vpop.f32.mrf.mxu0
    %v1258 = vadd.f32 0.0, %v1257
    %1259 = vdwg.mxu0
    %v1260 = vmax.f32 %v1209, %v1211
    %v1261 = vmax.f32 %v1213, %v1215
    %v1262 = vmax.f32 %v1252, %v1254
    %v1263 = vmax.f32 %v1256, %v1258
    %v1264 = vmax.f32 %v1260, %v1262
    %v1265 = vmax.f32 %v1261, %v1263
    %v1266 = vadd.f32 %v1264, %v506
    %v1267 = vadd.f32 %v1265, %v506
    %v1268 = vmax.f32 %v1266, 0.0
    %v1269 = vmax.f32 %v1267, 0.0
    %v1270 = vpack.c.bf16 %v1269, %v1268
    %v1272 = vunpack.c.l.b16 %v1270
    %v1273 = vunpack.c.h.b16 %v1270
    %v1274 = vpack.c.b16 %v1272, %v1272
    %v1275 = vpack.c.b16 %v1273, %v1273
    %1278 = vst [vmem:[#allocation2 + $0x18] sm:$0xf] %v1274
    %1279 = vst [vmem:[#allocation2 + $0x48] sm:$0xf] %v1275
    %v1280 = vld [vmem:[%s0 + $0x18] sm:$0xff]
    %v1281 = vld [vmem:[%s0 + $0x20] sm:$0xff]
    %v1282 = vld [vmem:[%s0 + $0x50] sm:$0xff]
    %v1283 = vld [vmem:[%s0 + $0x58] sm:$0xff]
    %v1284 = vpack.c.bf16 %v1282, %v1280
    %v1285 = vpack.c.bf16 %v1283, %v1281
    %1288 = vrot.lane.b32.xlu0 %v1284, 120
    %v1289 = vpop.permute.xlu0 %1288
    %1290 = vrot.lane.b32.xlu0 %v1285, 120
    %v1291 = vpop.permute.xlu0 %1290
    %vm1292 = vcmask 982016
    %v1293 = vsel %vm1292, %v1289, %v1291
    %v1296 = vsel %vm393, %v1291, 0
    %1298 = vmatprep.subr.bf16.mxu0 %v338
    %1299 = vmatpush1.bf16.msra.mxu0 %v337
    %1300 = vmatprep.subr.bf16.mxu0 %v334
    %1301 = vmatpush1.bf16.msra.mxu0 %v333
    %1302 = vmatprep.subr.bf16.mxu0 %v330
    %1303 = vmatpush1.bf16.msra.mxu0 %v329
    %1304 = vmatprep.subr.bf16.mxu0 %v326
    %1305 = vmatpush1.bf16.msra.mxu0 %v325
    %1306 = vmatprep.subr.bf16.mxu0 %v322
    %1307 = vmatpush1.bf16.msra.mxu0 %v321
    %1308 = vmatprep.subr.bf16.mxu0 %v318
    %1309 = vmatpush1.bf16.msra.mxu0 %v317
    %1310 = vmatprep.subr.bf16.mxu0 %v314
    %1311 = vmatpush1.bf16.msra.mxu0 %v313
    %1312 = vmatprep.subr.bf16.mxu0 %v310
    %1313 = vmatpush1.bf16.msra.mxu0 %v309
    %1314 = vmatprep.subr.bf16.mxu0 0
    %1315 = vmatpush2.bf16.msra.mxu0 0
    %1316 = vmatprep.subr.bf16.mxu0 0
    %1317 = vmatpush2.bf16.msra.mxu0 0
    %1318 = vmatprep.subr.bf16.mxu0 0
    %1319 = vmatpush2.bf16.msra.mxu0 0
    %1320 = vmatprep.subr.bf16.mxu0 0
    %1321 = vmatpush2.bf16.msra.mxu0 0
    %1322 = vmatprep.subr.bf16.mxu0 0
    %1323 = vmatpush2.bf16.msra.mxu0 0
    %1324 = vmatprep.subr.bf16.mxu0 %v402
    %1325 = vmatpush2.bf16.msra.mxu0 %v399
    %1326 = vmatprep.subr.bf16.mxu0 %v346
    %1327 = vmatpush2.bf16.msra.mxu0 %v345
    %1328 = vmatprep.subr.bf16.mxu0 %v342
    %1329 = vmatpush2.bf16.msra.mxu0 %v341
    %1330 = vmatprep.mubr.bf16.mxu0 %v1296
    %1331 = vmatmul.mubr.bf16.gmra.mxu0 %v1293
    %v1332 = vpop.f32.mrf.mxu0
    %v1333 = vadd.f32 0.0, %v1332
    %v1334 = vpop.f32.mrf.mxu0
    %v1335 = vadd.f32 0.0, %v1334
    %v1336 = vpop.f32.mrf.mxu0
    %v1337 = vadd.f32 0.0, %v1336
    %v1338 = vpop.f32.mrf.mxu0
    %v1339 = vadd.f32 0.0, %v1338
    %1340 = vdwg.mxu0
    %1341 = vmatprep.subr.bf16.mxu0 %v340
    %1342 = vmatpush1.bf16.msra.mxu0 %v339
    %1343 = vmatprep.subr.bf16.mxu0 %v336
    %1344 = vmatpush1.bf16.msra.mxu0 %v335
    %1345 = vmatprep.subr.bf16.mxu0 %v332
    %1346 = vmatpush1.bf16.msra.mxu0 %v331
    %1347 = vmatprep.subr.bf16.mxu0 %v328
    %1348 = vmatpush1.bf16.msra.mxu0 %v327
    %1349 = vmatprep.subr.bf16.mxu0 %v324
    %1350 = vmatpush1.bf16.msra.mxu0 %v323
    %1351 = vmatprep.subr.bf16.mxu0 %v320
    %1352 = vmatpush1.bf16.msra.mxu0 %v319
    %1353 = vmatprep.subr.bf16.mxu0 %v316
    %1354 = vmatpush1.bf16.msra.mxu0 %v315
    %1355 = vmatprep.subr.bf16.mxu0 %v312
    %1356 = vmatpush1.bf16.msra.mxu0 %v311
    %1357 = vmatprep.subr.bf16.mxu0 0
    %1358 = vmatpush2.bf16.msra.mxu0 0
    %1359 = vmatprep.subr.bf16.mxu0 0
    %1360 = vmatpush2.bf16.msra.mxu0 0
    %1361 = vmatprep.subr.bf16.mxu0 0
    %1362 = vmatpush2.bf16.msra.mxu0 0
    %1363 = vmatprep.subr.bf16.mxu0 0
    %1364 = vmatpush2.bf16.msra.mxu0 0
    %1365 = vmatprep.subr.bf16.mxu0 0
    %1366 = vmatpush2.bf16.msra.mxu0 0
    %1367 = vmatprep.subr.bf16.mxu0 %v408
    %1368 = vmatpush2.bf16.msra.mxu0 %v405
    %1369 = vmatprep.subr.bf16.mxu0 %v348
    %1370 = vmatpush2.bf16.msra.mxu0 %v347
    %1371 = vmatprep.subr.bf16.mxu0 %v344
    %1372 = vmatpush2.bf16.msra.mxu0 %v343
    %1373 = vmatprep.mubr.bf16.mxu0 %v1296
    %1374 = vmatmul.mubr.bf16.gmra.mxu0 %v1293
    %v1375 = vpop.f32.mrf.mxu0
    %v1376 = vadd.f32 0.0, %v1375
    %v1377 = vpop.f32.mrf.mxu0
    %v1378 = vadd.f32 0.0, %v1377
    %v1379 = vpop.f32.mrf.mxu0
    %v1380 = vadd.f32 0.0, %v1379
    %v1381 = vpop.f32.mrf.mxu0
    %v1382 = vadd.f32 0.0, %v1381
    %1383 = vdwg.mxu0
    %v1384 = vmax.f32 %v1333, %v1335
    %v1385 = vmax.f32 %v1337, %v1339
    %v1386 = vmax.f32 %v1376, %v1378
    %v1387 = vmax.f32 %v1380, %v1382
    %v1388 = vmax.f32 %v1384, %v1386
    %v1389 = vmax.f32 %v1385, %v1387
    %v1390 = vadd.f32 %v1388, %v506
    %v1391 = vadd.f32 %v1389, %v506
    %v1392 = vmax.f32 %v1390, 0.0
    %v1393 = vmax.f32 %v1391, 0.0
    %v1394 = vpack.c.bf16 %v1393, %v1392
    %v1396 = vunpack.c.l.b16 %v1394
    %v1397 = vunpack.c.h.b16 %v1394
    %v1398 = vpack.c.b16 %v1396, %v1396
    %v1399 = vpack.c.b16 %v1397, %v1397
    %1402 = vst [vmem:[#allocation2 + $0x1c] sm:$0xf] %v1398
    %1403 = vst [vmem:[#allocation2 + $0x4c] sm:$0xf] %v1399
    %v1404 = vld [vmem:[%s0 + $0x18] sm:$0xff]
    %v1405 = vld [vmem:[%s0 + $0x20] sm:$0xff]
    %v1406 = vld [vmem:[%s0 + $0x50] sm:$0xff]
    %v1407 = vld [vmem:[%s0 + $0x58] sm:$0xff]
    %v1408 = vpack.c.bf16 %v1406, %v1404
    %v1409 = vpack.c.bf16 %v1407, %v1405
    %1412 = vrot.lane.b32.xlu0 %v1408, 64
    %v1413 = vpop.permute.xlu0 %1412
    %1414 = vrot.lane.b32.xlu0 %v1409, 64
    %v1415 = vpop.permute.xlu0 %1414
    %vm1416 = vcmask 523264
    %v1417 = vsel %vm1416, %v1413, %v1415
    %v1420 = vsel %vm393, %v1415, 0
    %1422 = vmatprep.subr.bf16.mxu0 %v338
    %1423 = vmatpush1.bf16.msra.mxu0 %v337
    %1424 = vmatprep.subr.bf16.mxu0 %v334
    %1425 = vmatpush1.bf16.msra.mxu0 %v333
    %1426 = vmatprep.subr.bf16.mxu0 %v330
    %1427 = vmatpush1.bf16.msra.mxu0 %v329
    %1428 = vmatprep.subr.bf16.mxu0 %v326
    %1429 = vmatpush1.bf16.msra.mxu0 %v325
    %1430 = vmatprep.subr.bf16.mxu0 %v322
    %1431 = vmatpush1.bf16.msra.mxu0 %v321
    %1432 = vmatprep.subr.bf16.mxu0 %v318
    %1433 = vmatpush1.bf16.msra.mxu0 %v317
    %1434 = vmatprep.subr.bf16.mxu0 %v314
    %1435 = vmatpush1.bf16.msra.mxu0 %v313
    %1436 = vmatprep.subr.bf16.mxu0 %v310
    %1437 = vmatpush1.bf16.msra.mxu0 %v309
    %1438 = vmatprep.subr.bf16.mxu0 0
    %1439 = vmatpush2.bf16.msra.mxu0 0
    %1440 = vmatprep.subr.bf16.mxu0 0
    %1441 = vmatpush2.bf16.msra.mxu0 0
    %1442 = vmatprep.subr.bf16.mxu0 0
    %1443 = vmatpush2.bf16.msra.mxu0 0
    %1444 = vmatprep.subr.bf16.mxu0 0
    %1445 = vmatpush2.bf16.msra.mxu0 0
    %1446 = vmatprep.subr.bf16.mxu0 0
    %1447 = vmatpush2.bf16.msra.mxu0 0
    %1448 = vmatprep.subr.bf16.mxu0 %v402
    %1449 = vmatpush2.bf16.msra.mxu0 %v399
    %1450 = vmatprep.subr.bf16.mxu0 %v346
    %1451 = vmatpush2.bf16.msra.mxu0 %v345
    %1452 = vmatprep.subr.bf16.mxu0 %v342
    %1453 = vmatpush2.bf16.msra.mxu0 %v341
    %1454 = vmatprep.mubr.bf16.mxu0 %v1420
    %1455 = vmatmul.mubr.bf16.gmra.mxu0 %v1417
    %v1456 = vpop.f32.mrf.mxu0
    %v1457 = vadd.f32 0.0, %v1456
    %v1458 = vpop.f32.mrf.mxu0
    %v1459 = vadd.f32 0.0, %v1458
    %v1460 = vpop.f32.mrf.mxu0
    %v1461 = vadd.f32 0.0, %v1460
    %v1462 = vpop.f32.mrf.mxu0
    %v1463 = vadd.f32 0.0, %v1462
    %1464 = vdwg.mxu0
    %1465 = vmatprep.subr.bf16.mxu0 %v340
    %1466 = vmatpush1.bf16.msra.mxu0 %v339
    %1467 = vmatprep.subr.bf16.mxu0 %v336
    %1468 = vmatpush1.bf16.msra.mxu0 %v335
    %1469 = vmatprep.subr.bf16.mxu0 %v332
    %1470 = vmatpush1.bf16.msra.mxu0 %v331
    %1471 = vmatprep.subr.bf16.mxu0 %v328
    %1472 = vmatpush1.bf16.msra.mxu0 %v327
    %1473 = vmatprep.subr.bf16.mxu0 %v324
    %1474 = vmatpush1.bf16.msra.mxu0 %v323
    %1475 = vmatprep.subr.bf16.mxu0 %v320
    %1476 = vmatpush1.bf16.msra.mxu0 %v319
    %1477 = vmatprep.subr.bf16.mxu0 %v316
    %1478 = vmatpush1.bf16.msra.mxu0 %v315
    %1479 = vmatprep.subr.bf16.mxu0 %v312
    %1480 = vmatpush1.bf16.msra.mxu0 %v311
    %1481 = vmatprep.subr.bf16.mxu0 0
    %1482 = vmatpush2.bf16.msra.mxu0 0
    %1483 = vmatprep.subr.bf16.mxu0 0
    %1484 = vmatpush2.bf16.msra.mxu0 0
    %1485 = vmatprep.subr.bf16.mxu0 0
    %1486 = vmatpush2.bf16.msra.mxu0 0
    %1487 = vmatprep.subr.bf16.mxu0 0
    %1488 = vmatpush2.bf16.msra.mxu0 0
    %1489 = vmatprep.subr.bf16.mxu0 0
    %1490 = vmatpush2.bf16.msra.mxu0 0
    %1491 = vmatprep.subr.bf16.mxu0 %v408
    %1492 = vmatpush2.bf16.msra.mxu0 %v405
    %1493 = vmatprep.subr.bf16.mxu0 %v348
    %1494 = vmatpush2.bf16.msra.mxu0 %v347
    %1495 = vmatprep.subr.bf16.mxu0 %v344
    %1496 = vmatpush2.bf16.msra.mxu0 %v343
    %1497 = vmatprep.mubr.bf16.mxu0 %v1420
    %1498 = vmatmul.mubr.bf16.gmra.mxu0 %v1417
    %v1499 = vpop.f32.mrf.mxu0
    %v1500 = vadd.f32 0.0, %v1499
    %v1501 = vpop.f32.mrf.mxu0
    %v1502 = vadd.f32 0.0, %v1501
    %v1503 = vpop.f32.mrf.mxu0
    %v1504 = vadd.f32 0.0, %v1503
    %v1505 = vpop.f32.mrf.mxu0
    %v1506 = vadd.f32 0.0, %v1505
    %1507 = vdwg.mxu0
    %v1508 = vmax.f32 %v1457, %v1459
    %v1509 = vmax.f32 %v1461, %v1463
    %v1510 = vmax.f32 %v1500, %v1502
    %v1511 = vmax.f32 %v1504, %v1506
    %v1512 = vmax.f32 %v1508, %v1510
    %v1513 = vmax.f32 %v1509, %v1511
    %v1514 = vadd.f32 %v1512, %v506
    %v1515 = vadd.f32 %v1513, %v506
    %v1516 = vmax.f32 %v1514, 0.0
    %v1517 = vmax.f32 %v1515, 0.0
    %v1518 = vpack.c.bf16 %v1517, %v1516
    %v1520 = vunpack.c.l.b16 %v1518
    %v1521 = vunpack.c.h.b16 %v1518
    %v1522 = vpack.c.b16 %v1520, %v1520
    %v1523 = vpack.c.b16 %v1521, %v1521
    %1526 = vst [vmem:[#allocation2 + $0x20] sm:$0xf] %v1522
    %1527 = vst [vmem:[#allocation2 + $0x50] sm:$0xf] %v1523
    %v1528 = vld [vmem:[%s0 + $0x18] sm:$0xff]
    %v1529 = vld [vmem:[%s0 + $0x20] sm:$0xff]
    %v1530 = vld [vmem:[%s0 + $0x28] sm:$0xff]
    %v1531 = vld [vmem:[%s0 + $0x50] sm:$0xff]
    %v1532 = vld [vmem:[%s0 + $0x58] sm:$0xff]
    %v1533 = vld [vmem:[%s0 + $0x60] sm:$0xff]
    %v1534 = vpack.c.bf16 %v1531, %v1528
    %v1535 = vpack.c.bf16 %v1532, %v1529
    %v1536 = vpack.c.bf16 %v1533, %v1530
    %1540 = vrot.lane.b32.xlu0 %v1534, 8
    %v1541 = vpop.permute.xlu0 %1540
    %1542 = vrot.lane.b32.xlu0 %v1535, 8
    %v1543 = vpop.permute.xlu0 %1542
    %1544 = vrot.lane.b32.xlu0 %v1536, 8
    %v1545 = vpop.permute.xlu0 %1544
    %vm1546 = vcmask 64512
    %v1547 = vsel %vm1546, %v1541, %v1543
    %v1548 = vsel %vm1546, %v1543, %v1545
    %v1551 = vsel %vm393, %v1548, 0
    %1553 = vmatprep.subr.bf16.mxu0 %v338
    %1554 = vmatpush1.bf16.msra.mxu0 %v337
    %1555 = vmatprep.subr.bf16.mxu0 %v334
    %1556 = vmatpush1.bf16.msra.mxu0 %v333
    %1557 = vmatprep.subr.bf16.mxu0 %v330
    %1558 = vmatpush1.bf16.msra.mxu0 %v329
    %1559 = vmatprep.subr.bf16.mxu0 %v326
    %1560 = vmatpush1.bf16.msra.mxu0 %v325
    %1561 = vmatprep.subr.bf16.mxu0 %v322
    %1562 = vmatpush1.bf16.msra.mxu0 %v321
    %1563 = vmatprep.subr.bf16.mxu0 %v318
    %1564 = vmatpush1.bf16.msra.mxu0 %v317
    %1565 = vmatprep.subr.bf16.mxu0 %v314
    %1566 = vmatpush1.bf16.msra.mxu0 %v313
    %1567 = vmatprep.subr.bf16.mxu0 %v310
    %1568 = vmatpush1.bf16.msra.mxu0 %v309
    %1569 = vmatprep.subr.bf16.mxu0 0
    %1570 = vmatpush2.bf16.msra.mxu0 0
    %1571 = vmatprep.subr.bf16.mxu0 0
    %1572 = vmatpush2.bf16.msra.mxu0 0
    %1573 = vmatprep.subr.bf16.mxu0 0
    %1574 = vmatpush2.bf16.msra.mxu0 0
    %1575 = vmatprep.subr.bf16.mxu0 0
    %1576 = vmatpush2.bf16.msra.mxu0 0
    %1577 = vmatprep.subr.bf16.mxu0 0
    %1578 = vmatpush2.bf16.msra.mxu0 0
    %1579 = vmatprep.subr.bf16.mxu0 %v402
    %1580 = vmatpush2.bf16.msra.mxu0 %v399
    %1581 = vmatprep.subr.bf16.mxu0 %v346
    %1582 = vmatpush2.bf16.msra.mxu0 %v345
    %1583 = vmatprep.subr.bf16.mxu0 %v342
    %1584 = vmatpush2.bf16.msra.mxu0 %v341
    %1585 = vmatprep.mubr.bf16.mxu0 %v1551
    %1586 = vmatmul.mubr.bf16.gmra.mxu0 %v1547
    %v1587 = vpop.f32.mrf.mxu0
    %v1588 = vadd.f32 0.0, %v1587
    %v1589 = vpop.f32.mrf.mxu0
    %v1590 = vadd.f32 0.0, %v1589
    %v1591 = vpop.f32.mrf.mxu0
    %v1592 = vadd.f32 0.0, %v1591
    %v1593 = vpop.f32.mrf.mxu0
    %v1594 = vadd.f32 0.0, %v1593
    %1595 = vdwg.mxu0
    %1596 = vmatprep.subr.bf16.mxu0 %v340
    %1597 = vmatpush1.bf16.msra.mxu0 %v339
    %1598 = vmatprep.subr.bf16.mxu0 %v336
    %1599 = vmatpush1.bf16.msra.mxu0 %v335
    %1600 = vmatprep.subr.bf16.mxu0 %v332
    %1601 = vmatpush1.bf16.msra.mxu0 %v331
    %1602 = vmatprep.subr.bf16.mxu0 %v328
    %1603 = vmatpush1.bf16.msra.mxu0 %v327
    %1604 = vmatprep.subr.bf16.mxu0 %v324
    %1605 = vmatpush1.bf16.msra.mxu0 %v323
    %1606 = vmatprep.subr.bf16.mxu0 %v320
    %1607 = vmatpush1.bf16.msra.mxu0 %v319
    %1608 = vmatprep.subr.bf16.mxu0 %v316
    %1609 = vmatpush1.bf16.msra.mxu0 %v315
    %1610 = vmatprep.subr.bf16.mxu0 %v312
    %1611 = vmatpush1.bf16.msra.mxu0 %v311
    %1612 = vmatprep.subr.bf16.mxu0 0
    %1613 = vmatpush2.bf16.msra.mxu0 0
    %1614 = vmatprep.subr.bf16.mxu0 0
    %1615 = vmatpush2.bf16.msra.mxu0 0
    %1616 = vmatprep.subr.bf16.mxu0 0
    %1617 = vmatpush2.bf16.msra.mxu0 0
    %1618 = vmatprep.subr.bf16.mxu0 0
    %1619 = vmatpush2.bf16.msra.mxu0 0
    %1620 = vmatprep.subr.bf16.mxu0 0
    %1621 = vmatpush2.bf16.msra.mxu0 0
    %1622 = vmatprep.subr.bf16.mxu0 %v408
    %1623 = vmatpush2.bf16.msra.mxu0 %v405
    %1624 = vmatprep.subr.bf16.mxu0 %v348
    %1625 = vmatpush2.bf16.msra.mxu0 %v347
    %1626 = vmatprep.subr.bf16.mxu0 %v344
    %1627 = vmatpush2.bf16.msra.mxu0 %v343
    %1628 = vmatprep.mubr.bf16.mxu0 %v1551
    %1629 = vmatmul.mubr.bf16.gmra.mxu0 %v1547
    %v1630 = vpop.f32.mrf.mxu0
    %v1631 = vadd.f32 0.0, %v1630
    %v1632 = vpop.f32.mrf.mxu0
    %v1633 = vadd.f32 0.0, %v1632
    %v1634 = vpop.f32.mrf.mxu0
    %v1635 = vadd.f32 0.0, %v1634
    %v1636 = vpop.f32.mrf.mxu0
    %v1637 = vadd.f32 0.0, %v1636
    %1638 = vdwg.mxu0
    %v1639 = vmax.f32 %v1588, %v1590
    %v1640 = vmax.f32 %v1592, %v1594
    %v1641 = vmax.f32 %v1631, %v1633
    %v1642 = vmax.f32 %v1635, %v1637
    %v1643 = vmax.f32 %v1639, %v1641
    %v1644 = vmax.f32 %v1640, %v1642
    %v1645 = vadd.f32 %v1643, %v506
    %v1646 = vadd.f32 %v1644, %v506
    %v1647 = vmax.f32 %v1645, 0.0
    %v1648 = vmax.f32 %v1646, 0.0
    %v1649 = vpack.c.bf16 %v1648, %v1647
    %v1651 = vunpack.c.l.b16 %v1649
    %v1652 = vunpack.c.h.b16 %v1649
    %v1653 = vpack.c.b16 %v1651, %v1651
    %v1654 = vpack.c.b16 %v1652, %v1652
    %1657 = vst [vmem:[#allocation2 + $0x24] sm:$0xf] %v1653
    %1658 = vst [vmem:[#allocation2 + $0x54] sm:$0xf] %v1654
    %v1659 = vld [vmem:[%s0 + $0x20] sm:$0xff]
    %v1660 = vld [vmem:[%s0 + $0x28] sm:$0xff]
    %v1661 = vld [vmem:[%s0 + $0x58] sm:$0xff]
    %v1662 = vld [vmem:[%s0 + $0x60] sm:$0xff]
    %v1663 = vpack.c.bf16 %v1661, %v1659
    %v1664 = vpack.c.bf16 %v1662, %v1660
    %1667 = vrot.lane.b32.xlu0 %v1663, 80
    %v1668 = vpop.permute.xlu0 %1667
    %1669 = vrot.lane.b32.xlu0 %v1664, 80
    %v1670 = vpop.permute.xlu0 %1669
    %vm1671 = vcmask 654336
    %v1672 = vsel %vm1671, %v1668, %v1670
    %v1675 = vsel %vm393, %v1670, 0
    %1677 = vmatprep.subr.bf16.mxu0 %v338
    %1678 = vmatpush1.bf16.msra.mxu0 %v337
    %1679 = vmatprep.subr.bf16.mxu0 %v334
    %1680 = vmatpush1.bf16.msra.mxu0 %v333
    %1681 = vmatprep.subr.bf16.mxu0 %v330
    %1682 = vmatpush1.bf16.msra.mxu0 %v329
    %1683 = vmatprep.subr.bf16.mxu0 %v326
    %1684 = vmatpush1.bf16.msra.mxu0 %v325
    %1685 = vmatprep.subr.bf16.mxu0 %v322
    %1686 = vmatpush1.bf16.msra.mxu0 %v321
    %1687 = vmatprep.subr.bf16.mxu0 %v318
    %1688 = vmatpush1.bf16.msra.mxu0 %v317
    %1689 = vmatprep.subr.bf16.mxu0 %v314
    %1690 = vmatpush1.bf16.msra.mxu0 %v313
    %1691 = vmatprep.subr.bf16.mxu0 %v310
    %1692 = vmatpush1.bf16.msra.mxu0 %v309
    %1693 = vmatprep.subr.bf16.mxu0 0
    %1694 = vmatpush2.bf16.msra.mxu0 0
    %1695 = vmatprep.subr.bf16.mxu0 0
    %1696 = vmatpush2.bf16.msra.mxu0 0
    %1697 = vmatprep.subr.bf16.mxu0 0
    %1698 = vmatpush2.bf16.msra.mxu0 0
    %1699 = vmatprep.subr.bf16.mxu0 0
    %1700 = vmatpush2.bf16.msra.mxu0 0
    %1701 = vmatprep.subr.bf16.mxu0 0
    %1702 = vmatpush2.bf16.msra.mxu0 0
    %1703 = vmatprep.subr.bf16.mxu0 %v402
    %1704 = vmatpush2.bf16.msra.mxu0 %v399
    %1705 = vmatprep.subr.bf16.mxu0 %v346
    %1706 = vmatpush2.bf16.msra.mxu0 %v345
    %1707 = vmatprep.subr.bf16.mxu0 %v342
    %1708 = vmatpush2.bf16.msra.mxu0 %v341
    %1709 = vmatprep.mubr.bf16.mxu0 %v1675
    %1710 = vmatmul.mubr.bf16.gmra.mxu0 %v1672
    %v1711 = vpop.f32.mrf.mxu0
    %v1712 = vadd.f32 0.0, %v1711
    %v1713 = vpop.f32.mrf.mxu0
    %v1714 = vadd.f32 0.0, %v1713
    %v1715 = vpop.f32.mrf.mxu0
    %v1716 = vadd.f32 0.0, %v1715
    %v1717 = vpop.f32.mrf.mxu0
    %v1718 = vadd.f32 0.0, %v1717
    %1719 = vdwg.mxu0
    %1720 = vmatprep.subr.bf16.mxu0 %v340
    %1721 = vmatpush1.bf16.msra.mxu0 %v339
    %1722 = vmatprep.subr.bf16.mxu0 %v336
    %1723 = vmatpush1.bf16.msra.mxu0 %v335
    %1724 = vmatprep.subr.bf16.mxu0 %v332
    %1725 = vmatpush1.bf16.msra.mxu0 %v331
    %1726 = vmatprep.subr.bf16.mxu0 %v328
    %1727 = vmatpush1.bf16.msra.mxu0 %v327
    %1728 = vmatprep.subr.bf16.mxu0 %v324
    %1729 = vmatpush1.bf16.msra.mxu0 %v323
    %1730 = vmatprep.subr.bf16.mxu0 %v320
    %1731 = vmatpush1.bf16.msra.mxu0 %v319
    %1732 = vmatprep.subr.bf16.mxu0 %v316
    %1733 = vmatpush1.bf16.msra.mxu0 %v315
    %1734 = vmatprep.subr.bf16.mxu0 %v312
    %1735 = vmatpush1.bf16.msra.mxu0 %v311
    %1736 = vmatprep.subr.bf16.mxu0 0
    %1737 = vmatpush2.bf16.msra.mxu0 0
    %1738 = vmatprep.subr.bf16.mxu0 0
    %1739 = vmatpush2.bf16.msra.mxu0 0
    %1740 = vmatprep.subr.bf16.mxu0 0
    %1741 = vmatpush2.bf16.msra.mxu0 0
    %1742 = vmatprep.subr.bf16.mxu0 0
    %1743 = vmatpush2.bf16.msra.mxu0 0
    %1744 = vmatprep.subr.bf16.mxu0 0
    %1745 = vmatpush2.bf16.msra.mxu0 0
    %1746 = vmatprep.subr.bf16.mxu0 %v408
    %1747 = vmatpush2.bf16.msra.mxu0 %v405
    %1748 = vmatprep.subr.bf16.mxu0 %v348
    %1749 = vmatpush2.bf16.msra.mxu0 %v347
    %1750 = vmatprep.subr.bf16.mxu0 %v344
    %1751 = vmatpush2.bf16.msra.mxu0 %v343
    %1752 = vmatprep.mubr.bf16.mxu0 %v1675
    %1753 = vmatmul.mubr.bf16.gmra.mxu0 %v1672
    %v1754 = vpop.f32.mrf.mxu0
    %v1755 = vadd.f32 0.0, %v1754
    %v1756 = vpop.f32.mrf.mxu0
    %v1757 = vadd.f32 0.0, %v1756
    %v1758 = vpop.f32.mrf.mxu0
    %v1759 = vadd.f32 0.0, %v1758
    %v1760 = vpop.f32.mrf.mxu0
    %v1761 = vadd.f32 0.0, %v1760
    %1762 = vdwg.mxu0
    %v1763 = vmax.f32 %v1712, %v1714
    %v1764 = vmax.f32 %v1716, %v1718
    %v1765 = vmax.f32 %v1755, %v1757
    %v1766 = vmax.f32 %v1759, %v1761
    %v1767 = vmax.f32 %v1763, %v1765
    %v1768 = vmax.f32 %v1764, %v1766
    %v1769 = vadd.f32 %v1767, %v506
    %v1770 = vadd.f32 %v1768, %v506
    %v1771 = vmax.f32 %v1769, 0.0
    %v1772 = vmax.f32 %v1770, 0.0
    %v1773 = vpack.c.bf16 %v1772, %v1771
    %v1775 = vunpack.c.l.b16 %v1773
    %v1776 = vunpack.c.h.b16 %v1773
    %v1777 = vpack.c.b16 %v1775, %v1775
    %v1778 = vpack.c.b16 %v1776, %v1776
    %1781 = vst [vmem:[#allocation2 + $0x28] sm:$0xf] %v1777
    %1782 = vst [vmem:[#allocation2 + $0x58] sm:$0xf] %v1778
    %v1783 = vld [vmem:[%s0 + $0x20] sm:$0xff]
    %v1784 = vld [vmem:[%s0 + $0x28] sm:$0xff]
    %v1785 = vld [vmem:[%s0 + $0x30] sm:$0xff]
    %v1786 = vld [vmem:[%s0 + $0x58] sm:$0xff]
    %v1787 = vld [vmem:[%s0 + $0x60] sm:$0xff]
    %v1788 = vld [vmem:[%s0 + $0x68] sm:$0xff]
    %v1789 = vpack.c.bf16 %v1786, %v1783
    %v1790 = vpack.c.bf16 %v1787, %v1784
    %v1791 = vpack.c.bf16 %v1788, %v1785
    %1795 = vrot.lane.b32.xlu0 %v1789, 24
    %v1796 = vpop.permute.xlu0 %1795
    %1797 = vrot.lane.b32.xlu0 %v1790, 24
    %v1798 = vpop.permute.xlu0 %1797
    %1799 = vrot.lane.b32.xlu0 %v1791, 24
    %v1800 = vpop.permute.xlu0 %1799
    %vm1801 = vcmask 195584
    %v1802 = vsel %vm1801, %v1796, %v1798
    %v1803 = vsel %vm1801, %v1798, %v1800
    %v1806 = vsel %vm393, %v1803, 0
    %1808 = vmatprep.subr.bf16.mxu0 %v338
    %1809 = vmatpush1.bf16.msra.mxu0 %v337
    %1810 = vmatprep.subr.bf16.mxu0 %v334
    %1811 = vmatpush1.bf16.msra.mxu0 %v333
    %1812 = vmatprep.subr.bf16.mxu0 %v330
    %1813 = vmatpush1.bf16.msra.mxu0 %v329
    %1814 = vmatprep.subr.bf16.mxu0 %v326
    %1815 = vmatpush1.bf16.msra.mxu0 %v325
    %1816 = vmatprep.subr.bf16.mxu0 %v322
    %1817 = vmatpush1.bf16.msra.mxu0 %v321
    %1818 = vmatprep.subr.bf16.mxu0 %v318
    %1819 = vmatpush1.bf16.msra.mxu0 %v317
    %1820 = vmatprep.subr.bf16.mxu0 %v314
    %1821 = vmatpush1.bf16.msra.mxu0 %v313
    %1822 = vmatprep.subr.bf16.mxu0 %v310
    %1823 = vmatpush1.bf16.msra.mxu0 %v309
    %1824 = vmatprep.subr.bf16.mxu0 0
    %1825 = vmatpush2.bf16.msra.mxu0 0
    %1826 = vmatprep.subr.bf16.mxu0 0
    %1827 = vmatpush2.bf16.msra.mxu0 0
    %1828 = vmatprep.subr.bf16.mxu0 0
    %1829 = vmatpush2.bf16.msra.mxu0 0
    %1830 = vmatprep.subr.bf16.mxu0 0
    %1831 = vmatpush2.bf16.msra.mxu0 0
    %1832 = vmatprep.subr.bf16.mxu0 0
    %1833 = vmatpush2.bf16.msra.mxu0 0
    %1834 = vmatprep.subr.bf16.mxu0 %v402
    %1835 = vmatpush2.bf16.msra.mxu0 %v399
    %1836 = vmatprep.subr.bf16.mxu0 %v346
    %1837 = vmatpush2.bf16.msra.mxu0 %v345
    %1838 = vmatprep.subr.bf16.mxu0 %v342
    %1839 = vmatpush2.bf16.msra.mxu0 %v341
    %1840 = vmatprep.mubr.bf16.mxu0 %v1806
    %1841 = vmatmul.mubr.bf16.gmra.mxu0 %v1802
    %v1842 = vpop.f32.mrf.mxu0
    %v1843 = vadd.f32 0.0, %v1842
    %v1844 = vpop.f32.mrf.mxu0
    %v1845 = vadd.f32 0.0, %v1844
    %v1846 = vpop.f32.mrf.mxu0
    %v1847 = vadd.f32 0.0, %v1846
    %v1848 = vpop.f32.mrf.mxu0
    %v1849 = vadd.f32 0.0, %v1848
    %1850 = vdwg.mxu0
    %1851 = vmatprep.subr.bf16.mxu0 %v340
    %1852 = vmatpush1.bf16.msra.mxu0 %v339
    %1853 = vmatprep.subr.bf16.mxu0 %v336
    %1854 = vmatpush1.bf16.msra.mxu0 %v335
    %1855 = vmatprep.subr.bf16.mxu0 %v332
    %1856 = vmatpush1.bf16.msra.mxu0 %v331
    %1857 = vmatprep.subr.bf16.mxu0 %v328
    %1858 = vmatpush1.bf16.msra.mxu0 %v327
    %1859 = vmatprep.subr.bf16.mxu0 %v324
    %1860 = vmatpush1.bf16.msra.mxu0 %v323
    %1861 = vmatprep.subr.bf16.mxu0 %v320
    %1862 = vmatpush1.bf16.msra.mxu0 %v319
    %1863 = vmatprep.subr.bf16.mxu0 %v316
    %1864 = vmatpush1.bf16.msra.mxu0 %v315
    %1865 = vmatprep.subr.bf16.mxu0 %v312
    %1866 = vmatpush1.bf16.msra.mxu0 %v311
    %1867 = vmatprep.subr.bf16.mxu0 0
    %1868 = vmatpush2.bf16.msra.mxu0 0
    %1869 = vmatprep.subr.bf16.mxu0 0
    %1870 = vmatpush2.bf16.msra.mxu0 0
    %1871 = vmatprep.subr.bf16.mxu0 0
    %1872 = vmatpush2.bf16.msra.mxu0 0
    %1873 = vmatprep.subr.bf16.mxu0 0
    %1874 = vmatpush2.bf16.msra.mxu0 0
    %1875 = vmatprep.subr.bf16.mxu0 0
    %1876 = vmatpush2.bf16.msra.mxu0 0
    %1877 = vmatprep.subr.bf16.mxu0 %v408
    %1878 = vmatpush2.bf16.msra.mxu0 %v405
    %1879 = vmatprep.subr.bf16.mxu0 %v348
    %1880 = vmatpush2.bf16.msra.mxu0 %v347
    %1881 = vmatprep.subr.bf16.mxu0 %v344
    %1882 = vmatpush2.bf16.msra.mxu0 %v343
    %1883 = vmatprep.mubr.bf16.mxu0 %v1806
    %1884 = vmatmul.mubr.bf16.gmra.mxu0 %v1802
    %v1885 = vpop.f32.mrf.mxu0
    %v1886 = vadd.f32 0.0, %v1885
    %v1887 = vpop.f32.mrf.mxu0
    %v1888 = vadd.f32 0.0, %v1887
    %v1889 = vpop.f32.mrf.mxu0
    %v1890 = vadd.f32 0.0, %v1889
    %v1891 = vpop.f32.mrf.mxu0
    %v1892 = vadd.f32 0.0, %v1891
    %1893 = vdwg.mxu0
    %v1894 = vmax.f32 %v1843, %v1845
    %v1895 = vmax.f32 %v1847, %v1849
    %v1896 = vmax.f32 %v1886, %v1888
    %v1897 = vmax.f32 %v1890, %v1892
    %v1898 = vmax.f32 %v1894, %v1896
    %v1899 = vmax.f32 %v1895, %v1897
    %v1900 = vadd.f32 %v1898, %v506
    %v1901 = vadd.f32 %v1899, %v506
    %v1902 = vmax.f32 %v1900, 0.0
    %v1903 = vmax.f32 %v1901, 0.0
    %v1904 = vpack.c.bf16 %v1903, %v1902
    %v1906 = vunpack.c.l.b16 %v1904
    %v1907 = vunpack.c.h.b16 %v1904
    %v1908 = vpack.c.b16 %v1906, %v1906
    %v1909 = vpack.c.b16 %v1907, %v1907
    %1912 = vst [vmem:[#allocation2 + $0x2c] sm:$0xf] %v1908
    %1913 = vst [vmem:[#allocation2 + $0x5c] sm:$0xf] %v1909
    %v1914 = vld [vmem:[#allocation2] sm:$0xff]
    %v1915 = vld [vmem:[#allocation2 + $0x8] sm:$0xff]
    %v1916 = vld [vmem:[#allocation2 + $0x10] sm:$0xff]
    %v1917 = vld [vmem:[#allocation2 + $0x18] sm:$0xff]
    %v1918 = vld [vmem:[#allocation2 + $0x20] sm:$0xff]
    %v1919 = vld [vmem:[#allocation2 + $0x28] sm:$0xff]
    %v1920 = vld [vmem:[#allocation2 + $0x30] sm:$0xff]
    %v1921 = vld [vmem:[#allocation2 + $0x38] sm:$0xff]
    %v1922 = vld [vmem:[#allocation2 + $0x40] sm:$0xff]
    %v1923 = vld [vmem:[#allocation2 + $0x48] sm:$0xff]
    %v1924 = vld [vmem:[#allocation2 + $0x50] sm:$0xff]
    %v1925 = vld [vmem:[#allocation2 + $0x58] sm:$0xff]
    %v1926 = vld [vmem:[#allocation7] sm:$0xff]
    %v1927 = vld [vmem:[#allocation7 + $0x8] sm:$0xf]
    %v1928 = vld [vmem:[#allocation7 + $0x30] sm:$0xff]
    %v1929 = vld [vmem:[#allocation7 + $0x38] sm:$0xf]
    %v1930 = vld [vmem:[#allocation7 + $0x60] sm:$0xff]
    %v1931 = vld [vmem:[#allocation7 + $0x68] sm:$0xf]
    %v1932 = vld [vmem:[#allocation7 + $0x90] sm:$0xff]
    %v1933 = vld [vmem:[#allocation7 + $0x98] sm:$0xf]
    %v1934 = vld [vmem:[#allocation7 + $0xc0] sm:$0xff]
    %v1935 = vld [vmem:[#allocation7 + $0xc8] sm:$0xf]
    %v1936 = vld [vmem:[#allocation7 + $0xf0] sm:$0xff]
    %v1937 = vld [vmem:[#allocation7 + $0xf8] sm:$0xf]
    %v1938 = vld [vmem:[#allocation7 + $0x120] sm:$0xff]
    %v1939 = vld [vmem:[#allocation7 + $0x128] sm:$0xf]
    %v1940 = vld [vmem:[#allocation7 + $0x150] sm:$0xff]
    %v1941 = vld [vmem:[#allocation7 + $0x158] sm:$0xf]
    %v1942 = vld [vmem:[#allocation7 + $0x180] sm:$0xff]
    %v1943 = vld [vmem:[#allocation7 + $0x188] sm:$0xf]
    %v1944 = vld [vmem:[#allocation7 + $0x1b0] sm:$0xff]
    %v1945 = vld [vmem:[#allocation7 + $0x1b8] sm:$0xf]
    %v1946 = vld [vmem:[#allocation7 + $0x1e0] sm:$0xff]
    %v1947 = vld [vmem:[#allocation7 + $0x1e8] sm:$0xf]
    %v1948 = vld [vmem:[#allocation7 + $0x210] sm:$0xff]
    %v1949 = vld [vmem:[#allocation7 + $0x218] sm:$0xf]
    %v1950 = vld [vmem:[#allocation7 + $0x240] sm:$0xff]
    %v1951 = vld [vmem:[#allocation7 + $0x248] sm:$0xf]
    %v1952 = vld [vmem:[#allocation7 + $0x270] sm:$0xff]
    %v1953 = vld [vmem:[#allocation7 + $0x278] sm:$0xf]
    %v1954 = vld [vmem:[#allocation7 + $0x2a0] sm:$0xff]
    %v1955 = vld [vmem:[#allocation7 + $0x2a8] sm:$0xf]
    %v1956 = vld [vmem:[#allocation7 + $0x2d0] sm:$0xff]
    %v1957 = vld [vmem:[#allocation7 + $0x2d8] sm:$0xf]
    %v1958 = vld [vmem:[#allocation7 + $0x300] sm:$0xff]
    %v1959 = vld [vmem:[#allocation7 + $0x308] sm:$0xf]
    %v1960 = vld [vmem:[#allocation7 + $0x330] sm:$0xff]
    %v1961 = vld [vmem:[#allocation7 + $0x338] sm:$0xf]
    %v1962 = vld [vmem:[#allocation7 + $0x360] sm:$0xff]
    %v1963 = vld [vmem:[#allocation7 + $0x368] sm:$0xf]
    %v1964 = vld [vmem:[#allocation7 + $0x390] sm:$0xff]
    %v1965 = vld [vmem:[#allocation7 + $0x398] sm:$0xf]
    %v1966 = vld [vmem:[#allocation7 + $0x3c0] sm:$0xff]
    %v1967 = vld [vmem:[#allocation7 + $0x3c8] sm:$0xf]
    %v1968 = vld [vmem:[#allocation7 + $0x3f0] sm:$0xff]
    %v1969 = vld [vmem:[#allocation7 + $0x3f8] sm:$0xf]
    %v1970 = vld [vmem:[#allocation7 + $0x420] sm:$0xff]
    %v1971 = vld [vmem:[#allocation7 + $0x428] sm:$0xf]
    %v1972 = vld [vmem:[#allocation7 + $0x450] sm:$0xff]
    %v1973 = vld [vmem:[#allocation7 + $0x458] sm:$0xf]
    %v1974 = vld [vmem:[#allocation7 + $0x480] sm:$0xff]
    %v1975 = vld [vmem:[#allocation7 + $0x488] sm:$0xf]
    %v1976 = vld [vmem:[#allocation7 + $0x4b0] sm:$0xff]
    %v1977 = vld [vmem:[#allocation7 + $0x4b8] sm:$0xf]
    %v1978 = vld [vmem:[#allocation7 + $0x4e0] sm:$0xff]
    %v1979 = vld [vmem:[#allocation7 + $0x4e8] sm:$0xf]
    %v1980 = vld [vmem:[#allocation7 + $0x510] sm:$0xff]
    %v1981 = vld [vmem:[#allocation7 + $0x518] sm:$0xf]
    %v1982 = vld [vmem:[#allocation7 + $0x540] sm:$0xff]
    %v1983 = vld [vmem:[#allocation7 + $0x548] sm:$0xf]
    %v1984 = vld [vmem:[#allocation7 + $0x570] sm:$0xff]
    %v1985 = vld [vmem:[#allocation7 + $0x578] sm:$0xf]
    %v1986 = vld [vmem:[#allocation7 + $0x5a0] sm:$0xff]
    %v1987 = vld [vmem:[#allocation7 + $0x5a8] sm:$0xf]
    %v1988 = vld [vmem:[#allocation7 + $0x5d0] sm:$0xff]
    %v1989 = vld [vmem:[#allocation7 + $0x5d8] sm:$0xf]
    %v1990 = vld [vmem:[#allocation7 + $0x600] sm:$0xff]
    %v1991 = vld [vmem:[#allocation7 + $0x608] sm:$0xf]
    %v1992 = vld [vmem:[#allocation7 + $0x630] sm:$0xff]
    %v1993 = vld [vmem:[#allocation7 + $0x638] sm:$0xf]
    %v1994 = vld [vmem:[#allocation7 + $0x660] sm:$0xff]
    %v1995 = vld [vmem:[#allocation7 + $0x668] sm:$0xf]
    %v1996 = vld [vmem:[#allocation7 + $0x690] sm:$0xff]
    %v1997 = vld [vmem:[#allocation7 + $0x698] sm:$0xf]
    %v1998 = vld [vmem:[#allocation7 + $0x6c0] sm:$0xff]
    %v1999 = vld [vmem:[#allocation7 + $0x6c8] sm:$0xf]
    %v2000 = vld [vmem:[#allocation7 + $0x6f0] sm:$0xff]
    %v2001 = vld [vmem:[#allocation7 + $0x6f8] sm:$0xf]
    %v2002 = vld [vmem:[#allocation7 + $0x720] sm:$0xff]
    %v2003 = vld [vmem:[#allocation7 + $0x728] sm:$0xf]
    %v2004 = vld [vmem:[#allocation7 + $0x750] sm:$0xff]
    %v2005 = vld [vmem:[#allocation7 + $0x758] sm:$0xf]
    %v2006 = vld [vmem:[#allocation7 + $0x780] sm:$0xff]
    %v2007 = vld [vmem:[#allocation7 + $0x788] sm:$0xf]
    %v2008 = vld [vmem:[#allocation7 + $0x7b0] sm:$0xff]
    %v2009 = vld [vmem:[#allocation7 + $0x7b8] sm:$0xf]
    %v2010 = vld [vmem:[#allocation7 + $0x7e0] sm:$0xff]
    %v2011 = vld [vmem:[#allocation7 + $0x7e8] sm:$0xf]
    %v2012 = vld [vmem:[#allocation7 + $0x810] sm:$0xff]
    %v2013 = vld [vmem:[#allocation7 + $0x818] sm:$0xf]
    %v2014 = vld [vmem:[#allocation7 + $0x840] sm:$0xff]
    %v2015 = vld [vmem:[#allocation7 + $0x848] sm:$0xf]
    %v2016 = vld [vmem:[#allocation7 + $0x870] sm:$0xff]
    %v2017 = vld [vmem:[#allocation7 + $0x878] sm:$0xf]
    %v2018 = vld [vmem:[#allocation7 + $0x8a0] sm:$0xff]
    %v2019 = vld [vmem:[#allocation7 + $0x8a8] sm:$0xf]
    %v2020 = vld [vmem:[#allocation7 + $0x8d0] sm:$0xff]
    %v2021 = vld [vmem:[#allocation7 + $0x8d8] sm:$0xf]
    %v2022 = vld [vmem:[#allocation7 + $0x900] sm:$0xff]
    %v2023 = vld [vmem:[#allocation7 + $0x908] sm:$0xf]
    %v2024 = vld [vmem:[#allocation7 + $0x930] sm:$0xff]
    %v2025 = vld [vmem:[#allocation7 + $0x938] sm:$0xf]
    %v2026 = vld [vmem:[#allocation7 + $0x960] sm:$0xff]
    %v2027 = vld [vmem:[#allocation7 + $0x968] sm:$0xf]
    %v2028 = vld [vmem:[#allocation7 + $0x990] sm:$0xff]
    %v2029 = vld [vmem:[#allocation7 + $0x998] sm:$0xf]
    %v2030 = vld [vmem:[#allocation7 + $0x9c0] sm:$0xff]
    %v2031 = vld [vmem:[#allocation7 + $0x9c8] sm:$0xf]
    %v2032 = vld [vmem:[#allocation7 + $0x9f0] sm:$0xff]
    %v2033 = vld [vmem:[#allocation7 + $0x9f8] sm:$0xf]
    %v2034 = vld [vmem:[#allocation7 + $0xa20] sm:$0xff]
    %v2035 = vld [vmem:[#allocation7 + $0xa28] sm:$0xf]
    %v2036 = vld [vmem:[#allocation7 + $0xa50] sm:$0xff]
    %v2037 = vld [vmem:[#allocation7 + $0xa58] sm:$0xf]
    %v2038 = vld [vmem:[#allocation7 + $0xa80] sm:$0xff]
    %v2039 = vld [vmem:[#allocation7 + $0xa88] sm:$0xf]
    %v2040 = vld [vmem:[#allocation7 + $0xab0] sm:$0xff]
    %v2041 = vld [vmem:[#allocation7 + $0xab8] sm:$0xf]
    %v2042 = vld [vmem:[#allocation7 + $0xae0] sm:$0xff]
    %v2043 = vld [vmem:[#allocation7 + $0xae8] sm:$0xf]
    %v2044 = vld [vmem:[#allocation7 + $0xb10] sm:$0xff]
    %v2045 = vld [vmem:[#allocation7 + $0xb18] sm:$0xf]
    %v2046 = vld [vmem:[#allocation7 + $0xb40] sm:$0xff]
    %v2047 = vld [vmem:[#allocation7 + $0xb48] sm:$0xf]
    %v2048 = vld [vmem:[#allocation7 + $0xb70] sm:$0xff]
    %v2049 = vld [vmem:[#allocation7 + $0xb78] sm:$0xf]
    %v2050 = vld [vmem:[#allocation7 + $0xba0] sm:$0xff]
    %v2051 = vld [vmem:[#allocation7 + $0xba8] sm:$0xf]
    %v2052 = vld [vmem:[#allocation7 + $0xbd0] sm:$0xff]
    %v2053 = vld [vmem:[#allocation7 + $0xbd8] sm:$0xf]
    %v2054 = vld [vmem:[#allocation7 + $0xc00] sm:$0xff]
    %v2055 = vld [vmem:[#allocation7 + $0xc08] sm:$0xf]
    %v2056 = vld [vmem:[#allocation7 + $0xc30] sm:$0xff]
    %v2057 = vld [vmem:[#allocation7 + $0xc38] sm:$0xf]
    %v2058 = vld [vmem:[#allocation7 + $0xc60] sm:$0xff]
    %v2059 = vld [vmem:[#allocation7 + $0xc68] sm:$0xf]
    %v2060 = vld [vmem:[#allocation7 + $0xc90] sm:$0xff]
    %v2061 = vld [vmem:[#allocation7 + $0xc98] sm:$0xf]
    %v2062 = vld [vmem:[#allocation7 + $0xcc0] sm:$0xff]
    %v2063 = vld [vmem:[#allocation7 + $0xcc8] sm:$0xf]
    %v2064 = vld [vmem:[#allocation7 + $0xcf0] sm:$0xff]
    %v2065 = vld [vmem:[#allocation7 + $0xcf8] sm:$0xf]
    %v2066 = vld [vmem:[#allocation7 + $0xd20] sm:$0xff]
    %v2067 = vld [vmem:[#allocation7 + $0xd28] sm:$0xf]
    %v2068 = vld [vmem:[#allocation7 + $0xd50] sm:$0xff]
    %v2069 = vld [vmem:[#allocation7 + $0xd58] sm:$0xf]
    %v2070 = vld [vmem:[#allocation7 + $0xd80] sm:$0xff]
    %v2071 = vld [vmem:[#allocation7 + $0xd88] sm:$0xf]
    %v2072 = vld [vmem:[#allocation7 + $0xdb0] sm:$0xff]
    %v2073 = vld [vmem:[#allocation7 + $0xdb8] sm:$0xf]
    %v2074 = vld [vmem:[#allocation7 + $0xde0] sm:$0xff]
    %v2075 = vld [vmem:[#allocation7 + $0xde8] sm:$0xf]
    %v2076 = vld [vmem:[#allocation7 + $0xe10] sm:$0xff]
    %v2077 = vld [vmem:[#allocation7 + $0xe18] sm:$0xf]
    %v2078 = vld [vmem:[#allocation7 + $0xe40] sm:$0xff]
    %v2079 = vld [vmem:[#allocation7 + $0xe48] sm:$0xf]
    %v2080 = vld [vmem:[#allocation7 + $0xe70] sm:$0xff]
    %v2081 = vld [vmem:[#allocation7 + $0xe78] sm:$0xf]
    %v2082 = vld [vmem:[#allocation7 + $0xea0] sm:$0xff]
    %v2083 = vld [vmem:[#allocation7 + $0xea8] sm:$0xf]
    %v2084 = vld [vmem:[#allocation7 + $0xed0] sm:$0xff]
    %v2085 = vld [vmem:[#allocation7 + $0xed8] sm:$0xf]
    %v2086 = vld [vmem:[#allocation7 + $0xf00] sm:$0xff]
    %v2087 = vld [vmem:[#allocation7 + $0xf08] sm:$0xf]
    %v2088 = vld [vmem:[#allocation7 + $0xf30] sm:$0xff]
    %v2089 = vld [vmem:[#allocation7 + $0xf38] sm:$0xf]
    %v2090 = vld [vmem:[#allocation7 + $0xf60] sm:$0xff]
    %v2091 = vld [vmem:[#allocation7 + $0xf68] sm:$0xf]
    %v2092 = vld [vmem:[#allocation7 + $0xf90] sm:$0xff]
    %v2093 = vld [vmem:[#allocation7 + $0xf98] sm:$0xf]
    %v2094 = vld [vmem:[#allocation7 + $0xfc0] sm:$0xff]
    %v2095 = vld [vmem:[#allocation7 + $0xfc8] sm:$0xf]
    %v2096 = vld [vmem:[#allocation7 + $0xff0] sm:$0xff]
    %v2097 = vld [vmem:[#allocation7 + $0xff8] sm:$0xf]
    %v2098 = vld [vmem:[#allocation7 + $0x1020] sm:$0xff]
    %v2099 = vld [vmem:[#allocation7 + $0x1028] sm:$0xf]
    %v2100 = vld [vmem:[#allocation7 + $0x1050] sm:$0xff]
    %v2101 = vld [vmem:[#allocation7 + $0x1058] sm:$0xf]
    %v2102 = vld [vmem:[#allocation7 + $0x1080] sm:$0xff]
    %v2103 = vld [vmem:[#allocation7 + $0x1088] sm:$0xf]
    %v2104 = vld [vmem:[#allocation7 + $0x10b0] sm:$0xff]
    %v2105 = vld [vmem:[#allocation7 + $0x10b8] sm:$0xf]
    %v2106 = vld [vmem:[#allocation7 + $0x10e0] sm:$0xff]
    %v2107 = vld [vmem:[#allocation7 + $0x10e8] sm:$0xf]
    %v2108 = vld [vmem:[#allocation7 + $0x1110] sm:$0xff]
    %v2109 = vld [vmem:[#allocation7 + $0x1118] sm:$0xf]
    %v2110 = vld [vmem:[#allocation7 + $0x1140] sm:$0xff]
    %v2111 = vld [vmem:[#allocation7 + $0x1148] sm:$0xf]
    %v2112 = vld [vmem:[#allocation7 + $0x1170] sm:$0xff]
    %v2113 = vld [vmem:[#allocation7 + $0x1178] sm:$0xf]
    %v2114 = vld [vmem:[#allocation7 + $0x11a0] sm:$0xff]
    %v2115 = vld [vmem:[#allocation7 + $0x11a8] sm:$0xf]
    %v2116 = vld [vmem:[#allocation7 + $0x11d0] sm:$0xff]
    %v2117 = vld [vmem:[#allocation7 + $0x11d8] sm:$0xf]
    %v2118 = vld [vmem:[#allocation7 + $0x1200] sm:$0xff]
    %v2119 = vld [vmem:[#allocation7 + $0x1208] sm:$0xf]
    %v2120 = vld [vmem:[#allocation7 + $0x1230] sm:$0xff]
    %v2121 = vld [vmem:[#allocation7 + $0x1238] sm:$0xf]
    %v2122 = vld [vmem:[#allocation7 + $0x1260] sm:$0xff]
    %v2123 = vld [vmem:[#allocation7 + $0x1268] sm:$0xf]
    %v2124 = vld [vmem:[#allocation7 + $0x1290] sm:$0xff]
    %v2125 = vld [vmem:[#allocation7 + $0x1298] sm:$0xf]
    %v2126 = vld [vmem:[#allocation7 + $0x12c0] sm:$0xff]
    %v2127 = vld [vmem:[#allocation7 + $0x12c8] sm:$0xf]
    %v2128 = vld [vmem:[#allocation7 + $0x12f0] sm:$0xff]
    %v2129 = vld [vmem:[#allocation7 + $0x12f8] sm:$0xf]
    %v2130 = vld [vmem:[#allocation7 + $0x1320] sm:$0xff]
    %v2131 = vld [vmem:[#allocation7 + $0x1328] sm:$0xf]
    %v2132 = vld [vmem:[#allocation7 + $0x1350] sm:$0xff]
    %v2133 = vld [vmem:[#allocation7 + $0x1358] sm:$0xf]
    %v2134 = vld [vmem:[#allocation7 + $0x1380] sm:$0xff]
    %v2135 = vld [vmem:[#allocation7 + $0x1388] sm:$0xf]
    %v2136 = vld [vmem:[#allocation7 + $0x13b0] sm:$0xff]
    %v2137 = vld [vmem:[#allocation7 + $0x13b8] sm:$0xf]
    %v2138 = vld [vmem:[#allocation7 + $0x13e0] sm:$0xff]
    %v2139 = vld [vmem:[#allocation7 + $0x13e8] sm:$0xf]
    %v2140 = vld [vmem:[#allocation7 + $0x1410] sm:$0xff]
    %v2141 = vld [vmem:[#allocation7 + $0x1418] sm:$0xf]
    %v2142 = vld [vmem:[#allocation7 + $0x1440] sm:$0xff]
    %v2143 = vld [vmem:[#allocation7 + $0x1448] sm:$0xf]
    %v2144 = vld [vmem:[#allocation7 + $0x1470] sm:$0xff]
    %v2145 = vld [vmem:[#allocation7 + $0x1478] sm:$0xf]
    %v2146 = vld [vmem:[#allocation7 + $0x14a0] sm:$0xff]
    %v2147 = vld [vmem:[#allocation7 + $0x14a8] sm:$0xf]
    %v2148 = vld [vmem:[#allocation7 + $0x14d0] sm:$0xff]
    %v2149 = vld [vmem:[#allocation7 + $0x14d8] sm:$0xf]
    %v2150 = vld [vmem:[#allocation7 + $0x1500] sm:$0xff]
    %v2151 = vld [vmem:[#allocation7 + $0x1508] sm:$0xf]
    %v2152 = vld [vmem:[#allocation7 + $0x1530] sm:$0xff]
    %v2153 = vld [vmem:[#allocation7 + $0x1538] sm:$0xf]
    %v2154 = vld [vmem:[#allocation7 + $0x1560] sm:$0xff]
    %v2155 = vld [vmem:[#allocation7 + $0x1568] sm:$0xf]
    %v2156 = vld [vmem:[#allocation7 + $0x1590] sm:$0xff]
    %v2157 = vld [vmem:[#allocation7 + $0x1598] sm:$0xf]
    %v2158 = vld [vmem:[#allocation7 + $0x15c0] sm:$0xff]
    %v2159 = vld [vmem:[#allocation7 + $0x15c8] sm:$0xf]
    %v2160 = vld [vmem:[#allocation7 + $0x15f0] sm:$0xff]
    %v2161 = vld [vmem:[#allocation7 + $0x15f8] sm:$0xf]
    %v2162 = vld [vmem:[#allocation7 + $0x1620] sm:$0xff]
    %v2163 = vld [vmem:[#allocation7 + $0x1628] sm:$0xf]
    %v2164 = vld [vmem:[#allocation7 + $0x1650] sm:$0xff]
    %v2165 = vld [vmem:[#allocation7 + $0x1658] sm:$0xf]
    %v2166 = vld [vmem:[#allocation7 + $0x1680] sm:$0xff]
    %v2167 = vld [vmem:[#allocation7 + $0x1688] sm:$0xf]
    %v2168 = vld [vmem:[#allocation7 + $0x16b0] sm:$0xff]
    %v2169 = vld [vmem:[#allocation7 + $0x16b8] sm:$0xf]
    %v2170 = vld [vmem:[#allocation7 + $0x16e0] sm:$0xff]
    %v2171 = vld [vmem:[#allocation7 + $0x16e8] sm:$0xf]
    %v2172 = vld [vmem:[#allocation7 + $0x1710] sm:$0xff]
    %v2173 = vld [vmem:[#allocation7 + $0x1718] sm:$0xf]
    %v2174 = vld [vmem:[#allocation7 + $0x1740] sm:$0xff]
    %v2175 = vld [vmem:[#allocation7 + $0x1748] sm:$0xf]
    %v2176 = vld [vmem:[#allocation7 + $0x1770] sm:$0xff]
    %v2177 = vld [vmem:[#allocation7 + $0x1778] sm:$0xf]
    %v2178 = vld [vmem:[#allocation7 + $0x17a0] sm:$0xff]
    %v2179 = vld [vmem:[#allocation7 + $0x17a8] sm:$0xf]
    %v2180 = vld [vmem:[#allocation7 + $0x17d0] sm:$0xff]
    %v2181 = vld [vmem:[#allocation7 + $0x17d8] sm:$0xf]
    %v2182 = vld [vmem:[#allocation7 + $0x1800] sm:$0xff]
    %v2183 = vld [vmem:[#allocation7 + $0x1808] sm:$0xf]
    %v2184 = vld [vmem:[#allocation7 + $0x1830] sm:$0xff]
    %v2185 = vld [vmem:[#allocation7 + $0x1838] sm:$0xf]
    %v2186 = vld [vmem:[#allocation7 + $0x1860] sm:$0xff]
    %v2187 = vld [vmem:[#allocation7 + $0x1868] sm:$0xf]
    %v2188 = vld [vmem:[#allocation7 + $0x1890] sm:$0xff]
    %v2189 = vld [vmem:[#allocation7 + $0x1898] sm:$0xf]
    %v2190 = vld [vmem:[#allocation7 + $0x18c0] sm:$0xff]
    %v2191 = vld [vmem:[#allocation7 + $0x18c8] sm:$0xf]
    %v2192 = vld [vmem:[#allocation7 + $0x18f0] sm:$0xff]
    %v2193 = vld [vmem:[#allocation7 + $0x18f8] sm:$0xf]
    %v2194 = vld [vmem:[#allocation7 + $0x1920] sm:$0xff]
    %v2195 = vld [vmem:[#allocation7 + $0x1928] sm:$0xf]
    %v2196 = vld [vmem:[#allocation7 + $0x1950] sm:$0xff]
    %v2197 = vld [vmem:[#allocation7 + $0x1958] sm:$0xf]
    %v2198 = vld [vmem:[#allocation7 + $0x1980] sm:$0xff]
    %v2199 = vld [vmem:[#allocation7 + $0x1988] sm:$0xf]
    %v2200 = vld [vmem:[#allocation7 + $0x19b0] sm:$0xff]
    %v2201 = vld [vmem:[#allocation7 + $0x19b8] sm:$0xf]
    %v2202 = vld [vmem:[#allocation7 + $0x19e0] sm:$0xff]
    %v2203 = vld [vmem:[#allocation7 + $0x19e8] sm:$0xf]
    %v2204 = vld [vmem:[#allocation7 + $0x1a10] sm:$0xff]
    %v2205 = vld [vmem:[#allocation7 + $0x1a18] sm:$0xf]
    %v2206 = vld [vmem:[#allocation7 + $0x1a40] sm:$0xff]
    %v2207 = vld [vmem:[#allocation7 + $0x1a48] sm:$0xf]
    %v2208 = vld [vmem:[#allocation7 + $0x1a70] sm:$0xff]
    %v2209 = vld [vmem:[#allocation7 + $0x1a78] sm:$0xf]
    %v2210 = vld [vmem:[#allocation7 + $0x1aa0] sm:$0xff]
    %v2211 = vld [vmem:[#allocation7 + $0x1aa8] sm:$0xf]
    %v2212 = vld [vmem:[#allocation7 + $0x1ad0] sm:$0xff]
    %v2213 = vld [vmem:[#allocation7 + $0x1ad8] sm:$0xf]
    %v2214 = vld [vmem:[#allocation7 + $0x1b00] sm:$0xff]
    %v2215 = vld [vmem:[#allocation7 + $0x1b08] sm:$0xf]
    %v2216 = vld [vmem:[#allocation7 + $0x1b30] sm:$0xff]
    %v2217 = vld [vmem:[#allocation7 + $0x1b38] sm:$0xf]
    %v2218 = vld [vmem:[#allocation7 + $0x1b60] sm:$0xff]
    %v2219 = vld [vmem:[#allocation7 + $0x1b68] sm:$0xf]
    %v2220 = vld [vmem:[#allocation7 + $0x1b90] sm:$0xff]
    %v2221 = vld [vmem:[#allocation7 + $0x1b98] sm:$0xf]
    %v2222 = vld [vmem:[#allocation7 + $0x1bc0] sm:$0xff]
    %v2223 = vld [vmem:[#allocation7 + $0x1bc8] sm:$0xf]
    %v2224 = vld [vmem:[#allocation7 + $0x1bf0] sm:$0xff]
    %v2225 = vld [vmem:[#allocation7 + $0x1bf8] sm:$0xf]
    %v2226 = vld [vmem:[#allocation7 + $0x1c20] sm:$0xff]
    %v2227 = vld [vmem:[#allocation7 + $0x1c28] sm:$0xf]
    %v2228 = vld [vmem:[#allocation7 + $0x1c50] sm:$0xff]
    %v2229 = vld [vmem:[#allocation7 + $0x1c58] sm:$0xf]
    %v2230 = vld [vmem:[#allocation7 + $0x1c80] sm:$0xff]
    %v2231 = vld [vmem:[#allocation7 + $0x1c88] sm:$0xf]
    %v2232 = vld [vmem:[#allocation7 + $0x1cb0] sm:$0xff]
    %v2233 = vld [vmem:[#allocation7 + $0x1cb8] sm:$0xf]
    %v2234 = vld [vmem:[#allocation7 + $0x1ce0] sm:$0xff]
    %v2235 = vld [vmem:[#allocation7 + $0x1ce8] sm:$0xf]
    %v2236 = vld [vmem:[#allocation7 + $0x1d10] sm:$0xff]
    %v2237 = vld [vmem:[#allocation7 + $0x1d18] sm:$0xf]
    %v2238 = vld [vmem:[#allocation7 + $0x1d40] sm:$0xff]
    %v2239 = vld [vmem:[#allocation7 + $0x1d48] sm:$0xf]
    %v2240 = vld [vmem:[#allocation7 + $0x1d70] sm:$0xff]
    %v2241 = vld [vmem:[#allocation7 + $0x1d78] sm:$0xf]
    %v2242 = vld [vmem:[#allocation7 + $0x1da0] sm:$0xff]
    %v2243 = vld [vmem:[#allocation7 + $0x1da8] sm:$0xf]
    %v2244 = vld [vmem:[#allocation7 + $0x1dd0] sm:$0xff]
    %v2245 = vld [vmem:[#allocation7 + $0x1dd8] sm:$0xf]
    %v2246 = vld [vmem:[#allocation7 + $0x1e00] sm:$0xff]
    %v2247 = vld [vmem:[#allocation7 + $0x1e08] sm:$0xf]
    %v2248 = vld [vmem:[#allocation7 + $0x1e30] sm:$0xff]
    %v2249 = vld [vmem:[#allocation7 + $0x1e38] sm:$0xf]
    %v2250 = vld [vmem:[#allocation7 + $0x1e60] sm:$0xff]
    %v2251 = vld [vmem:[#allocation7 + $0x1e68] sm:$0xf]
    %v2252 = vld [vmem:[#allocation7 + $0x1e90] sm:$0xff]
    %v2253 = vld [vmem:[#allocation7 + $0x1e98] sm:$0xf]
    %v2254 = vld [vmem:[#allocation7 + $0x1ec0] sm:$0xff]
    %v2255 = vld [vmem:[#allocation7 + $0x1ec8] sm:$0xf]
    %v2256 = vld [vmem:[#allocation7 + $0x1ef0] sm:$0xff]
    %v2257 = vld [vmem:[#allocation7 + $0x1ef8] sm:$0xf]
    %v2258 = vld [vmem:[#allocation7 + $0x1f20] sm:$0xff]
    %v2259 = vld [vmem:[#allocation7 + $0x1f28] sm:$0xf]
    %v2260 = vld [vmem:[#allocation7 + $0x1f50] sm:$0xff]
    %v2261 = vld [vmem:[#allocation7 + $0x1f58] sm:$0xf]
    %v2262 = vld [vmem:[#allocation7 + $0x1f80] sm:$0xff]
    %v2263 = vld [vmem:[#allocation7 + $0x1f88] sm:$0xf]
    %v2264 = vld [vmem:[#allocation7 + $0x1fb0] sm:$0xff]
    %v2265 = vld [vmem:[#allocation7 + $0x1fb8] sm:$0xf]
    %v2266 = vld [vmem:[#allocation7 + $0x1fe0] sm:$0xff]
    %v2267 = vld [vmem:[#allocation7 + $0x1fe8] sm:$0xf]
    %v2268 = vld [vmem:[#allocation7 + $0x2010] sm:$0xff]
    %v2269 = vld [vmem:[#allocation7 + $0x2018] sm:$0xf]
    %v2270 = vld [vmem:[#allocation7 + $0x2040] sm:$0xff]
    %v2271 = vld [vmem:[#allocation7 + $0x2048] sm:$0xf]
    %v2272 = vld [vmem:[#allocation7 + $0x2070] sm:$0xff]
    %v2273 = vld [vmem:[#allocation7 + $0x2078] sm:$0xf]
    %v2274 = vld [vmem:[#allocation7 + $0x20a0] sm:$0xff]
    %v2275 = vld [vmem:[#allocation7 + $0x20a8] sm:$0xf]
    %v2276 = vld [vmem:[#allocation7 + $0x20d0] sm:$0xff]
    %v2277 = vld [vmem:[#allocation7 + $0x20d8] sm:$0xf]
    %v2278 = vld [vmem:[#allocation7 + $0x2100] sm:$0xff]
    %v2279 = vld [vmem:[#allocation7 + $0x2108] sm:$0xf]
    %v2280 = vld [vmem:[#allocation7 + $0x2130] sm:$0xff]
    %v2281 = vld [vmem:[#allocation7 + $0x2138] sm:$0xf]
    %v2282 = vld [vmem:[#allocation7 + $0x2160] sm:$0xff]
    %v2283 = vld [vmem:[#allocation7 + $0x2168] sm:$0xf]
    %v2284 = vld [vmem:[#allocation7 + $0x2190] sm:$0xff]
    %v2285 = vld [vmem:[#allocation7 + $0x2198] sm:$0xf]
    %v2286 = vld [vmem:[#allocation7 + $0x21c0] sm:$0xff]
    %v2287 = vld [vmem:[#allocation7 + $0x21c8] sm:$0xf]
    %v2288 = vld [vmem:[#allocation7 + $0x21f0] sm:$0xff]
    %v2289 = vld [vmem:[#allocation7 + $0x21f8] sm:$0xf]
    %v2290 = vld [vmem:[#allocation7 + $0x2220] sm:$0xff]
    %v2291 = vld [vmem:[#allocation7 + $0x2228] sm:$0xf]
    %v2292 = vld [vmem:[#allocation7 + $0x2250] sm:$0xff]
    %v2293 = vld [vmem:[#allocation7 + $0x2258] sm:$0xf]
    %v2294 = vld [vmem:[#allocation7 + $0x2280] sm:$0xff]
    %v2295 = vld [vmem:[#allocation7 + $0x2288] sm:$0xf]
    %v2296 = vld [vmem:[#allocation7 + $0x22b0] sm:$0xff]
    %v2297 = vld [vmem:[#allocation7 + $0x22b8] sm:$0xf]
    %v2298 = vld [vmem:[#allocation7 + $0x22e0] sm:$0xff]
    %v2299 = vld [vmem:[#allocation7 + $0x22e8] sm:$0xf]
    %v2300 = vld [vmem:[#allocation7 + $0x2310] sm:$0xff]
    %v2301 = vld [vmem:[#allocation7 + $0x2318] sm:$0xf]
    %v2302 = vld [vmem:[#allocation7 + $0x2340] sm:$0xff]
    %v2303 = vld [vmem:[#allocation7 + $0x2348] sm:$0xf]
    %v2304 = vld [vmem:[#allocation7 + $0x2370] sm:$0xff]
    %v2305 = vld [vmem:[#allocation7 + $0x2378] sm:$0xf]
    %v2306 = vld [vmem:[#allocation7 + $0x23a0] sm:$0xff]
    %v2307 = vld [vmem:[#allocation7 + $0x23a8] sm:$0xf]
    %v2308 = vld [vmem:[#allocation7 + $0x23d0] sm:$0xff]
    %v2309 = vld [vmem:[#allocation7 + $0x23d8] sm:$0xf]
    %v2322 = vunpack.c.l.b16 %v1914
    %v2323 = vunpack.c.h.b16 %v1914
    %v2324 = vunpack.c.l.b16 %v1915
    %v2325 = vunpack.c.h.b16 %v1915
    %v2326 = vunpack.c.l.b16 %v1916
    %v2327 = vunpack.c.h.b16 %v1916
    %v2328 = vunpack.c.l.b16 %v1917
    %v2329 = vunpack.c.h.b16 %v1917
    %v2330 = vunpack.c.l.b16 %v1918
    %v2331 = vunpack.c.h.b16 %v1918
    %v2332 = vunpack.c.l.b16 %v1919
    %v2333 = vunpack.c.h.b16 %v1919
    %v2334 = vunpack.c.l.b16 %v1920
    %v2335 = vunpack.c.h.b16 %v1920
    %v2336 = vunpack.c.l.b16 %v1921
    %v2337 = vunpack.c.h.b16 %v1921
    %v2338 = vunpack.c.l.b16 %v1922
    %v2339 = vunpack.c.h.b16 %v1922
    %v2340 = vunpack.c.l.b16 %v1923
    %v2341 = vunpack.c.h.b16 %v1923
    %v2342 = vunpack.c.l.b16 %v1924
    %v2343 = vunpack.c.h.b16 %v1924
    %v2344 = vunpack.c.l.b16 %v1925
    %v2345 = vunpack.c.h.b16 %v1925
    %v2346 = vpack.c.b16 %v2334, %v2322
    %v2347 = vpack.c.b16 %v2335, %v2323
    %v2348 = vpack.c.b16 %v2336, %v2324
    %v2349 = vpack.c.b16 %v2337, %v2325
    %v2350 = vpack.c.b16 %v2338, %v2326
    %v2351 = vpack.c.b16 %v2339, %v2327
    %v2352 = vpack.c.b16 %v2340, %v2328
    %v2353 = vpack.c.b16 %v2341, %v2329
    %v2354 = vpack.c.b16 %v2342, %v2330
    %v2355 = vpack.c.b16 %v2343, %v2331
    %v2356 = vpack.c.b16 %v2344, %v2332
    %v2357 = vpack.c.b16 %v2345, %v2333
    %v2754 = vunpack.c.l.b16 %v1926
    %v2755 = vunpack.c.h.b16 %v1926
    %v2756 = vunpack.c.l.b16 %v1927
    %v2757 = vunpack.c.l.b16 %v1928
    %v2758 = vunpack.c.h.b16 %v1928
    %v2759 = vunpack.c.l.b16 %v1929
    %v2760 = vunpack.c.l.b16 %v1930
    %v2761 = vunpack.c.h.b16 %v1930
    %v2762 = vunpack.c.l.b16 %v1931
    %v2763 = vunpack.c.l.b16 %v1932
    %v2764 = vunpack.c.h.b16 %v1932
    %v2765 = vunpack.c.l.b16 %v1933
    %v2766 = vunpack.c.l.b16 %v1934
    %v2767 = vunpack.c.h.b16 %v1934
    %v2768 = vunpack.c.l.b16 %v1935
    %v2769 = vunpack.c.l.b16 %v1936
    %v2770 = vunpack.c.h.b16 %v1936
    %v2771 = vunpack.c.l.b16 %v1937
    %v2772 = vunpack.c.l.b16 %v1938
    %v2773 = vunpack.c.h.b16 %v1938
    %v2774 = vunpack.c.l.b16 %v1939
    %v2775 = vunpack.c.l.b16 %v1940
    %v2776 = vunpack.c.h.b16 %v1940
    %v2777 = vunpack.c.l.b16 %v1941
    %v2778 = vunpack.c.l.b16 %v1942
    %v2779 = vunpack.c.h.b16 %v1942
    %v2780 = vunpack.c.l.b16 %v1943
    %v2781 = vunpack.c.l.b16 %v1944
    %v2782 = vunpack.c.h.b16 %v1944
    %v2783 = vunpack.c.l.b16 %v1945
    %v2784 = vunpack.c.l.b16 %v1946
    %v2785 = vunpack.c.h.b16 %v1946
    %v2786 = vunpack.c.l.b16 %v1947
    %v2787 = vunpack.c.l.b16 %v1948
    %v2788 = vunpack.c.h.b16 %v1948
    %v2789 = vunpack.c.l.b16 %v1949
    %v2790 = vunpack.c.l.b16 %v1950
    %v2791 = vunpack.c.h.b16 %v1950
    %v2792 = vunpack.c.l.b16 %v1951
    %v2793 = vunpack.c.l.b16 %v1952
    %v2794 = vunpack.c.h.b16 %v1952
    %v2795 = vunpack.c.l.b16 %v1953
    %v2796 = vunpack.c.l.b16 %v1954
    %v2797 = vunpack.c.h.b16 %v1954
    %v2798 = vunpack.c.l.b16 %v1955
    %v2799 = vunpack.c.l.b16 %v1956
    %v2800 = vunpack.c.h.b16 %v1956
    %v2801 = vunpack.c.l.b16 %v1957
    %v2802 = vunpack.c.l.b16 %v1958
    %v2803 = vunpack.c.h.b16 %v1958
    %v2804 = vunpack.c.l.b16 %v1959
    %v2805 = vunpack.c.l.b16 %v1960
    %v2806 = vunpack.c.h.b16 %v1960
    %v2807 = vunpack.c.l.b16 %v1961
    %v2808 = vunpack.c.l.b16 %v1962
    %v2809 = vunpack.c.h.b16 %v1962
    %v2810 = vunpack.c.l.b16 %v1963
    %v2811 = vunpack.c.l.b16 %v1964
    %v2812 = vunpack.c.h.b16 %v1964
    %v2813 = vunpack.c.l.b16 %v1965
    %v2814 = vunpack.c.l.b16 %v1966
    %v2815 = vunpack.c.h.b16 %v1966
    %v2816 = vunpack.c.l.b16 %v1967
    %v2817 = vunpack.c.l.b16 %v1968
    %v2818 = vunpack.c.h.b16 %v1968
    %v2819 = vunpack.c.l.b16 %v1969
    %v2820 = vunpack.c.l.b16 %v1970
    %v2821 = vunpack.c.h.b16 %v1970
    %v2822 = vunpack.c.l.b16 %v1971
    %v2823 = vunpack.c.l.b16 %v1972
    %v2824 = vunpack.c.h.b16 %v1972
    %v2825 = vunpack.c.l.b16 %v1973
    %v2826 = vunpack.c.l.b16 %v1974
    %v2827 = vunpack.c.h.b16 %v1974
    %v2828 = vunpack.c.l.b16 %v1975
    %v2829 = vunpack.c.l.b16 %v1976
    %v2830 = vunpack.c.h.b16 %v1976
    %v2831 = vunpack.c.l.b16 %v1977
    %v2832 = vunpack.c.l.b16 %v1978
    %v2833 = vunpack.c.h.b16 %v1978
    %v2834 = vunpack.c.l.b16 %v1979
    %v2835 = vunpack.c.l.b16 %v1980
    %v2836 = vunpack.c.h.b16 %v1980
    %v2837 = vunpack.c.l.b16 %v1981
    %v2838 = vunpack.c.l.b16 %v1982
    %v2839 = vunpack.c.h.b16 %v1982
    %v2840 = vunpack.c.l.b16 %v1983
    %v2841 = vunpack.c.l.b16 %v1984
    %v2842 = vunpack.c.h.b16 %v1984
    %v2843 = vunpack.c.l.b16 %v1985
    %v2844 = vunpack.c.l.b16 %v1986
    %v2845 = vunpack.c.h.b16 %v1986
    %v2846 = vunpack.c.l.b16 %v1987
    %v2847 = vunpack.c.l.b16 %v1988
    %v2848 = vunpack.c.h.b16 %v1988
    %v2849 = vunpack.c.l.b16 %v1989
    %v2850 = vunpack.c.l.b16 %v1990
    %v2851 = vunpack.c.h.b16 %v1990
    %v2852 = vunpack.c.l.b16 %v1991
    %v2853 = vunpack.c.l.b16 %v1992
    %v2854 = vunpack.c.h.b16 %v1992
    %v2855 = vunpack.c.l.b16 %v1993
    %v2856 = vunpack.c.l.b16 %v1994
    %v2857 = vunpack.c.h.b16 %v1994
    %v2858 = vunpack.c.l.b16 %v1995
    %v2859 = vunpack.c.l.b16 %v1996
    %v2860 = vunpack.c.h.b16 %v1996
    %v2861 = vunpack.c.l.b16 %v1997
    %v2862 = vunpack.c.l.b16 %v1998
    %v2863 = vunpack.c.h.b16 %v1998
    %v2864 = vunpack.c.l.b16 %v1999
    %v2865 = vunpack.c.l.b16 %v2000
    %v2866 = vunpack.c.h.b16 %v2000
    %v2867 = vunpack.c.l.b16 %v2001
    %v2868 = vunpack.c.l.b16 %v2002
    %v2869 = vunpack.c.h.b16 %v2002
    %v2870 = vunpack.c.l.b16 %v2003
    %v2871 = vunpack.c.l.b16 %v2004
    %v2872 = vunpack.c.h.b16 %v2004
    %v2873 = vunpack.c.l.b16 %v2005
    %v2874 = vunpack.c.l.b16 %v2006
    %v2875 = vunpack.c.h.b16 %v2006
    %v2876 = vunpack.c.l.b16 %v2007
    %v2877 = vunpack.c.l.b16 %v2008
    %v2878 = vunpack.c.h.b16 %v2008
    %v2879 = vunpack.c.l.b16 %v2009
    %v2880 = vunpack.c.l.b16 %v2010
    %v2881 = vunpack.c.h.b16 %v2010
    %v2882 = vunpack.c.l.b16 %v2011
    %v2883 = vunpack.c.l.b16 %v2012
    %v2884 = vunpack.c.h.b16 %v2012
    %v2885 = vunpack.c.l.b16 %v2013
    %v2886 = vunpack.c.l.b16 %v2014
    %v2887 = vunpack.c.h.b16 %v2014
    %v2888 = vunpack.c.l.b16 %v2015
    %v2889 = vunpack.c.l.b16 %v2016
    %v2890 = vunpack.c.h.b16 %v2016
    %v2891 = vunpack.c.l.b16 %v2017
    %v2892 = vunpack.c.l.b16 %v2018
    %v2893 = vunpack.c.h.b16 %v2018
    %v2894 = vunpack.c.l.b16 %v2019
    %v2895 = vunpack.c.l.b16 %v2020
    %v2896 = vunpack.c.h.b16 %v2020
    %v2897 = vunpack.c.l.b16 %v2021
    %v2898 = vunpack.c.l.b16 %v2022
    %v2899 = vunpack.c.h.b16 %v2022
    %v2900 = vunpack.c.l.b16 %v2023
    %v2901 = vunpack.c.l.b16 %v2024
    %v2902 = vunpack.c.h.b16 %v2024
    %v2903 = vunpack.c.l.b16 %v2025
    %v2904 = vunpack.c.l.b16 %v2026
    %v2905 = vunpack.c.h.b16 %v2026
    %v2906 = vunpack.c.l.b16 %v2027
    %v2907 = vunpack.c.l.b16 %v2028
    %v2908 = vunpack.c.h.b16 %v2028
    %v2909 = vunpack.c.l.b16 %v2029
    %v2910 = vunpack.c.l.b16 %v2030
    %v2911 = vunpack.c.h.b16 %v2030
    %v2912 = vunpack.c.l.b16 %v2031
    %v2913 = vunpack.c.l.b16 %v2032
    %v2914 = vunpack.c.h.b16 %v2032
    %v2915 = vunpack.c.l.b16 %v2033
    %v2916 = vunpack.c.l.b16 %v2034
    %v2917 = vunpack.c.h.b16 %v2034
    %v2918 = vunpack.c.l.b16 %v2035
    %v2919 = vunpack.c.l.b16 %v2036
    %v2920 = vunpack.c.h.b16 %v2036
    %v2921 = vunpack.c.l.b16 %v2037
    %v2922 = vunpack.c.l.b16 %v2038
    %v2923 = vunpack.c.h.b16 %v2038
    %v2924 = vunpack.c.l.b16 %v2039
    %v2925 = vunpack.c.l.b16 %v2040
    %v2926 = vunpack.c.h.b16 %v2040
    %v2927 = vunpack.c.l.b16 %v2041
    %v2928 = vunpack.c.l.b16 %v2042
    %v2929 = vunpack.c.h.b16 %v2042
    %v2930 = vunpack.c.l.b16 %v2043
    %v2931 = vunpack.c.l.b16 %v2044
    %v2932 = vunpack.c.h.b16 %v2044
    %v2933 = vunpack.c.l.b16 %v2045
    %v2934 = vunpack.c.l.b16 %v2046
    %v2935 = vunpack.c.h.b16 %v2046
    %v2936 = vunpack.c.l.b16 %v2047
    %v2937 = vunpack.c.l.b16 %v2048
    %v2938 = vunpack.c.h.b16 %v2048
    %v2939 = vunpack.c.l.b16 %v2049
    %v2940 = vunpack.c.l.b16 %v2050
    %v2941 = vunpack.c.h.b16 %v2050
    %v2942 = vunpack.c.l.b16 %v2051
    %v2943 = vunpack.c.l.b16 %v2052
    %v2944 = vunpack.c.h.b16 %v2052
    %v2945 = vunpack.c.l.b16 %v2053
    %v2946 = vunpack.c.l.b16 %v2054
    %v2947 = vunpack.c.h.b16 %v2054
    %v2948 = vunpack.c.l.b16 %v2055
    %v2949 = vunpack.c.l.b16 %v2056
    %v2950 = vunpack.c.h.b16 %v2056
    %v2951 = vunpack.c.l.b16 %v2057
    %v2952 = vunpack.c.l.b16 %v2058
    %v2953 = vunpack.c.h.b16 %v2058
    %v2954 = vunpack.c.l.b16 %v2059
    %v2955 = vunpack.c.l.b16 %v2060
    %v2956 = vunpack.c.h.b16 %v2060
    %v2957 = vunpack.c.l.b16 %v2061
    %v2958 = vunpack.c.l.b16 %v2062
    %v2959 = vunpack.c.h.b16 %v2062
    %v2960 = vunpack.c.l.b16 %v2063
    %v2961 = vunpack.c.l.b16 %v2064
    %v2962 = vunpack.c.h.b16 %v2064
    %v2963 = vunpack.c.l.b16 %v2065
    %v2964 = vunpack.c.l.b16 %v2066
    %v2965 = vunpack.c.h.b16 %v2066
    %v2966 = vunpack.c.l.b16 %v2067
    %v2967 = vunpack.c.l.b16 %v2068
    %v2968 = vunpack.c.h.b16 %v2068
    %v2969 = vunpack.c.l.b16 %v2069
    %v2970 = vunpack.c.l.b16 %v2070
    %v2971 = vunpack.c.h.b16 %v2070
    %v2972 = vunpack.c.l.b16 %v2071
    %v2973 = vunpack.c.l.b16 %v2072
    %v2974 = vunpack.c.h.b16 %v2072
    %v2975 = vunpack.c.l.b16 %v2073
    %v2976 = vunpack.c.l.b16 %v2074
    %v2977 = vunpack.c.h.b16 %v2074
    %v2978 = vunpack.c.l.b16 %v2075
    %v2979 = vunpack.c.l.b16 %v2076
    %v2980 = vunpack.c.h.b16 %v2076
    %v2981 = vunpack.c.l.b16 %v2077
    %v2982 = vunpack.c.l.b16 %v2078
    %v2983 = vunpack.c.h.b16 %v2078
    %v2984 = vunpack.c.l.b16 %v2079
    %v2985 = vunpack.c.l.b16 %v2080
    %v2986 = vunpack.c.h.b16 %v2080
    %v2987 = vunpack.c.l.b16 %v2081
    %v2988 = vunpack.c.l.b16 %v2082
    %v2989 = vunpack.c.h.b16 %v2082
    %v2990 = vunpack.c.l.b16 %v2083
    %v2991 = vunpack.c.l.b16 %v2084
    %v2992 = vunpack.c.h.b16 %v2084
    %v2993 = vunpack.c.l.b16 %v2085
    %v2994 = vunpack.c.l.b16 %v2086
    %v2995 = vunpack.c.h.b16 %v2086
    %v2996 = vunpack.c.l.b16 %v2087
    %v2997 = vunpack.c.l.b16 %v2088
    %v2998 = vunpack.c.h.b16 %v2088
    %v2999 = vunpack.c.l.b16 %v2089
    %v3000 = vunpack.c.l.b16 %v2090
    %v3001 = vunpack.c.h.b16 %v2090
    %v3002 = vunpack.c.l.b16 %v2091
    %v3003 = vunpack.c.l.b16 %v2092
    %v3004 = vunpack.c.h.b16 %v2092
    %v3005 = vunpack.c.l.b16 %v2093
    %v3006 = vunpack.c.l.b16 %v2094
    %v3007 = vunpack.c.h.b16 %v2094
    %v3008 = vunpack.c.l.b16 %v2095
    %v3009 = vunpack.c.l.b16 %v2096
    %v3010 = vunpack.c.h.b16 %v2096
    %v3011 = vunpack.c.l.b16 %v2097
    %v3012 = vunpack.c.l.b16 %v2098
    %v3013 = vunpack.c.h.b16 %v2098
    %v3014 = vunpack.c.l.b16 %v2099
    %v3015 = vunpack.c.l.b16 %v2100
    %v3016 = vunpack.c.h.b16 %v2100
    %v3017 = vunpack.c.l.b16 %v2101
    %v3018 = vunpack.c.l.b16 %v2102
    %v3019 = vunpack.c.h.b16 %v2102
    %v3020 = vunpack.c.l.b16 %v2103
    %v3021 = vunpack.c.l.b16 %v2104
    %v3022 = vunpack.c.h.b16 %v2104
    %v3023 = vunpack.c.l.b16 %v2105
    %v3024 = vunpack.c.l.b16 %v2106
    %v3025 = vunpack.c.h.b16 %v2106
    %v3026 = vunpack.c.l.b16 %v2107
    %v3027 = vunpack.c.l.b16 %v2108
    %v3028 = vunpack.c.h.b16 %v2108
    %v3029 = vunpack.c.l.b16 %v2109
    %v3030 = vunpack.c.l.b16 %v2110
    %v3031 = vunpack.c.h.b16 %v2110
    %v3032 = vunpack.c.l.b16 %v2111
    %v3033 = vunpack.c.l.b16 %v2112
    %v3034 = vunpack.c.h.b16 %v2112
    %v3035 = vunpack.c.l.b16 %v2113
    %v3036 = vunpack.c.l.b16 %v2114
    %v3037 = vunpack.c.h.b16 %v2114
    %v3038 = vunpack.c.l.b16 %v2115
    %v3039 = vunpack.c.l.b16 %v2116
    %v3040 = vunpack.c.h.b16 %v2116
    %v3041 = vunpack.c.l.b16 %v2117
    %v3042 = vunpack.c.l.b16 %v2118
    %v3043 = vunpack.c.h.b16 %v2118
    %v3044 = vunpack.c.l.b16 %v2119
    %v3045 = vunpack.c.l.b16 %v2120
    %v3046 = vunpack.c.h.b16 %v2120
    %v3047 = vunpack.c.l.b16 %v2121
    %v3048 = vunpack.c.l.b16 %v2122
    %v3049 = vunpack.c.h.b16 %v2122
    %v3050 = vunpack.c.l.b16 %v2123
    %v3051 = vunpack.c.l.b16 %v2124
    %v3052 = vunpack.c.h.b16 %v2124
    %v3053 = vunpack.c.l.b16 %v2125
    %v3054 = vunpack.c.l.b16 %v2126
    %v3055 = vunpack.c.h.b16 %v2126
    %v3056 = vunpack.c.l.b16 %v2127
    %v3057 = vunpack.c.l.b16 %v2128
    %v3058 = vunpack.c.h.b16 %v2128
    %v3059 = vunpack.c.l.b16 %v2129
    %v3060 = vunpack.c.l.b16 %v2130
    %v3061 = vunpack.c.h.b16 %v2130
    %v3062 = vunpack.c.l.b16 %v2131
    %v3063 = vunpack.c.l.b16 %v2132
    %v3064 = vunpack.c.h.b16 %v2132
    %v3065 = vunpack.c.l.b16 %v2133
    %v3066 = vunpack.c.l.b16 %v2134
    %v3067 = vunpack.c.h.b16 %v2134
    %v3068 = vunpack.c.l.b16 %v2135
    %v3069 = vunpack.c.l.b16 %v2136
    %v3070 = vunpack.c.h.b16 %v2136
    %v3071 = vunpack.c.l.b16 %v2137
    %v3072 = vunpack.c.l.b16 %v2138
    %v3073 = vunpack.c.h.b16 %v2138
    %v3074 = vunpack.c.l.b16 %v2139
    %v3075 = vunpack.c.l.b16 %v2140
    %v3076 = vunpack.c.h.b16 %v2140
    %v3077 = vunpack.c.l.b16 %v2141
    %v3078 = vunpack.c.l.b16 %v2142
    %v3079 = vunpack.c.h.b16 %v2142
    %v3080 = vunpack.c.l.b16 %v2143
    %v3081 = vunpack.c.l.b16 %v2144
    %v3082 = vunpack.c.h.b16 %v2144
    %v3083 = vunpack.c.l.b16 %v2145
    %v3084 = vunpack.c.l.b16 %v2146
    %v3085 = vunpack.c.h.b16 %v2146
    %v3086 = vunpack.c.l.b16 %v2147
    %v3087 = vunpack.c.l.b16 %v2148
    %v3088 = vunpack.c.h.b16 %v2148
    %v3089 = vunpack.c.l.b16 %v2149
    %v3090 = vunpack.c.l.b16 %v2150
    %v3091 = vunpack.c.h.b16 %v2150
    %v3092 = vunpack.c.l.b16 %v2151
    %v3093 = vunpack.c.l.b16 %v2152
    %v3094 = vunpack.c.h.b16 %v2152
    %v3095 = vunpack.c.l.b16 %v2153
    %v3096 = vunpack.c.l.b16 %v2154
    %v3097 = vunpack.c.h.b16 %v2154
    %v3098 = vunpack.c.l.b16 %v2155
    %v3099 = vunpack.c.l.b16 %v2156
    %v3100 = vunpack.c.h.b16 %v2156
    %v3101 = vunpack.c.l.b16 %v2157
    %v3102 = vunpack.c.l.b16 %v2158
    %v3103 = vunpack.c.h.b16 %v2158
    %v3104 = vunpack.c.l.b16 %v2159
    %v3105 = vunpack.c.l.b16 %v2160
    %v3106 = vunpack.c.h.b16 %v2160
    %v3107 = vunpack.c.l.b16 %v2161
    %v3108 = vunpack.c.l.b16 %v2162
    %v3109 = vunpack.c.h.b16 %v2162
    %v3110 = vunpack.c.l.b16 %v2163
    %v3111 = vunpack.c.l.b16 %v2164
    %v3112 = vunpack.c.h.b16 %v2164
    %v3113 = vunpack.c.l.b16 %v2165
    %v3114 = vunpack.c.l.b16 %v2166
    %v3115 = vunpack.c.h.b16 %v2166
    %v3116 = vunpack.c.l.b16 %v2167
    %v3117 = vunpack.c.l.b16 %v2168
    %v3118 = vunpack.c.h.b16 %v2168
    %v3119 = vunpack.c.l.b16 %v2169
    %v3120 = vunpack.c.l.b16 %v2170
    %v3121 = vunpack.c.h.b16 %v2170
    %v3122 = vunpack.c.l.b16 %v2171
    %v3123 = vunpack.c.l.b16 %v2172
    %v3124 = vunpack.c.h.b16 %v2172
    %v3125 = vunpack.c.l.b16 %v2173
    %v3126 = vunpack.c.l.b16 %v2174
    %v3127 = vunpack.c.h.b16 %v2174
    %v3128 = vunpack.c.l.b16 %v2175
    %v3129 = vunpack.c.l.b16 %v2176
    %v3130 = vunpack.c.h.b16 %v2176
    %v3131 = vunpack.c.l.b16 %v2177
    %v3132 = vunpack.c.l.b16 %v2178
    %v3133 = vunpack.c.h.b16 %v2178
    %v3134 = vunpack.c.l.b16 %v2179
    %v3135 = vunpack.c.l.b16 %v2180
    %v3136 = vunpack.c.h.b16 %v2180
    %v3137 = vunpack.c.l.b16 %v2181
    %v3138 = vunpack.c.l.b16 %v2182
    %v3139 = vunpack.c.h.b16 %v2182
    %v3140 = vunpack.c.l.b16 %v2183
    %v3141 = vunpack.c.l.b16 %v2184
    %v3142 = vunpack.c.h.b16 %v2184
    %v3143 = vunpack.c.l.b16 %v2185
    %v3144 = vunpack.c.l.b16 %v2186
    %v3145 = vunpack.c.h.b16 %v2186
    %v3146 = vunpack.c.l.b16 %v2187
    %v3147 = vunpack.c.l.b16 %v2188
    %v3148 = vunpack.c.h.b16 %v2188
    %v3149 = vunpack.c.l.b16 %v2189
    %v3150 = vunpack.c.l.b16 %v2190
    %v3151 = vunpack.c.h.b16 %v2190
    %v3152 = vunpack.c.l.b16 %v2191
    %v3153 = vunpack.c.l.b16 %v2192
    %v3154 = vunpack.c.h.b16 %v2192
    %v3155 = vunpack.c.l.b16 %v2193
    %v3156 = vunpack.c.l.b16 %v2194
    %v3157 = vunpack.c.h.b16 %v2194
    %v3158 = vunpack.c.l.b16 %v2195
    %v3159 = vunpack.c.l.b16 %v2196
    %v3160 = vunpack.c.h.b16 %v2196
    %v3161 = vunpack.c.l.b16 %v2197
    %v3162 = vunpack.c.l.b16 %v2198
    %v3163 = vunpack.c.h.b16 %v2198
    %v3164 = vunpack.c.l.b16 %v2199
    %v3165 = vunpack.c.l.b16 %v2200
    %v3166 = vunpack.c.h.b16 %v2200
    %v3167 = vunpack.c.l.b16 %v2201
    %v3168 = vunpack.c.l.b16 %v2202
    %v3169 = vunpack.c.h.b16 %v2202
    %v3170 = vunpack.c.l.b16 %v2203
    %v3171 = vunpack.c.l.b16 %v2204
    %v3172 = vunpack.c.h.b16 %v2204
    %v3173 = vunpack.c.l.b16 %v2205
    %v3174 = vunpack.c.l.b16 %v2206
    %v3175 = vunpack.c.h.b16 %v2206
    %v3176 = vunpack.c.l.b16 %v2207
    %v3177 = vunpack.c.l.b16 %v2208
    %v3178 = vunpack.c.h.b16 %v2208
    %v3179 = vunpack.c.l.b16 %v2209
    %v3180 = vunpack.c.l.b16 %v2210
    %v3181 = vunpack.c.h.b16 %v2210
    %v3182 = vunpack.c.l.b16 %v2211
    %v3183 = vunpack.c.l.b16 %v2212
    %v3184 = vunpack.c.h.b16 %v2212
    %v3185 = vunpack.c.l.b16 %v2213
    %v3186 = vunpack.c.l.b16 %v2214
    %v3187 = vunpack.c.h.b16 %v2214
    %v3188 = vunpack.c.l.b16 %v2215
    %v3189 = vunpack.c.l.b16 %v2216
    %v3190 = vunpack.c.h.b16 %v2216
    %v3191 = vunpack.c.l.b16 %v2217
    %v3192 = vunpack.c.l.b16 %v2218
    %v3193 = vunpack.c.h.b16 %v2218
    %v3194 = vunpack.c.l.b16 %v2219
    %v3195 = vunpack.c.l.b16 %v2220
    %v3196 = vunpack.c.h.b16 %v2220
    %v3197 = vunpack.c.l.b16 %v2221
    %v3198 = vunpack.c.l.b16 %v2222
    %v3199 = vunpack.c.h.b16 %v2222
    %v3200 = vunpack.c.l.b16 %v2223
    %v3201 = vunpack.c.l.b16 %v2224
    %v3202 = vunpack.c.h.b16 %v2224
    %v3203 = vunpack.c.l.b16 %v2225
    %v3204 = vunpack.c.l.b16 %v2226
    %v3205 = vunpack.c.h.b16 %v2226
    %v3206 = vunpack.c.l.b16 %v2227
    %v3207 = vunpack.c.l.b16 %v2228
    %v3208 = vunpack.c.h.b16 %v2228
    %v3209 = vunpack.c.l.b16 %v2229
    %v3210 = vunpack.c.l.b16 %v2230
    %v3211 = vunpack.c.h.b16 %v2230
    %v3212 = vunpack.c.l.b16 %v2231
    %v3213 = vunpack.c.l.b16 %v2232
    %v3214 = vunpack.c.h.b16 %v2232
    %v3215 = vunpack.c.l.b16 %v2233
    %v3216 = vunpack.c.l.b16 %v2234
    %v3217 = vunpack.c.h.b16 %v2234
    %v3218 = vunpack.c.l.b16 %v2235
    %v3219 = vunpack.c.l.b16 %v2236
    %v3220 = vunpack.c.h.b16 %v2236
    %v3221 = vunpack.c.l.b16 %v2237
    %v3222 = vunpack.c.l.b16 %v2238
    %v3223 = vunpack.c.h.b16 %v2238
    %v3224 = vunpack.c.l.b16 %v2239
    %v3225 = vunpack.c.l.b16 %v2240
    %v3226 = vunpack.c.h.b16 %v2240
    %v3227 = vunpack.c.l.b16 %v2241
    %v3228 = vunpack.c.l.b16 %v2242
    %v3229 = vunpack.c.h.b16 %v2242
    %v3230 = vunpack.c.l.b16 %v2243
    %v3231 = vunpack.c.l.b16 %v2244
    %v3232 = vunpack.c.h.b16 %v2244
    %v3233 = vunpack.c.l.b16 %v2245
    %v3234 = vunpack.c.l.b16 %v2246
    %v3235 = vunpack.c.h.b16 %v2246
    %v3236 = vunpack.c.l.b16 %v2247
    %v3237 = vunpack.c.l.b16 %v2248
    %v3238 = vunpack.c.h.b16 %v2248
    %v3239 = vunpack.c.l.b16 %v2249
    %v3240 = vunpack.c.l.b16 %v2250
    %v3241 = vunpack.c.h.b16 %v2250
    %v3242 = vunpack.c.l.b16 %v2251
    %v3243 = vunpack.c.l.b16 %v2252
    %v3244 = vunpack.c.h.b16 %v2252
    %v3245 = vunpack.c.l.b16 %v2253
    %v3246 = vunpack.c.l.b16 %v2254
    %v3247 = vunpack.c.h.b16 %v2254
    %v3248 = vunpack.c.l.b16 %v2255
    %v3249 = vunpack.c.l.b16 %v2256
    %v3250 = vunpack.c.h.b16 %v2256
    %v3251 = vunpack.c.l.b16 %v2257
    %v3252 = vunpack.c.l.b16 %v2258
    %v3253 = vunpack.c.h.b16 %v2258
    %v3254 = vunpack.c.l.b16 %v2259
    %v3255 = vunpack.c.l.b16 %v2260
    %v3256 = vunpack.c.h.b16 %v2260
    %v3257 = vunpack.c.l.b16 %v2261
    %v3258 = vunpack.c.l.b16 %v2262
    %v3259 = vunpack.c.h.b16 %v2262
    %v3260 = vunpack.c.l.b16 %v2263
    %v3261 = vunpack.c.l.b16 %v2264
    %v3262 = vunpack.c.h.b16 %v2264
    %v3263 = vunpack.c.l.b16 %v2265
    %v3264 = vunpack.c.l.b16 %v2266
    %v3265 = vunpack.c.h.b16 %v2266
    %v3266 = vunpack.c.l.b16 %v2267
    %v3267 = vunpack.c.l.b16 %v2268
    %v3268 = vunpack.c.h.b16 %v2268
    %v3269 = vunpack.c.l.b16 %v2269
    %v3270 = vunpack.c.l.b16 %v2270
    %v3271 = vunpack.c.h.b16 %v2270
    %v3272 = vunpack.c.l.b16 %v2271
    %v3273 = vunpack.c.l.b16 %v2272
    %v3274 = vunpack.c.h.b16 %v2272
    %v3275 = vunpack.c.l.b16 %v2273
    %v3276 = vunpack.c.l.b16 %v2274
    %v3277 = vunpack.c.h.b16 %v2274
    %v3278 = vunpack.c.l.b16 %v2275
    %v3279 = vunpack.c.l.b16 %v2276
    %v3280 = vunpack.c.h.b16 %v2276
    %v3281 = vunpack.c.l.b16 %v2277
    %v3282 = vunpack.c.l.b16 %v2278
    %v3283 = vunpack.c.h.b16 %v2278
    %v3284 = vunpack.c.l.b16 %v2279
    %v3285 = vunpack.c.l.b16 %v2280
    %v3286 = vunpack.c.h.b16 %v2280
    %v3287 = vunpack.c.l.b16 %v2281
    %v3288 = vunpack.c.l.b16 %v2282
    %v3289 = vunpack.c.h.b16 %v2282
    %v3290 = vunpack.c.l.b16 %v2283
    %v3291 = vunpack.c.l.b16 %v2284
    %v3292 = vunpack.c.h.b16 %v2284
    %v3293 = vunpack.c.l.b16 %v2285
    %v3294 = vunpack.c.l.b16 %v2286
    %v3295 = vunpack.c.h.b16 %v2286
    %v3296 = vunpack.c.l.b16 %v2287
    %v3297 = vunpack.c.l.b16 %v2288
    %v3298 = vunpack.c.h.b16 %v2288
    %v3299 = vunpack.c.l.b16 %v2289
    %v3300 = vunpack.c.l.b16 %v2290
    %v3301 = vunpack.c.h.b16 %v2290
    %v3302 = vunpack.c.l.b16 %v2291
    %v3303 = vunpack.c.l.b16 %v2292
    %v3304 = vunpack.c.h.b16 %v2292
    %v3305 = vunpack.c.l.b16 %v2293
    %v3306 = vunpack.c.l.b16 %v2294
    %v3307 = vunpack.c.h.b16 %v2294
    %v3308 = vunpack.c.l.b16 %v2295
    %v3309 = vunpack.c.l.b16 %v2296
    %v3310 = vunpack.c.h.b16 %v2296
    %v3311 = vunpack.c.l.b16 %v2297
    %v3312 = vunpack.c.l.b16 %v2298
    %v3313 = vunpack.c.h.b16 %v2298
    %v3314 = vunpack.c.l.b16 %v2299
    %v3315 = vunpack.c.l.b16 %v2300
    %v3316 = vunpack.c.h.b16 %v2300
    %v3317 = vunpack.c.l.b16 %v2301
    %v3318 = vunpack.c.l.b16 %v2302
    %v3319 = vunpack.c.h.b16 %v2302
    %v3320 = vunpack.c.l.b16 %v2303
    %v3321 = vunpack.c.l.b16 %v2304
    %v3322 = vunpack.c.h.b16 %v2304
    %v3323 = vunpack.c.l.b16 %v2305
    %v3324 = vunpack.c.l.b16 %v2306
    %v3325 = vunpack.c.h.b16 %v2306
    %v3326 = vunpack.c.l.b16 %v2307
    %v3327 = vunpack.c.l.b16 %v2308
    %v3328 = vunpack.c.h.b16 %v2308
    %v3329 = vunpack.c.l.b16 %v2309
    %v3330 = vpack.c.b16 %v2757, %v2754
    %v3331 = vpack.c.b16 %v2758, %v2755
    %v3332 = vpack.c.b16 %v2759, %v2756
    %v3333 = vpack.c.b16 %v2763, %v2760
    %v3334 = vpack.c.b16 %v2764, %v2761
    %v3335 = vpack.c.b16 %v2765, %v2762
    %v3336 = vpack.c.b16 %v2769, %v2766
    %v3337 = vpack.c.b16 %v2770, %v2767
    %v3338 = vpack.c.b16 %v2771, %v2768
    %v3339 = vpack.c.b16 %v2775, %v2772
    %v3340 = vpack.c.b16 %v2776, %v2773
    %v3341 = vpack.c.b16 %v2777, %v2774
    %v3342 = vpack.c.b16 %v2781, %v2778
    %v3343 = vpack.c.b16 %v2782, %v2779
    %v3344 = vpack.c.b16 %v2783, %v2780
    %v3345 = vpack.c.b16 %v2787, %v2784
    %v3346 = vpack.c.b16 %v2788, %v2785
    %v3347 = vpack.c.b16 %v2789, %v2786
    %v3348 = vpack.c.b16 %v2793, %v2790
    %v3349 = vpack.c.b16 %v2794, %v2791
    %v3350 = vpack.c.b16 %v2795, %v2792
    %v3351 = vpack.c.b16 %v2799, %v2796
    %v3352 = vpack.c.b16 %v2800, %v2797
    %v3353 = vpack.c.b16 %v2801, %v2798
    %v3354 = vpack.c.b16 %v2805, %v2802
    %v3355 = vpack.c.b16 %v2806, %v2803
    %v3356 = vpack.c.b16 %v2807, %v2804
    %v3357 = vpack.c.b16 %v2811, %v2808
    %v3358 = vpack.c.b16 %v2812, %v2809
    %v3359 = vpack.c.b16 %v2813, %v2810
    %v3360 = vpack.c.b16 %v2817, %v2814
    %v3361 = vpack.c.b16 %v2818, %v2815
    %v3362 = vpack.c.b16 %v2819, %v2816
    %v3363 = vpack.c.b16 %v2823, %v2820
    %v3364 = vpack.c.b16 %v2824, %v2821
    %v3365 = vpack.c.b16 %v2825, %v2822
    %v3366 = vpack.c.b16 %v2829, %v2826
    %v3367 = vpack.c.b16 %v2830, %v2827
    %v3368 = vpack.c.b16 %v2831, %v2828
    %v3369 = vpack.c.b16 %v2835, %v2832
    %v3370 = vpack.c.b16 %v2836, %v2833
    %v3371 = vpack.c.b16 %v2837, %v2834
    %v3372 = vpack.c.b16 %v2841, %v2838
    %v3373 = vpack.c.b16 %v2842, %v2839
    %v3374 = vpack.c.b16 %v2843, %v2840
    %v3375 = vpack.c.b16 %v2847, %v2844
    %v3376 = vpack.c.b16 %v2848, %v2845
    %v3377 = vpack.c.b16 %v2849, %v2846
    %v3378 = vpack.c.b16 %v2853, %v2850
    %v3379 = vpack.c.b16 %v2854, %v2851
    %v3380 = vpack.c.b16 %v2855, %v2852
    %v3381 = vpack.c.b16 %v2859, %v2856
    %v3382 = vpack.c.b16 %v2860, %v2857
    %v3383 = vpack.c.b16 %v2861, %v2858
    %v3384 = vpack.c.b16 %v2865, %v2862
    %v3385 = vpack.c.b16 %v2866, %v2863
    %v3386 = vpack.c.b16 %v2867, %v2864
    %v3387 = vpack.c.b16 %v2871, %v2868
    %v3388 = vpack.c.b16 %v2872, %v2869
    %v3389 = vpack.c.b16 %v2873, %v2870
    %v3390 = vpack.c.b16 %v2877, %v2874
    %v3391 = vpack.c.b16 %v2878, %v2875
    %v3392 = vpack.c.b16 %v2879, %v2876
    %v3393 = vpack.c.b16 %v2883, %v2880
    %v3394 = vpack.c.b16 %v2884, %v2881
    %v3395 = vpack.c.b16 %v2885, %v2882
    %v3396 = vpack.c.b16 %v2889, %v2886
    %v3397 = vpack.c.b16 %v2890, %v2887
    %v3398 = vpack.c.b16 %v2891, %v2888
    %v3399 = vpack.c.b16 %v2895, %v2892
    %v3400 = vpack.c.b16 %v2896, %v2893
    %v3401 = vpack.c.b16 %v2897, %v2894
    %v3402 = vpack.c.b16 %v2901, %v2898
    %v3403 = vpack.c.b16 %v2902, %v2899
    %v3404 = vpack.c.b16 %v2903, %v2900
    %v3405 = vpack.c.b16 %v2907, %v2904
    %v3406 = vpack.c.b16 %v2908, %v2905
    %v3407 = vpack.c.b16 %v2909, %v2906
    %v3408 = vpack.c.b16 %v2913, %v2910
    %v3409 = vpack.c.b16 %v2914, %v2911
    %v3410 = vpack.c.b16 %v2915, %v2912
    %v3411 = vpack.c.b16 %v2919, %v2916
    %v3412 = vpack.c.b16 %v2920, %v2917
    %v3413 = vpack.c.b16 %v2921, %v2918
    %v3414 = vpack.c.b16 %v2925, %v2922
    %v3415 = vpack.c.b16 %v2926, %v2923
    %v3416 = vpack.c.b16 %v2927, %v2924
    %v3417 = vpack.c.b16 %v2931, %v2928
    %v3418 = vpack.c.b16 %v2932, %v2929
    %v3419 = vpack.c.b16 %v2933, %v2930
    %v3420 = vpack.c.b16 %v2937, %v2934
    %v3421 = vpack.c.b16 %v2938, %v2935
    %v3422 = vpack.c.b16 %v2939, %v2936
    %v3423 = vpack.c.b16 %v2943, %v2940
    %v3424 = vpack.c.b16 %v2944, %v2941
    %v3425 = vpack.c.b16 %v2945, %v2942
    %v3426 = vpack.c.b16 %v2949, %v2946
    %v3427 = vpack.c.b16 %v2950, %v2947
    %v3428 = vpack.c.b16 %v2951, %v2948
    %v3429 = vpack.c.b16 %v2955, %v2952
    %v3430 = vpack.c.b16 %v2956, %v2953
    %v3431 = vpack.c.b16 %v2957, %v2954
    %v3432 = vpack.c.b16 %v2961, %v2958
    %v3433 = vpack.c.b16 %v2962, %v2959
    %v3434 = vpack.c.b16 %v2963, %v2960
    %v3435 = vpack.c.b16 %v2967, %v2964
    %v3436 = vpack.c.b16 %v2968, %v2965
    %v3437 = vpack.c.b16 %v2969, %v2966
    %v3438 = vpack.c.b16 %v2973, %v2970
    %v3439 = vpack.c.b16 %v2974, %v2971
    %v3440 = vpack.c.b16 %v2975, %v2972
    %v3441 = vpack.c.b16 %v2979, %v2976
    %v3442 = vpack.c.b16 %v2980, %v2977
    %v3443 = vpack.c.b16 %v2981, %v2978
    %v3444 = vpack.c.b16 %v2985, %v2982
    %v3445 = vpack.c.b16 %v2986, %v2983
    %v3446 = vpack.c.b16 %v2987, %v2984
    %v3447 = vpack.c.b16 %v2991, %v2988
    %v3448 = vpack.c.b16 %v2992, %v2989
    %v3449 = vpack.c.b16 %v2993, %v2990
    %v3450 = vpack.c.b16 %v2997, %v2994
    %v3451 = vpack.c.b16 %v2998, %v2995
    %v3452 = vpack.c.b16 %v2999, %v2996
    %v3453 = vpack.c.b16 %v3003, %v3000
    %v3454 = vpack.c.b16 %v3004, %v3001
    %v3455 = vpack.c.b16 %v3005, %v3002
    %v3456 = vpack.c.b16 %v3009, %v3006
    %v3457 = vpack.c.b16 %v3010, %v3007
    %v3458 = vpack.c.b16 %v3011, %v3008
    %v3459 = vpack.c.b16 %v3015, %v3012
    %v3460 = vpack.c.b16 %v3016, %v3013
    %v3461 = vpack.c.b16 %v3017, %v3014
    %v3462 = vpack.c.b16 %v3021, %v3018
    %v3463 = vpack.c.b16 %v3022, %v3019
    %v3464 = vpack.c.b16 %v3023, %v3020
    %v3465 = vpack.c.b16 %v3027, %v3024
    %v3466 = vpack.c.b16 %v3028, %v3025
    %v3467 = vpack.c.b16 %v3029, %v3026
    %v3468 = vpack.c.b16 %v3033, %v3030
    %v3469 = vpack.c.b16 %v3034, %v3031
    %v3470 = vpack.c.b16 %v3035, %v3032
    %v3471 = vpack.c.b16 %v3039, %v3036
    %v3472 = vpack.c.b16 %v3040, %v3037
    %v3473 = vpack.c.b16 %v3041, %v3038
    %v3474 = vpack.c.b16 %v3045, %v3042
    %v3475 = vpack.c.b16 %v3046, %v3043
    %v3476 = vpack.c.b16 %v3047, %v3044
    %v3477 = vpack.c.b16 %v3051, %v3048
    %v3478 = vpack.c.b16 %v3052, %v3049
    %v3479 = vpack.c.b16 %v3053, %v3050
    %v3480 = vpack.c.b16 %v3057, %v3054
    %v3481 = vpack.c.b16 %v3058, %v3055
    %v3482 = vpack.c.b16 %v3059, %v3056
    %v3483 = vpack.c.b16 %v3063, %v3060
    %v3484 = vpack.c.b16 %v3064, %v3061
    %v3485 = vpack.c.b16 %v3065, %v3062
    %v3486 = vpack.c.b16 %v3069, %v3066
    %v3487 = vpack.c.b16 %v3070, %v3067
    %v3488 = vpack.c.b16 %v3071, %v3068
    %v3489 = vpack.c.b16 %v3075, %v3072
    %v3490 = vpack.c.b16 %v3076, %v3073
    %v3491 = vpack.c.b16 %v3077, %v3074
    %v3492 = vpack.c.b16 %v3081, %v3078
    %v3493 = vpack.c.b16 %v3082, %v3079
    %v3494 = vpack.c.b16 %v3083, %v3080
    %v3495 = vpack.c.b16 %v3087, %v3084
    %v3496 = vpack.c.b16 %v3088, %v3085
    %v3497 = vpack.c.b16 %v3089, %v3086
    %v3498 = vpack.c.b16 %v3093, %v3090
    %v3499 = vpack.c.b16 %v3094, %v3091
    %v3500 = vpack.c.b16 %v3095, %v3092
    %v3501 = vpack.c.b16 %v3099, %v3096
    %v3502 = vpack.c.b16 %v3100, %v3097
    %v3503 = vpack.c.b16 %v3101, %v3098
    %v3504 = vpack.c.b16 %v3105, %v3102
    %v3505 = vpack.c.b16 %v3106, %v3103
    %v3506 = vpack.c.b16 %v3107, %v3104
    %v3507 = vpack.c.b16 %v3111, %v3108
    %v3508 = vpack.c.b16 %v3112, %v3109
    %v3509 = vpack.c.b16 %v3113, %v3110
    %v3510 = vpack.c.b16 %v3117, %v3114
    %v3511 = vpack.c.b16 %v3118, %v3115
    %v3512 = vpack.c.b16 %v3119, %v3116
    %v3513 = vpack.c.b16 %v3123, %v3120
    %v3514 = vpack.c.b16 %v3124, %v3121
    %v3515 = vpack.c.b16 %v3125, %v3122
    %v3516 = vpack.c.b16 %v3129, %v3126
    %v3517 = vpack.c.b16 %v3130, %v3127
    %v3518 = vpack.c.b16 %v3131, %v3128
    %v3519 = vpack.c.b16 %v3135, %v3132
    %v3520 = vpack.c.b16 %v3136, %v3133
    %v3521 = vpack.c.b16 %v3137, %v3134
    %v3522 = vpack.c.b16 %v3141, %v3138
    %v3523 = vpack.c.b16 %v3142, %v3139
    %v3524 = vpack.c.b16 %v3143, %v3140
    %v3525 = vpack.c.b16 %v3147, %v3144
    %v3526 = vpack.c.b16 %v3148, %v3145
    %v3527 = vpack.c.b16 %v3149, %v3146
    %v3528 = vpack.c.b16 %v3153, %v3150
    %v3529 = vpack.c.b16 %v3154, %v3151
    %v3530 = vpack.c.b16 %v3155, %v3152
    %v3531 = vpack.c.b16 %v3159, %v3156
    %v3532 = vpack.c.b16 %v3160, %v3157
    %v3533 = vpack.c.b16 %v3161, %v3158
    %v3534 = vpack.c.b16 %v3165, %v3162
    %v3535 = vpack.c.b16 %v3166, %v3163
    %v3536 = vpack.c.b16 %v3167, %v3164
    %v3537 = vpack.c.b16 %v3171, %v3168
    %v3538 = vpack.c.b16 %v3172, %v3169
    %v3539 = vpack.c.b16 %v3173, %v3170
    %v3540 = vpack.c.b16 %v3177, %v3174
    %v3541 = vpack.c.b16 %v3178, %v3175
    %v3542 = vpack.c.b16 %v3179, %v3176
    %v3543 = vpack.c.b16 %v3183, %v3180
    %v3544 = vpack.c.b16 %v3184, %v3181
    %v3545 = vpack.c.b16 %v3185, %v3182
    %v3546 = vpack.c.b16 %v3189, %v3186
    %v3547 = vpack.c.b16 %v3190, %v3187
    %v3548 = vpack.c.b16 %v3191, %v3188
    %v3549 = vpack.c.b16 %v3195, %v3192
    %v3550 = vpack.c.b16 %v3196, %v3193
    %v3551 = vpack.c.b16 %v3197, %v3194
    %v3552 = vpack.c.b16 %v3201, %v3198
    %v3553 = vpack.c.b16 %v3202, %v3199
    %v3554 = vpack.c.b16 %v3203, %v3200
    %v3555 = vpack.c.b16 %v3207, %v3204
    %v3556 = vpack.c.b16 %v3208, %v3205
    %v3557 = vpack.c.b16 %v3209, %v3206
    %v3558 = vpack.c.b16 %v3213, %v3210
    %v3559 = vpack.c.b16 %v3214, %v3211
    %v3560 = vpack.c.b16 %v3215, %v3212
    %v3561 = vpack.c.b16 %v3219, %v3216
    %v3562 = vpack.c.b16 %v3220, %v3217
    %v3563 = vpack.c.b16 %v3221, %v3218
    %v3564 = vpack.c.b16 %v3225, %v3222
    %v3565 = vpack.c.b16 %v3226, %v3223
    %v3566 = vpack.c.b16 %v3227, %v3224
    %v3567 = vpack.c.b16 %v3231, %v3228
    %v3568 = vpack.c.b16 %v3232, %v3229
    %v3569 = vpack.c.b16 %v3233, %v3230
    %v3570 = vpack.c.b16 %v3237, %v3234
    %v3571 = vpack.c.b16 %v3238, %v3235
    %v3572 = vpack.c.b16 %v3239, %v3236
    %v3573 = vpack.c.b16 %v3243, %v3240
    %v3574 = vpack.c.b16 %v3244, %v3241
    %v3575 = vpack.c.b16 %v3245, %v3242
    %v3576 = vpack.c.b16 %v3249, %v3246
    %v3577 = vpack.c.b16 %v3250, %v3247
    %v3578 = vpack.c.b16 %v3251, %v3248
    %v3579 = vpack.c.b16 %v3255, %v3252
    %v3580 = vpack.c.b16 %v3256, %v3253
    %v3581 = vpack.c.b16 %v3257, %v3254
    %v3582 = vpack.c.b16 %v3261, %v3258
    %v3583 = vpack.c.b16 %v3262, %v3259
    %v3584 = vpack.c.b16 %v3263, %v3260
    %v3585 = vpack.c.b16 %v3267, %v3264
    %v3586 = vpack.c.b16 %v3268, %v3265
    %v3587 = vpack.c.b16 %v3269, %v3266
    %v3588 = vpack.c.b16 %v3273, %v3270
    %v3589 = vpack.c.b16 %v3274, %v3271
    %v3590 = vpack.c.b16 %v3275, %v3272
    %v3591 = vpack.c.b16 %v3279, %v3276
    %v3592 = vpack.c.b16 %v3280, %v3277
    %v3593 = vpack.c.b16 %v3281, %v3278
    %v3594 = vpack.c.b16 %v3285, %v3282
    %v3595 = vpack.c.b16 %v3286, %v3283
    %v3596 = vpack.c.b16 %v3287, %v3284
    %v3597 = vpack.c.b16 %v3291, %v3288
    %v3598 = vpack.c.b16 %v3292, %v3289
    %v3599 = vpack.c.b16 %v3293, %v3290
    %v3600 = vpack.c.b16 %v3297, %v3294
    %v3601 = vpack.c.b16 %v3298, %v3295
    %v3602 = vpack.c.b16 %v3299, %v3296
    %v3603 = vpack.c.b16 %v3303, %v3300
    %v3604 = vpack.c.b16 %v3304, %v3301
    %v3605 = vpack.c.b16 %v3305, %v3302
    %v3606 = vpack.c.b16 %v3309, %v3306
    %v3607 = vpack.c.b16 %v3310, %v3307
    %v3608 = vpack.c.b16 %v3311, %v3308
    %v3609 = vpack.c.b16 %v3315, %v3312
    %v3610 = vpack.c.b16 %v3316, %v3313
    %v3611 = vpack.c.b16 %v3317, %v3314
    %v3612 = vpack.c.b16 %v3321, %v3318
    %v3613 = vpack.c.b16 %v3322, %v3319
    %v3614 = vpack.c.b16 %v3323, %v3320
    %v3615 = vpack.c.b16 %v3327, %v3324
    %v3616 = vpack.c.b16 %v3328, %v3325
    %v3617 = vpack.c.b16 %v3329, %v3326
    %3906 = vmatprep.subr.bf16.mxu0 %v3352
    %3907 = vmatpush1.bf16.msra.mxu0 %v3351
    %3908 = vmatprep.subr.bf16.mxu0 %v3349
    %3909 = vmatpush1.bf16.msra.mxu0 %v3348
    %3910 = vmatprep.subr.bf16.mxu0 %v3346
    %3911 = vmatpush1.bf16.msra.mxu0 %v3345
    %3912 = vmatprep.subr.bf16.mxu0 %v3343
    %3913 = vmatpush1.bf16.msra.mxu0 %v3342
    %3914 = vmatprep.subr.bf16.mxu0 %v3340
    %3915 = vmatpush1.bf16.msra.mxu0 %v3339
    %3916 = vmatprep.subr.bf16.mxu0 %v3337
    %3917 = vmatpush1.bf16.msra.mxu0 %v3336
    %3918 = vmatprep.subr.bf16.mxu0 %v3334
    %3919 = vmatpush1.bf16.msra.mxu0 %v3333
    %3920 = vmatprep.subr.bf16.mxu0 %v3331
    %3921 = vmatpush1.bf16.msra.mxu0 %v3330
    %3922 = vmatprep.subr.bf16.mxu0 %v3376
    %3923 = vmatpush2.bf16.msra.mxu0 %v3375
    %3924 = vmatprep.subr.bf16.mxu0 %v3373
    %3925 = vmatpush2.bf16.msra.mxu0 %v3372
    %3926 = vmatprep.subr.bf16.mxu0 %v3370
    %3927 = vmatpush2.bf16.msra.mxu0 %v3369
    %3928 = vmatprep.subr.bf16.mxu0 %v3367
    %3929 = vmatpush2.bf16.msra.mxu0 %v3366
    %3930 = vmatprep.subr.bf16.mxu0 %v3364
    %3931 = vmatpush2.bf16.msra.mxu0 %v3363
    %3932 = vmatprep.subr.bf16.mxu0 %v3361
    %3933 = vmatpush2.bf16.msra.mxu0 %v3360
    %3934 = vmatprep.subr.bf16.mxu0 %v3358
    %3935 = vmatpush2.bf16.msra.mxu0 %v3357
    %3936 = vmatprep.subr.bf16.mxu0 %v3355
    %3937 = vmatpush2.bf16.msra.mxu0 %v3354
    %3938 = vmatprep.mubr.bf16.mxu0 %v2347
    %3939 = vmatmul.mubr.bf16.gmra.mxu0 %v2346
    %v3940 = vpop.f32.mrf.mxu0
    %v3941 = vadd.f32 0.0, %v3940
    %v3942 = vpop.f32.mrf.mxu0
    %v3943 = vadd.f32 0.0, %v3942
    %v3944 = vpop.f32.mrf.mxu0
    %v3945 = vadd.f32 0.0, %v3944
    %v3946 = vpop.f32.mrf.mxu0
    %v3947 = vadd.f32 0.0, %v3946
    %3948 = vdwg.mxu0
    %3949 = vmatprep.subr.bf16.mxu0 %v3400
    %3950 = vmatpush1.bf16.msra.mxu0 %v3399
    %3951 = vmatprep.subr.bf16.mxu0 %v3397
    %3952 = vmatpush1.bf16.msra.mxu0 %v3396
    %3953 = vmatprep.subr.bf16.mxu0 %v3394
    %3954 = vmatpush1.bf16.msra.mxu0 %v3393
    %3955 = vmatprep.subr.bf16.mxu0 %v3391
    %3956 = vmatpush1.bf16.msra.mxu0 %v3390
    %3957 = vmatprep.subr.bf16.mxu0 %v3388
    %3958 = vmatpush1.bf16.msra.mxu0 %v3387
    %3959 = vmatprep.subr.bf16.mxu0 %v3385
    %3960 = vmatpush1.bf16.msra.mxu0 %v3384
    %3961 = vmatprep.subr.bf16.mxu0 %v3382
    %3962 = vmatpush1.bf16.msra.mxu0 %v3381
    %3963 = vmatprep.subr.bf16.mxu0 %v3379
    %3964 = vmatpush1.bf16.msra.mxu0 %v3378
    %3965 = vmatprep.subr.bf16.mxu0 %v3424
    %3966 = vmatpush2.bf16.msra.mxu0 %v3423
    %3967 = vmatprep.subr.bf16.mxu0 %v3421
    %3968 = vmatpush2.bf16.msra.mxu0 %v3420
    %3969 = vmatprep.subr.bf16.mxu0 %v3418
    %3970 = vmatpush2.bf16.msra.mxu0 %v3417
    %3971 = vmatprep.subr.bf16.mxu0 %v3415
    %3972 = vmatpush2.bf16.msra.mxu0 %v3414
    %3973 = vmatprep.subr.bf16.mxu0 %v3412
    %3974 = vmatpush2.bf16.msra.mxu0 %v3411
    %3975 = vmatprep.subr.bf16.mxu0 %v3409
    %3976 = vmatpush2.bf16.msra.mxu0 %v3408
    %3977 = vmatprep.subr.bf16.mxu0 %v3406
    %3978 = vmatpush2.bf16.msra.mxu0 %v3405
    %3979 = vmatprep.subr.bf16.mxu0 %v3403
    %3980 = vmatpush2.bf16.msra.mxu0 %v3402
    %3981 = vmatprep.mubr.bf16.mxu0 %v2349
    %3982 = vmatmul.mubr.bf16.gmra.mxu0 %v2348
    %v3983 = vpop.f32.mrf.mxu0
    %v3984 = vadd.f32 %v3941, %v3983
    %v3985 = vpop.f32.mrf.mxu0
    %v3986 = vadd.f32 %v3943, %v3985
    %v3987 = vpop.f32.mrf.mxu0
    %v3988 = vadd.f32 %v3945, %v3987
    %v3989 = vpop.f32.mrf.mxu0
    %v3990 = vadd.f32 %v3947, %v3989
    %3991 = vdwg.mxu0
    %3992 = vmatprep.subr.bf16.mxu0 %v3448
    %3993 = vmatpush1.bf16.msra.mxu0 %v3447
    %3994 = vmatprep.subr.bf16.mxu0 %v3445
    %3995 = vmatpush1.bf16.msra.mxu0 %v3444
    %3996 = vmatprep.subr.bf16.mxu0 %v3442
    %3997 = vmatpush1.bf16.msra.mxu0 %v3441
    %3998 = vmatprep.subr.bf16.mxu0 %v3439
    %3999 = vmatpush1.bf16.msra.mxu0 %v3438
    %4000 = vmatprep.subr.bf16.mxu0 %v3436
    %4001 = vmatpush1.bf16.msra.mxu0 %v3435
    %4002 = vmatprep.subr.bf16.mxu0 %v3433
    %4003 = vmatpush1.bf16.msra.mxu0 %v3432
    %4004 = vmatprep.subr.bf16.mxu0 %v3430
    %4005 = vmatpush1.bf16.msra.mxu0 %v3429
    %4006 = vmatprep.subr.bf16.mxu0 %v3427
    %4007 = vmatpush1.bf16.msra.mxu0 %v3426
    %4008 = vmatprep.subr.bf16.mxu0 %v3472
    %4009 = vmatpush2.bf16.msra.mxu0 %v3471
    %4010 = vmatprep.subr.bf16.mxu0 %v3469
    %4011 = vmatpush2.bf16.msra.mxu0 %v3468
    %4012 = vmatprep.subr.bf16.mxu0 %v3466
    %4013 = vmatpush2.bf16.msra.mxu0 %v3465
    %4014 = vmatprep.subr.bf16.mxu0 %v3463
    %4015 = vmatpush2.bf16.msra.mxu0 %v3462
    %4016 = vmatprep.subr.bf16.mxu0 %v3460
    %4017 = vmatpush2.bf16.msra.mxu0 %v3459
    %4018 = vmatprep.subr.bf16.mxu0 %v3457
    %4019 = vmatpush2.bf16.msra.mxu0 %v3456
    %4020 = vmatprep.subr.bf16.mxu0 %v3454
    %4021 = vmatpush2.bf16.msra.mxu0 %v3453
    %4022 = vmatprep.subr.bf16.mxu0 %v3451
    %4023 = vmatpush2.bf16.msra.mxu0 %v3450
    %4024 = vmatprep.mubr.bf16.mxu0 %v2351
    %4025 = vmatmul.mubr.bf16.gmra.mxu0 %v2350
    %v4026 = vpop.f32.mrf.mxu0
    %v4027 = vadd.f32 %v3984, %v4026
    %v4028 = vpop.f32.mrf.mxu0
    %v4029 = vadd.f32 %v3986, %v4028
    %v4030 = vpop.f32.mrf.mxu0
    %v4031 = vadd.f32 %v3988, %v4030
    %v4032 = vpop.f32.mrf.mxu0
    %v4033 = vadd.f32 %v3990, %v4032
    %4034 = vdwg.mxu0
    %4035 = vmatprep.subr.bf16.mxu0 %v3496
    %4036 = vmatpush1.bf16.msra.mxu0 %v3495
    %4037 = vmatprep.subr.bf16.mxu0 %v3493
    %4038 = vmatpush1.bf16.msra.mxu0 %v3492
    %4039 = vmatprep.subr.bf16.mxu0 %v3490
    %4040 = vmatpush1.bf16.msra.mxu0 %v3489
    %4041 = vmatprep.subr.bf16.mxu0 %v3487
    %4042 = vmatpush1.bf16.msra.mxu0 %v3486
    %4043 = vmatprep.subr.bf16.mxu0 %v3484
    %4044 = vmatpush1.bf16.msra.mxu0 %v3483
    %4045 = vmatprep.subr.bf16.mxu0 %v3481
    %4046 = vmatpush1.bf16.msra.mxu0 %v3480
    %4047 = vmatprep.subr.bf16.mxu0 %v3478
    %4048 = vmatpush1.bf16.msra.mxu0 %v3477
    %4049 = vmatprep.subr.bf16.mxu0 %v3475
    %4050 = vmatpush1.bf16.msra.mxu0 %v3474
    %4051 = vmatprep.subr.bf16.mxu0 %v3520
    %4052 = vmatpush2.bf16.msra.mxu0 %v3519
    %4053 = vmatprep.subr.bf16.mxu0 %v3517
    %4054 = vmatpush2.bf16.msra.mxu0 %v3516
    %4055 = vmatprep.subr.bf16.mxu0 %v3514
    %4056 = vmatpush2.bf16.msra.mxu0 %v3513
    %4057 = vmatprep.subr.bf16.mxu0 %v3511
    %4058 = vmatpush2.bf16.msra.mxu0 %v3510
    %4059 = vmatprep.subr.bf16.mxu0 %v3508
    %4060 = vmatpush2.bf16.msra.mxu0 %v3507
    %4061 = vmatprep.subr.bf16.mxu0 %v3505
    %4062 = vmatpush2.bf16.msra.mxu0 %v3504
    %4063 = vmatprep.subr.bf16.mxu0 %v3502
    %4064 = vmatpush2.bf16.msra.mxu0 %v3501
    %4065 = vmatprep.subr.bf16.mxu0 %v3499
    %4066 = vmatpush2.bf16.msra.mxu0 %v3498
    %4067 = vmatprep.mubr.bf16.mxu0 %v2353
    %4068 = vmatmul.mubr.bf16.gmra.mxu0 %v2352
    %v4069 = vpop.f32.mrf.mxu0
    %v4070 = vadd.f32 %v4027, %v4069
    %v4071 = vpop.f32.mrf.mxu0
    %v4072 = vadd.f32 %v4029, %v4071
    %v4073 = vpop.f32.mrf.mxu0
    %v4074 = vadd.f32 %v4031, %v4073
    %v4075 = vpop.f32.mrf.mxu0
    %v4076 = vadd.f32 %v4033, %v4075
    %4077 = vdwg.mxu0
    %4078 = vmatprep.subr.bf16.mxu0 %v3544
    %4079 = vmatpush1.bf16.msra.mxu0 %v3543
    %4080 = vmatprep.subr.bf16.mxu0 %v3541
    %4081 = vmatpush1.bf16.msra.mxu0 %v3540
    %4082 = vmatprep.subr.bf16.mxu0 %v3538
    %4083 = vmatpush1.bf16.msra.mxu0 %v3537
    %4084 = vmatprep.subr.bf16.mxu0 %v3535
    %4085 = vmatpush1.bf16.msra.mxu0 %v3534
    %4086 = vmatprep.subr.bf16.mxu0 %v3532
    %4087 = vmatpush1.bf16.msra.mxu0 %v3531
    %4088 = vmatprep.subr.bf16.mxu0 %v3529
    %4089 = vmatpush1.bf16.msra.mxu0 %v3528
    %4090 = vmatprep.subr.bf16.mxu0 %v3526
    %4091 = vmatpush1.bf16.msra.mxu0 %v3525
    %4092 = vmatprep.subr.bf16.mxu0 %v3523
    %4093 = vmatpush1.bf16.msra.mxu0 %v3522
    %4094 = vmatprep.subr.bf16.mxu0 %v3568
    %4095 = vmatpush2.bf16.msra.mxu0 %v3567
    %4096 = vmatprep.subr.bf16.mxu0 %v3565
    %4097 = vmatpush2.bf16.msra.mxu0 %v3564
    %4098 = vmatprep.subr.bf16.mxu0 %v3562
    %4099 = vmatpush2.bf16.msra.mxu0 %v3561
    %4100 = vmatprep.subr.bf16.mxu0 %v3559
    %4101 = vmatpush2.bf16.msra.mxu0 %v3558
    %4102 = vmatprep.subr.bf16.mxu0 %v3556
    %4103 = vmatpush2.bf16.msra.mxu0 %v3555
    %4104 = vmatprep.subr.bf16.mxu0 %v3553
    %4105 = vmatpush2.bf16.msra.mxu0 %v3552
    %4106 = vmatprep.subr.bf16.mxu0 %v3550
    %4107 = vmatpush2.bf16.msra.mxu0 %v3549
    %4108 = vmatprep.subr.bf16.mxu0 %v3547
    %4109 = vmatpush2.bf16.msra.mxu0 %v3546
    %4110 = vmatprep.mubr.bf16.mxu0 %v2355
    %4111 = vmatmul.mubr.bf16.gmra.mxu0 %v2354
    %v4112 = vpop.f32.mrf.mxu0
    %v4113 = vadd.f32 %v4070, %v4112
    %v4114 = vpop.f32.mrf.mxu0
    %v4115 = vadd.f32 %v4072, %v4114
    %v4116 = vpop.f32.mrf.mxu0
    %v4117 = vadd.f32 %v4074, %v4116
    %v4118 = vpop.f32.mrf.mxu0
    %v4119 = vadd.f32 %v4076, %v4118
    %4120 = vdwg.mxu0
    %4121 = vmatprep.subr.bf16.mxu0 %v3592
    %4122 = vmatpush1.bf16.msra.mxu0 %v3591
    %4123 = vmatprep.subr.bf16.mxu0 %v3589
    %4124 = vmatpush1.bf16.msra.mxu0 %v3588
    %4125 = vmatprep.subr.bf16.mxu0 %v3586
    %4126 = vmatpush1.bf16.msra.mxu0 %v3585
    %4127 = vmatprep.subr.bf16.mxu0 %v3583
    %4128 = vmatpush1.bf16.msra.mxu0 %v3582
    %4129 = vmatprep.subr.bf16.mxu0 %v3580
    %4130 = vmatpush1.bf16.msra.mxu0 %v3579
    %4131 = vmatprep.subr.bf16.mxu0 %v3577
    %4132 = vmatpush1.bf16.msra.mxu0 %v3576
    %4133 = vmatprep.subr.bf16.mxu0 %v3574
    %4134 = vmatpush1.bf16.msra.mxu0 %v3573
    %4135 = vmatprep.subr.bf16.mxu0 %v3571
    %4136 = vmatpush1.bf16.msra.mxu0 %v3570
    %4137 = vmatprep.subr.bf16.mxu0 %v3616
    %4138 = vmatpush2.bf16.msra.mxu0 %v3615
    %4139 = vmatprep.subr.bf16.mxu0 %v3613
    %4140 = vmatpush2.bf16.msra.mxu0 %v3612
    %4141 = vmatprep.subr.bf16.mxu0 %v3610
    %4142 = vmatpush2.bf16.msra.mxu0 %v3609
    %4143 = vmatprep.subr.bf16.mxu0 %v3607
    %4144 = vmatpush2.bf16.msra.mxu0 %v3606
    %4145 = vmatprep.subr.bf16.mxu0 %v3604
    %4146 = vmatpush2.bf16.msra.mxu0 %v3603
    %4147 = vmatprep.subr.bf16.mxu0 %v3601
    %4148 = vmatpush2.bf16.msra.mxu0 %v3600
    %4149 = vmatprep.subr.bf16.mxu0 %v3598
    %4150 = vmatpush2.bf16.msra.mxu0 %v3597
    %4151 = vmatprep.subr.bf16.mxu0 %v3595
    %4152 = vmatpush2.bf16.msra.mxu0 %v3594
    %4153 = vmatprep.mubr.bf16.mxu0 %v2357
    %4154 = vmatmul.mubr.bf16.gmra.mxu0 %v2356
    %v4155 = vpop.f32.mrf.mxu0
    %v4156 = vadd.f32 %v4113, %v4155
    %v4157 = vpop.f32.mrf.mxu0
    %v4158 = vadd.f32 %v4115, %v4157
    %v4159 = vpop.f32.mrf.mxu0
    %v4160 = vadd.f32 %v4117, %v4159
    %v4161 = vpop.f32.mrf.mxu0
    %v4162 = vadd.f32 %v4119, %v4161
    %4163 = vdwg.mxu0
    %4164 = vmatprep.subr.bf16.mxu0 0
    %4165 = vmatpush1.bf16.msra.mxu0 %v3353
    %4166 = vmatprep.subr.bf16.mxu0 0
    %4167 = vmatpush1.bf16.msra.mxu0 %v3350
    %4168 = vmatprep.subr.bf16.mxu0 0
    %4169 = vmatpush1.bf16.msra.mxu0 %v3347
    %4170 = vmatprep.subr.bf16.mxu0 0
    %4171 = vmatpush1.bf16.msra.mxu0 %v3344
    %4172 = vmatprep.subr.bf16.mxu0 0
    %4173 = vmatpush1.bf16.msra.mxu0 %v3341
    %4174 = vmatprep.subr.bf16.mxu0 0
    %4175 = vmatpush1.bf16.msra.mxu0 %v3338
    %4176 = vmatprep.subr.bf16.mxu0 0
    %4177 = vmatpush1.bf16.msra.mxu0 %v3335
    %4178 = vmatprep.subr.bf16.mxu0 0
    %4179 = vmatpush1.bf16.msra.mxu0 %v3332
    %4180 = vmatprep.subr.bf16.mxu0 0
    %4181 = vmatpush2.bf16.msra.mxu0 %v3377
    %4182 = vmatprep.subr.bf16.mxu0 0
    %4183 = vmatpush2.bf16.msra.mxu0 %v3374
    %4184 = vmatprep.subr.bf16.mxu0 0
    %4185 = vmatpush2.bf16.msra.mxu0 %v3371
    %4186 = vmatprep.subr.bf16.mxu0 0
    %4187 = vmatpush2.bf16.msra.mxu0 %v3368
    %4188 = vmatprep.subr.bf16.mxu0 0
    %4189 = vmatpush2.bf16.msra.mxu0 %v3365
    %4190 = vmatprep.subr.bf16.mxu0 0
    %4191 = vmatpush2.bf16.msra.mxu0 %v3362
    %4192 = vmatprep.subr.bf16.mxu0 0
    %4193 = vmatpush2.bf16.msra.mxu0 %v3359
    %4194 = vmatprep.subr.bf16.mxu0 0
    %4195 = vmatpush2.bf16.msra.mxu0 %v3356
    %4196 = vmatprep.mubr.bf16.mxu0 %v2347
    %4197 = vmatmul.mubr.bf16.gmra.mxu0 %v2346
    %v4198 = vpop.f32.mrf.mxu0
    %v4199 = vadd.f32 0.0, %v4198
    %v4200 = vpop.f32.mrf.mxu0
    %v4201 = vpop.f32.mrf.mxu0
    %v4202 = vadd.f32 0.0, %v4201
    %v4203 = vpop.f32.mrf.mxu0
    %4204 = vdwg.mxu0
    %4205 = vmatprep.subr.bf16.mxu0 0
    %4206 = vmatpush1.bf16.msra.mxu0 %v3401
    %4207 = vmatprep.subr.bf16.mxu0 0
    %4208 = vmatpush1.bf16.msra.mxu0 %v3398
    %4209 = vmatprep.subr.bf16.mxu0 0
    %4210 = vmatpush1.bf16.msra.mxu0 %v3395
    %4211 = vmatprep.subr.bf16.mxu0 0
    %4212 = vmatpush1.bf16.msra.mxu0 %v3392
    %4213 = vmatprep.subr.bf16.mxu0 0
    %4214 = vmatpush1.bf16.msra.mxu0 %v3389
    %4215 = vmatprep.subr.bf16.mxu0 0
    %4216 = vmatpush1.bf16.msra.mxu0 %v3386
    %4217 = vmatprep.subr.bf16.mxu0 0
    %4218 = vmatpush1.bf16.msra.mxu0 %v3383
    %4219 = vmatprep.subr.bf16.mxu0 0
    %4220 = vmatpush1.bf16.msra.mxu0 %v3380
    %4221 = vmatprep.subr.bf16.mxu0 0
    %4222 = vmatpush2.bf16.msra.mxu0 %v3425
    %4223 = vmatprep.subr.bf16.mxu0 0
    %4224 = vmatpush2.bf16.msra.mxu0 %v3422
    %4225 = vmatprep.subr.bf16.mxu0 0
    %4226 = vmatpush2.bf16.msra.mxu0 %v3419
    %4227 = vmatprep.subr.bf16.mxu0 0
    %4228 = vmatpush2.bf16.msra.mxu0 %v3416
    %4229 = vmatprep.subr.bf16.mxu0 0
    %4230 = vmatpush2.bf16.msra.mxu0 %v3413
    %4231 = vmatprep.subr.bf16.mxu0 0
    %4232 = vmatpush2.bf16.msra.mxu0 %v3410
    %4233 = vmatprep.subr.bf16.mxu0 0
    %4234 = vmatpush2.bf16.msra.mxu0 %v3407
    %4235 = vmatprep.subr.bf16.mxu0 0
    %4236 = vmatpush2.bf16.msra.mxu0 %v3404
    %4237 = vmatprep.mubr.bf16.mxu0 %v2349
    %4238 = vmatmul.mubr.bf16.gmra.mxu0 %v2348
    %v4239 = vpop.f32.mrf.mxu0
    %v4240 = vadd.f32 %v4199, %v4239
    %v4241 = vpop.f32.mrf.mxu0
    %v4242 = vpop.f32.mrf.mxu0
    %v4243 = vadd.f32 %v4202, %v4242
    %v4244 = vpop.f32.mrf.mxu0
    %4245 = vdwg.mxu0
    %4246 = vmatprep.subr.bf16.mxu0 0
    %4247 = vmatpush1.bf16.msra.mxu0 %v3449
    %4248 = vmatprep.subr.bf16.mxu0 0
    %4249 = vmatpush1.bf16.msra.mxu0 %v3446
    %4250 = vmatprep.subr.bf16.mxu0 0
    %4251 = vmatpush1.bf16.msra.mxu0 %v3443
    %4252 = vmatprep.subr.bf16.mxu0 0
    %4253 = vmatpush1.bf16.msra.mxu0 %v3440
    %4254 = vmatprep.subr.bf16.mxu0 0
    %4255 = vmatpush1.bf16.msra.mxu0 %v3437
    %4256 = vmatprep.subr.bf16.mxu0 0
    %4257 = vmatpush1.bf16.msra.mxu0 %v3434
    %4258 = vmatprep.subr.bf16.mxu0 0
    %4259 = vmatpush1.bf16.msra.mxu0 %v3431
    %4260 = vmatprep.subr.bf16.mxu0 0
    %4261 = vmatpush1.bf16.msra.mxu0 %v3428
    %4262 = vmatprep.subr.bf16.mxu0 0
    %4263 = vmatpush2.bf16.msra.mxu0 %v3473
    %4264 = vmatprep.subr.bf16.mxu0 0
    %4265 = vmatpush2.bf16.msra.mxu0 %v3470
    %4266 = vmatprep.subr.bf16.mxu0 0
    %4267 = vmatpush2.bf16.msra.mxu0 %v3467
    %4268 = vmatprep.subr.bf16.mxu0 0
    %4269 = vmatpush2.bf16.msra.mxu0 %v3464
    %4270 = vmatprep.subr.bf16.mxu0 0
    %4271 = vmatpush2.bf16.msra.mxu0 %v3461
    %4272 = vmatprep.subr.bf16.mxu0 0
    %4273 = vmatpush2.bf16.msra.mxu0 %v3458
    %4274 = vmatprep.subr.bf16.mxu0 0
    %4275 = vmatpush2.bf16.msra.mxu0 %v3455
    %4276 = vmatprep.subr.bf16.mxu0 0
    %4277 = vmatpush2.bf16.msra.mxu0 %v3452
    %4278 = vmatprep.mubr.bf16.mxu0 %v2351
    %4279 = vmatmul.mubr.bf16.gmra.mxu0 %v2350
    %v4280 = vpop.f32.mrf.mxu0
    %v4281 = vadd.f32 %v4240, %v4280
    %v4282 = vpop.f32.mrf.mxu0
    %v4283 = vpop.f32.mrf.mxu0
    %v4284 = vadd.f32 %v4243, %v4283
    %v4285 = vpop.f32.mrf.mxu0
    %4286 = vdwg.mxu0
    %4287 = vmatprep.subr.bf16.mxu0 0
    %4288 = vmatpush1.bf16.msra.mxu0 %v3497
    %4289 = vmatprep.subr.bf16.mxu0 0
    %4290 = vmatpush1.bf16.msra.mxu0 %v3494
    %4291 = vmatprep.subr.bf16.mxu0 0
    %4292 = vmatpush1.bf16.msra.mxu0 %v3491
    %4293 = vmatprep.subr.bf16.mxu0 0
    %4294 = vmatpush1.bf16.msra.mxu0 %v3488
    %4295 = vmatprep.subr.bf16.mxu0 0
    %4296 = vmatpush1.bf16.msra.mxu0 %v3485
    %4297 = vmatprep.subr.bf16.mxu0 0
    %4298 = vmatpush1.bf16.msra.mxu0 %v3482
    %4299 = vmatprep.subr.bf16.mxu0 0
    %4300 = vmatpush1.bf16.msra.mxu0 %v3479
    %4301 = vmatprep.subr.bf16.mxu0 0
    %4302 = vmatpush1.bf16.msra.mxu0 %v3476
    %4303 = vmatprep.subr.bf16.mxu0 0
    %4304 = vmatpush2.bf16.msra.mxu0 %v3521
    %4305 = vmatprep.subr.bf16.mxu0 0
    %4306 = vmatpush2.bf16.msra.mxu0 %v3518
    %4307 = vmatprep.subr.bf16.mxu0 0
    %4308 = vmatpush2.bf16.msra.mxu0 %v3515
    %4309 = vmatprep.subr.bf16.mxu0 0
    %4310 = vmatpush2.bf16.msra.mxu0 %v3512
    %4311 = vmatprep.subr.bf16.mxu0 0
    %4312 = vmatpush2.bf16.msra.mxu0 %v3509
    %4313 = vmatprep.subr.bf16.mxu0 0
    %4314 = vmatpush2.bf16.msra.mxu0 %v3506
    %4315 = vmatprep.subr.bf16.mxu0 0
    %4316 = vmatpush2.bf16.msra.mxu0 %v3503
    %4317 = vmatprep.subr.bf16.mxu0 0
    %4318 = vmatpush2.bf16.msra.mxu0 %v3500
    %4319 = vmatprep.mubr.bf16.mxu0 %v2353
    %4320 = vmatmul.mubr.bf16.gmra.mxu0 %v2352
    %v4321 = vpop.f32.mrf.mxu0
    %v4322 = vadd.f32 %v4281, %v4321
    %v4323 = vpop.f32.mrf.mxu0
    %v4324 = vpop.f32.mrf.mxu0
    %v4325 = vadd.f32 %v4284, %v4324
    %v4326 = vpop.f32.mrf.mxu0
    %4327 = vdwg.mxu0
    %4328 = vmatprep.subr.bf16.mxu0 0
    %4329 = vmatpush1.bf16.msra.mxu0 %v3545
    %4330 = vmatprep.subr.bf16.mxu0 0
    %4331 = vmatpush1.bf16.msra.mxu0 %v3542
    %4332 = vmatprep.subr.bf16.mxu0 0
    %4333 = vmatpush1.bf16.msra.mxu0 %v3539
    %4334 = vmatprep.subr.bf16.mxu0 0
    %4335 = vmatpush1.bf16.msra.mxu0 %v3536
    %4336 = vmatprep.subr.bf16.mxu0 0
    %4337 = vmatpush1.bf16.msra.mxu0 %v3533
    %4338 = vmatprep.subr.bf16.mxu0 0
    %4339 = vmatpush1.bf16.msra.mxu0 %v3530
    %4340 = vmatprep.subr.bf16.mxu0 0
    %4341 = vmatpush1.bf16.msra.mxu0 %v3527
    %4342 = vmatprep.subr.bf16.mxu0 0
    %4343 = vmatpush1.bf16.msra.mxu0 %v3524
    %4344 = vmatprep.subr.bf16.mxu0 0
    %4345 = vmatpush2.bf16.msra.mxu0 %v3569
    %4346 = vmatprep.subr.bf16.mxu0 0
    %4347 = vmatpush2.bf16.msra.mxu0 %v3566
    %4348 = vmatprep.subr.bf16.mxu0 0
    %4349 = vmatpush2.bf16.msra.mxu0 %v3563
    %4350 = vmatprep.subr.bf16.mxu0 0
    %4351 = vmatpush2.bf16.msra.mxu0 %v3560
    %4352 = vmatprep.subr.bf16.mxu0 0
    %4353 = vmatpush2.bf16.msra.mxu0 %v3557
    %4354 = vmatprep.subr.bf16.mxu0 0
    %4355 = vmatpush2.bf16.msra.mxu0 %v3554
    %4356 = vmatprep.subr.bf16.mxu0 0
    %4357 = vmatpush2.bf16.msra.mxu0 %v3551
    %4358 = vmatprep.subr.bf16.mxu0 0
    %4359 = vmatpush2.bf16.msra.mxu0 %v3548
    %4360 = vmatprep.mubr.bf16.mxu0 %v2355
    %4361 = vmatmul.mubr.bf16.gmra.mxu0 %v2354
    %v4362 = vpop.f32.mrf.mxu0
    %v4363 = vadd.f32 %v4322, %v4362
    %v4364 = vpop.f32.mrf.mxu0
    %v4365 = vpop.f32.mrf.mxu0
    %v4366 = vadd.f32 %v4325, %v4365
    %v4367 = vpop.f32.mrf.mxu0
    %4368 = vdwg.mxu0
    %4369 = vmatprep.subr.bf16.mxu0 0
    %4370 = vmatpush1.bf16.msra.mxu0 %v3593
    %4371 = vmatprep.subr.bf16.mxu0 0
    %4372 = vmatpush1.bf16.msra.mxu0 %v3590
    %4373 = vmatprep.subr.bf16.mxu0 0
    %4374 = vmatpush1.bf16.msra.mxu0 %v3587
    %4375 = vmatprep.subr.bf16.mxu0 0
    %4376 = vmatpush1.bf16.msra.mxu0 %v3584
    %4377 = vmatprep.subr.bf16.mxu0 0
    %4378 = vmatpush1.bf16.msra.mxu0 %v3581
    %4379 = vmatprep.subr.bf16.mxu0 0
    %4380 = vmatpush1.bf16.msra.mxu0 %v3578
    %4381 = vmatprep.subr.bf16.mxu0 0
    %4382 = vmatpush1.bf16.msra.mxu0 %v3575
    %4383 = vmatprep.subr.bf16.mxu0 0
    %4384 = vmatpush1.bf16.msra.mxu0 %v3572
    %4385 = vmatprep.subr.bf16.mxu0 0
    %4386 = vmatpush2.bf16.msra.mxu0 %v3617
    %4387 = vmatprep.subr.bf16.mxu0 0
    %4388 = vmatpush2.bf16.msra.mxu0 %v3614
    %4389 = vmatprep.subr.bf16.mxu0 0
    %4390 = vmatpush2.bf16.msra.mxu0 %v3611
    %4391 = vmatprep.subr.bf16.mxu0 0
    %4392 = vmatpush2.bf16.msra.mxu0 %v3608
    %4393 = vmatprep.subr.bf16.mxu0 0
    %4394 = vmatpush2.bf16.msra.mxu0 %v3605
    %4395 = vmatprep.subr.bf16.mxu0 0
    %4396 = vmatpush2.bf16.msra.mxu0 %v3602
    %4397 = vmatprep.subr.bf16.mxu0 0
    %4398 = vmatpush2.bf16.msra.mxu0 %v3599
    %4399 = vmatprep.subr.bf16.mxu0 0
    %4400 = vmatpush2.bf16.msra.mxu0 %v3596
    %4401 = vmatprep.mubr.bf16.mxu0 %v2357
    %4402 = vmatmul.mubr.bf16.gmra.mxu0 %v2356
    %v4403 = vpop.f32.mrf.mxu0
    %v4404 = vadd.f32 %v4363, %v4403
    %v4405 = vpop.f32.mrf.mxu0
    %v4406 = vpop.f32.mrf.mxu0
    %v4407 = vadd.f32 %v4366, %v4406
    %v4408 = vpop.f32.mrf.mxu0
    %4409 = vdwg.mxu0
    %v4410 = vld [vmem:[#allocation7 + $0xc] sm:$0xff]
    %v4411 = vld [vmem:[#allocation7 + $0x14] sm:$0xf]
    %v4412 = vld [vmem:[#allocation7 + $0x3c] sm:$0xff]
    %v4413 = vld [vmem:[#allocation7 + $0x44] sm:$0xf]
    %v4414 = vld [vmem:[#allocation7 + $0x6c] sm:$0xff]
    %v4415 = vld [vmem:[#allocation7 + $0x74] sm:$0xf]
    %v4416 = vld [vmem:[#allocation7 + $0x9c] sm:$0xff]
    %v4417 = vld [vmem:[#allocation7 + $0xa4] sm:$0xf]
    %v4418 = vld [vmem:[#allocation7 + $0xcc] sm:$0xff]
    %v4419 = vld [vmem:[#allocation7 + $0xd4] sm:$0xf]
    %v4420 = vld [vmem:[#allocation7 + $0xfc] sm:$0xff]
    %v4421 = vld [vmem:[#allocation7 + $0x104] sm:$0xf]
    %v4422 = vld [vmem:[#allocation7 + $0x12c] sm:$0xff]
    %v4423 = vld [vmem:[#allocation7 + $0x134] sm:$0xf]
    %v4424 = vld [vmem:[#allocation7 + $0x15c] sm:$0xff]
    %v4425 = vld [vmem:[#allocation7 + $0x164] sm:$0xf]
    %v4426 = vld [vmem:[#allocation7 + $0x18c] sm:$0xff]
    %v4427 = vld [vmem:[#allocation7 + $0x194] sm:$0xf]
    %v4428 = vld [vmem:[#allocation7 + $0x1bc] sm:$0xff]
    %v4429 = vld [vmem:[#allocation7 + $0x1c4] sm:$0xf]
    %v4430 = vld [vmem:[#allocation7 + $0x1ec] sm:$0xff]
    %v4431 = vld [vmem:[#allocation7 + $0x1f4] sm:$0xf]
    %v4432 = vld [vmem:[#allocation7 + $0x21c] sm:$0xff]
    %v4433 = vld [vmem:[#allocation7 + $0x224] sm:$0xf]
    %v4434 = vld [vmem:[#allocation7 + $0x24c] sm:$0xff]
    %v4435 = vld [vmem:[#allocation7 + $0x254] sm:$0xf]
    %v4436 = vld [vmem:[#allocation7 + $0x27c] sm:$0xff]
    %v4437 = vld [vmem:[#allocation7 + $0x284] sm:$0xf]
    %v4438 = vld [vmem:[#allocation7 + $0x2ac] sm:$0xff]
    %v4439 = vld [vmem:[#allocation7 + $0x2b4] sm:$0xf]
    %v4440 = vld [vmem:[#allocation7 + $0x2dc] sm:$0xff]
    %v4441 = vld [vmem:[#allocation7 + $0x2e4] sm:$0xf]
    %v4442 = vld [vmem:[#allocation7 + $0x30c] sm:$0xff]
    %v4443 = vld [vmem:[#allocation7 + $0x314] sm:$0xf]
    %v4444 = vld [vmem:[#allocation7 + $0x33c] sm:$0xff]
    %v4445 = vld [vmem:[#allocation7 + $0x344] sm:$0xf]
    %v4446 = vld [vmem:[#allocation7 + $0x36c] sm:$0xff]
    %v4447 = vld [vmem:[#allocation7 + $0x374] sm:$0xf]
    %v4448 = vld [vmem:[#allocation7 + $0x39c] sm:$0xff]
    %v4449 = vld [vmem:[#allocation7 + $0x3a4] sm:$0xf]
    %v4450 = vld [vmem:[#allocation7 + $0x3cc] sm:$0xff]
    %v4451 = vld [vmem:[#allocation7 + $0x3d4] sm:$0xf]
    %v4452 = vld [vmem:[#allocation7 + $0x3fc] sm:$0xff]
    %v4453 = vld [vmem:[#allocation7 + $0x404] sm:$0xf]
    %v4454 = vld [vmem:[#allocation7 + $0x42c] sm:$0xff]
    %v4455 = vld [vmem:[#allocation7 + $0x434] sm:$0xf]
    %v4456 = vld [vmem:[#allocation7 + $0x45c] sm:$0xff]
    %v4457 = vld [vmem:[#allocation7 + $0x464] sm:$0xf]
    %v4458 = vld [vmem:[#allocation7 + $0x48c] sm:$0xff]
    %v4459 = vld [vmem:[#allocation7 + $0x494] sm:$0xf]
    %v4460 = vld [vmem:[#allocation7 + $0x4bc] sm:$0xff]
    %v4461 = vld [vmem:[#allocation7 + $0x4c4] sm:$0xf]
    %v4462 = vld [vmem:[#allocation7 + $0x4ec] sm:$0xff]
    %v4463 = vld [vmem:[#allocation7 + $0x4f4] sm:$0xf]
    %v4464 = vld [vmem:[#allocation7 + $0x51c] sm:$0xff]
    %v4465 = vld [vmem:[#allocation7 + $0x524] sm:$0xf]
    %v4466 = vld [vmem:[#allocation7 + $0x54c] sm:$0xff]
    %v4467 = vld [vmem:[#allocation7 + $0x554] sm:$0xf]
    %v4468 = vld [vmem:[#allocation7 + $0x57c] sm:$0xff]
    %v4469 = vld [vmem:[#allocation7 + $0x584] sm:$0xf]
    %v4470 = vld [vmem:[#allocation7 + $0x5ac] sm:$0xff]
    %v4471 = vld [vmem:[#allocation7 + $0x5b4] sm:$0xf]
    %v4472 = vld [vmem:[#allocation7 + $0x5dc] sm:$0xff]
    %v4473 = vld [vmem:[#allocation7 + $0x5e4] sm:$0xf]
    %v4474 = vld [vmem:[#allocation7 + $0x60c] sm:$0xff]
    %v4475 = vld [vmem:[#allocation7 + $0x614] sm:$0xf]
    %v4476 = vld [vmem:[#allocation7 + $0x63c] sm:$0xff]
    %v4477 = vld [vmem:[#allocation7 + $0x644] sm:$0xf]
    %v4478 = vld [vmem:[#allocation7 + $0x66c] sm:$0xff]
    %v4479 = vld [vmem:[#allocation7 + $0x674] sm:$0xf]
    %v4480 = vld [vmem:[#allocation7 + $0x69c] sm:$0xff]
    %v4481 = vld [vmem:[#allocation7 + $0x6a4] sm:$0xf]
    %v4482 = vld [vmem:[#allocation7 + $0x6cc] sm:$0xff]
    %v4483 = vld [vmem:[#allocation7 + $0x6d4] sm:$0xf]
    %v4484 = vld [vmem:[#allocation7 + $0x6fc] sm:$0xff]
    %v4485 = vld [vmem:[#allocation7 + $0x704] sm:$0xf]
    %v4486 = vld [vmem:[#allocation7 + $0x72c] sm:$0xff]
    %v4487 = vld [vmem:[#allocation7 + $0x734] sm:$0xf]
    %v4488 = vld [vmem:[#allocation7 + $0x75c] sm:$0xff]
    %v4489 = vld [vmem:[#allocation7 + $0x764] sm:$0xf]
    %v4490 = vld [vmem:[#allocation7 + $0x78c] sm:$0xff]
    %v4491 = vld [vmem:[#allocation7 + $0x794] sm:$0xf]
    %v4492 = vld [vmem:[#allocation7 + $0x7bc] sm:$0xff]
    %v4493 = vld [vmem:[#allocation7 + $0x7c4] sm:$0xf]
    %v4494 = vld [vmem:[#allocation7 + $0x7ec] sm:$0xff]
    %v4495 = vld [vmem:[#allocation7 + $0x7f4] sm:$0xf]
    %v4496 = vld [vmem:[#allocation7 + $0x81c] sm:$0xff]
    %v4497 = vld [vmem:[#allocation7 + $0x824] sm:$0xf]
    %v4498 = vld [vmem:[#allocation7 + $0x84c] sm:$0xff]
    %v4499 = vld [vmem:[#allocation7 + $0x854] sm:$0xf]
    %v4500 = vld [vmem:[#allocation7 + $0x87c] sm:$0xff]
    %v4501 = vld [vmem:[#allocation7 + $0x884] sm:$0xf]
    %v4502 = vld [vmem:[#allocation7 + $0x8ac] sm:$0xff]
    %v4503 = vld [vmem:[#allocation7 + $0x8b4] sm:$0xf]
    %v4504 = vld [vmem:[#allocation7 + $0x8dc] sm:$0xff]
    %v4505 = vld [vmem:[#allocation7 + $0x8e4] sm:$0xf]
    %v4506 = vld [vmem:[#allocation7 + $0x90c] sm:$0xff]
    %v4507 = vld [vmem:[#allocation7 + $0x914] sm:$0xf]
    %v4508 = vld [vmem:[#allocation7 + $0x93c] sm:$0xff]
    %v4509 = vld [vmem:[#allocation7 + $0x944] sm:$0xf]
    %v4510 = vld [vmem:[#allocation7 + $0x96c] sm:$0xff]
    %v4511 = vld [vmem:[#allocation7 + $0x974] sm:$0xf]
    %v4512 = vld [vmem:[#allocation7 + $0x99c] sm:$0xff]
    %v4513 = vld [vmem:[#allocation7 + $0x9a4] sm:$0xf]
    %v4514 = vld [vmem:[#allocation7 + $0x9cc] sm:$0xff]
    %v4515 = vld [vmem:[#allocation7 + $0x9d4] sm:$0xf]
    %v4516 = vld [vmem:[#allocation7 + $0x9fc] sm:$0xff]
    %v4517 = vld [vmem:[#allocation7 + $0xa04] sm:$0xf]
    %v4518 = vld [vmem:[#allocation7 + $0xa2c] sm:$0xff]
    %v4519 = vld [vmem:[#allocation7 + $0xa34] sm:$0xf]
    %v4520 = vld [vmem:[#allocation7 + $0xa5c] sm:$0xff]
    %v4521 = vld [vmem:[#allocation7 + $0xa64] sm:$0xf]
    %v4522 = vld [vmem:[#allocation7 + $0xa8c] sm:$0xff]
    %v4523 = vld [vmem:[#allocation7 + $0xa94] sm:$0xf]
    %v4524 = vld [vmem:[#allocation7 + $0xabc] sm:$0xff]
    %v4525 = vld [vmem:[#allocation7 + $0xac4] sm:$0xf]
    %v4526 = vld [vmem:[#allocation7 + $0xaec] sm:$0xff]
    %v4527 = vld [vmem:[#allocation7 + $0xaf4] sm:$0xf]
    %v4528 = vld [vmem:[#allocation7 + $0xb1c] sm:$0xff]
    %v4529 = vld [vmem:[#allocation7 + $0xb24] sm:$0xf]
    %v4530 = vld [vmem:[#allocation7 + $0xb4c] sm:$0xff]
    %v4531 = vld [vmem:[#allocation7 + $0xb54] sm:$0xf]
    %v4532 = vld [vmem:[#allocation7 + $0xb7c] sm:$0xff]
    %v4533 = vld [vmem:[#allocation7 + $0xb84] sm:$0xf]
    %v4534 = vld [vmem:[#allocation7 + $0xbac] sm:$0xff]
    %v4535 = vld [vmem:[#allocation7 + $0xbb4] sm:$0xf]
    %v4536 = vld [vmem:[#allocation7 + $0xbdc] sm:$0xff]
    %v4537 = vld [vmem:[#allocation7 + $0xbe4] sm:$0xf]
    %v4538 = vld [vmem:[#allocation7 + $0xc0c] sm:$0xff]
    %v4539 = vld [vmem:[#allocation7 + $0xc14] sm:$0xf]
    %v4540 = vld [vmem:[#allocation7 + $0xc3c] sm:$0xff]
    %v4541 = vld [vmem:[#allocation7 + $0xc44] sm:$0xf]
    %v4542 = vld [vmem:[#allocation7 + $0xc6c] sm:$0xff]
    %v4543 = vld [vmem:[#allocation7 + $0xc74] sm:$0xf]
    %v4544 = vld [vmem:[#allocation7 + $0xc9c] sm:$0xff]
    %v4545 = vld [vmem:[#allocation7 + $0xca4] sm:$0xf]
    %v4546 = vld [vmem:[#allocation7 + $0xccc] sm:$0xff]
    %v4547 = vld [vmem:[#allocation7 + $0xcd4] sm:$0xf]
    %v4548 = vld [vmem:[#allocation7 + $0xcfc] sm:$0xff]
    %v4549 = vld [vmem:[#allocation7 + $0xd04] sm:$0xf]
    %v4550 = vld [vmem:[#allocation7 + $0xd2c] sm:$0xff]
    %v4551 = vld [vmem:[#allocation7 + $0xd34] sm:$0xf]
    %v4552 = vld [vmem:[#allocation7 + $0xd5c] sm:$0xff]
    %v4553 = vld [vmem:[#allocation7 + $0xd64] sm:$0xf]
    %v4554 = vld [vmem:[#allocation7 + $0xd8c] sm:$0xff]
    %v4555 = vld [vmem:[#allocation7 + $0xd94] sm:$0xf]
    %v4556 = vld [vmem:[#allocation7 + $0xdbc] sm:$0xff]
    %v4557 = vld [vmem:[#allocation7 + $0xdc4] sm:$0xf]
    %v4558 = vld [vmem:[#allocation7 + $0xdec] sm:$0xff]
    %v4559 = vld [vmem:[#allocation7 + $0xdf4] sm:$0xf]
    %v4560 = vld [vmem:[#allocation7 + $0xe1c] sm:$0xff]
    %v4561 = vld [vmem:[#allocation7 + $0xe24] sm:$0xf]
    %v4562 = vld [vmem:[#allocation7 + $0xe4c] sm:$0xff]
    %v4563 = vld [vmem:[#allocation7 + $0xe54] sm:$0xf]
    %v4564 = vld [vmem:[#allocation7 + $0xe7c] sm:$0xff]
    %v4565 = vld [vmem:[#allocation7 + $0xe84] sm:$0xf]
    %v4566 = vld [vmem:[#allocation7 + $0xeac] sm:$0xff]
    %v4567 = vld [vmem:[#allocation7 + $0xeb4] sm:$0xf]
    %v4568 = vld [vmem:[#allocation7 + $0xedc] sm:$0xff]
    %v4569 = vld [vmem:[#allocation7 + $0xee4] sm:$0xf]
    %v4570 = vld [vmem:[#allocation7 + $0xf0c] sm:$0xff]
    %v4571 = vld [vmem:[#allocation7 + $0xf14] sm:$0xf]
    %v4572 = vld [vmem:[#allocation7 + $0xf3c] sm:$0xff]
    %v4573 = vld [vmem:[#allocation7 + $0xf44] sm:$0xf]
    %v4574 = vld [vmem:[#allocation7 + $0xf6c] sm:$0xff]
    %v4575 = vld [vmem:[#allocation7 + $0xf74] sm:$0xf]
    %v4576 = vld [vmem:[#allocation7 + $0xf9c] sm:$0xff]
    %v4577 = vld [vmem:[#allocation7 + $0xfa4] sm:$0xf]
    %v4578 = vld [vmem:[#allocation7 + $0xfcc] sm:$0xff]
    %v4579 = vld [vmem:[#allocation7 + $0xfd4] sm:$0xf]
    %v4580 = vld [vmem:[#allocation7 + $0xffc] sm:$0xff]
    %v4581 = vld [vmem:[#allocation7 + $0x1004] sm:$0xf]
    %v4582 = vld [vmem:[#allocation7 + $0x102c] sm:$0xff]
    %v4583 = vld [vmem:[#allocation7 + $0x1034] sm:$0xf]
    %v4584 = vld [vmem:[#allocation7 + $0x105c] sm:$0xff]
    %v4585 = vld [vmem:[#allocation7 + $0x1064] sm:$0xf]
    %v4586 = vld [vmem:[#allocation7 + $0x108c] sm:$0xff]
    %v4587 = vld [vmem:[#allocation7 + $0x1094] sm:$0xf]
    %v4588 = vld [vmem:[#allocation7 + $0x10bc] sm:$0xff]
    %v4589 = vld [vmem:[#allocation7 + $0x10c4] sm:$0xf]
    %v4590 = vld [vmem:[#allocation7 + $0x10ec] sm:$0xff]
    %v4591 = vld [vmem:[#allocation7 + $0x10f4] sm:$0xf]
    %v4592 = vld [vmem:[#allocation7 + $0x111c] sm:$0xff]
    %v4593 = vld [vmem:[#allocation7 + $0x1124] sm:$0xf]
    %v4594 = vld [vmem:[#allocation7 + $0x114c] sm:$0xff]
    %v4595 = vld [vmem:[#allocation7 + $0x1154] sm:$0xf]
    %v4596 = vld [vmem:[#allocation7 + $0x117c] sm:$0xff]
    %v4597 = vld [vmem:[#allocation7 + $0x1184] sm:$0xf]
    %v4598 = vld [vmem:[#allocation7 + $0x11ac] sm:$0xff]
    %v4599 = vld [vmem:[#allocation7 + $0x11b4] sm:$0xf]
    %v4600 = vld [vmem:[#allocation7 + $0x11dc] sm:$0xff]
    %v4601 = vld [vmem:[#allocation7 + $0x11e4] sm:$0xf]
    %v4602 = vld [vmem:[#allocation7 + $0x120c] sm:$0xff]
    %v4603 = vld [vmem:[#allocation7 + $0x1214] sm:$0xf]
    %v4604 = vld [vmem:[#allocation7 + $0x123c] sm:$0xff]
    %v4605 = vld [vmem:[#allocation7 + $0x1244] sm:$0xf]
    %v4606 = vld [vmem:[#allocation7 + $0x126c] sm:$0xff]
    %v4607 = vld [vmem:[#allocation7 + $0x1274] sm:$0xf]
    %v4608 = vld [vmem:[#allocation7 + $0x129c] sm:$0xff]
    %v4609 = vld [vmem:[#allocation7 + $0x12a4] sm:$0xf]
    %v4610 = vld [vmem:[#allocation7 + $0x12cc] sm:$0xff]
    %v4611 = vld [vmem:[#allocation7 + $0x12d4] sm:$0xf]
    %v4612 = vld [vmem:[#allocation7 + $0x12fc] sm:$0xff]
    %v4613 = vld [vmem:[#allocation7 + $0x1304] sm:$0xf]
    %v4614 = vld [vmem:[#allocation7 + $0x132c] sm:$0xff]
    %v4615 = vld [vmem:[#allocation7 + $0x1334] sm:$0xf]
    %v4616 = vld [vmem:[#allocation7 + $0x135c] sm:$0xff]
    %v4617 = vld [vmem:[#allocation7 + $0x1364] sm:$0xf]
    %v4618 = vld [vmem:[#allocation7 + $0x138c] sm:$0xff]
    %v4619 = vld [vmem:[#allocation7 + $0x1394] sm:$0xf]
    %v4620 = vld [vmem:[#allocation7 + $0x13bc] sm:$0xff]
    %v4621 = vld [vmem:[#allocation7 + $0x13c4] sm:$0xf]
    %v4622 = vld [vmem:[#allocation7 + $0x13ec] sm:$0xff]
    %v4623 = vld [vmem:[#allocation7 + $0x13f4] sm:$0xf]
    %v4624 = vld [vmem:[#allocation7 + $0x141c] sm:$0xff]
    %v4625 = vld [vmem:[#allocation7 + $0x1424] sm:$0xf]
    %v4626 = vld [vmem:[#allocation7 + $0x144c] sm:$0xff]
    %v4627 = vld [vmem:[#allocation7 + $0x1454] sm:$0xf]
    %v4628 = vld [vmem:[#allocation7 + $0x147c] sm:$0xff]
    %v4629 = vld [vmem:[#allocation7 + $0x1484] sm:$0xf]
    %v4630 = vld [vmem:[#allocation7 + $0x14ac] sm:$0xff]
    %v4631 = vld [vmem:[#allocation7 + $0x14b4] sm:$0xf]
    %v4632 = vld [vmem:[#allocation7 + $0x14dc] sm:$0xff]
    %v4633 = vld [vmem:[#allocation7 + $0x14e4] sm:$0xf]
    %v4634 = vld [vmem:[#allocation7 + $0x150c] sm:$0xff]
    %v4635 = vld [vmem:[#allocation7 + $0x1514] sm:$0xf]
    %v4636 = vld [vmem:[#allocation7 + $0x153c] sm:$0xff]
    %v4637 = vld [vmem:[#allocation7 + $0x1544] sm:$0xf]
    %v4638 = vld [vmem:[#allocation7 + $0x156c] sm:$0xff]
    %v4639 = vld [vmem:[#allocation7 + $0x1574] sm:$0xf]
    %v4640 = vld [vmem:[#allocation7 + $0x159c] sm:$0xff]
    %v4641 = vld [vmem:[#allocation7 + $0x15a4] sm:$0xf]
    %v4642 = vld [vmem:[#allocation7 + $0x15cc] sm:$0xff]
    %v4643 = vld [vmem:[#allocation7 + $0x15d4] sm:$0xf]
    %v4644 = vld [vmem:[#allocation7 + $0x15fc] sm:$0xff]
    %v4645 = vld [vmem:[#allocation7 + $0x1604] sm:$0xf]
    %v4646 = vld [vmem:[#allocation7 + $0x162c] sm:$0xff]
    %v4647 = vld [vmem:[#allocation7 + $0x1634] sm:$0xf]
    %v4648 = vld [vmem:[#allocation7 + $0x165c] sm:$0xff]
    %v4649 = vld [vmem:[#allocation7 + $0x1664] sm:$0xf]
    %v4650 = vld [vmem:[#allocation7 + $0x168c] sm:$0xff]
    %v4651 = vld [vmem:[#allocation7 + $0x1694] sm:$0xf]
    %v4652 = vld [vmem:[#allocation7 + $0x16bc] sm:$0xff]
    %v4653 = vld [vmem:[#allocation7 + $0x16c4] sm:$0xf]
    %v4654 = vld [vmem:[#allocation7 + $0x16ec] sm:$0xff]
    %v4655 = vld [vmem:[#allocation7 + $0x16f4] sm:$0xf]
    %v4656 = vld [vmem:[#allocation7 + $0x171c] sm:$0xff]
    %v4657 = vld [vmem:[#allocation7 + $0x1724] sm:$0xf]
    %v4658 = vld [vmem:[#allocation7 + $0x174c] sm:$0xff]
    %v4659 = vld [vmem:[#allocation7 + $0x1754] sm:$0xf]
    %v4660 = vld [vmem:[#allocation7 + $0x177c] sm:$0xff]
    %v4661 = vld [vmem:[#allocation7 + $0x1784] sm:$0xf]
    %v4662 = vld [vmem:[#allocation7 + $0x17ac] sm:$0xff]
    %v4663 = vld [vmem:[#allocation7 + $0x17b4] sm:$0xf]
    %v4664 = vld [vmem:[#allocation7 + $0x17dc] sm:$0xff]
    %v4665 = vld [vmem:[#allocation7 + $0x17e4] sm:$0xf]
    %v4666 = vld [vmem:[#allocation7 + $0x180c] sm:$0xff]
    %v4667 = vld [vmem:[#allocation7 + $0x1814] sm:$0xf]
    %v4668 = vld [vmem:[#allocation7 + $0x183c] sm:$0xff]
    %v4669 = vld [vmem:[#allocation7 + $0x1844] sm:$0xf]
    %v4670 = vld [vmem:[#allocation7 + $0x186c] sm:$0xff]
    %v4671 = vld [vmem:[#allocation7 + $0x1874] sm:$0xf]
    %v4672 = vld [vmem:[#allocation7 + $0x189c] sm:$0xff]
    %v4673 = vld [vmem:[#allocation7 + $0x18a4] sm:$0xf]
    %v4674 = vld [vmem:[#allocation7 + $0x18cc] sm:$0xff]
    %v4675 = vld [vmem:[#allocation7 + $0x18d4] sm:$0xf]
    %v4676 = vld [vmem:[#allocation7 + $0x18fc] sm:$0xff]
    %v4677 = vld [vmem:[#allocation7 + $0x1904] sm:$0xf]
    %v4678 = vld [vmem:[#allocation7 + $0x192c] sm:$0xff]
    %v4679 = vld [vmem:[#allocation7 + $0x1934] sm:$0xf]
    %v4680 = vld [vmem:[#allocation7 + $0x195c] sm:$0xff]
    %v4681 = vld [vmem:[#allocation7 + $0x1964] sm:$0xf]
    %v4682 = vld [vmem:[#allocation7 + $0x198c] sm:$0xff]
    %v4683 = vld [vmem:[#allocation7 + $0x1994] sm:$0xf]
    %v4684 = vld [vmem:[#allocation7 + $0x19bc] sm:$0xff]
    %v4685 = vld [vmem:[#allocation7 + $0x19c4] sm:$0xf]
    %v4686 = vld [vmem:[#allocation7 + $0x19ec] sm:$0xff]
    %v4687 = vld [vmem:[#allocation7 + $0x19f4] sm:$0xf]
    %v4688 = vld [vmem:[#allocation7 + $0x1a1c] sm:$0xff]
    %v4689 = vld [vmem:[#allocation7 + $0x1a24] sm:$0xf]
    %v4690 = vld [vmem:[#allocation7 + $0x1a4c] sm:$0xff]
    %v4691 = vld [vmem:[#allocation7 + $0x1a54] sm:$0xf]
    %v4692 = vld [vmem:[#allocation7 + $0x1a7c] sm:$0xff]
    %v4693 = vld [vmem:[#allocation7 + $0x1a84] sm:$0xf]
    %v4694 = vld [vmem:[#allocation7 + $0x1aac] sm:$0xff]
    %v4695 = vld [vmem:[#allocation7 + $0x1ab4] sm:$0xf]
    %v4696 = vld [vmem:[#allocation7 + $0x1adc] sm:$0xff]
    %v4697 = vld [vmem:[#allocation7 + $0x1ae4] sm:$0xf]
    %v4698 = vld [vmem:[#allocation7 + $0x1b0c] sm:$0xff]
    %v4699 = vld [vmem:[#allocation7 + $0x1b14] sm:$0xf]
    %v4700 = vld [vmem:[#allocation7 + $0x1b3c] sm:$0xff]
    %v4701 = vld [vmem:[#allocation7 + $0x1b44] sm:$0xf]
    %v4702 = vld [vmem:[#allocation7 + $0x1b6c] sm:$0xff]
    %v4703 = vld [vmem:[#allocation7 + $0x1b74] sm:$0xf]
    %v4704 = vld [vmem:[#allocation7 + $0x1b9c] sm:$0xff]
    %v4705 = vld [vmem:[#allocation7 + $0x1ba4] sm:$0xf]
    %v4706 = vld [vmem:[#allocation7 + $0x1bcc] sm:$0xff]
    %v4707 = vld [vmem:[#allocation7 + $0x1bd4] sm:$0xf]
    %v4708 = vld [vmem:[#allocation7 + $0x1bfc] sm:$0xff]
    %v4709 = vld [vmem:[#allocation7 + $0x1c04] sm:$0xf]
    %v4710 = vld [vmem:[#allocation7 + $0x1c2c] sm:$0xff]
    %v4711 = vld [vmem:[#allocation7 + $0x1c34] sm:$0xf]
    %v4712 = vld [vmem:[#allocation7 + $0x1c5c] sm:$0xff]
    %v4713 = vld [vmem:[#allocation7 + $0x1c64] sm:$0xf]
    %v4714 = vld [vmem:[#allocation7 + $0x1c8c] sm:$0xff]
    %v4715 = vld [vmem:[#allocation7 + $0x1c94] sm:$0xf]
    %v4716 = vld [vmem:[#allocation7 + $0x1cbc] sm:$0xff]
    %v4717 = vld [vmem:[#allocation7 + $0x1cc4] sm:$0xf]
    %v4718 = vld [vmem:[#allocation7 + $0x1cec] sm:$0xff]
    %v4719 = vld [vmem:[#allocation7 + $0x1cf4] sm:$0xf]
    %v4720 = vld [vmem:[#allocation7 + $0x1d1c] sm:$0xff]
    %v4721 = vld [vmem:[#allocation7 + $0x1d24] sm:$0xf]
    %v4722 = vld [vmem:[#allocation7 + $0x1d4c] sm:$0xff]
    %v4723 = vld [vmem:[#allocation7 + $0x1d54] sm:$0xf]
    %v4724 = vld [vmem:[#allocation7 + $0x1d7c] sm:$0xff]
    %v4725 = vld [vmem:[#allocation7 + $0x1d84] sm:$0xf]
    %v4726 = vld [vmem:[#allocation7 + $0x1dac] sm:$0xff]
    %v4727 = vld [vmem:[#allocation7 + $0x1db4] sm:$0xf]
    %v4728 = vld [vmem:[#allocation7 + $0x1ddc] sm:$0xff]
    %v4729 = vld [vmem:[#allocation7 + $0x1de4] sm:$0xf]
    %v4730 = vld [vmem:[#allocation7 + $0x1e0c] sm:$0xff]
    %v4731 = vld [vmem:[#allocation7 + $0x1e14] sm:$0xf]
    %v4732 = vld [vmem:[#allocation7 + $0x1e3c] sm:$0xff]
    %v4733 = vld [vmem:[#allocation7 + $0x1e44] sm:$0xf]
    %v4734 = vld [vmem:[#allocation7 + $0x1e6c] sm:$0xff]
    %v4735 = vld [vmem:[#allocation7 + $0x1e74] sm:$0xf]
    %v4736 = vld [vmem:[#allocation7 + $0x1e9c] sm:$0xff]
    %v4737 = vld [vmem:[#allocation7 + $0x1ea4] sm:$0xf]
    %v4738 = vld [vmem:[#allocation7 + $0x1ecc] sm:$0xff]
    %v4739 = vld [vmem:[#allocation7 + $0x1ed4] sm:$0xf]
    %v4740 = vld [vmem:[#allocation7 + $0x1efc] sm:$0xff]
    %v4741 = vld [vmem:[#allocation7 + $0x1f04] sm:$0xf]
    %v4742 = vld [vmem:[#allocation7 + $0x1f2c] sm:$0xff]
    %v4743 = vld [vmem:[#allocation7 + $0x1f34] sm:$0xf]
    %v4744 = vld [vmem:[#allocation7 + $0x1f5c] sm:$0xff]
    %v4745 = vld [vmem:[#allocation7 + $0x1f64] sm:$0xf]
    %v4746 = vld [vmem:[#allocation7 + $0x1f8c] sm:$0xff]
    %v4747 = vld [vmem:[#allocation7 + $0x1f94] sm:$0xf]
    %v4748 = vld [vmem:[#allocation7 + $0x1fbc] sm:$0xff]
    %v4749 = vld [vmem:[#allocation7 + $0x1fc4] sm:$0xf]
    %v4750 = vld [vmem:[#allocation7 + $0x1fec] sm:$0xff]
    %v4751 = vld [vmem:[#allocation7 + $0x1ff4] sm:$0xf]
    %v4752 = vld [vmem:[#allocation7 + $0x201c] sm:$0xff]
    %v4753 = vld [vmem:[#allocation7 + $0x2024] sm:$0xf]
    %v4754 = vld [vmem:[#allocation7 + $0x204c] sm:$0xff]
    %v4755 = vld [vmem:[#allocation7 + $0x2054] sm:$0xf]
    %v4756 = vld [vmem:[#allocation7 + $0x207c] sm:$0xff]
    %v4757 = vld [vmem:[#allocation7 + $0x2084] sm:$0xf]
    %v4758 = vld [vmem:[#allocation7 + $0x20ac] sm:$0xff]
    %v4759 = vld [vmem:[#allocation7 + $0x20b4] sm:$0xf]
    %v4760 = vld [vmem:[#allocation7 + $0x20dc] sm:$0xff]
    %v4761 = vld [vmem:[#allocation7 + $0x20e4] sm:$0xf]
    %v4762 = vld [vmem:[#allocation7 + $0x210c] sm:$0xff]
    %v4763 = vld [vmem:[#allocation7 + $0x2114] sm:$0xf]
    %v4764 = vld [vmem:[#allocation7 + $0x213c] sm:$0xff]
    %v4765 = vld [vmem:[#allocation7 + $0x2144] sm:$0xf]
    %v4766 = vld [vmem:[#allocation7 + $0x216c] sm:$0xff]
    %v4767 = vld [vmem:[#allocation7 + $0x2174] sm:$0xf]
    %v4768 = vld [vmem:[#allocation7 + $0x219c] sm:$0xff]
    %v4769 = vld [vmem:[#allocation7 + $0x21a4] sm:$0xf]
    %v4770 = vld [vmem:[#allocation7 + $0x21cc] sm:$0xff]
    %v4771 = vld [vmem:[#allocation7 + $0x21d4] sm:$0xf]
    %v4772 = vld [vmem:[#allocation7 + $0x21fc] sm:$0xff]
    %v4773 = vld [vmem:[#allocation7 + $0x2204] sm:$0xf]
    %v4774 = vld [vmem:[#allocation7 + $0x222c] sm:$0xff]
    %v4775 = vld [vmem:[#allocation7 + $0x2234] sm:$0xf]
    %v4776 = vld [vmem:[#allocation7 + $0x225c] sm:$0xff]
    %v4777 = vld [vmem:[#allocation7 + $0x2264] sm:$0xf]
    %v4778 = vld [vmem:[#allocation7 + $0x228c] sm:$0xff]
    %v4779 = vld [vmem:[#allocation7 + $0x2294] sm:$0xf]
    %v4780 = vld [vmem:[#allocation7 + $0x22bc] sm:$0xff]
    %v4781 = vld [vmem:[#allocation7 + $0x22c4] sm:$0xf]
    %v4782 = vld [vmem:[#allocation7 + $0x22ec] sm:$0xff]
    %v4783 = vld [vmem:[#allocation7 + $0x22f4] sm:$0xf]
    %v4784 = vld [vmem:[#allocation7 + $0x231c] sm:$0xff]
    %v4785 = vld [vmem:[#allocation7 + $0x2324] sm:$0xf]
    %v4786 = vld [vmem:[#allocation7 + $0x234c] sm:$0xff]
    %v4787 = vld [vmem:[#allocation7 + $0x2354] sm:$0xf]
    %v4788 = vld [vmem:[#allocation7 + $0x237c] sm:$0xff]
    %v4789 = vld [vmem:[#allocation7 + $0x2384] sm:$0xf]
    %v4790 = vld [vmem:[#allocation7 + $0x23ac] sm:$0xff]
    %v4791 = vld [vmem:[#allocation7 + $0x23b4] sm:$0xf]
    %v4792 = vld [vmem:[#allocation7 + $0x23dc] sm:$0xff]
    %v4793 = vld [vmem:[#allocation7 + $0x23e4] sm:$0xf]
    %v5178 = vunpack.c.l.b16 %v4410
    %v5179 = vunpack.c.h.b16 %v4410
    %v5180 = vunpack.c.l.b16 %v4411
    %v5181 = vunpack.c.l.b16 %v4412
    %v5182 = vunpack.c.h.b16 %v4412
    %v5183 = vunpack.c.l.b16 %v4413
    %v5184 = vunpack.c.l.b16 %v4414
    %v5185 = vunpack.c.h.b16 %v4414
    %v5186 = vunpack.c.l.b16 %v4415
    %v5187 = vunpack.c.l.b16 %v4416
    %v5188 = vunpack.c.h.b16 %v4416
    %v5189 = vunpack.c.l.b16 %v4417
    %v5190 = vunpack.c.l.b16 %v4418
    %v5191 = vunpack.c.h.b16 %v4418
    %v5192 = vunpack.c.l.b16 %v4419
    %v5193 = vunpack.c.l.b16 %v4420
    %v5194 = vunpack.c.h.b16 %v4420
    %v5195 = vunpack.c.l.b16 %v4421
    %v5196 = vunpack.c.l.b16 %v4422
    %v5197 = vunpack.c.h.b16 %v4422
    %v5198 = vunpack.c.l.b16 %v4423
    %v5199 = vunpack.c.l.b16 %v4424
    %v5200 = vunpack.c.h.b16 %v4424
    %v5201 = vunpack.c.l.b16 %v4425
    %v5202 = vunpack.c.l.b16 %v4426
    %v5203 = vunpack.c.h.b16 %v4426
    %v5204 = vunpack.c.l.b16 %v4427
    %v5205 = vunpack.c.l.b16 %v4428
    %v5206 = vunpack.c.h.b16 %v4428
    %v5207 = vunpack.c.l.b16 %v4429
    %v5208 = vunpack.c.l.b16 %v4430
    %v5209 = vunpack.c.h.b16 %v4430
    %v5210 = vunpack.c.l.b16 %v4431
    %v5211 = vunpack.c.l.b16 %v4432
    %v5212 = vunpack.c.h.b16 %v4432
    %v5213 = vunpack.c.l.b16 %v4433
    %v5214 = vunpack.c.l.b16 %v4434
    %v5215 = vunpack.c.h.b16 %v4434
    %v5216 = vunpack.c.l.b16 %v4435
    %v5217 = vunpack.c.l.b16 %v4436
    %v5218 = vunpack.c.h.b16 %v4436
    %v5219 = vunpack.c.l.b16 %v4437
    %v5220 = vunpack.c.l.b16 %v4438
    %v5221 = vunpack.c.h.b16 %v4438
    %v5222 = vunpack.c.l.b16 %v4439
    %v5223 = vunpack.c.l.b16 %v4440
    %v5224 = vunpack.c.h.b16 %v4440
    %v5225 = vunpack.c.l.b16 %v4441
    %v5226 = vunpack.c.l.b16 %v4442
    %v5227 = vunpack.c.h.b16 %v4442
    %v5228 = vunpack.c.l.b16 %v4443
    %v5229 = vunpack.c.l.b16 %v4444
    %v5230 = vunpack.c.h.b16 %v4444
    %v5231 = vunpack.c.l.b16 %v4445
    %v5232 = vunpack.c.l.b16 %v4446
    %v5233 = vunpack.c.h.b16 %v4446
    %v5234 = vunpack.c.l.b16 %v4447
    %v5235 = vunpack.c.l.b16 %v4448
    %v5236 = vunpack.c.h.b16 %v4448
    %v5237 = vunpack.c.l.b16 %v4449
    %v5238 = vunpack.c.l.b16 %v4450
    %v5239 = vunpack.c.h.b16 %v4450
    %v5240 = vunpack.c.l.b16 %v4451
    %v5241 = vunpack.c.l.b16 %v4452
    %v5242 = vunpack.c.h.b16 %v4452
    %v5243 = vunpack.c.l.b16 %v4453
    %v5244 = vunpack.c.l.b16 %v4454
    %v5245 = vunpack.c.h.b16 %v4454
    %v5246 = vunpack.c.l.b16 %v4455
    %v5247 = vunpack.c.l.b16 %v4456
    %v5248 = vunpack.c.h.b16 %v4456
    %v5249 = vunpack.c.l.b16 %v4457
    %v5250 = vunpack.c.l.b16 %v4458
    %v5251 = vunpack.c.h.b16 %v4458
    %v5252 = vunpack.c.l.b16 %v4459
    %v5253 = vunpack.c.l.b16 %v4460
    %v5254 = vunpack.c.h.b16 %v4460
    %v5255 = vunpack.c.l.b16 %v4461
    %v5256 = vunpack.c.l.b16 %v4462
    %v5257 = vunpack.c.h.b16 %v4462
    %v5258 = vunpack.c.l.b16 %v4463
    %v5259 = vunpack.c.l.b16 %v4464
    %v5260 = vunpack.c.h.b16 %v4464
    %v5261 = vunpack.c.l.b16 %v4465
    %v5262 = vunpack.c.l.b16 %v4466
    %v5263 = vunpack.c.h.b16 %v4466
    %v5264 = vunpack.c.l.b16 %v4467
    %v5265 = vunpack.c.l.b16 %v4468
    %v5266 = vunpack.c.h.b16 %v4468
    %v5267 = vunpack.c.l.b16 %v4469
    %v5268 = vunpack.c.l.b16 %v4470
    %v5269 = vunpack.c.h.b16 %v4470
    %v5270 = vunpack.c.l.b16 %v4471
    %v5271 = vunpack.c.l.b16 %v4472
    %v5272 = vunpack.c.h.b16 %v4472
    %v5273 = vunpack.c.l.b16 %v4473
    %v5274 = vunpack.c.l.b16 %v4474
    %v5275 = vunpack.c.h.b16 %v4474
    %v5276 = vunpack.c.l.b16 %v4475
    %v5277 = vunpack.c.l.b16 %v4476
    %v5278 = vunpack.c.h.b16 %v4476
    %v5279 = vunpack.c.l.b16 %v4477
    %v5280 = vunpack.c.l.b16 %v4478
    %v5281 = vunpack.c.h.b16 %v4478
    %v5282 = vunpack.c.l.b16 %v4479
    %v5283 = vunpack.c.l.b16 %v4480
    %v5284 = vunpack.c.h.b16 %v4480
    %v5285 = vunpack.c.l.b16 %v4481
    %v5286 = vunpack.c.l.b16 %v4482
    %v5287 = vunpack.c.h.b16 %v4482
    %v5288 = vunpack.c.l.b16 %v4483
    %v5289 = vunpack.c.l.b16 %v4484
    %v5290 = vunpack.c.h.b16 %v4484
    %v5291 = vunpack.c.l.b16 %v4485
    %v5292 = vunpack.c.l.b16 %v4486
    %v5293 = vunpack.c.h.b16 %v4486
    %v5294 = vunpack.c.l.b16 %v4487
    %v5295 = vunpack.c.l.b16 %v4488
    %v5296 = vunpack.c.h.b16 %v4488
    %v5297 = vunpack.c.l.b16 %v4489
    %v5298 = vunpack.c.l.b16 %v4490
    %v5299 = vunpack.c.h.b16 %v4490
    %v5300 = vunpack.c.l.b16 %v4491
    %v5301 = vunpack.c.l.b16 %v4492
    %v5302 = vunpack.c.h.b16 %v4492
    %v5303 = vunpack.c.l.b16 %v4493
    %v5304 = vunpack.c.l.b16 %v4494
    %v5305 = vunpack.c.h.b16 %v4494
    %v5306 = vunpack.c.l.b16 %v4495
    %v5307 = vunpack.c.l.b16 %v4496
    %v5308 = vunpack.c.h.b16 %v4496
    %v5309 = vunpack.c.l.b16 %v4497
    %v5310 = vunpack.c.l.b16 %v4498
    %v5311 = vunpack.c.h.b16 %v4498
    %v5312 = vunpack.c.l.b16 %v4499
    %v5313 = vunpack.c.l.b16 %v4500
    %v5314 = vunpack.c.h.b16 %v4500
    %v5315 = vunpack.c.l.b16 %v4501
    %v5316 = vunpack.c.l.b16 %v4502
    %v5317 = vunpack.c.h.b16 %v4502
    %v5318 = vunpack.c.l.b16 %v4503
    %v5319 = vunpack.c.l.b16 %v4504
    %v5320 = vunpack.c.h.b16 %v4504
    %v5321 = vunpack.c.l.b16 %v4505
    %v5322 = vunpack.c.l.b16 %v4506
    %v5323 = vunpack.c.h.b16 %v4506
    %v5324 = vunpack.c.l.b16 %v4507
    %v5325 = vunpack.c.l.b16 %v4508
    %v5326 = vunpack.c.h.b16 %v4508
    %v5327 = vunpack.c.l.b16 %v4509
    %v5328 = vunpack.c.l.b16 %v4510
    %v5329 = vunpack.c.h.b16 %v4510
    %v5330 = vunpack.c.l.b16 %v4511
    %v5331 = vunpack.c.l.b16 %v4512
    %v5332 = vunpack.c.h.b16 %v4512
    %v5333 = vunpack.c.l.b16 %v4513
    %v5334 = vunpack.c.l.b16 %v4514
    %v5335 = vunpack.c.h.b16 %v4514
    %v5336 = vunpack.c.l.b16 %v4515
    %v5337 = vunpack.c.l.b16 %v4516
    %v5338 = vunpack.c.h.b16 %v4516
    %v5339 = vunpack.c.l.b16 %v4517
    %v5340 = vunpack.c.l.b16 %v4518
    %v5341 = vunpack.c.h.b16 %v4518
    %v5342 = vunpack.c.l.b16 %v4519
    %v5343 = vunpack.c.l.b16 %v4520
    %v5344 = vunpack.c.h.b16 %v4520
    %v5345 = vunpack.c.l.b16 %v4521
    %v5346 = vunpack.c.l.b16 %v4522
    %v5347 = vunpack.c.h.b16 %v4522
    %v5348 = vunpack.c.l.b16 %v4523
    %v5349 = vunpack.c.l.b16 %v4524
    %v5350 = vunpack.c.h.b16 %v4524
    %v5351 = vunpack.c.l.b16 %v4525
    %v5352 = vunpack.c.l.b16 %v4526
    %v5353 = vunpack.c.h.b16 %v4526
    %v5354 = vunpack.c.l.b16 %v4527
    %v5355 = vunpack.c.l.b16 %v4528
    %v5356 = vunpack.c.h.b16 %v4528
    %v5357 = vunpack.c.l.b16 %v4529
    %v5358 = vunpack.c.l.b16 %v4530
    %v5359 = vunpack.c.h.b16 %v4530
    %v5360 = vunpack.c.l.b16 %v4531
    %v5361 = vunpack.c.l.b16 %v4532
    %v5362 = vunpack.c.h.b16 %v4532
    %v5363 = vunpack.c.l.b16 %v4533
    %v5364 = vunpack.c.l.b16 %v4534
    %v5365 = vunpack.c.h.b16 %v4534
    %v5366 = vunpack.c.l.b16 %v4535
    %v5367 = vunpack.c.l.b16 %v4536
    %v5368 = vunpack.c.h.b16 %v4536
    %v5369 = vunpack.c.l.b16 %v4537
    %v5370 = vunpack.c.l.b16 %v4538
    %v5371 = vunpack.c.h.b16 %v4538
    %v5372 = vunpack.c.l.b16 %v4539
    %v5373 = vunpack.c.l.b16 %v4540
    %v5374 = vunpack.c.h.b16 %v4540
    %v5375 = vunpack.c.l.b16 %v4541
    %v5376 = vunpack.c.l.b16 %v4542
    %v5377 = vunpack.c.h.b16 %v4542
    %v5378 = vunpack.c.l.b16 %v4543
    %v5379 = vunpack.c.l.b16 %v4544
    %v5380 = vunpack.c.h.b16 %v4544
    %v5381 = vunpack.c.l.b16 %v4545
    %v5382 = vunpack.c.l.b16 %v4546
    %v5383 = vunpack.c.h.b16 %v4546
    %v5384 = vunpack.c.l.b16 %v4547
    %v5385 = vunpack.c.l.b16 %v4548
    %v5386 = vunpack.c.h.b16 %v4548
    %v5387 = vunpack.c.l.b16 %v4549
    %v5388 = vunpack.c.l.b16 %v4550
    %v5389 = vunpack.c.h.b16 %v4550
    %v5390 = vunpack.c.l.b16 %v4551
    %v5391 = vunpack.c.l.b16 %v4552
    %v5392 = vunpack.c.h.b16 %v4552
    %v5393 = vunpack.c.l.b16 %v4553
    %v5394 = vunpack.c.l.b16 %v4554
    %v5395 = vunpack.c.h.b16 %v4554
    %v5396 = vunpack.c.l.b16 %v4555
    %v5397 = vunpack.c.l.b16 %v4556
    %v5398 = vunpack.c.h.b16 %v4556
    %v5399 = vunpack.c.l.b16 %v4557
    %v5400 = vunpack.c.l.b16 %v4558
    %v5401 = vunpack.c.h.b16 %v4558
    %v5402 = vunpack.c.l.b16 %v4559
    %v5403 = vunpack.c.l.b16 %v4560
    %v5404 = vunpack.c.h.b16 %v4560
    %v5405 = vunpack.c.l.b16 %v4561
    %v5406 = vunpack.c.l.b16 %v4562
    %v5407 = vunpack.c.h.b16 %v4562
    %v5408 = vunpack.c.l.b16 %v4563
    %v5409 = vunpack.c.l.b16 %v4564
    %v5410 = vunpack.c.h.b16 %v4564
    %v5411 = vunpack.c.l.b16 %v4565
    %v5412 = vunpack.c.l.b16 %v4566
    %v5413 = vunpack.c.h.b16 %v4566
    %v5414 = vunpack.c.l.b16 %v4567
    %v5415 = vunpack.c.l.b16 %v4568
    %v5416 = vunpack.c.h.b16 %v4568
    %v5417 = vunpack.c.l.b16 %v4569
    %v5418 = vunpack.c.l.b16 %v4570
    %v5419 = vunpack.c.h.b16 %v4570
    %v5420 = vunpack.c.l.b16 %v4571
    %v5421 = vunpack.c.l.b16 %v4572
    %v5422 = vunpack.c.h.b16 %v4572
    %v5423 = vunpack.c.l.b16 %v4573
    %v5424 = vunpack.c.l.b16 %v4574
    %v5425 = vunpack.c.h.b16 %v4574
    %v5426 = vunpack.c.l.b16 %v4575
    %v5427 = vunpack.c.l.b16 %v4576
    %v5428 = vunpack.c.h.b16 %v4576
    %v5429 = vunpack.c.l.b16 %v4577
    %v5430 = vunpack.c.l.b16 %v4578
    %v5431 = vunpack.c.h.b16 %v4578
    %v5432 = vunpack.c.l.b16 %v4579
    %v5433 = vunpack.c.l.b16 %v4580
    %v5434 = vunpack.c.h.b16 %v4580
    %v5435 = vunpack.c.l.b16 %v4581
    %v5436 = vunpack.c.l.b16 %v4582
    %v5437 = vunpack.c.h.b16 %v4582
    %v5438 = vunpack.c.l.b16 %v4583
    %v5439 = vunpack.c.l.b16 %v4584
    %v5440 = vunpack.c.h.b16 %v4584
    %v5441 = vunpack.c.l.b16 %v4585
    %v5442 = vunpack.c.l.b16 %v4586
    %v5443 = vunpack.c.h.b16 %v4586
    %v5444 = vunpack.c.l.b16 %v4587
    %v5445 = vunpack.c.l.b16 %v4588
    %v5446 = vunpack.c.h.b16 %v4588
    %v5447 = vunpack.c.l.b16 %v4589
    %v5448 = vunpack.c.l.b16 %v4590
    %v5449 = vunpack.c.h.b16 %v4590
    %v5450 = vunpack.c.l.b16 %v4591
    %v5451 = vunpack.c.l.b16 %v4592
    %v5452 = vunpack.c.h.b16 %v4592
    %v5453 = vunpack.c.l.b16 %v4593
    %v5454 = vunpack.c.l.b16 %v4594
    %v5455 = vunpack.c.h.b16 %v4594
    %v5456 = vunpack.c.l.b16 %v4595
    %v5457 = vunpack.c.l.b16 %v4596
    %v5458 = vunpack.c.h.b16 %v4596
    %v5459 = vunpack.c.l.b16 %v4597
    %v5460 = vunpack.c.l.b16 %v4598
    %v5461 = vunpack.c.h.b16 %v4598
    %v5462 = vunpack.c.l.b16 %v4599
    %v5463 = vunpack.c.l.b16 %v4600
    %v5464 = vunpack.c.h.b16 %v4600
    %v5465 = vunpack.c.l.b16 %v4601
    %v5466 = vunpack.c.l.b16 %v4602
    %v5467 = vunpack.c.h.b16 %v4602
    %v5468 = vunpack.c.l.b16 %v4603
    %v5469 = vunpack.c.l.b16 %v4604
    %v5470 = vunpack.c.h.b16 %v4604
    %v5471 = vunpack.c.l.b16 %v4605
    %v5472 = vunpack.c.l.b16 %v4606
    %v5473 = vunpack.c.h.b16 %v4606
    %v5474 = vunpack.c.l.b16 %v4607
    %v5475 = vunpack.c.l.b16 %v4608
    %v5476 = vunpack.c.h.b16 %v4608
    %v5477 = vunpack.c.l.b16 %v4609
    %v5478 = vunpack.c.l.b16 %v4610
    %v5479 = vunpack.c.h.b16 %v4610
    %v5480 = vunpack.c.l.b16 %v4611
    %v5481 = vunpack.c.l.b16 %v4612
    %v5482 = vunpack.c.h.b16 %v4612
    %v5483 = vunpack.c.l.b16 %v4613
    %v5484 = vunpack.c.l.b16 %v4614
    %v5485 = vunpack.c.h.b16 %v4614
    %v5486 = vunpack.c.l.b16 %v4615
    %v5487 = vunpack.c.l.b16 %v4616
    %v5488 = vunpack.c.h.b16 %v4616
    %v5489 = vunpack.c.l.b16 %v4617
    %v5490 = vunpack.c.l.b16 %v4618
    %v5491 = vunpack.c.h.b16 %v4618
    %v5492 = vunpack.c.l.b16 %v4619
    %v5493 = vunpack.c.l.b16 %v4620
    %v5494 = vunpack.c.h.b16 %v4620
    %v5495 = vunpack.c.l.b16 %v4621
    %v5496 = vunpack.c.l.b16 %v4622
    %v5497 = vunpack.c.h.b16 %v4622
    %v5498 = vunpack.c.l.b16 %v4623
    %v5499 = vunpack.c.l.b16 %v4624
    %v5500 = vunpack.c.h.b16 %v4624
    %v5501 = vunpack.c.l.b16 %v4625
    %v5502 = vunpack.c.l.b16 %v4626
    %v5503 = vunpack.c.h.b16 %v4626
    %v5504 = vunpack.c.l.b16 %v4627
    %v5505 = vunpack.c.l.b16 %v4628
    %v5506 = vunpack.c.h.b16 %v4628
    %v5507 = vunpack.c.l.b16 %v4629
    %v5508 = vunpack.c.l.b16 %v4630
    %v5509 = vunpack.c.h.b16 %v4630
    %v5510 = vunpack.c.l.b16 %v4631
    %v5511 = vunpack.c.l.b16 %v4632
    %v5512 = vunpack.c.h.b16 %v4632
    %v5513 = vunpack.c.l.b16 %v4633
    %v5514 = vunpack.c.l.b16 %v4634
    %v5515 = vunpack.c.h.b16 %v4634
    %v5516 = vunpack.c.l.b16 %v4635
    %v5517 = vunpack.c.l.b16 %v4636
    %v5518 = vunpack.c.h.b16 %v4636
    %v5519 = vunpack.c.l.b16 %v4637
    %v5520 = vunpack.c.l.b16 %v4638
    %v5521 = vunpack.c.h.b16 %v4638
    %v5522 = vunpack.c.l.b16 %v4639
    %v5523 = vunpack.c.l.b16 %v4640
    %v5524 = vunpack.c.h.b16 %v4640
    %v5525 = vunpack.c.l.b16 %v4641
    %v5526 = vunpack.c.l.b16 %v4642
    %v5527 = vunpack.c.h.b16 %v4642
    %v5528 = vunpack.c.l.b16 %v4643
    %v5529 = vunpack.c.l.b16 %v4644
    %v5530 = vunpack.c.h.b16 %v4644
    %v5531 = vunpack.c.l.b16 %v4645
    %v5532 = vunpack.c.l.b16 %v4646
    %v5533 = vunpack.c.h.b16 %v4646
    %v5534 = vunpack.c.l.b16 %v4647
    %v5535 = vunpack.c.l.b16 %v4648
    %v5536 = vunpack.c.h.b16 %v4648
    %v5537 = vunpack.c.l.b16 %v4649
    %v5538 = vunpack.c.l.b16 %v4650
    %v5539 = vunpack.c.h.b16 %v4650
    %v5540 = vunpack.c.l.b16 %v4651
    %v5541 = vunpack.c.l.b16 %v4652
    %v5542 = vunpack.c.h.b16 %v4652
    %v5543 = vunpack.c.l.b16 %v4653
    %v5544 = vunpack.c.l.b16 %v4654
    %v5545 = vunpack.c.h.b16 %v4654
    %v5546 = vunpack.c.l.b16 %v4655
    %v5547 = vunpack.c.l.b16 %v4656
    %v5548 = vunpack.c.h.b16 %v4656
    %v5549 = vunpack.c.l.b16 %v4657
    %v5550 = vunpack.c.l.b16 %v4658
    %v5551 = vunpack.c.h.b16 %v4658
    %v5552 = vunpack.c.l.b16 %v4659
    %v5553 = vunpack.c.l.b16 %v4660
    %v5554 = vunpack.c.h.b16 %v4660
    %v5555 = vunpack.c.l.b16 %v4661
    %v5556 = vunpack.c.l.b16 %v4662
    %v5557 = vunpack.c.h.b16 %v4662
    %v5558 = vunpack.c.l.b16 %v4663
    %v5559 = vunpack.c.l.b16 %v4664
    %v5560 = vunpack.c.h.b16 %v4664
    %v5561 = vunpack.c.l.b16 %v4665
    %v5562 = vunpack.c.l.b16 %v4666
    %v5563 = vunpack.c.h.b16 %v4666
    %v5564 = vunpack.c.l.b16 %v4667
    %v5565 = vunpack.c.l.b16 %v4668
    %v5566 = vunpack.c.h.b16 %v4668
    %v5567 = vunpack.c.l.b16 %v4669
    %v5568 = vunpack.c.l.b16 %v4670
    %v5569 = vunpack.c.h.b16 %v4670
    %v5570 = vunpack.c.l.b16 %v4671
    %v5571 = vunpack.c.l.b16 %v4672
    %v5572 = vunpack.c.h.b16 %v4672
    %v5573 = vunpack.c.l.b16 %v4673
    %v5574 = vunpack.c.l.b16 %v4674
    %v5575 = vunpack.c.h.b16 %v4674
    %v5576 = vunpack.c.l.b16 %v4675
    %v5577 = vunpack.c.l.b16 %v4676
    %v5578 = vunpack.c.h.b16 %v4676
    %v5579 = vunpack.c.l.b16 %v4677
    %v5580 = vunpack.c.l.b16 %v4678
    %v5581 = vunpack.c.h.b16 %v4678
    %v5582 = vunpack.c.l.b16 %v4679
    %v5583 = vunpack.c.l.b16 %v4680
    %v5584 = vunpack.c.h.b16 %v4680
    %v5585 = vunpack.c.l.b16 %v4681
    %v5586 = vunpack.c.l.b16 %v4682
    %v5587 = vunpack.c.h.b16 %v4682
    %v5588 = vunpack.c.l.b16 %v4683
    %v5589 = vunpack.c.l.b16 %v4684
    %v5590 = vunpack.c.h.b16 %v4684
    %v5591 = vunpack.c.l.b16 %v4685
    %v5592 = vunpack.c.l.b16 %v4686
    %v5593 = vunpack.c.h.b16 %v4686
    %v5594 = vunpack.c.l.b16 %v4687
    %v5595 = vunpack.c.l.b16 %v4688
    %v5596 = vunpack.c.h.b16 %v4688
    %v5597 = vunpack.c.l.b16 %v4689
    %v5598 = vunpack.c.l.b16 %v4690
    %v5599 = vunpack.c.h.b16 %v4690
    %v5600 = vunpack.c.l.b16 %v4691
    %v5601 = vunpack.c.l.b16 %v4692
    %v5602 = vunpack.c.h.b16 %v4692
    %v5603 = vunpack.c.l.b16 %v4693
    %v5604 = vunpack.c.l.b16 %v4694
    %v5605 = vunpack.c.h.b16 %v4694
    %v5606 = vunpack.c.l.b16 %v4695
    %v5607 = vunpack.c.l.b16 %v4696
    %v5608 = vunpack.c.h.b16 %v4696
    %v5609 = vunpack.c.l.b16 %v4697
    %v5610 = vunpack.c.l.b16 %v4698
    %v5611 = vunpack.c.h.b16 %v4698
    %v5612 = vunpack.c.l.b16 %v4699
    %v5613 = vunpack.c.l.b16 %v4700
    %v5614 = vunpack.c.h.b16 %v4700
    %v5615 = vunpack.c.l.b16 %v4701
    %v5616 = vunpack.c.l.b16 %v4702
    %v5617 = vunpack.c.h.b16 %v4702
    %v5618 = vunpack.c.l.b16 %v4703
    %v5619 = vunpack.c.l.b16 %v4704
    %v5620 = vunpack.c.h.b16 %v4704
    %v5621 = vunpack.c.l.b16 %v4705
    %v5622 = vunpack.c.l.b16 %v4706
    %v5623 = vunpack.c.h.b16 %v4706
    %v5624 = vunpack.c.l.b16 %v4707
    %v5625 = vunpack.c.l.b16 %v4708
    %v5626 = vunpack.c.h.b16 %v4708
    %v5627 = vunpack.c.l.b16 %v4709
    %v5628 = vunpack.c.l.b16 %v4710
    %v5629 = vunpack.c.h.b16 %v4710
    %v5630 = vunpack.c.l.b16 %v4711
    %v5631 = vunpack.c.l.b16 %v4712
    %v5632 = vunpack.c.h.b16 %v4712
    %v5633 = vunpack.c.l.b16 %v4713
    %v5634 = vunpack.c.l.b16 %v4714
    %v5635 = vunpack.c.h.b16 %v4714
    %v5636 = vunpack.c.l.b16 %v4715
    %v5637 = vunpack.c.l.b16 %v4716
    %v5638 = vunpack.c.h.b16 %v4716
    %v5639 = vunpack.c.l.b16 %v4717
    %v5640 = vunpack.c.l.b16 %v4718
    %v5641 = vunpack.c.h.b16 %v4718
    %v5642 = vunpack.c.l.b16 %v4719
    %v5643 = vunpack.c.l.b16 %v4720
    %v5644 = vunpack.c.h.b16 %v4720
    %v5645 = vunpack.c.l.b16 %v4721
    %v5646 = vunpack.c.l.b16 %v4722
    %v5647 = vunpack.c.h.b16 %v4722
    %v5648 = vunpack.c.l.b16 %v4723
    %v5649 = vunpack.c.l.b16 %v4724
    %v5650 = vunpack.c.h.b16 %v4724
    %v5651 = vunpack.c.l.b16 %v4725
    %v5652 = vunpack.c.l.b16 %v4726
    %v5653 = vunpack.c.h.b16 %v4726
    %v5654 = vunpack.c.l.b16 %v4727
    %v5655 = vunpack.c.l.b16 %v4728
    %v5656 = vunpack.c.h.b16 %v4728
    %v5657 = vunpack.c.l.b16 %v4729
    %v5658 = vunpack.c.l.b16 %v4730
    %v5659 = vunpack.c.h.b16 %v4730
    %v5660 = vunpack.c.l.b16 %v4731
    %v5661 = vunpack.c.l.b16 %v4732
    %v5662 = vunpack.c.h.b16 %v4732
    %v5663 = vunpack.c.l.b16 %v4733
    %v5664 = vunpack.c.l.b16 %v4734
    %v5665 = vunpack.c.h.b16 %v4734
    %v5666 = vunpack.c.l.b16 %v4735
    %v5667 = vunpack.c.l.b16 %v4736
    %v5668 = vunpack.c.h.b16 %v4736
    %v5669 = vunpack.c.l.b16 %v4737
    %v5670 = vunpack.c.l.b16 %v4738
    %v5671 = vunpack.c.h.b16 %v4738
    %v5672 = vunpack.c.l.b16 %v4739
    %v5673 = vunpack.c.l.b16 %v4740
    %v5674 = vunpack.c.h.b16 %v4740
    %v5675 = vunpack.c.l.b16 %v4741
    %v5676 = vunpack.c.l.b16 %v4742
    %v5677 = vunpack.c.h.b16 %v4742
    %v5678 = vunpack.c.l.b16 %v4743
    %v5679 = vunpack.c.l.b16 %v4744
    %v5680 = vunpack.c.h.b16 %v4744
    %v5681 = vunpack.c.l.b16 %v4745
    %v5682 = vunpack.c.l.b16 %v4746
    %v5683 = vunpack.c.h.b16 %v4746
    %v5684 = vunpack.c.l.b16 %v4747
    %v5685 = vunpack.c.l.b16 %v4748
    %v5686 = vunpack.c.h.b16 %v4748
    %v5687 = vunpack.c.l.b16 %v4749
    %v5688 = vunpack.c.l.b16 %v4750
    %v5689 = vunpack.c.h.b16 %v4750
    %v5690 = vunpack.c.l.b16 %v4751
    %v5691 = vunpack.c.l.b16 %v4752
    %v5692 = vunpack.c.h.b16 %v4752
    %v5693 = vunpack.c.l.b16 %v4753
    %v5694 = vunpack.c.l.b16 %v4754
    %v5695 = vunpack.c.h.b16 %v4754
    %v5696 = vunpack.c.l.b16 %v4755
    %v5697 = vunpack.c.l.b16 %v4756
    %v5698 = vunpack.c.h.b16 %v4756
    %v5699 = vunpack.c.l.b16 %v4757
    %v5700 = vunpack.c.l.b16 %v4758
    %v5701 = vunpack.c.h.b16 %v4758
    %v5702 = vunpack.c.l.b16 %v4759
    %v5703 = vunpack.c.l.b16 %v4760
    %v5704 = vunpack.c.h.b16 %v4760
    %v5705 = vunpack.c.l.b16 %v4761
    %v5706 = vunpack.c.l.b16 %v4762
    %v5707 = vunpack.c.h.b16 %v4762
    %v5708 = vunpack.c.l.b16 %v4763
    %v5709 = vunpack.c.l.b16 %v4764
    %v5710 = vunpack.c.h.b16 %v4764
    %v5711 = vunpack.c.l.b16 %v4765
    %v5712 = vunpack.c.l.b16 %v4766
    %v5713 = vunpack.c.h.b16 %v4766
    %v5714 = vunpack.c.l.b16 %v4767
    %v5715 = vunpack.c.l.b16 %v4768
    %v5716 = vunpack.c.h.b16 %v4768
    %v5717 = vunpack.c.l.b16 %v4769
    %v5718 = vunpack.c.l.b16 %v4770
    %v5719 = vunpack.c.h.b16 %v4770
    %v5720 = vunpack.c.l.b16 %v4771
    %v5721 = vunpack.c.l.b16 %v4772
    %v5722 = vunpack.c.h.b16 %v4772
    %v5723 = vunpack.c.l.b16 %v4773
    %v5724 = vunpack.c.l.b16 %v4774
    %v5725 = vunpack.c.h.b16 %v4774
    %v5726 = vunpack.c.l.b16 %v4775
    %v5727 = vunpack.c.l.b16 %v4776
    %v5728 = vunpack.c.h.b16 %v4776
    %v5729 = vunpack.c.l.b16 %v4777
    %v5730 = vunpack.c.l.b16 %v4778
    %v5731 = vunpack.c.h.b16 %v4778
    %v5732 = vunpack.c.l.b16 %v4779
    %v5733 = vunpack.c.l.b16 %v4780
    %v5734 = vunpack.c.h.b16 %v4780
    %v5735 = vunpack.c.l.b16 %v4781
    %v5736 = vunpack.c.l.b16 %v4782
    %v5737 = vunpack.c.h.b16 %v4782
    %v5738 = vunpack.c.l.b16 %v4783
    %v5739 = vunpack.c.l.b16 %v4784
    %v5740 = vunpack.c.h.b16 %v4784
    %v5741 = vunpack.c.l.b16 %v4785
    %v5742 = vunpack.c.l.b16 %v4786
    %v5743 = vunpack.c.h.b16 %v4786
    %v5744 = vunpack.c.l.b16 %v4787
    %v5745 = vunpack.c.l.b16 %v4788
    %v5746 = vunpack.c.h.b16 %v4788
    %v5747 = vunpack.c.l.b16 %v4789
    %v5748 = vunpack.c.l.b16 %v4790
    %v5749 = vunpack.c.h.b16 %v4790
    %v5750 = vunpack.c.l.b16 %v4791
    %v5751 = vunpack.c.l.b16 %v4792
    %v5752 = vunpack.c.h.b16 %v4792
    %v5753 = vunpack.c.l.b16 %v4793
    %v5754 = vpack.c.b16 %v5181, %v5178
    %v5755 = vpack.c.b16 %v5182, %v5179
    %v5756 = vpack.c.b16 %v5183, %v5180
    %v5757 = vpack.c.b16 %v5187, %v5184
    %v5758 = vpack.c.b16 %v5188, %v5185
    %v5759 = vpack.c.b16 %v5189, %v5186
    %v5760 = vpack.c.b16 %v5193, %v5190
    %v5761 = vpack.c.b16 %v5194, %v5191
    %v5762 = vpack.c.b16 %v5195, %v5192
    %v5763 = vpack.c.b16 %v5199, %v5196
    %v5764 = vpack.c.b16 %v5200, %v5197
    %v5765 = vpack.c.b16 %v5201, %v5198
    %v5766 = vpack.c.b16 %v5205, %v5202
    %v5767 = vpack.c.b16 %v5206, %v5203
    %v5768 = vpack.c.b16 %v5207, %v5204
    %v5769 = vpack.c.b16 %v5211, %v5208
    %v5770 = vpack.c.b16 %v5212, %v5209
    %v5771 = vpack.c.b16 %v5213, %v5210
    %v5772 = vpack.c.b16 %v5217, %v5214
    %v5773 = vpack.c.b16 %v5218, %v5215
    %v5774 = vpack.c.b16 %v5219, %v5216
    %v5775 = vpack.c.b16 %v5223, %v5220
    %v5776 = vpack.c.b16 %v5224, %v5221
    %v5777 = vpack.c.b16 %v5225, %v5222
    %v5778 = vpack.c.b16 %v5229, %v5226
    %v5779 = vpack.c.b16 %v5230, %v5227
    %v5780 = vpack.c.b16 %v5231, %v5228
    %v5781 = vpack.c.b16 %v5235, %v5232
    %v5782 = vpack.c.b16 %v5236, %v5233
    %v5783 = vpack.c.b16 %v5237, %v5234
    %v5784 = vpack.c.b16 %v5241, %v5238
    %v5785 = vpack.c.b16 %v5242, %v5239
    %v5786 = vpack.c.b16 %v5243, %v5240
    %v5787 = vpack.c.b16 %v5247, %v5244
    %v5788 = vpack.c.b16 %v5248, %v5245
    %v5789 = vpack.c.b16 %v5249, %v5246
    %v5790 = vpack.c.b16 %v5253, %v5250
    %v5791 = vpack.c.b16 %v5254, %v5251
    %v5792 = vpack.c.b16 %v5255, %v5252
    %v5793 = vpack.c.b16 %v5259, %v5256
    %v5794 = vpack.c.b16 %v5260, %v5257
    %v5795 = vpack.c.b16 %v5261, %v5258
    %v5796 = vpack.c.b16 %v5265, %v5262
    %v5797 = vpack.c.b16 %v5266, %v5263
    %v5798 = vpack.c.b16 %v5267, %v5264
    %v5799 = vpack.c.b16 %v5271, %v5268
    %v5800 = vpack.c.b16 %v5272, %v5269
    %v5801 = vpack.c.b16 %v5273, %v5270
    %v5802 = vpack.c.b16 %v5277, %v5274
    %v5803 = vpack.c.b16 %v5278, %v5275
    %v5804 = vpack.c.b16 %v5279, %v5276
    %v5805 = vpack.c.b16 %v5283, %v5280
    %v5806 = vpack.c.b16 %v5284, %v5281
    %v5807 = vpack.c.b16 %v5285, %v5282
    %v5808 = vpack.c.b16 %v5289, %v5286
    %v5809 = vpack.c.b16 %v5290, %v5287
    %v5810 = vpack.c.b16 %v5291, %v5288
    %v5811 = vpack.c.b16 %v5295, %v5292
    %v5812 = vpack.c.b16 %v5296, %v5293
    %v5813 = vpack.c.b16 %v5297, %v5294
    %v5814 = vpack.c.b16 %v5301, %v5298
    %v5815 = vpack.c.b16 %v5302, %v5299
    %v5816 = vpack.c.b16 %v5303, %v5300
    %v5817 = vpack.c.b16 %v5307, %v5304
    %v5818 = vpack.c.b16 %v5308, %v5305
    %v5819 = vpack.c.b16 %v5309, %v5306
    %v5820 = vpack.c.b16 %v5313, %v5310
    %v5821 = vpack.c.b16 %v5314, %v5311
    %v5822 = vpack.c.b16 %v5315, %v5312
    %v5823 = vpack.c.b16 %v5319, %v5316
    %v5824 = vpack.c.b16 %v5320, %v5317
    %v5825 = vpack.c.b16 %v5321, %v5318
    %v5826 = vpack.c.b16 %v5325, %v5322
    %v5827 = vpack.c.b16 %v5326, %v5323
    %v5828 = vpack.c.b16 %v5327, %v5324
    %v5829 = vpack.c.b16 %v5331, %v5328
    %v5830 = vpack.c.b16 %v5332, %v5329
    %v5831 = vpack.c.b16 %v5333, %v5330
    %v5832 = vpack.c.b16 %v5337, %v5334
    %v5833 = vpack.c.b16 %v5338, %v5335
    %v5834 = vpack.c.b16 %v5339, %v5336
    %v5835 = vpack.c.b16 %v5343, %v5340
    %v5836 = vpack.c.b16 %v5344, %v5341
    %v5837 = vpack.c.b16 %v5345, %v5342
    %v5838 = vpack.c.b16 %v5349, %v5346
    %v5839 = vpack.c.b16 %v5350, %v5347
    %v5840 = vpack.c.b16 %v5351, %v5348
    %v5841 = vpack.c.b16 %v5355, %v5352
    %v5842 = vpack.c.b16 %v5356, %v5353
    %v5843 = vpack.c.b16 %v5357, %v5354
    %v5844 = vpack.c.b16 %v5361, %v5358
    %v5845 = vpack.c.b16 %v5362, %v5359
    %v5846 = vpack.c.b16 %v5363, %v5360
    %v5847 = vpack.c.b16 %v5367, %v5364
    %v5848 = vpack.c.b16 %v5368, %v5365
    %v5849 = vpack.c.b16 %v5369, %v5366
    %v5850 = vpack.c.b16 %v5373, %v5370
    %v5851 = vpack.c.b16 %v5374, %v5371
    %v5852 = vpack.c.b16 %v5375, %v5372
    %v5853 = vpack.c.b16 %v5379, %v5376
    %v5854 = vpack.c.b16 %v5380, %v5377
    %v5855 = vpack.c.b16 %v5381, %v5378
    %v5856 = vpack.c.b16 %v5385, %v5382
    %v5857 = vpack.c.b16 %v5386, %v5383
    %v5858 = vpack.c.b16 %v5387, %v5384
    %v5859 = vpack.c.b16 %v5391, %v5388
    %v5860 = vpack.c.b16 %v5392, %v5389
    %v5861 = vpack.c.b16 %v5393, %v5390
    %v5862 = vpack.c.b16 %v5397, %v5394
    %v5863 = vpack.c.b16 %v5398, %v5395
    %v5864 = vpack.c.b16 %v5399, %v5396
    %v5865 = vpack.c.b16 %v5403, %v5400
    %v5866 = vpack.c.b16 %v5404, %v5401
    %v5867 = vpack.c.b16 %v5405, %v5402
    %v5868 = vpack.c.b16 %v5409, %v5406
    %v5869 = vpack.c.b16 %v5410, %v5407
    %v5870 = vpack.c.b16 %v5411, %v5408
    %v5871 = vpack.c.b16 %v5415, %v5412
    %v5872 = vpack.c.b16 %v5416, %v5413
    %v5873 = vpack.c.b16 %v5417, %v5414
    %v5874 = vpack.c.b16 %v5421, %v5418
    %v5875 = vpack.c.b16 %v5422, %v5419
    %v5876 = vpack.c.b16 %v5423, %v5420
    %v5877 = vpack.c.b16 %v5427, %v5424
    %v5878 = vpack.c.b16 %v5428, %v5425
    %v5879 = vpack.c.b16 %v5429, %v5426
    %v5880 = vpack.c.b16 %v5433, %v5430
    %v5881 = vpack.c.b16 %v5434, %v5431
    %v5882 = vpack.c.b16 %v5435, %v5432
    %v5883 = vpack.c.b16 %v5439, %v5436
    %v5884 = vpack.c.b16 %v5440, %v5437
    %v5885 = vpack.c.b16 %v5441, %v5438
    %v5886 = vpack.c.b16 %v5445, %v5442
    %v5887 = vpack.c.b16 %v5446, %v5443
    %v5888 = vpack.c.b16 %v5447, %v5444
    %v5889 = vpack.c.b16 %v5451, %v5448
    %v5890 = vpack.c.b16 %v5452, %v5449
    %v5891 = vpack.c.b16 %v5453, %v5450
    %v5892 = vpack.c.b16 %v5457, %v5454
    %v5893 = vpack.c.b16 %v5458, %v5455
    %v5894 = vpack.c.b16 %v5459, %v5456
    %v5895 = vpack.c.b16 %v5463, %v5460
    %v5896 = vpack.c.b16 %v5464, %v5461
    %v5897 = vpack.c.b16 %v5465, %v5462
    %v5898 = vpack.c.b16 %v5469, %v5466
    %v5899 = vpack.c.b16 %v5470, %v5467
    %v5900 = vpack.c.b16 %v5471, %v5468
    %v5901 = vpack.c.b16 %v5475, %v5472
    %v5902 = vpack.c.b16 %v5476, %v5473
    %v5903 = vpack.c.b16 %v5477, %v5474
    %v5904 = vpack.c.b16 %v5481, %v5478
    %v5905 = vpack.c.b16 %v5482, %v5479
    %v5906 = vpack.c.b16 %v5483, %v5480
    %v5907 = vpack.c.b16 %v5487, %v5484
    %v5908 = vpack.c.b16 %v5488, %v5485
    %v5909 = vpack.c.b16 %v5489, %v5486
    %v5910 = vpack.c.b16 %v5493, %v5490
    %v5911 = vpack.c.b16 %v5494, %v5491
    %v5912 = vpack.c.b16 %v5495, %v5492
    %v5913 = vpack.c.b16 %v5499, %v5496
    %v5914 = vpack.c.b16 %v5500, %v5497
    %v5915 = vpack.c.b16 %v5501, %v5498
    %v5916 = vpack.c.b16 %v5505, %v5502
    %v5917 = vpack.c.b16 %v5506, %v5503
    %v5918 = vpack.c.b16 %v5507, %v5504
    %v5919 = vpack.c.b16 %v5511, %v5508
    %v5920 = vpack.c.b16 %v5512, %v5509
    %v5921 = vpack.c.b16 %v5513, %v5510
    %v5922 = vpack.c.b16 %v5517, %v5514
    %v5923 = vpack.c.b16 %v5518, %v5515
    %v5924 = vpack.c.b16 %v5519, %v5516
    %v5925 = vpack.c.b16 %v5523, %v5520
    %v5926 = vpack.c.b16 %v5524, %v5521
    %v5927 = vpack.c.b16 %v5525, %v5522
    %v5928 = vpack.c.b16 %v5529, %v5526
    %v5929 = vpack.c.b16 %v5530, %v5527
    %v5930 = vpack.c.b16 %v5531, %v5528
    %v5931 = vpack.c.b16 %v5535, %v5532
    %v5932 = vpack.c.b16 %v5536, %v5533
    %v5933 = vpack.c.b16 %v5537, %v5534
    %v5934 = vpack.c.b16 %v5541, %v5538
    %v5935 = vpack.c.b16 %v5542, %v5539
    %v5936 = vpack.c.b16 %v5543, %v5540
    %v5937 = vpack.c.b16 %v5547, %v5544
    %v5938 = vpack.c.b16 %v5548, %v5545
    %v5939 = vpack.c.b16 %v5549, %v5546
    %v5940 = vpack.c.b16 %v5553, %v5550
    %v5941 = vpack.c.b16 %v5554, %v5551
    %v5942 = vpack.c.b16 %v5555, %v5552
    %v5943 = vpack.c.b16 %v5559, %v5556
    %v5944 = vpack.c.b16 %v5560, %v5557
    %v5945 = vpack.c.b16 %v5561, %v5558
    %v5946 = vpack.c.b16 %v5565, %v5562
    %v5947 = vpack.c.b16 %v5566, %v5563
    %v5948 = vpack.c.b16 %v5567, %v5564
    %v5949 = vpack.c.b16 %v5571, %v5568
    %v5950 = vpack.c.b16 %v5572, %v5569
    %v5951 = vpack.c.b16 %v5573, %v5570
    %v5952 = vpack.c.b16 %v5577, %v5574
    %v5953 = vpack.c.b16 %v5578, %v5575
    %v5954 = vpack.c.b16 %v5579, %v5576
    %v5955 = vpack.c.b16 %v5583, %v5580
    %v5956 = vpack.c.b16 %v5584, %v5581
    %v5957 = vpack.c.b16 %v5585, %v5582
    %v5958 = vpack.c.b16 %v5589, %v5586
    %v5959 = vpack.c.b16 %v5590, %v5587
    %v5960 = vpack.c.b16 %v5591, %v5588
    %v5961 = vpack.c.b16 %v5595, %v5592
    %v5962 = vpack.c.b16 %v5596, %v5593
    %v5963 = vpack.c.b16 %v5597, %v5594
    %v5964 = vpack.c.b16 %v5601, %v5598
    %v5965 = vpack.c.b16 %v5602, %v5599
    %v5966 = vpack.c.b16 %v5603, %v5600
    %v5967 = vpack.c.b16 %v5607, %v5604
    %v5968 = vpack.c.b16 %v5608, %v5605
    %v5969 = vpack.c.b16 %v5609, %v5606
    %v5970 = vpack.c.b16 %v5613, %v5610
    %v5971 = vpack.c.b16 %v5614, %v5611
    %v5972 = vpack.c.b16 %v5615, %v5612
    %v5973 = vpack.c.b16 %v5619, %v5616
    %v5974 = vpack.c.b16 %v5620, %v5617
    %v5975 = vpack.c.b16 %v5621, %v5618
    %v5976 = vpack.c.b16 %v5625, %v5622
    %v5977 = vpack.c.b16 %v5626, %v5623
    %v5978 = vpack.c.b16 %v5627, %v5624
    %v5979 = vpack.c.b16 %v5631, %v5628
    %v5980 = vpack.c.b16 %v5632, %v5629
    %v5981 = vpack.c.b16 %v5633, %v5630
    %v5982 = vpack.c.b16 %v5637, %v5634
    %v5983 = vpack.c.b16 %v5638, %v5635
    %v5984 = vpack.c.b16 %v5639, %v5636
    %v5985 = vpack.c.b16 %v5643, %v5640
    %v5986 = vpack.c.b16 %v5644, %v5641
    %v5987 = vpack.c.b16 %v5645, %v5642
    %v5988 = vpack.c.b16 %v5649, %v5646
    %v5989 = vpack.c.b16 %v5650, %v5647
    %v5990 = vpack.c.b16 %v5651, %v5648
    %v5991 = vpack.c.b16 %v5655, %v5652
    %v5992 = vpack.c.b16 %v5656, %v5653
    %v5993 = vpack.c.b16 %v5657, %v5654
    %v5994 = vpack.c.b16 %v5661, %v5658
    %v5995 = vpack.c.b16 %v5662, %v5659
    %v5996 = vpack.c.b16 %v5663, %v5660
    %v5997 = vpack.c.b16 %v5667, %v5664
    %v5998 = vpack.c.b16 %v5668, %v5665
    %v5999 = vpack.c.b16 %v5669, %v5666
    %v6000 = vpack.c.b16 %v5673, %v5670
    %v6001 = vpack.c.b16 %v5674, %v5671
    %v6002 = vpack.c.b16 %v5675, %v5672
    %v6003 = vpack.c.b16 %v5679, %v5676
    %v6004 = vpack.c.b16 %v5680, %v5677
    %v6005 = vpack.c.b16 %v5681, %v5678
    %v6006 = vpack.c.b16 %v5685, %v5682
    %v6007 = vpack.c.b16 %v5686, %v5683
    %v6008 = vpack.c.b16 %v5687, %v5684
    %v6009 = vpack.c.b16 %v5691, %v5688
    %v6010 = vpack.c.b16 %v5692, %v5689
    %v6011 = vpack.c.b16 %v5693, %v5690
    %v6012 = vpack.c.b16 %v5697, %v5694
    %v6013 = vpack.c.b16 %v5698, %v5695
    %v6014 = vpack.c.b16 %v5699, %v5696
    %v6015 = vpack.c.b16 %v5703, %v5700
    %v6016 = vpack.c.b16 %v5704, %v5701
    %v6017 = vpack.c.b16 %v5705, %v5702
    %v6018 = vpack.c.b16 %v5709, %v5706
    %v6019 = vpack.c.b16 %v5710, %v5707
    %v6020 = vpack.c.b16 %v5711, %v5708
    %v6021 = vpack.c.b16 %v5715, %v5712
    %v6022 = vpack.c.b16 %v5716, %v5713
    %v6023 = vpack.c.b16 %v5717, %v5714
    %v6024 = vpack.c.b16 %v5721, %v5718
    %v6025 = vpack.c.b16 %v5722, %v5719
    %v6026 = vpack.c.b16 %v5723, %v5720
    %v6027 = vpack.c.b16 %v5727, %v5724
    %v6028 = vpack.c.b16 %v5728, %v5725
    %v6029 = vpack.c.b16 %v5729, %v5726
    %v6030 = vpack.c.b16 %v5733, %v5730
    %v6031 = vpack.c.b16 %v5734, %v5731
    %v6032 = vpack.c.b16 %v5735, %v5732
    %v6033 = vpack.c.b16 %v5739, %v5736
    %v6034 = vpack.c.b16 %v5740, %v5737
    %v6035 = vpack.c.b16 %v5741, %v5738
    %v6036 = vpack.c.b16 %v5745, %v5742
    %v6037 = vpack.c.b16 %v5746, %v5743
    %v6038 = vpack.c.b16 %v5747, %v5744
    %v6039 = vpack.c.b16 %v5751, %v5748
    %v6040 = vpack.c.b16 %v5752, %v5749
    %v6041 = vpack.c.b16 %v5753, %v5750
    %6330 = vmatprep.subr.bf16.mxu0 %v5776
    %6331 = vmatpush1.bf16.msra.mxu0 %v5775
    %6332 = vmatprep.subr.bf16.mxu0 %v5773
    %6333 = vmatpush1.bf16.msra.mxu0 %v5772
    %6334 = vmatprep.subr.bf16.mxu0 %v5770
    %6335 = vmatpush1.bf16.msra.mxu0 %v5769
    %6336 = vmatprep.subr.bf16.mxu0 %v5767
    %6337 = vmatpush1.bf16.msra.mxu0 %v5766
    %6338 = vmatprep.subr.bf16.mxu0 %v5764
    %6339 = vmatpush1.bf16.msra.mxu0 %v5763
    %6340 = vmatprep.subr.bf16.mxu0 %v5761
    %6341 = vmatpush1.bf16.msra.mxu0 %v5760
    %6342 = vmatprep.subr.bf16.mxu0 %v5758
    %6343 = vmatpush1.bf16.msra.mxu0 %v5757
    %6344 = vmatprep.subr.bf16.mxu0 %v5755
    %6345 = vmatpush1.bf16.msra.mxu0 %v5754
    %6346 = vmatprep.subr.bf16.mxu0 %v5800
    %6347 = vmatpush2.bf16.msra.mxu0 %v5799
    %6348 = vmatprep.subr.bf16.mxu0 %v5797
    %6349 = vmatpush2.bf16.msra.mxu0 %v5796
    %6350 = vmatprep.subr.bf16.mxu0 %v5794
    %6351 = vmatpush2.bf16.msra.mxu0 %v5793
    %6352 = vmatprep.subr.bf16.mxu0 %v5791
    %6353 = vmatpush2.bf16.msra.mxu0 %v5790
    %6354 = vmatprep.subr.bf16.mxu0 %v5788
    %6355 = vmatpush2.bf16.msra.mxu0 %v5787
    %6356 = vmatprep.subr.bf16.mxu0 %v5785
    %6357 = vmatpush2.bf16.msra.mxu0 %v5784
    %6358 = vmatprep.subr.bf16.mxu0 %v5782
    %6359 = vmatpush2.bf16.msra.mxu0 %v5781
    %6360 = vmatprep.subr.bf16.mxu0 %v5779
    %6361 = vmatpush2.bf16.msra.mxu0 %v5778
    %6362 = vmatprep.mubr.bf16.mxu0 %v2347
    %6363 = vmatmul.mubr.bf16.gmra.mxu0 %v2346
    %v6364 = vpop.f32.mrf.mxu0
    %v6365 = vadd.f32 0.0, %v6364
    %v6366 = vpop.f32.mrf.mxu0
    %v6367 = vadd.f32 0.0, %v6366
    %v6368 = vpop.f32.mrf.mxu0
    %v6369 = vadd.f32 0.0, %v6368
    %v6370 = vpop.f32.mrf.mxu0
    %v6371 = vadd.f32 0.0, %v6370
    %6372 = vdwg.mxu0
    %6373 = vmatprep.subr.bf16.mxu0 %v5824
    %6374 = vmatpush1.bf16.msra.mxu0 %v5823
    %6375 = vmatprep.subr.bf16.mxu0 %v5821
    %6376 = vmatpush1.bf16.msra.mxu0 %v5820
    %6377 = vmatprep.subr.bf16.mxu0 %v5818
    %6378 = vmatpush1.bf16.msra.mxu0 %v5817
    %6379 = vmatprep.subr.bf16.mxu0 %v5815
    %6380 = vmatpush1.bf16.msra.mxu0 %v5814
    %6381 = vmatprep.subr.bf16.mxu0 %v5812
    %6382 = vmatpush1.bf16.msra.mxu0 %v5811
    %6383 = vmatprep.subr.bf16.mxu0 %v5809
    %6384 = vmatpush1.bf16.msra.mxu0 %v5808
    %6385 = vmatprep.subr.bf16.mxu0 %v5806
    %6386 = vmatpush1.bf16.msra.mxu0 %v5805
    %6387 = vmatprep.subr.bf16.mxu0 %v5803
    %6388 = vmatpush1.bf16.msra.mxu0 %v5802
    %6389 = vmatprep.subr.bf16.mxu0 %v5848
    %6390 = vmatpush2.bf16.msra.mxu0 %v5847
    %6391 = vmatprep.subr.bf16.mxu0 %v5845
    %6392 = vmatpush2.bf16.msra.mxu0 %v5844
    %6393 = vmatprep.subr.bf16.mxu0 %v5842
    %6394 = vmatpush2.bf16.msra.mxu0 %v5841
    %6395 = vmatprep.subr.bf16.mxu0 %v5839
    %6396 = vmatpush2.bf16.msra.mxu0 %v5838
    %6397 = vmatprep.subr.bf16.mxu0 %v5836
    %6398 = vmatpush2.bf16.msra.mxu0 %v5835
    %6399 = vmatprep.subr.bf16.mxu0 %v5833
    %6400 = vmatpush2.bf16.msra.mxu0 %v5832
    %6401 = vmatprep.subr.bf16.mxu0 %v5830
    %6402 = vmatpush2.bf16.msra.mxu0 %v5829
    %6403 = vmatprep.subr.bf16.mxu0 %v5827
    %6404 = vmatpush2.bf16.msra.mxu0 %v5826
    %6405 = vmatprep.mubr.bf16.mxu0 %v2349
    %6406 = vmatmul.mubr.bf16.gmra.mxu0 %v2348
    %v6407 = vpop.f32.mrf.mxu0
    %v6408 = vadd.f32 %v6365, %v6407
    %v6409 = vpop.f32.mrf.mxu0
    %v6410 = vadd.f32 %v6367, %v6409
    %v6411 = vpop.f32.mrf.mxu0
    %v6412 = vadd.f32 %v6369, %v6411
    %v6413 = vpop.f32.mrf.mxu0
    %v6414 = vadd.f32 %v6371, %v6413
    %6415 = vdwg.mxu0
    %6416 = vmatprep.subr.bf16.mxu0 %v5872
    %6417 = vmatpush1.bf16.msra.mxu0 %v5871
    %6418 = vmatprep.subr.bf16.mxu0 %v5869
    %6419 = vmatpush1.bf16.msra.mxu0 %v5868
    %6420 = vmatprep.subr.bf16.mxu0 %v5866
    %6421 = vmatpush1.bf16.msra.mxu0 %v5865
    %6422 = vmatprep.subr.bf16.mxu0 %v5863
    %6423 = vmatpush1.bf16.msra.mxu0 %v5862
    %6424 = vmatprep.subr.bf16.mxu0 %v5860
    %6425 = vmatpush1.bf16.msra.mxu0 %v5859
    %6426 = vmatprep.subr.bf16.mxu0 %v5857
    %6427 = vmatpush1.bf16.msra.mxu0 %v5856
    %6428 = vmatprep.subr.bf16.mxu0 %v5854
    %6429 = vmatpush1.bf16.msra.mxu0 %v5853
    %6430 = vmatprep.subr.bf16.mxu0 %v5851
    %6431 = vmatpush1.bf16.msra.mxu0 %v5850
    %6432 = vmatprep.subr.bf16.mxu0 %v5896
    %6433 = vmatpush2.bf16.msra.mxu0 %v5895
    %6434 = vmatprep.subr.bf16.mxu0 %v5893
    %6435 = vmatpush2.bf16.msra.mxu0 %v5892
    %6436 = vmatprep.subr.bf16.mxu0 %v5890
    %6437 = vmatpush2.bf16.msra.mxu0 %v5889
    %6438 = vmatprep.subr.bf16.mxu0 %v5887
    %6439 = vmatpush2.bf16.msra.mxu0 %v5886
    %6440 = vmatprep.subr.bf16.mxu0 %v5884
    %6441 = vmatpush2.bf16.msra.mxu0 %v5883
    %6442 = vmatprep.subr.bf16.mxu0 %v5881
    %6443 = vmatpush2.bf16.msra.mxu0 %v5880
    %6444 = vmatprep.subr.bf16.mxu0 %v5878
    %6445 = vmatpush2.bf16.msra.mxu0 %v5877
    %6446 = vmatprep.subr.bf16.mxu0 %v5875
    %6447 = vmatpush2.bf16.msra.mxu0 %v5874
    %6448 = vmatprep.mubr.bf16.mxu0 %v2351
    %6449 = vmatmul.mubr.bf16.gmra.mxu0 %v2350
    %v6450 = vpop.f32.mrf.mxu0
    %v6451 = vadd.f32 %v6408, %v6450
    %v6452 = vpop.f32.mrf.mxu0
    %v6453 = vadd.f32 %v6410, %v6452
    %v6454 = vpop.f32.mrf.mxu0
    %v6455 = vadd.f32 %v6412, %v6454
    %v6456 = vpop.f32.mrf.mxu0
    %v6457 = vadd.f32 %v6414, %v6456
    %6458 = vdwg.mxu0
    %6459 = vmatprep.subr.bf16.mxu0 %v5920
    %6460 = vmatpush1.bf16.msra.mxu0 %v5919
    %6461 = vmatprep.subr.bf16.mxu0 %v5917
    %6462 = vmatpush1.bf16.msra.mxu0 %v5916
    %6463 = vmatprep.subr.bf16.mxu0 %v5914
    %6464 = vmatpush1.bf16.msra.mxu0 %v5913
    %6465 = vmatprep.subr.bf16.mxu0 %v5911
    %6466 = vmatpush1.bf16.msra.mxu0 %v5910
    %6467 = vmatprep.subr.bf16.mxu0 %v5908
    %6468 = vmatpush1.bf16.msra.mxu0 %v5907
    %6469 = vmatprep.subr.bf16.mxu0 %v5905
    %6470 = vmatpush1.bf16.msra.mxu0 %v5904
    %6471 = vmatprep.subr.bf16.mxu0 %v5902
    %6472 = vmatpush1.bf16.msra.mxu0 %v5901
    %6473 = vmatprep.subr.bf16.mxu0 %v5899
    %6474 = vmatpush1.bf16.msra.mxu0 %v5898
    %6475 = vmatprep.subr.bf16.mxu0 %v5944
    %6476 = vmatpush2.bf16.msra.mxu0 %v5943
    %6477 = vmatprep.subr.bf16.mxu0 %v5941
    %6478 = vmatpush2.bf16.msra.mxu0 %v5940
    %6479 = vmatprep.subr.bf16.mxu0 %v5938
    %6480 = vmatpush2.bf16.msra.mxu0 %v5937
    %6481 = vmatprep.subr.bf16.mxu0 %v5935
    %6482 = vmatpush2.bf16.msra.mxu0 %v5934
    %6483 = vmatprep.subr.bf16.mxu0 %v5932
    %6484 = vmatpush2.bf16.msra.mxu0 %v5931
    %6485 = vmatprep.subr.bf16.mxu0 %v5929
    %6486 = vmatpush2.bf16.msra.mxu0 %v5928
    %6487 = vmatprep.subr.bf16.mxu0 %v5926
    %6488 = vmatpush2.bf16.msra.mxu0 %v5925
    %6489 = vmatprep.subr.bf16.mxu0 %v5923
    %6490 = vmatpush2.bf16.msra.mxu0 %v5922
    %6491 = vmatprep.mubr.bf16.mxu0 %v2353
    %6492 = vmatmul.mubr.bf16.gmra.mxu0 %v2352
    %v6493 = vpop.f32.mrf.mxu0
    %v6494 = vadd.f32 %v6451, %v6493
    %v6495 = vpop.f32.mrf.mxu0
    %v6496 = vadd.f32 %v6453, %v6495
    %v6497 = vpop.f32.mrf.mxu0
    %v6498 = vadd.f32 %v6455, %v6497
    %v6499 = vpop.f32.mrf.mxu0
    %v6500 = vadd.f32 %v6457, %v6499
    %6501 = vdwg.mxu0
    %6502 = vmatprep.subr.bf16.mxu0 %v5968
    %6503 = vmatpush1.bf16.msra.mxu0 %v5967
    %6504 = vmatprep.subr.bf16.mxu0 %v5965
    %6505 = vmatpush1.bf16.msra.mxu0 %v5964
    %6506 = vmatprep.subr.bf16.mxu0 %v5962
    %6507 = vmatpush1.bf16.msra.mxu0 %v5961
    %6508 = vmatprep.subr.bf16.mxu0 %v5959
    %6509 = vmatpush1.bf16.msra.mxu0 %v5958
    %6510 = vmatprep.subr.bf16.mxu0 %v5956
    %6511 = vmatpush1.bf16.msra.mxu0 %v5955
    %6512 = vmatprep.subr.bf16.mxu0 %v5953
    %6513 = vmatpush1.bf16.msra.mxu0 %v5952
    %6514 = vmatprep.subr.bf16.mxu0 %v5950
    %6515 = vmatpush1.bf16.msra.mxu0 %v5949
    %6516 = vmatprep.subr.bf16.mxu0 %v5947
    %6517 = vmatpush1.bf16.msra.mxu0 %v5946
    %6518 = vmatprep.subr.bf16.mxu0 %v5992
    %6519 = vmatpush2.bf16.msra.mxu0 %v5991
    %6520 = vmatprep.subr.bf16.mxu0 %v5989
    %6521 = vmatpush2.bf16.msra.mxu0 %v5988
    %6522 = vmatprep.subr.bf16.mxu0 %v5986
    %6523 = vmatpush2.bf16.msra.mxu0 %v5985
    %6524 = vmatprep.subr.bf16.mxu0 %v5983
    %6525 = vmatpush2.bf16.msra.mxu0 %v5982
    %6526 = vmatprep.subr.bf16.mxu0 %v5980
    %6527 = vmatpush2.bf16.msra.mxu0 %v5979
    %6528 = vmatprep.subr.bf16.mxu0 %v5977
    %6529 = vmatpush2.bf16.msra.mxu0 %v5976
    %6530 = vmatprep.subr.bf16.mxu0 %v5974
    %6531 = vmatpush2.bf16.msra.mxu0 %v5973
    %6532 = vmatprep.subr.bf16.mxu0 %v5971
    %6533 = vmatpush2.bf16.msra.mxu0 %v5970
    %6534 = vmatprep.mubr.bf16.mxu0 %v2355
    %6535 = vmatmul.mubr.bf16.gmra.mxu0 %v2354
    %v6536 = vpop.f32.mrf.mxu0
    %v6537 = vadd.f32 %v6494, %v6536
    %v6538 = vpop.f32.mrf.mxu0
    %v6539 = vadd.f32 %v6496, %v6538
    %v6540 = vpop.f32.mrf.mxu0
    %v6541 = vadd.f32 %v6498, %v6540
    %v6542 = vpop.f32.mrf.mxu0
    %v6543 = vadd.f32 %v6500, %v6542
    %6544 = vdwg.mxu0
    %6545 = vmatprep.subr.bf16.mxu0 %v6016
    %6546 = vmatpush1.bf16.msra.mxu0 %v6015
    %6547 = vmatprep.subr.bf16.mxu0 %v6013
    %6548 = vmatpush1.bf16.msra.mxu0 %v6012
    %6549 = vmatprep.subr.bf16.mxu0 %v6010
    %6550 = vmatpush1.bf16.msra.mxu0 %v6009
    %6551 = vmatprep.subr.bf16.mxu0 %v6007
    %6552 = vmatpush1.bf16.msra.mxu0 %v6006
    %6553 = vmatprep.subr.bf16.mxu0 %v6004
    %6554 = vmatpush1.bf16.msra.mxu0 %v6003
    %6555 = vmatprep.subr.bf16.mxu0 %v6001
    %6556 = vmatpush1.bf16.msra.mxu0 %v6000
    %6557 = vmatprep.subr.bf16.mxu0 %v5998
    %6558 = vmatpush1.bf16.msra.mxu0 %v5997
    %6559 = vmatprep.subr.bf16.mxu0 %v5995
    %6560 = vmatpush1.bf16.msra.mxu0 %v5994
    %6561 = vmatprep.subr.bf16.mxu0 %v6040
    %6562 = vmatpush2.bf16.msra.mxu0 %v6039
    %6563 = vmatprep.subr.bf16.mxu0 %v6037
    %6564 = vmatpush2.bf16.msra.mxu0 %v6036
    %6565 = vmatprep.subr.bf16.mxu0 %v6034
    %6566 = vmatpush2.bf16.msra.mxu0 %v6033
    %6567 = vmatprep.subr.bf16.mxu0 %v6031
    %6568 = vmatpush2.bf16.msra.mxu0 %v6030
    %6569 = vmatprep.subr.bf16.mxu0 %v6028
    %6570 = vmatpush2.bf16.msra.mxu0 %v6027
    %6571 = vmatprep.subr.bf16.mxu0 %v6025
    %6572 = vmatpush2.bf16.msra.mxu0 %v6024
    %6573 = vmatprep.subr.bf16.mxu0 %v6022
    %6574 = vmatpush2.bf16.msra.mxu0 %v6021
    %6575 = vmatprep.subr.bf16.mxu0 %v6019
    %6576 = vmatpush2.bf16.msra.mxu0 %v6018
    %6577 = vmatprep.mubr.bf16.mxu0 %v2357
    %6578 = vmatmul.mubr.bf16.gmra.mxu0 %v2356
    %v6579 = vpop.f32.mrf.mxu0
    %v6580 = vadd.f32 %v6537, %v6579
    %v6581 = vpop.f32.mrf.mxu0
    %v6582 = vadd.f32 %v6539, %v6581
    %v6583 = vpop.f32.mrf.mxu0
    %v6584 = vadd.f32 %v6541, %v6583
    %v6585 = vpop.f32.mrf.mxu0
    %v6586 = vadd.f32 %v6543, %v6585
    %6587 = vdwg.mxu0
    %6588 = vmatprep.subr.bf16.mxu0 0
    %6589 = vmatpush1.bf16.msra.mxu0 %v5777
    %6590 = vmatprep.subr.bf16.mxu0 0
    %6591 = vmatpush1.bf16.msra.mxu0 %v5774
    %6592 = vmatprep.subr.bf16.mxu0 0
    %6593 = vmatpush1.bf16.msra.mxu0 %v5771
    %6594 = vmatprep.subr.bf16.mxu0 0
    %6595 = vmatpush1.bf16.msra.mxu0 %v5768
    %6596 = vmatprep.subr.bf16.mxu0 0
    %6597 = vmatpush1.bf16.msra.mxu0 %v5765
    %6598 = vmatprep.subr.bf16.mxu0 0
    %6599 = vmatpush1.bf16.msra.mxu0 %v5762
    %6600 = vmatprep.subr.bf16.mxu0 0
    %6601 = vmatpush1.bf16.msra.mxu0 %v5759
    %6602 = vmatprep.subr.bf16.mxu0 0
    %6603 = vmatpush1.bf16.msra.mxu0 %v5756
    %6604 = vmatprep.subr.bf16.mxu0 0
    %6605 = vmatpush2.bf16.msra.mxu0 %v5801
    %6606 = vmatprep.subr.bf16.mxu0 0
    %6607 = vmatpush2.bf16.msra.mxu0 %v5798
    %6608 = vmatprep.subr.bf16.mxu0 0
    %6609 = vmatpush2.bf16.msra.mxu0 %v5795
    %6610 = vmatprep.subr.bf16.mxu0 0
    %6611 = vmatpush2.bf16.msra.mxu0 %v5792
    %6612 = vmatprep.subr.bf16.mxu0 0
    %6613 = vmatpush2.bf16.msra.mxu0 %v5789
    %6614 = vmatprep.subr.bf16.mxu0 0
    %6615 = vmatpush2.bf16.msra.mxu0 %v5786
    %6616 = vmatprep.subr.bf16.mxu0 0
    %6617 = vmatpush2.bf16.msra.mxu0 %v5783
    %6618 = vmatprep.subr.bf16.mxu0 0
    %6619 = vmatpush2.bf16.msra.mxu0 %v5780
    %6620 = vmatprep.mubr.bf16.mxu0 %v2347
    %6621 = vmatmul.mubr.bf16.gmra.mxu0 %v2346
    %v6622 = vpop.f32.mrf.mxu0
    %v6623 = vadd.f32 0.0, %v6622
    %v6624 = vpop.f32.mrf.mxu0
    %v6625 = vpop.f32.mrf.mxu0
    %v6626 = vadd.f32 0.0, %v6625
    %v6627 = vpop.f32.mrf.mxu0
    %6628 = vdwg.mxu0
    %6629 = vmatprep.subr.bf16.mxu0 0
    %6630 = vmatpush1.bf16.msra.mxu0 %v5825
    %6631 = vmatprep.subr.bf16.mxu0 0
    %6632 = vmatpush1.bf16.msra.mxu0 %v5822
    %6633 = vmatprep.subr.bf16.mxu0 0
    %6634 = vmatpush1.bf16.msra.mxu0 %v5819
    %6635 = vmatprep.subr.bf16.mxu0 0
    %6636 = vmatpush1.bf16.msra.mxu0 %v5816
    %6637 = vmatprep.subr.bf16.mxu0 0
    %6638 = vmatpush1.bf16.msra.mxu0 %v5813
    %6639 = vmatprep.subr.bf16.mxu0 0
    %6640 = vmatpush1.bf16.msra.mxu0 %v5810
    %6641 = vmatprep.subr.bf16.mxu0 0
    %6642 = vmatpush1.bf16.msra.mxu0 %v5807
    %6643 = vmatprep.subr.bf16.mxu0 0
    %6644 = vmatpush1.bf16.msra.mxu0 %v5804
    %6645 = vmatprep.subr.bf16.mxu0 0
    %6646 = vmatpush2.bf16.msra.mxu0 %v5849
    %6647 = vmatprep.subr.bf16.mxu0 0
    %6648 = vmatpush2.bf16.msra.mxu0 %v5846
    %6649 = vmatprep.subr.bf16.mxu0 0
    %6650 = vmatpush2.bf16.msra.mxu0 %v5843
    %6651 = vmatprep.subr.bf16.mxu0 0
    %6652 = vmatpush2.bf16.msra.mxu0 %v5840
    %6653 = vmatprep.subr.bf16.mxu0 0
    %6654 = vmatpush2.bf16.msra.mxu0 %v5837
    %6655 = vmatprep.subr.bf16.mxu0 0
    %6656 = vmatpush2.bf16.msra.mxu0 %v5834
    %6657 = vmatprep.subr.bf16.mxu0 0
    %6658 = vmatpush2.bf16.msra.mxu0 %v5831
    %6659 = vmatprep.subr.bf16.mxu0 0
    %6660 = vmatpush2.bf16.msra.mxu0 %v5828
    %6661 = vmatprep.mubr.bf16.mxu0 %v2349
    %6662 = vmatmul.mubr.bf16.gmra.mxu0 %v2348
    %v6663 = vpop.f32.mrf.mxu0
    %v6664 = vadd.f32 %v6623, %v6663
    %v6665 = vpop.f32.mrf.mxu0
    %v6666 = vpop.f32.mrf.mxu0
    %v6667 = vadd.f32 %v6626, %v6666
    %v6668 = vpop.f32.mrf.mxu0
    %6669 = vdwg.mxu0
    %6670 = vmatprep.subr.bf16.mxu0 0
    %6671 = vmatpush1.bf16.msra.mxu0 %v5873
    %6672 = vmatprep.subr.bf16.mxu0 0
    %6673 = vmatpush1.bf16.msra.mxu0 %v5870
    %6674 = vmatprep.subr.bf16.mxu0 0
    %6675 = vmatpush1.bf16.msra.mxu0 %v5867
    %6676 = vmatprep.subr.bf16.mxu0 0
    %6677 = vmatpush1.bf16.msra.mxu0 %v5864
    %6678 = vmatprep.subr.bf16.mxu0 0
    %6679 = vmatpush1.bf16.msra.mxu0 %v5861
    %6680 = vmatprep.subr.bf16.mxu0 0
    %6681 = vmatpush1.bf16.msra.mxu0 %v5858
    %6682 = vmatprep.subr.bf16.mxu0 0
    %6683 = vmatpush1.bf16.msra.mxu0 %v5855
    %6684 = vmatprep.subr.bf16.mxu0 0
    %6685 = vmatpush1.bf16.msra.mxu0 %v5852
    %6686 = vmatprep.subr.bf16.mxu0 0
    %6687 = vmatpush2.bf16.msra.mxu0 %v5897
    %6688 = vmatprep.subr.bf16.mxu0 0
    %6689 = vmatpush2.bf16.msra.mxu0 %v5894
    %6690 = vmatprep.subr.bf16.mxu0 0
    %6691 = vmatpush2.bf16.msra.mxu0 %v5891
    %6692 = vmatprep.subr.bf16.mxu0 0
    %6693 = vmatpush2.bf16.msra.mxu0 %v5888
    %6694 = vmatprep.subr.bf16.mxu0 0
    %6695 = vmatpush2.bf16.msra.mxu0 %v5885
    %6696 = vmatprep.subr.bf16.mxu0 0
    %6697 = vmatpush2.bf16.msra.mxu0 %v5882
    %6698 = vmatprep.subr.bf16.mxu0 0
    %6699 = vmatpush2.bf16.msra.mxu0 %v5879
    %6700 = vmatprep.subr.bf16.mxu0 0
    %6701 = vmatpush2.bf16.msra.mxu0 %v5876
    %6702 = vmatprep.mubr.bf16.mxu0 %v2351
    %6703 = vmatmul.mubr.bf16.gmra.mxu0 %v2350
    %v6704 = vpop.f32.mrf.mxu0
    %v6705 = vadd.f32 %v6664, %v6704
    %v6706 = vpop.f32.mrf.mxu0
    %v6707 = vpop.f32.mrf.mxu0
    %v6708 = vadd.f32 %v6667, %v6707
    %v6709 = vpop.f32.mrf.mxu0
    %6710 = vdwg.mxu0
    %6711 = vmatprep.subr.bf16.mxu0 0
    %6712 = vmatpush1.bf16.msra.mxu0 %v5921
    %6713 = vmatprep.subr.bf16.mxu0 0
    %6714 = vmatpush1.bf16.msra.mxu0 %v5918
    %6715 = vmatprep.subr.bf16.mxu0 0
    %6716 = vmatpush1.bf16.msra.mxu0 %v5915
    %6717 = vmatprep.subr.bf16.mxu0 0
    %6718 = vmatpush1.bf16.msra.mxu0 %v5912
    %6719 = vmatprep.subr.bf16.mxu0 0
    %6720 = vmatpush1.bf16.msra.mxu0 %v5909
    %6721 = vmatprep.subr.bf16.mxu0 0
    %6722 = vmatpush1.bf16.msra.mxu0 %v5906
    %6723 = vmatprep.subr.bf16.mxu0 0
    %6724 = vmatpush1.bf16.msra.mxu0 %v5903
    %6725 = vmatprep.subr.bf16.mxu0 0
    %6726 = vmatpush1.bf16.msra.mxu0 %v5900
    %6727 = vmatprep.subr.bf16.mxu0 0
    %6728 = vmatpush2.bf16.msra.mxu0 %v5945
    %6729 = vmatprep.subr.bf16.mxu0 0
    %6730 = vmatpush2.bf16.msra.mxu0 %v5942
    %6731 = vmatprep.subr.bf16.mxu0 0
    %6732 = vmatpush2.bf16.msra.mxu0 %v5939
    %6733 = vmatprep.subr.bf16.mxu0 0
    %6734 = vmatpush2.bf16.msra.mxu0 %v5936
    %6735 = vmatprep.subr.bf16.mxu0 0
    %6736 = vmatpush2.bf16.msra.mxu0 %v5933
    %6737 = vmatprep.subr.bf16.mxu0 0
    %6738 = vmatpush2.bf16.msra.mxu0 %v5930
    %6739 = vmatprep.subr.bf16.mxu0 0
    %6740 = vmatpush2.bf16.msra.mxu0 %v5927
    %6741 = vmatprep.subr.bf16.mxu0 0
    %6742 = vmatpush2.bf16.msra.mxu0 %v5924
    %6743 = vmatprep.mubr.bf16.mxu0 %v2353
    %6744 = vmatmul.mubr.bf16.gmra.mxu0 %v2352
    %v6745 = vpop.f32.mrf.mxu0
    %v6746 = vadd.f32 %v6705, %v6745
    %v6747 = vpop.f32.mrf.mxu0
    %v6748 = vpop.f32.mrf.mxu0
    %v6749 = vadd.f32 %v6708, %v6748
    %v6750 = vpop.f32.mrf.mxu0
    %6751 = vdwg.mxu0
    %6752 = vmatprep.subr.bf16.mxu0 0
    %6753 = vmatpush1.bf16.msra.mxu0 %v5969
    %6754 = vmatprep.subr.bf16.mxu0 0
    %6755 = vmatpush1.bf16.msra.mxu0 %v5966
    %6756 = vmatprep.subr.bf16.mxu0 0
    %6757 = vmatpush1.bf16.msra.mxu0 %v5963
    %6758 = vmatprep.subr.bf16.mxu0 0
    %6759 = vmatpush1.bf16.msra.mxu0 %v5960
    %6760 = vmatprep.subr.bf16.mxu0 0
    %6761 = vmatpush1.bf16.msra.mxu0 %v5957
    %6762 = vmatprep.subr.bf16.mxu0 0
    %6763 = vmatpush1.bf16.msra.mxu0 %v5954
    %6764 = vmatprep.subr.bf16.mxu0 0
    %6765 = vmatpush1.bf16.msra.mxu0 %v5951
    %6766 = vmatprep.subr.bf16.mxu0 0
    %6767 = vmatpush1.bf16.msra.mxu0 %v5948
    %6768 = vmatprep.subr.bf16.mxu0 0
    %6769 = vmatpush2.bf16.msra.mxu0 %v5993
    %6770 = vmatprep.subr.bf16.mxu0 0
    %6771 = vmatpush2.bf16.msra.mxu0 %v5990
    %6772 = vmatprep.subr.bf16.mxu0 0
    %6773 = vmatpush2.bf16.msra.mxu0 %v5987
    %6774 = vmatprep.subr.bf16.mxu0 0
    %6775 = vmatpush2.bf16.msra.mxu0 %v5984
    %6776 = vmatprep.subr.bf16.mxu0 0
    %6777 = vmatpush2.bf16.msra.mxu0 %v5981
    %6778 = vmatprep.subr.bf16.mxu0 0
    %6779 = vmatpush2.bf16.msra.mxu0 %v5978
    %6780 = vmatprep.subr.bf16.mxu0 0
    %6781 = vmatpush2.bf16.msra.mxu0 %v5975
    %6782 = vmatprep.subr.bf16.mxu0 0
    %6783 = vmatpush2.bf16.msra.mxu0 %v5972
    %6784 = vmatprep.mubr.bf16.mxu0 %v2355
    %6785 = vmatmul.mubr.bf16.gmra.mxu0 %v2354
    %v6786 = vpop.f32.mrf.mxu0
    %v6787 = vadd.f32 %v6746, %v6786
    %v6788 = vpop.f32.mrf.mxu0
    %v6789 = vpop.f32.mrf.mxu0
    %v6790 = vadd.f32 %v6749, %v6789
    %v6791 = vpop.f32.mrf.mxu0
    %6792 = vdwg.mxu0
    %6793 = vmatprep.subr.bf16.mxu0 0
    %6794 = vmatpush1.bf16.msra.mxu0 %v6017
    %6795 = vmatprep.subr.bf16.mxu0 0
    %6796 = vmatpush1.bf16.msra.mxu0 %v6014
    %6797 = vmatprep.subr.bf16.mxu0 0
    %6798 = vmatpush1.bf16.msra.mxu0 %v6011
    %6799 = vmatprep.subr.bf16.mxu0 0
    %6800 = vmatpush1.bf16.msra.mxu0 %v6008
    %6801 = vmatprep.subr.bf16.mxu0 0
    %6802 = vmatpush1.bf16.msra.mxu0 %v6005
    %6803 = vmatprep.subr.bf16.mxu0 0
    %6804 = vmatpush1.bf16.msra.mxu0 %v6002
    %6805 = vmatprep.subr.bf16.mxu0 0
    %6806 = vmatpush1.bf16.msra.mxu0 %v5999
    %6807 = vmatprep.subr.bf16.mxu0 0
    %6808 = vmatpush1.bf16.msra.mxu0 %v5996
    %6809 = vmatprep.subr.bf16.mxu0 0
    %6810 = vmatpush2.bf16.msra.mxu0 %v6041
    %6811 = vmatprep.subr.bf16.mxu0 0
    %6812 = vmatpush2.bf16.msra.mxu0 %v6038
    %6813 = vmatprep.subr.bf16.mxu0 0
    %6814 = vmatpush2.bf16.msra.mxu0 %v6035
    %6815 = vmatprep.subr.bf16.mxu0 0
    %6816 = vmatpush2.bf16.msra.mxu0 %v6032
    %6817 = vmatprep.subr.bf16.mxu0 0
    %6818 = vmatpush2.bf16.msra.mxu0 %v6029
    %6819 = vmatprep.subr.bf16.mxu0 0
    %6820 = vmatpush2.bf16.msra.mxu0 %v6026
    %6821 = vmatprep.subr.bf16.mxu0 0
    %6822 = vmatpush2.bf16.msra.mxu0 %v6023
    %6823 = vmatprep.subr.bf16.mxu0 0
    %6824 = vmatpush2.bf16.msra.mxu0 %v6020
    %6825 = vmatprep.mubr.bf16.mxu0 %v2357
    %6826 = vmatmul.mubr.bf16.gmra.mxu0 %v2356
    %v6827 = vpop.f32.mrf.mxu0
    %v6828 = vadd.f32 %v6787, %v6827
    %v6829 = vpop.f32.mrf.mxu0
    %v6830 = vpop.f32.mrf.mxu0
    %v6831 = vadd.f32 %v6790, %v6830
    %v6832 = vpop.f32.mrf.mxu0
    %6833 = vdwg.mxu0
    %v6834 = vmax.f32 %v4156, %v6580
    %v6835 = vmax.f32 %v4158, %v6582
    %v6836 = vmax.f32 %v4404, %v6828
    %v6837 = vmax.f32 %v4160, %v6584
    %v6838 = vmax.f32 %v4162, %v6586
    %v6839 = vmax.f32 %v4407, %v6831
    %v6840 = vld [vmem:[#allocation7 + $0x18] sm:$0xff]
    %v6841 = vld [vmem:[#allocation7 + $0x20] sm:$0xf]
    %v6842 = vld [vmem:[#allocation7 + $0x48] sm:$0xff]
    %v6843 = vld [vmem:[#allocation7 + $0x50] sm:$0xf]
    %v6844 = vld [vmem:[#allocation7 + $0x78] sm:$0xff]
    %v6845 = vld [vmem:[#allocation7 + $0x80] sm:$0xf]
    %v6846 = vld [vmem:[#allocation7 + $0xa8] sm:$0xff]
    %v6847 = vld [vmem:[#allocation7 + $0xb0] sm:$0xf]
    %v6848 = vld [vmem:[#allocation7 + $0xd8] sm:$0xff]
    %v6849 = vld [vmem:[#allocation7 + $0xe0] sm:$0xf]
    %v6850 = vld [vmem:[#allocation7 + $0x108] sm:$0xff]
    %v6851 = vld [vmem:[#allocation7 + $0x110] sm:$0xf]
    %v6852 = vld [vmem:[#allocation7 + $0x138] sm:$0xff]
    %v6853 = vld [vmem:[#allocation7 + $0x140] sm:$0xf]
    %v6854 = vld [vmem:[#allocation7 + $0x168] sm:$0xff]
    %v6855 = vld [vmem:[#allocation7 + $0x170] sm:$0xf]
    %v6856 = vld [vmem:[#allocation7 + $0x198] sm:$0xff]
    %v6857 = vld [vmem:[#allocation7 + $0x1a0] sm:$0xf]
    %v6858 = vld [vmem:[#allocation7 + $0x1c8] sm:$0xff]
    %v6859 = vld [vmem:[#allocation7 + $0x1d0] sm:$0xf]
    %v6860 = vld [vmem:[#allocation7 + $0x1f8] sm:$0xff]
    %v6861 = vld [vmem:[#allocation7 + $0x200] sm:$0xf]
    %v6862 = vld [vmem:[#allocation7 + $0x228] sm:$0xff]
    %v6863 = vld [vmem:[#allocation7 + $0x230] sm:$0xf]
    %v6864 = vld [vmem:[#allocation7 + $0x258] sm:$0xff]
    %v6865 = vld [vmem:[#allocation7 + $0x260] sm:$0xf]
    %v6866 = vld [vmem:[#allocation7 + $0x288] sm:$0xff]
    %v6867 = vld [vmem:[#allocation7 + $0x290] sm:$0xf]
    %v6868 = vld [vmem:[#allocation7 + $0x2b8] sm:$0xff]
    %v6869 = vld [vmem:[#allocation7 + $0x2c0] sm:$0xf]
    %v6870 = vld [vmem:[#allocation7 + $0x2e8] sm:$0xff]
    %v6871 = vld [vmem:[#allocation7 + $0x2f0] sm:$0xf]
    %v6872 = vld [vmem:[#allocation7 + $0x318] sm:$0xff]
    %v6873 = vld [vmem:[#allocation7 + $0x320] sm:$0xf]
    %v6874 = vld [vmem:[#allocation7 + $0x348] sm:$0xff]
    %v6875 = vld [vmem:[#allocation7 + $0x350] sm:$0xf]
    %v6876 = vld [vmem:[#allocation7 + $0x378] sm:$0xff]
    %v6877 = vld [vmem:[#allocation7 + $0x380] sm:$0xf]
    %v6878 = vld [vmem:[#allocation7 + $0x3a8] sm:$0xff]
    %v6879 = vld [vmem:[#allocation7 + $0x3b0] sm:$0xf]
    %v6880 = vld [vmem:[#allocation7 + $0x3d8] sm:$0xff]
    %v6881 = vld [vmem:[#allocation7 + $0x3e0] sm:$0xf]
    %v6882 = vld [vmem:[#allocation7 + $0x408] sm:$0xff]
    %v6883 = vld [vmem:[#allocation7 + $0x410] sm:$0xf]
    %v6884 = vld [vmem:[#allocation7 + $0x438] sm:$0xff]
    %v6885 = vld [vmem:[#allocation7 + $0x440] sm:$0xf]
    %v6886 = vld [vmem:[#allocation7 + $0x468] sm:$0xff]
    %v6887 = vld [vmem:[#allocation7 + $0x470] sm:$0xf]
    %v6888 = vld [vmem:[#allocation7 + $0x498] sm:$0xff]
    %v6889 = vld [vmem:[#allocation7 + $0x4a0] sm:$0xf]
    %v6890 = vld [vmem:[#allocation7 + $0x4c8] sm:$0xff]
    %v6891 = vld [vmem:[#allocation7 + $0x4d0] sm:$0xf]
    %v6892 = vld [vmem:[#allocation7 + $0x4f8] sm:$0xff]
    %v6893 = vld [vmem:[#allocation7 + $0x500] sm:$0xf]
    %v6894 = vld [vmem:[#allocation7 + $0x528] sm:$0xff]
    %v6895 = vld [vmem:[#allocation7 + $0x530] sm:$0xf]
    %v6896 = vld [vmem:[#allocation7 + $0x558] sm:$0xff]
    %v6897 = vld [vmem:[#allocation7 + $0x560] sm:$0xf]
    %v6898 = vld [vmem:[#allocation7 + $0x588] sm:$0xff]
    %v6899 = vld [vmem:[#allocation7 + $0x590] sm:$0xf]
    %v6900 = vld [vmem:[#allocation7 + $0x5b8] sm:$0xff]
    %v6901 = vld [vmem:[#allocation7 + $0x5c0] sm:$0xf]
    %v6902 = vld [vmem:[#allocation7 + $0x5e8] sm:$0xff]
    %v6903 = vld [vmem:[#allocation7 + $0x5f0] sm:$0xf]
    %v6904 = vld [vmem:[#allocation7 + $0x618] sm:$0xff]
    %v6905 = vld [vmem:[#allocation7 + $0x620] sm:$0xf]
    %v6906 = vld [vmem:[#allocation7 + $0x648] sm:$0xff]
    %v6907 = vld [vmem:[#allocation7 + $0x650] sm:$0xf]
    %v6908 = vld [vmem:[#allocation7 + $0x678] sm:$0xff]
    %v6909 = vld [vmem:[#allocation7 + $0x680] sm:$0xf]
    %v6910 = vld [vmem:[#allocation7 + $0x6a8] sm:$0xff]
    %v6911 = vld [vmem:[#allocation7 + $0x6b0] sm:$0xf]
    %v6912 = vld [vmem:[#allocation7 + $0x6d8] sm:$0xff]
    %v6913 = vld [vmem:[#allocation7 + $0x6e0] sm:$0xf]
    %v6914 = vld [vmem:[#allocation7 + $0x708] sm:$0xff]
    %v6915 = vld [vmem:[#allocation7 + $0x710] sm:$0xf]
    %v6916 = vld [vmem:[#allocation7 + $0x738] sm:$0xff]
    %v6917 = vld [vmem:[#allocation7 + $0x740] sm:$0xf]
    %v6918 = vld [vmem:[#allocation7 + $0x768] sm:$0xff]
    %v6919 = vld [vmem:[#allocation7 + $0x770] sm:$0xf]
    %v6920 = vld [vmem:[#allocation7 + $0x798] sm:$0xff]
    %v6921 = vld [vmem:[#allocation7 + $0x7a0] sm:$0xf]
    %v6922 = vld [vmem:[#allocation7 + $0x7c8] sm:$0xff]
    %v6923 = vld [vmem:[#allocation7 + $0x7d0] sm:$0xf]
    %v6924 = vld [vmem:[#allocation7 + $0x7f8] sm:$0xff]
    %v6925 = vld [vmem:[#allocation7 + $0x800] sm:$0xf]
    %v6926 = vld [vmem:[#allocation7 + $0x828] sm:$0xff]
    %v6927 = vld [vmem:[#allocation7 + $0x830] sm:$0xf]
    %v6928 = vld [vmem:[#allocation7 + $0x858] sm:$0xff]
    %v6929 = vld [vmem:[#allocation7 + $0x860] sm:$0xf]
    %v6930 = vld [vmem:[#allocation7 + $0x888] sm:$0xff]
    %v6931 = vld [vmem:[#allocation7 + $0x890] sm:$0xf]
    %v6932 = vld [vmem:[#allocation7 + $0x8b8] sm:$0xff]
    %v6933 = vld [vmem:[#allocation7 + $0x8c0] sm:$0xf]
    %v6934 = vld [vmem:[#allocation7 + $0x8e8] sm:$0xff]
    %v6935 = vld [vmem:[#allocation7 + $0x8f0] sm:$0xf]
    %v6936 = vld [vmem:[#allocation7 + $0x918] sm:$0xff]
    %v6937 = vld [vmem:[#allocation7 + $0x920] sm:$0xf]
    %v6938 = vld [vmem:[#allocation7 + $0x948] sm:$0xff]
    %v6939 = vld [vmem:[#allocation7 + $0x950] sm:$0xf]
    %v6940 = vld [vmem:[#allocation7 + $0x978] sm:$0xff]
    %v6941 = vld [vmem:[#allocation7 + $0x980] sm:$0xf]
    %v6942 = vld [vmem:[#allocation7 + $0x9a8] sm:$0xff]
    %v6943 = vld [vmem:[#allocation7 + $0x9b0] sm:$0xf]
    %v6944 = vld [vmem:[#allocation7 + $0x9d8] sm:$0xff]
    %v6945 = vld [vmem:[#allocation7 + $0x9e0] sm:$0xf]
    %v6946 = vld [vmem:[#allocation7 + $0xa08] sm:$0xff]
    %v6947 = vld [vmem:[#allocation7 + $0xa10] sm:$0xf]
    %v6948 = vld [vmem:[#allocation7 + $0xa38] sm:$0xff]
    %v6949 = vld [vmem:[#allocation7 + $0xa40] sm:$0xf]
    %v6950 = vld [vmem:[#allocation7 + $0xa68] sm:$0xff]
    %v6951 = vld [vmem:[#allocation7 + $0xa70] sm:$0xf]
    %v6952 = vld [vmem:[#allocation7 + $0xa98] sm:$0xff]
    %v6953 = vld [vmem:[#allocation7 + $0xaa0] sm:$0xf]
    %v6954 = vld [vmem:[#allocation7 + $0xac8] sm:$0xff]
    %v6955 = vld [vmem:[#allocation7 + $0xad0] sm:$0xf]
    %v6956 = vld [vmem:[#allocation7 + $0xaf8] sm:$0xff]
    %v6957 = vld [vmem:[#allocation7 + $0xb00] sm:$0xf]
    %v6958 = vld [vmem:[#allocation7 + $0xb28] sm:$0xff]
    %v6959 = vld [vmem:[#allocation7 + $0xb30] sm:$0xf]
    %v6960 = vld [vmem:[#allocation7 + $0xb58] sm:$0xff]
    %v6961 = vld [vmem:[#allocation7 + $0xb60] sm:$0xf]
    %v6962 = vld [vmem:[#allocation7 + $0xb88] sm:$0xff]
    %v6963 = vld [vmem:[#allocation7 + $0xb90] sm:$0xf]
    %v6964 = vld [vmem:[#allocation7 + $0xbb8] sm:$0xff]
    %v6965 = vld [vmem:[#allocation7 + $0xbc0] sm:$0xf]
    %v6966 = vld [vmem:[#allocation7 + $0xbe8] sm:$0xff]
    %v6967 = vld [vmem:[#allocation7 + $0xbf0] sm:$0xf]
    %v6968 = vld [vmem:[#allocation7 + $0xc18] sm:$0xff]
    %v6969 = vld [vmem:[#allocation7 + $0xc20] sm:$0xf]
    %v6970 = vld [vmem:[#allocation7 + $0xc48] sm:$0xff]
    %v6971 = vld [vmem:[#allocation7 + $0xc50] sm:$0xf]
    %v6972 = vld [vmem:[#allocation7 + $0xc78] sm:$0xff]
    %v6973 = vld [vmem:[#allocation7 + $0xc80] sm:$0xf]
    %v6974 = vld [vmem:[#allocation7 + $0xca8] sm:$0xff]
    %v6975 = vld [vmem:[#allocation7 + $0xcb0] sm:$0xf]
    %v6976 = vld [vmem:[#allocation7 + $0xcd8] sm:$0xff]
    %v6977 = vld [vmem:[#allocation7 + $0xce0] sm:$0xf]
    %v6978 = vld [vmem:[#allocation7 + $0xd08] sm:$0xff]
    %v6979 = vld [vmem:[#allocation7 + $0xd10] sm:$0xf]
    %v6980 = vld [vmem:[#allocation7 + $0xd38] sm:$0xff]
    %v6981 = vld [vmem:[#allocation7 + $0xd40] sm:$0xf]
    %v6982 = vld [vmem:[#allocation7 + $0xd68] sm:$0xff]
    %v6983 = vld [vmem:[#allocation7 + $0xd70] sm:$0xf]
    %v6984 = vld [vmem:[#allocation7 + $0xd98] sm:$0xff]
    %v6985 = vld [vmem:[#allocation7 + $0xda0] sm:$0xf]
    %v6986 = vld [vmem:[#allocation7 + $0xdc8] sm:$0xff]
    %v6987 = vld [vmem:[#allocation7 + $0xdd0] sm:$0xf]
    %v6988 = vld [vmem:[#allocation7 + $0xdf8] sm:$0xff]
    %v6989 = vld [vmem:[#allocation7 + $0xe00] sm:$0xf]
    %v6990 = vld [vmem:[#allocation7 + $0xe28] sm:$0xff]
    %v6991 = vld [vmem:[#allocation7 + $0xe30] sm:$0xf]
    %v6992 = vld [vmem:[#allocation7 + $0xe58] sm:$0xff]
    %v6993 = vld [vmem:[#allocation7 + $0xe60] sm:$0xf]
    %v6994 = vld [vmem:[#allocation7 + $0xe88] sm:$0xff]
    %v6995 = vld [vmem:[#allocation7 + $0xe90] sm:$0xf]
    %v6996 = vld [vmem:[#allocation7 + $0xeb8] sm:$0xff]
    %v6997 = vld [vmem:[#allocation7 + $0xec0] sm:$0xf]
    %v6998 = vld [vmem:[#allocation7 + $0xee8] sm:$0xff]
    %v6999 = vld [vmem:[#allocation7 + $0xef0] sm:$0xf]
    %v7000 = vld [vmem:[#allocation7 + $0xf18] sm:$0xff]
    %v7001 = vld [vmem:[#allocation7 + $0xf20] sm:$0xf]
    %v7002 = vld [vmem:[#allocation7 + $0xf48] sm:$0xff]
    %v7003 = vld [vmem:[#allocation7 + $0xf50] sm:$0xf]
    %v7004 = vld [vmem:[#allocation7 + $0xf78] sm:$0xff]
    %v7005 = vld [vmem:[#allocation7 + $0xf80] sm:$0xf]
    %v7006 = vld [vmem:[#allocation7 + $0xfa8] sm:$0xff]
    %v7007 = vld [vmem:[#allocation7 + $0xfb0] sm:$0xf]
    %v7008 = vld [vmem:[#allocation7 + $0xfd8] sm:$0xff]
    %v7009 = vld [vmem:[#allocation7 + $0xfe0] sm:$0xf]
    %v7010 = vld [vmem:[#allocation7 + $0x1008] sm:$0xff]
    %v7011 = vld [vmem:[#allocation7 + $0x1010] sm:$0xf]
    %v7012 = vld [vmem:[#allocation7 + $0x1038] sm:$0xff]
    %v7013 = vld [vmem:[#allocation7 + $0x1040] sm:$0xf]
    %v7014 = vld [vmem:[#allocation7 + $0x1068] sm:$0xff]
    %v7015 = vld [vmem:[#allocation7 + $0x1070] sm:$0xf]
    %v7016 = vld [vmem:[#allocation7 + $0x1098] sm:$0xff]
    %v7017 = vld [vmem:[#allocation7 + $0x10a0] sm:$0xf]
    %v7018 = vld [vmem:[#allocation7 + $0x10c8] sm:$0xff]
    %v7019 = vld [vmem:[#allocation7 + $0x10d0] sm:$0xf]
    %v7020 = vld [vmem:[#allocation7 + $0x10f8] sm:$0xff]
    %v7021 = vld [vmem:[#allocation7 + $0x1100] sm:$0xf]
    %v7022 = vld [vmem:[#allocation7 + $0x1128] sm:$0xff]
    %v7023 = vld [vmem:[#allocation7 + $0x1130] sm:$0xf]
    %v7024 = vld [vmem:[#allocation7 + $0x1158] sm:$0xff]
    %v7025 = vld [vmem:[#allocation7 + $0x1160] sm:$0xf]
    %v7026 = vld [vmem:[#allocation7 + $0x1188] sm:$0xff]
    %v7027 = vld [vmem:[#allocation7 + $0x1190] sm:$0xf]
    %v7028 = vld [vmem:[#allocation7 + $0x11b8] sm:$0xff]
    %v7029 = vld [vmem:[#allocation7 + $0x11c0] sm:$0xf]
    %v7030 = vld [vmem:[#allocation7 + $0x11e8] sm:$0xff]
    %v7031 = vld [vmem:[#allocation7 + $0x11f0] sm:$0xf]
    %v7032 = vld [vmem:[#allocation7 + $0x1218] sm:$0xff]
    %v7033 = vld [vmem:[#allocation7 + $0x1220] sm:$0xf]
    %v7034 = vld [vmem:[#allocation7 + $0x1248] sm:$0xff]
    %v7035 = vld [vmem:[#allocation7 + $0x1250] sm:$0xf]
    %v7036 = vld [vmem:[#allocation7 + $0x1278] sm:$0xff]
    %v7037 = vld [vmem:[#allocation7 + $0x1280] sm:$0xf]
    %v7038 = vld [vmem:[#allocation7 + $0x12a8] sm:$0xff]
    %v7039 = vld [vmem:[#allocation7 + $0x12b0] sm:$0xf]
    %v7040 = vld [vmem:[#allocation7 + $0x12d8] sm:$0xff]
    %v7041 = vld [vmem:[#allocation7 + $0x12e0] sm:$0xf]
    %v7042 = vld [vmem:[#allocation7 + $0x1308] sm:$0xff]
    %v7043 = vld [vmem:[#allocation7 + $0x1310] sm:$0xf]
    %v7044 = vld [vmem:[#allocation7 + $0x1338] sm:$0xff]
    %v7045 = vld [vmem:[#allocation7 + $0x1340] sm:$0xf]
    %v7046 = vld [vmem:[#allocation7 + $0x1368] sm:$0xff]
    %v7047 = vld [vmem:[#allocation7 + $0x1370] sm:$0xf]
    %v7048 = vld [vmem:[#allocation7 + $0x1398] sm:$0xff]
    %v7049 = vld [vmem:[#allocation7 + $0x13a0] sm:$0xf]
    %v7050 = vld [vmem:[#allocation7 + $0x13c8] sm:$0xff]
    %v7051 = vld [vmem:[#allocation7 + $0x13d0] sm:$0xf]
    %v7052 = vld [vmem:[#allocation7 + $0x13f8] sm:$0xff]
    %v7053 = vld [vmem:[#allocation7 + $0x1400] sm:$0xf]
    %v7054 = vld [vmem:[#allocation7 + $0x1428] sm:$0xff]
    %v7055 = vld [vmem:[#allocation7 + $0x1430] sm:$0xf]
    %v7056 = vld [vmem:[#allocation7 + $0x1458] sm:$0xff]
    %v7057 = vld [vmem:[#allocation7 + $0x1460] sm:$0xf]
    %v7058 = vld [vmem:[#allocation7 + $0x1488] sm:$0xff]
    %v7059 = vld [vmem:[#allocation7 + $0x1490] sm:$0xf]
    %v7060 = vld [vmem:[#allocation7 + $0x14b8] sm:$0xff]
    %v7061 = vld [vmem:[#allocation7 + $0x14c0] sm:$0xf]
    %v7062 = vld [vmem:[#allocation7 + $0x14e8] sm:$0xff]
    %v7063 = vld [vmem:[#allocation7 + $0x14f0] sm:$0xf]
    %v7064 = vld [vmem:[#allocation7 + $0x1518] sm:$0xff]
    %v7065 = vld [vmem:[#allocation7 + $0x1520] sm:$0xf]
    %v7066 = vld [vmem:[#allocation7 + $0x1548] sm:$0xff]
    %v7067 = vld [vmem:[#allocation7 + $0x1550] sm:$0xf]
    %v7068 = vld [vmem:[#allocation7 + $0x1578] sm:$0xff]
    %v7069 = vld [vmem:[#allocation7 + $0x1580] sm:$0xf]
    %v7070 = vld [vmem:[#allocation7 + $0x15a8] sm:$0xff]
    %v7071 = vld [vmem:[#allocation7 + $0x15b0] sm:$0xf]
    %v7072 = vld [vmem:[#allocation7 + $0x15d8] sm:$0xff]
    %v7073 = vld [vmem:[#allocation7 + $0x15e0] sm:$0xf]
    %v7074 = vld [vmem:[#allocation7 + $0x1608] sm:$0xff]
    %v7075 = vld [vmem:[#allocation7 + $0x1610] sm:$0xf]
    %v7076 = vld [vmem:[#allocation7 + $0x1638] sm:$0xff]
    %v7077 = vld [vmem:[#allocation7 + $0x1640] sm:$0xf]
    %v7078 = vld [vmem:[#allocation7 + $0x1668] sm:$0xff]
    %v7079 = vld [vmem:[#allocation7 + $0x1670] sm:$0xf]
    %v7080 = vld [vmem:[#allocation7 + $0x1698] sm:$0xff]
    %v7081 = vld [vmem:[#allocation7 + $0x16a0] sm:$0xf]
    %v7082 = vld [vmem:[#allocation7 + $0x16c8] sm:$0xff]
    %v7083 = vld [vmem:[#allocation7 + $0x16d0] sm:$0xf]
    %v7084 = vld [vmem:[#allocation7 + $0x16f8] sm:$0xff]
    %v7085 = vld [vmem:[#allocation7 + $0x1700] sm:$0xf]
    %v7086 = vld [vmem:[#allocation7 + $0x1728] sm:$0xff]
    %v7087 = vld [vmem:[#allocation7 + $0x1730] sm:$0xf]
    %v7088 = vld [vmem:[#allocation7 + $0x1758] sm:$0xff]
    %v7089 = vld [vmem:[#allocation7 + $0x1760] sm:$0xf]
    %v7090 = vld [vmem:[#allocation7 + $0x1788] sm:$0xff]
    %v7091 = vld [vmem:[#allocation7 + $0x1790] sm:$0xf]
    %v7092 = vld [vmem:[#allocation7 + $0x17b8] sm:$0xff]
    %v7093 = vld [vmem:[#allocation7 + $0x17c0] sm:$0xf]
    %v7094 = vld [vmem:[#allocation7 + $0x17e8] sm:$0xff]
    %v7095 = vld [vmem:[#allocation7 + $0x17f0] sm:$0xf]
    %v7096 = vld [vmem:[#allocation7 + $0x1818] sm:$0xff]
    %v7097 = vld [vmem:[#allocation7 + $0x1820] sm:$0xf]
    %v7098 = vld [vmem:[#allocation7 + $0x1848] sm:$0xff]
    %v7099 = vld [vmem:[#allocation7 + $0x1850] sm:$0xf]
    %v7100 = vld [vmem:[#allocation7 + $0x1878] sm:$0xff]
    %v7101 = vld [vmem:[#allocation7 + $0x1880] sm:$0xf]
    %v7102 = vld [vmem:[#allocation7 + $0x18a8] sm:$0xff]
    %v7103 = vld [vmem:[#allocation7 + $0x18b0] sm:$0xf]
    %v7104 = vld [vmem:[#allocation7 + $0x18d8] sm:$0xff]
    %v7105 = vld [vmem:[#allocation7 + $0x18e0] sm:$0xf]
    %v7106 = vld [vmem:[#allocation7 + $0x1908] sm:$0xff]
    %v7107 = vld [vmem:[#allocation7 + $0x1910] sm:$0xf]
    %v7108 = vld [vmem:[#allocation7 + $0x1938] sm:$0xff]
    %v7109 = vld [vmem:[#allocation7 + $0x1940] sm:$0xf]
    %v7110 = vld [vmem:[#allocation7 + $0x1968] sm:$0xff]
    %v7111 = vld [vmem:[#allocation7 + $0x1970] sm:$0xf]
    %v7112 = vld [vmem:[#allocation7 + $0x1998] sm:$0xff]
    %v7113 = vld [vmem:[#allocation7 + $0x19a0] sm:$0xf]
    %v7114 = vld [vmem:[#allocation7 + $0x19c8] sm:$0xff]
    %v7115 = vld [vmem:[#allocation7 + $0x19d0] sm:$0xf]
    %v7116 = vld [vmem:[#allocation7 + $0x19f8] sm:$0xff]
    %v7117 = vld [vmem:[#allocation7 + $0x1a00] sm:$0xf]
    %v7118 = vld [vmem:[#allocation7 + $0x1a28] sm:$0xff]
    %v7119 = vld [vmem:[#allocation7 + $0x1a30] sm:$0xf]
    %v7120 = vld [vmem:[#allocation7 + $0x1a58] sm:$0xff]
    %v7121 = vld [vmem:[#allocation7 + $0x1a60] sm:$0xf]
    %v7122 = vld [vmem:[#allocation7 + $0x1a88] sm:$0xff]
    %v7123 = vld [vmem:[#allocation7 + $0x1a90] sm:$0xf]
    %v7124 = vld [vmem:[#allocation7 + $0x1ab8] sm:$0xff]
    %v7125 = vld [vmem:[#allocation7 + $0x1ac0] sm:$0xf]
    %v7126 = vld [vmem:[#allocation7 + $0x1ae8] sm:$0xff]
    %v7127 = vld [vmem:[#allocation7 + $0x1af0] sm:$0xf]
    %v7128 = vld [vmem:[#allocation7 + $0x1b18] sm:$0xff]
    %v7129 = vld [vmem:[#allocation7 + $0x1b20] sm:$0xf]
    %v7130 = vld [vmem:[#allocation7 + $0x1b48] sm:$0xff]
    %v7131 = vld [vmem:[#allocation7 + $0x1b50] sm:$0xf]
    %v7132 = vld [vmem:[#allocation7 + $0x1b78] sm:$0xff]
    %v7133 = vld [vmem:[#allocation7 + $0x1b80] sm:$0xf]
    %v7134 = vld [vmem:[#allocation7 + $0x1ba8] sm:$0xff]
    %v7135 = vld [vmem:[#allocation7 + $0x1bb0] sm:$0xf]
    %v7136 = vld [vmem:[#allocation7 + $0x1bd8] sm:$0xff]
    %v7137 = vld [vmem:[#allocation7 + $0x1be0] sm:$0xf]
    %v7138 = vld [vmem:[#allocation7 + $0x1c08] sm:$0xff]
    %v7139 = vld [vmem:[#allocation7 + $0x1c10] sm:$0xf]
    %v7140 = vld [vmem:[#allocation7 + $0x1c38] sm:$0xff]
    %v7141 = vld [vmem:[#allocation7 + $0x1c40] sm:$0xf]
    %v7142 = vld [vmem:[#allocation7 + $0x1c68] sm:$0xff]
    %v7143 = vld [vmem:[#allocation7 + $0x1c70] sm:$0xf]
    %v7144 = vld [vmem:[#allocation7 + $0x1c98] sm:$0xff]
    %v7145 = vld [vmem:[#allocation7 + $0x1ca0] sm:$0xf]
    %v7146 = vld [vmem:[#allocation7 + $0x1cc8] sm:$0xff]
    %v7147 = vld [vmem:[#allocation7 + $0x1cd0] sm:$0xf]
    %v7148 = vld [vmem:[#allocation7 + $0x1cf8] sm:$0xff]
    %v7149 = vld [vmem:[#allocation7 + $0x1d00] sm:$0xf]
    %v7150 = vld [vmem:[#allocation7 + $0x1d28] sm:$0xff]
    %v7151 = vld [vmem:[#allocation7 + $0x1d30] sm:$0xf]
    %v7152 = vld [vmem:[#allocation7 + $0x1d58] sm:$0xff]
    %v7153 = vld [vmem:[#allocation7 + $0x1d60] sm:$0xf]
    %v7154 = vld [vmem:[#allocation7 + $0x1d88] sm:$0xff]
    %v7155 = vld [vmem:[#allocation7 + $0x1d90] sm:$0xf]
    %v7156 = vld [vmem:[#allocation7 + $0x1db8] sm:$0xff]
    %v7157 = vld [vmem:[#allocation7 + $0x1dc0] sm:$0xf]
    %v7158 = vld [vmem:[#allocation7 + $0x1de8] sm:$0xff]
    %v7159 = vld [vmem:[#allocation7 + $0x1df0] sm:$0xf]
    %v7160 = vld [vmem:[#allocation7 + $0x1e18] sm:$0xff]
    %v7161 = vld [vmem:[#allocation7 + $0x1e20] sm:$0xf]
    %v7162 = vld [vmem:[#allocation7 + $0x1e48] sm:$0xff]
    %v7163 = vld [vmem:[#allocation7 + $0x1e50] sm:$0xf]
    %v7164 = vld [vmem:[#allocation7 + $0x1e78] sm:$0xff]
    %v7165 = vld [vmem:[#allocation7 + $0x1e80] sm:$0xf]
    %v7166 = vld [vmem:[#allocation7 + $0x1ea8] sm:$0xff]
    %v7167 = vld [vmem:[#allocation7 + $0x1eb0] sm:$0xf]
    %v7168 = vld [vmem:[#allocation7 + $0x1ed8] sm:$0xff]
    %v7169 = vld [vmem:[#allocation7 + $0x1ee0] sm:$0xf]
    %v7170 = vld [vmem:[#allocation7 + $0x1f08] sm:$0xff]
    %v7171 = vld [vmem:[#allocation7 + $0x1f10] sm:$0xf]
    %v7172 = vld [vmem:[#allocation7 + $0x1f38] sm:$0xff]
    %v7173 = vld [vmem:[#allocation7 + $0x1f40] sm:$0xf]
    %v7174 = vld [vmem:[#allocation7 + $0x1f68] sm:$0xff]
    %v7175 = vld [vmem:[#allocation7 + $0x1f70] sm:$0xf]
    %v7176 = vld [vmem:[#allocation7 + $0x1f98] sm:$0xff]
    %v7177 = vld [vmem:[#allocation7 + $0x1fa0] sm:$0xf]
    %v7178 = vld [vmem:[#allocation7 + $0x1fc8] sm:$0xff]
    %v7179 = vld [vmem:[#allocation7 + $0x1fd0] sm:$0xf]
    %v7180 = vld [vmem:[#allocation7 + $0x1ff8] sm:$0xff]
    %v7181 = vld [vmem:[#allocation7 + $0x2000] sm:$0xf]
    %v7182 = vld [vmem:[#allocation7 + $0x2028] sm:$0xff]
    %v7183 = vld [vmem:[#allocation7 + $0x2030] sm:$0xf]
    %v7184 = vld [vmem:[#allocation7 + $0x2058] sm:$0xff]
    %v7185 = vld [vmem:[#allocation7 + $0x2060] sm:$0xf]
    %v7186 = vld [vmem:[#allocation7 + $0x2088] sm:$0xff]
    %v7187 = vld [vmem:[#allocation7 + $0x2090] sm:$0xf]
    %v7188 = vld [vmem:[#allocation7 + $0x20b8] sm:$0xff]
    %v7189 = vld [vmem:[#allocation7 + $0x20c0] sm:$0xf]
    %v7190 = vld [vmem:[#allocation7 + $0x20e8] sm:$0xff]
    %v7191 = vld [vmem:[#allocation7 + $0x20f0] sm:$0xf]
    %v7192 = vld [vmem:[#allocation7 + $0x2118] sm:$0xff]
    %v7193 = vld [vmem:[#allocation7 + $0x2120] sm:$0xf]
    %v7194 = vld [vmem:[#allocation7 + $0x2148] sm:$0xff]
    %v7195 = vld [vmem:[#allocation7 + $0x2150] sm:$0xf]
    %v7196 = vld [vmem:[#allocation7 + $0x2178] sm:$0xff]
    %v7197 = vld [vmem:[#allocation7 + $0x2180] sm:$0xf]
    %v7198 = vld [vmem:[#allocation7 + $0x21a8] sm:$0xff]
    %v7199 = vld [vmem:[#allocation7 + $0x21b0] sm:$0xf]
    %v7200 = vld [vmem:[#allocation7 + $0x21d8] sm:$0xff]
    %v7201 = vld [vmem:[#allocation7 + $0x21e0] sm:$0xf]
    %v7202 = vld [vmem:[#allocation7 + $0x2208] sm:$0xff]
    %v7203 = vld [vmem:[#allocation7 + $0x2210] sm:$0xf]
    %v7204 = vld [vmem:[#allocation7 + $0x2238] sm:$0xff]
    %v7205 = vld [vmem:[#allocation7 + $0x2240] sm:$0xf]
    %v7206 = vld [vmem:[#allocation7 + $0x2268] sm:$0xff]
    %v7207 = vld [vmem:[#allocation7 + $0x2270] sm:$0xf]
    %v7208 = vld [vmem:[#allocation7 + $0x2298] sm:$0xff]
    %v7209 = vld [vmem:[#allocation7 + $0x22a0] sm:$0xf]
    %v7210 = vld [vmem:[#allocation7 + $0x22c8] sm:$0xff]
    %v7211 = vld [vmem:[#allocation7 + $0x22d0] sm:$0xf]
    %v7212 = vld [vmem:[#allocation7 + $0x22f8] sm:$0xff]
    %v7213 = vld [vmem:[#allocation7 + $0x2300] sm:$0xf]
    %v7214 = vld [vmem:[#allocation7 + $0x2328] sm:$0xff]
    %v7215 = vld [vmem:[#allocation7 + $0x2330] sm:$0xf]
    %v7216 = vld [vmem:[#allocation7 + $0x2358] sm:$0xff]
    %v7217 = vld [vmem:[#allocation7 + $0x2360] sm:$0xf]
    %v7218 = vld [vmem:[#allocation7 + $0x2388] sm:$0xff]
    %v7219 = vld [vmem:[#allocation7 + $0x2390] sm:$0xf]
    %v7220 = vld [vmem:[#allocation7 + $0x23b8] sm:$0xff]
    %v7221 = vld [vmem:[#allocation7 + $0x23c0] sm:$0xf]
    %v7222 = vld [vmem:[#allocation7 + $0x23e8] sm:$0xff]
    %v7223 = vld [vmem:[#allocation7 + $0x23f0] sm:$0xf]
    %v7608 = vunpack.c.l.b16 %v6840
    %v7609 = vunpack.c.h.b16 %v6840
    %v7610 = vunpack.c.l.b16 %v6841
    %v7611 = vunpack.c.l.b16 %v6842
    %v7612 = vunpack.c.h.b16 %v6842
    %v7613 = vunpack.c.l.b16 %v6843
    %v7614 = vunpack.c.l.b16 %v6844
    %v7615 = vunpack.c.h.b16 %v6844
    %v7616 = vunpack.c.l.b16 %v6845
    %v7617 = vunpack.c.l.b16 %v6846
    %v7618 = vunpack.c.h.b16 %v6846
    %v7619 = vunpack.c.l.b16 %v6847
    %v7620 = vunpack.c.l.b16 %v6848
    %v7621 = vunpack.c.h.b16 %v6848
    %v7622 = vunpack.c.l.b16 %v6849
    %v7623 = vunpack.c.l.b16 %v6850
    %v7624 = vunpack.c.h.b16 %v6850
    %v7625 = vunpack.c.l.b16 %v6851
    %v7626 = vunpack.c.l.b16 %v6852
    %v7627 = vunpack.c.h.b16 %v6852
    %v7628 = vunpack.c.l.b16 %v6853
    %v7629 = vunpack.c.l.b16 %v6854
    %v7630 = vunpack.c.h.b16 %v6854
    %v7631 = vunpack.c.l.b16 %v6855
    %v7632 = vunpack.c.l.b16 %v6856
    %v7633 = vunpack.c.h.b16 %v6856
    %v7634 = vunpack.c.l.b16 %v6857
    %v7635 = vunpack.c.l.b16 %v6858
    %v7636 = vunpack.c.h.b16 %v6858
    %v7637 = vunpack.c.l.b16 %v6859
    %v7638 = vunpack.c.l.b16 %v6860
    %v7639 = vunpack.c.h.b16 %v6860
    %v7640 = vunpack.c.l.b16 %v6861
    %v7641 = vunpack.c.l.b16 %v6862
    %v7642 = vunpack.c.h.b16 %v6862
    %v7643 = vunpack.c.l.b16 %v6863
    %v7644 = vunpack.c.l.b16 %v6864
    %v7645 = vunpack.c.h.b16 %v6864
    %v7646 = vunpack.c.l.b16 %v6865
    %v7647 = vunpack.c.l.b16 %v6866
    %v7648 = vunpack.c.h.b16 %v6866
    %v7649 = vunpack.c.l.b16 %v6867
    %v7650 = vunpack.c.l.b16 %v6868
    %v7651 = vunpack.c.h.b16 %v6868
    %v7652 = vunpack.c.l.b16 %v6869
    %v7653 = vunpack.c.l.b16 %v6870
    %v7654 = vunpack.c.h.b16 %v6870
    %v7655 = vunpack.c.l.b16 %v6871
    %v7656 = vunpack.c.l.b16 %v6872
    %v7657 = vunpack.c.h.b16 %v6872
    %v7658 = vunpack.c.l.b16 %v6873
    %v7659 = vunpack.c.l.b16 %v6874
    %v7660 = vunpack.c.h.b16 %v6874
    %v7661 = vunpack.c.l.b16 %v6875
    %v7662 = vunpack.c.l.b16 %v6876
    %v7663 = vunpack.c.h.b16 %v6876
    %v7664 = vunpack.c.l.b16 %v6877
    %v7665 = vunpack.c.l.b16 %v6878
    %v7666 = vunpack.c.h.b16 %v6878
    %v7667 = vunpack.c.l.b16 %v6879
    %v7668 = vunpack.c.l.b16 %v6880
    %v7669 = vunpack.c.h.b16 %v6880
    %v7670 = vunpack.c.l.b16 %v6881
    %v7671 = vunpack.c.l.b16 %v6882
    %v7672 = vunpack.c.h.b16 %v6882
    %v7673 = vunpack.c.l.b16 %v6883
    %v7674 = vunpack.c.l.b16 %v6884
    %v7675 = vunpack.c.h.b16 %v6884
    %v7676 = vunpack.c.l.b16 %v6885
    %v7677 = vunpack.c.l.b16 %v6886
    %v7678 = vunpack.c.h.b16 %v6886
    %v7679 = vunpack.c.l.b16 %v6887
    %v7680 = vunpack.c.l.b16 %v6888
    %v7681 = vunpack.c.h.b16 %v6888
    %v7682 = vunpack.c.l.b16 %v6889
    %v7683 = vunpack.c.l.b16 %v6890
    %v7684 = vunpack.c.h.b16 %v6890
    %v7685 = vunpack.c.l.b16 %v6891
    %v7686 = vunpack.c.l.b16 %v6892
    %v7687 = vunpack.c.h.b16 %v6892
    %v7688 = vunpack.c.l.b16 %v6893
    %v7689 = vunpack.c.l.b16 %v6894
    %v7690 = vunpack.c.h.b16 %v6894
    %v7691 = vunpack.c.l.b16 %v6895
    %v7692 = vunpack.c.l.b16 %v6896
    %v7693 = vunpack.c.h.b16 %v6896
    %v7694 = vunpack.c.l.b16 %v6897
    %v7695 = vunpack.c.l.b16 %v6898
    %v7696 = vunpack.c.h.b16 %v6898
    %v7697 = vunpack.c.l.b16 %v6899
    %v7698 = vunpack.c.l.b16 %v6900
    %v7699 = vunpack.c.h.b16 %v6900
    %v7700 = vunpack.c.l.b16 %v6901
    %v7701 = vunpack.c.l.b16 %v6902
    %v7702 = vunpack.c.h.b16 %v6902
    %v7703 = vunpack.c.l.b16 %v6903
    %v7704 = vunpack.c.l.b16 %v6904
    %v7705 = vunpack.c.h.b16 %v6904
    %v7706 = vunpack.c.l.b16 %v6905
    %v7707 = vunpack.c.l.b16 %v6906
    %v7708 = vunpack.c.h.b16 %v6906
    %v7709 = vunpack.c.l.b16 %v6907
    %v7710 = vunpack.c.l.b16 %v6908
    %v7711 = vunpack.c.h.b16 %v6908
    %v7712 = vunpack.c.l.b16 %v6909
    %v7713 = vunpack.c.l.b16 %v6910
    %v7714 = vunpack.c.h.b16 %v6910
    %v7715 = vunpack.c.l.b16 %v6911
    %v7716 = vunpack.c.l.b16 %v6912
    %v7717 = vunpack.c.h.b16 %v6912
    %v7718 = vunpack.c.l.b16 %v6913
    %v7719 = vunpack.c.l.b16 %v6914
    %v7720 = vunpack.c.h.b16 %v6914
    %v7721 = vunpack.c.l.b16 %v6915
    %v7722 = vunpack.c.l.b16 %v6916
    %v7723 = vunpack.c.h.b16 %v6916
    %v7724 = vunpack.c.l.b16 %v6917
    %v7725 = vunpack.c.l.b16 %v6918
    %v7726 = vunpack.c.h.b16 %v6918
    %v7727 = vunpack.c.l.b16 %v6919
    %v7728 = vunpack.c.l.b16 %v6920
    %v7729 = vunpack.c.h.b16 %v6920
    %v7730 = vunpack.c.l.b16 %v6921
    %v7731 = vunpack.c.l.b16 %v6922
    %v7732 = vunpack.c.h.b16 %v6922
    %v7733 = vunpack.c.l.b16 %v6923
    %v7734 = vunpack.c.l.b16 %v6924
    %v7735 = vunpack.c.h.b16 %v6924
    %v7736 = vunpack.c.l.b16 %v6925
    %v7737 = vunpack.c.l.b16 %v6926
    %v7738 = vunpack.c.h.b16 %v6926
    %v7739 = vunpack.c.l.b16 %v6927
    %v7740 = vunpack.c.l.b16 %v6928
    %v7741 = vunpack.c.h.b16 %v6928
    %v7742 = vunpack.c.l.b16 %v6929
    %v7743 = vunpack.c.l.b16 %v6930
    %v7744 = vunpack.c.h.b16 %v6930
    %v7745 = vunpack.c.l.b16 %v6931
    %v7746 = vunpack.c.l.b16 %v6932
    %v7747 = vunpack.c.h.b16 %v6932
    %v7748 = vunpack.c.l.b16 %v6933
    %v7749 = vunpack.c.l.b16 %v6934
    %v7750 = vunpack.c.h.b16 %v6934
    %v7751 = vunpack.c.l.b16 %v6935
    %v7752 = vunpack.c.l.b16 %v6936
    %v7753 = vunpack.c.h.b16 %v6936
    %v7754 = vunpack.c.l.b16 %v6937
    %v7755 = vunpack.c.l.b16 %v6938
    %v7756 = vunpack.c.h.b16 %v6938
    %v7757 = vunpack.c.l.b16 %v6939
    %v7758 = vunpack.c.l.b16 %v6940
    %v7759 = vunpack.c.h.b16 %v6940
    %v7760 = vunpack.c.l.b16 %v6941
    %v7761 = vunpack.c.l.b16 %v6942
    %v7762 = vunpack.c.h.b16 %v6942
    %v7763 = vunpack.c.l.b16 %v6943
    %v7764 = vunpack.c.l.b16 %v6944
    %v7765 = vunpack.c.h.b16 %v6944
    %v7766 = vunpack.c.l.b16 %v6945
    %v7767 = vunpack.c.l.b16 %v6946
    %v7768 = vunpack.c.h.b16 %v6946
    %v7769 = vunpack.c.l.b16 %v6947
    %v7770 = vunpack.c.l.b16 %v6948
    %v7771 = vunpack.c.h.b16 %v6948
    %v7772 = vunpack.c.l.b16 %v6949
    %v7773 = vunpack.c.l.b16 %v6950
    %v7774 = vunpack.c.h.b16 %v6950
    %v7775 = vunpack.c.l.b16 %v6951
    %v7776 = vunpack.c.l.b16 %v6952
    %v7777 = vunpack.c.h.b16 %v6952
    %v7778 = vunpack.c.l.b16 %v6953
    %v7779 = vunpack.c.l.b16 %v6954
    %v7780 = vunpack.c.h.b16 %v6954
    %v7781 = vunpack.c.l.b16 %v6955
    %v7782 = vunpack.c.l.b16 %v6956
    %v7783 = vunpack.c.h.b16 %v6956
    %v7784 = vunpack.c.l.b16 %v6957
    %v7785 = vunpack.c.l.b16 %v6958
    %v7786 = vunpack.c.h.b16 %v6958
    %v7787 = vunpack.c.l.b16 %v6959
    %v7788 = vunpack.c.l.b16 %v6960
    %v7789 = vunpack.c.h.b16 %v6960
    %v7790 = vunpack.c.l.b16 %v6961
    %v7791 = vunpack.c.l.b16 %v6962
    %v7792 = vunpack.c.h.b16 %v6962
    %v7793 = vunpack.c.l.b16 %v6963
    %v7794 = vunpack.c.l.b16 %v6964
    %v7795 = vunpack.c.h.b16 %v6964
    %v7796 = vunpack.c.l.b16 %v6965
    %v7797 = vunpack.c.l.b16 %v6966
    %v7798 = vunpack.c.h.b16 %v6966
    %v7799 = vunpack.c.l.b16 %v6967
    %v7800 = vunpack.c.l.b16 %v6968
    %v7801 = vunpack.c.h.b16 %v6968
    %v7802 = vunpack.c.l.b16 %v6969
    %v7803 = vunpack.c.l.b16 %v6970
    %v7804 = vunpack.c.h.b16 %v6970
    %v7805 = vunpack.c.l.b16 %v6971
    %v7806 = vunpack.c.l.b16 %v6972
    %v7807 = vunpack.c.h.b16 %v6972
    %v7808 = vunpack.c.l.b16 %v6973
    %v7809 = vunpack.c.l.b16 %v6974
    %v7810 = vunpack.c.h.b16 %v6974
    %v7811 = vunpack.c.l.b16 %v6975
    %v7812 = vunpack.c.l.b16 %v6976
    %v7813 = vunpack.c.h.b16 %v6976
    %v7814 = vunpack.c.l.b16 %v6977
    %v7815 = vunpack.c.l.b16 %v6978
    %v7816 = vunpack.c.h.b16 %v6978
    %v7817 = vunpack.c.l.b16 %v6979
    %v7818 = vunpack.c.l.b16 %v6980
    %v7819 = vunpack.c.h.b16 %v6980
    %v7820 = vunpack.c.l.b16 %v6981
    %v7821 = vunpack.c.l.b16 %v6982
    %v7822 = vunpack.c.h.b16 %v6982
    %v7823 = vunpack.c.l.b16 %v6983
    %v7824 = vunpack.c.l.b16 %v6984
    %v7825 = vunpack.c.h.b16 %v6984
    %v7826 = vunpack.c.l.b16 %v6985
    %v7827 = vunpack.c.l.b16 %v6986
    %v7828 = vunpack.c.h.b16 %v6986
    %v7829 = vunpack.c.l.b16 %v6987
    %v7830 = vunpack.c.l.b16 %v6988
    %v7831 = vunpack.c.h.b16 %v6988
    %v7832 = vunpack.c.l.b16 %v6989
    %v7833 = vunpack.c.l.b16 %v6990
    %v7834 = vunpack.c.h.b16 %v6990
    %v7835 = vunpack.c.l.b16 %v6991
    %v7836 = vunpack.c.l.b16 %v6992
    %v7837 = vunpack.c.h.b16 %v6992
    %v7838 = vunpack.c.l.b16 %v6993
    %v7839 = vunpack.c.l.b16 %v6994
    %v7840 = vunpack.c.h.b16 %v6994
    %v7841 = vunpack.c.l.b16 %v6995
    %v7842 = vunpack.c.l.b16 %v6996
    %v7843 = vunpack.c.h.b16 %v6996
    %v7844 = vunpack.c.l.b16 %v6997
    %v7845 = vunpack.c.l.b16 %v6998
    %v7846 = vunpack.c.h.b16 %v6998
    %v7847 = vunpack.c.l.b16 %v6999
    %v7848 = vunpack.c.l.b16 %v7000
    %v7849 = vunpack.c.h.b16 %v7000
    %v7850 = vunpack.c.l.b16 %v7001
    %v7851 = vunpack.c.l.b16 %v7002
    %v7852 = vunpack.c.h.b16 %v7002
    %v7853 = vunpack.c.l.b16 %v7003
    %v7854 = vunpack.c.l.b16 %v7004
    %v7855 = vunpack.c.h.b16 %v7004
    %v7856 = vunpack.c.l.b16 %v7005
    %v7857 = vunpack.c.l.b16 %v7006
    %v7858 = vunpack.c.h.b16 %v7006
    %v7859 = vunpack.c.l.b16 %v7007
    %v7860 = vunpack.c.l.b16 %v7008
    %v7861 = vunpack.c.h.b16 %v7008
    %v7862 = vunpack.c.l.b16 %v7009
    %v7863 = vunpack.c.l.b16 %v7010
    %v7864 = vunpack.c.h.b16 %v7010
    %v7865 = vunpack.c.l.b16 %v7011
    %v7866 = vunpack.c.l.b16 %v7012
    %v7867 = vunpack.c.h.b16 %v7012
    %v7868 = vunpack.c.l.b16 %v7013
    %v7869 = vunpack.c.l.b16 %v7014
    %v7870 = vunpack.c.h.b16 %v7014
    %v7871 = vunpack.c.l.b16 %v7015
    %v7872 = vunpack.c.l.b16 %v7016
    %v7873 = vunpack.c.h.b16 %v7016
    %v7874 = vunpack.c.l.b16 %v7017
    %v7875 = vunpack.c.l.b16 %v7018
    %v7876 = vunpack.c.h.b16 %v7018
    %v7877 = vunpack.c.l.b16 %v7019
    %v7878 = vunpack.c.l.b16 %v7020
    %v7879 = vunpack.c.h.b16 %v7020
    %v7880 = vunpack.c.l.b16 %v7021
    %v7881 = vunpack.c.l.b16 %v7022
    %v7882 = vunpack.c.h.b16 %v7022
    %v7883 = vunpack.c.l.b16 %v7023
    %v7884 = vunpack.c.l.b16 %v7024
    %v7885 = vunpack.c.h.b16 %v7024
    %v7886 = vunpack.c.l.b16 %v7025
    %v7887 = vunpack.c.l.b16 %v7026
    %v7888 = vunpack.c.h.b16 %v7026
    %v7889 = vunpack.c.l.b16 %v7027
    %v7890 = vunpack.c.l.b16 %v7028
    %v7891 = vunpack.c.h.b16 %v7028
    %v7892 = vunpack.c.l.b16 %v7029
    %v7893 = vunpack.c.l.b16 %v7030
    %v7894 = vunpack.c.h.b16 %v7030
    %v7895 = vunpack.c.l.b16 %v7031
    %v7896 = vunpack.c.l.b16 %v7032
    %v7897 = vunpack.c.h.b16 %v7032
    %v7898 = vunpack.c.l.b16 %v7033
    %v7899 = vunpack.c.l.b16 %v7034
    %v7900 = vunpack.c.h.b16 %v7034
    %v7901 = vunpack.c.l.b16 %v7035
    %v7902 = vunpack.c.l.b16 %v7036
    %v7903 = vunpack.c.h.b16 %v7036
    %v7904 = vunpack.c.l.b16 %v7037
    %v7905 = vunpack.c.l.b16 %v7038
    %v7906 = vunpack.c.h.b16 %v7038
    %v7907 = vunpack.c.l.b16 %v7039
    %v7908 = vunpack.c.l.b16 %v7040
    %v7909 = vunpack.c.h.b16 %v7040
    %v7910 = vunpack.c.l.b16 %v7041
    %v7911 = vunpack.c.l.b16 %v7042
    %v7912 = vunpack.c.h.b16 %v7042
    %v7913 = vunpack.c.l.b16 %v7043
    %v7914 = vunpack.c.l.b16 %v7044
    %v7915 = vunpack.c.h.b16 %v7044
    %v7916 = vunpack.c.l.b16 %v7045
    %v7917 = vunpack.c.l.b16 %v7046
    %v7918 = vunpack.c.h.b16 %v7046
    %v7919 = vunpack.c.l.b16 %v7047
    %v7920 = vunpack.c.l.b16 %v7048
    %v7921 = vunpack.c.h.b16 %v7048
    %v7922 = vunpack.c.l.b16 %v7049
    %v7923 = vunpack.c.l.b16 %v7050
    %v7924 = vunpack.c.h.b16 %v7050
    %v7925 = vunpack.c.l.b16 %v7051
    %v7926 = vunpack.c.l.b16 %v7052
    %v7927 = vunpack.c.h.b16 %v7052
    %v7928 = vunpack.c.l.b16 %v7053
    %v7929 = vunpack.c.l.b16 %v7054
    %v7930 = vunpack.c.h.b16 %v7054
    %v7931 = vunpack.c.l.b16 %v7055
    %v7932 = vunpack.c.l.b16 %v7056
    %v7933 = vunpack.c.h.b16 %v7056
    %v7934 = vunpack.c.l.b16 %v7057
    %v7935 = vunpack.c.l.b16 %v7058
    %v7936 = vunpack.c.h.b16 %v7058
    %v7937 = vunpack.c.l.b16 %v7059
    %v7938 = vunpack.c.l.b16 %v7060
    %v7939 = vunpack.c.h.b16 %v7060
    %v7940 = vunpack.c.l.b16 %v7061
    %v7941 = vunpack.c.l.b16 %v7062
    %v7942 = vunpack.c.h.b16 %v7062
    %v7943 = vunpack.c.l.b16 %v7063
    %v7944 = vunpack.c.l.b16 %v7064
    %v7945 = vunpack.c.h.b16 %v7064
    %v7946 = vunpack.c.l.b16 %v7065
    %v7947 = vunpack.c.l.b16 %v7066
    %v7948 = vunpack.c.h.b16 %v7066
    %v7949 = vunpack.c.l.b16 %v7067
    %v7950 = vunpack.c.l.b16 %v7068
    %v7951 = vunpack.c.h.b16 %v7068
    %v7952 = vunpack.c.l.b16 %v7069
    %v7953 = vunpack.c.l.b16 %v7070
    %v7954 = vunpack.c.h.b16 %v7070
    %v7955 = vunpack.c.l.b16 %v7071
    %v7956 = vunpack.c.l.b16 %v7072
    %v7957 = vunpack.c.h.b16 %v7072
    %v7958 = vunpack.c.l.b16 %v7073
    %v7959 = vunpack.c.l.b16 %v7074
    %v7960 = vunpack.c.h.b16 %v7074
    %v7961 = vunpack.c.l.b16 %v7075
    %v7962 = vunpack.c.l.b16 %v7076
    %v7963 = vunpack.c.h.b16 %v7076
    %v7964 = vunpack.c.l.b16 %v7077
    %v7965 = vunpack.c.l.b16 %v7078
    %v7966 = vunpack.c.h.b16 %v7078
    %v7967 = vunpack.c.l.b16 %v7079
    %v7968 = vunpack.c.l.b16 %v7080
    %v7969 = vunpack.c.h.b16 %v7080
    %v7970 = vunpack.c.l.b16 %v7081
    %v7971 = vunpack.c.l.b16 %v7082
    %v7972 = vunpack.c.h.b16 %v7082
    %v7973 = vunpack.c.l.b16 %v7083
    %v7974 = vunpack.c.l.b16 %v7084
    %v7975 = vunpack.c.h.b16 %v7084
    %v7976 = vunpack.c.l.b16 %v7085
    %v7977 = vunpack.c.l.b16 %v7086
    %v7978 = vunpack.c.h.b16 %v7086
    %v7979 = vunpack.c.l.b16 %v7087
    %v7980 = vunpack.c.l.b16 %v7088
    %v7981 = vunpack.c.h.b16 %v7088
    %v7982 = vunpack.c.l.b16 %v7089
    %v7983 = vunpack.c.l.b16 %v7090
    %v7984 = vunpack.c.h.b16 %v7090
    %v7985 = vunpack.c.l.b16 %v7091
    %v7986 = vunpack.c.l.b16 %v7092
    %v7987 = vunpack.c.h.b16 %v7092
    %v7988 = vunpack.c.l.b16 %v7093
    %v7989 = vunpack.c.l.b16 %v7094
    %v7990 = vunpack.c.h.b16 %v7094
    %v7991 = vunpack.c.l.b16 %v7095
    %v7992 = vunpack.c.l.b16 %v7096
    %v7993 = vunpack.c.h.b16 %v7096
    %v7994 = vunpack.c.l.b16 %v7097
    %v7995 = vunpack.c.l.b16 %v7098
    %v7996 = vunpack.c.h.b16 %v7098
    %v7997 = vunpack.c.l.b16 %v7099
    %v7998 = vunpack.c.l.b16 %v7100
    %v7999 = vunpack.c.h.b16 %v7100
    %v8000 = vunpack.c.l.b16 %v7101
    %v8001 = vunpack.c.l.b16 %v7102
    %v8002 = vunpack.c.h.b16 %v7102
    %v8003 = vunpack.c.l.b16 %v7103
    %v8004 = vunpack.c.l.b16 %v7104
    %v8005 = vunpack.c.h.b16 %v7104
    %v8006 = vunpack.c.l.b16 %v7105
    %v8007 = vunpack.c.l.b16 %v7106
    %v8008 = vunpack.c.h.b16 %v7106
    %v8009 = vunpack.c.l.b16 %v7107
    %v8010 = vunpack.c.l.b16 %v7108
    %v8011 = vunpack.c.h.b16 %v7108
    %v8012 = vunpack.c.l.b16 %v7109
    %v8013 = vunpack.c.l.b16 %v7110
    %v8014 = vunpack.c.h.b16 %v7110
    %v8015 = vunpack.c.l.b16 %v7111
    %v8016 = vunpack.c.l.b16 %v7112
    %v8017 = vunpack.c.h.b16 %v7112
    %v8018 = vunpack.c.l.b16 %v7113
    %v8019 = vunpack.c.l.b16 %v7114
    %v8020 = vunpack.c.h.b16 %v7114
    %v8021 = vunpack.c.l.b16 %v7115
    %v8022 = vunpack.c.l.b16 %v7116
    %v8023 = vunpack.c.h.b16 %v7116
    %v8024 = vunpack.c.l.b16 %v7117
    %v8025 = vunpack.c.l.b16 %v7118
    %v8026 = vunpack.c.h.b16 %v7118
    %v8027 = vunpack.c.l.b16 %v7119
    %v8028 = vunpack.c.l.b16 %v7120
    %v8029 = vunpack.c.h.b16 %v7120
    %v8030 = vunpack.c.l.b16 %v7121
    %v8031 = vunpack.c.l.b16 %v7122
    %v8032 = vunpack.c.h.b16 %v7122
    %v8033 = vunpack.c.l.b16 %v7123
    %v8034 = vunpack.c.l.b16 %v7124
    %v8035 = vunpack.c.h.b16 %v7124
    %v8036 = vunpack.c.l.b16 %v7125
    %v8037 = vunpack.c.l.b16 %v7126
    %v8038 = vunpack.c.h.b16 %v7126
    %v8039 = vunpack.c.l.b16 %v7127
    %v8040 = vunpack.c.l.b16 %v7128
    %v8041 = vunpack.c.h.b16 %v7128
    %v8042 = vunpack.c.l.b16 %v7129
    %v8043 = vunpack.c.l.b16 %v7130
    %v8044 = vunpack.c.h.b16 %v7130
    %v8045 = vunpack.c.l.b16 %v7131
    %v8046 = vunpack.c.l.b16 %v7132
    %v8047 = vunpack.c.h.b16 %v7132
    %v8048 = vunpack.c.l.b16 %v7133
    %v8049 = vunpack.c.l.b16 %v7134
    %v8050 = vunpack.c.h.b16 %v7134
    %v8051 = vunpack.c.l.b16 %v7135
    %v8052 = vunpack.c.l.b16 %v7136
    %v8053 = vunpack.c.h.b16 %v7136
    %v8054 = vunpack.c.l.b16 %v7137
    %v8055 = vunpack.c.l.b16 %v7138
    %v8056 = vunpack.c.h.b16 %v7138
    %v8057 = vunpack.c.l.b16 %v7139
    %v8058 = vunpack.c.l.b16 %v7140
    %v8059 = vunpack.c.h.b16 %v7140
    %v8060 = vunpack.c.l.b16 %v7141
    %v8061 = vunpack.c.l.b16 %v7142
    %v8062 = vunpack.c.h.b16 %v7142
    %v8063 = vunpack.c.l.b16 %v7143
    %v8064 = vunpack.c.l.b16 %v7144
    %v8065 = vunpack.c.h.b16 %v7144
    %v8066 = vunpack.c.l.b16 %v7145
    %v8067 = vunpack.c.l.b16 %v7146
    %v8068 = vunpack.c.h.b16 %v7146
    %v8069 = vunpack.c.l.b16 %v7147
    %v8070 = vunpack.c.l.b16 %v7148
    %v8071 = vunpack.c.h.b16 %v7148
    %v8072 = vunpack.c.l.b16 %v7149
    %v8073 = vunpack.c.l.b16 %v7150
    %v8074 = vunpack.c.h.b16 %v7150
    %v8075 = vunpack.c.l.b16 %v7151
    %v8076 = vunpack.c.l.b16 %v7152
    %v8077 = vunpack.c.h.b16 %v7152
    %v8078 = vunpack.c.l.b16 %v7153
    %v8079 = vunpack.c.l.b16 %v7154
    %v8080 = vunpack.c.h.b16 %v7154
    %v8081 = vunpack.c.l.b16 %v7155
    %v8082 = vunpack.c.l.b16 %v7156
    %v8083 = vunpack.c.h.b16 %v7156
    %v8084 = vunpack.c.l.b16 %v7157
    %v8085 = vunpack.c.l.b16 %v7158
    %v8086 = vunpack.c.h.b16 %v7158
    %v8087 = vunpack.c.l.b16 %v7159
    %v8088 = vunpack.c.l.b16 %v7160
    %v8089 = vunpack.c.h.b16 %v7160
    %v8090 = vunpack.c.l.b16 %v7161
    %v8091 = vunpack.c.l.b16 %v7162
    %v8092 = vunpack.c.h.b16 %v7162
    %v8093 = vunpack.c.l.b16 %v7163
    %v8094 = vunpack.c.l.b16 %v7164
    %v8095 = vunpack.c.h.b16 %v7164
    %v8096 = vunpack.c.l.b16 %v7165
    %v8097 = vunpack.c.l.b16 %v7166
    %v8098 = vunpack.c.h.b16 %v7166
    %v8099 = vunpack.c.l.b16 %v7167
    %v8100 = vunpack.c.l.b16 %v7168
    %v8101 = vunpack.c.h.b16 %v7168
    %v8102 = vunpack.c.l.b16 %v7169
    %v8103 = vunpack.c.l.b16 %v7170
    %v8104 = vunpack.c.h.b16 %v7170
    %v8105 = vunpack.c.l.b16 %v7171
    %v8106 = vunpack.c.l.b16 %v7172
    %v8107 = vunpack.c.h.b16 %v7172
    %v8108 = vunpack.c.l.b16 %v7173
    %v8109 = vunpack.c.l.b16 %v7174
    %v8110 = vunpack.c.h.b16 %v7174
    %v8111 = vunpack.c.l.b16 %v7175
    %v8112 = vunpack.c.l.b16 %v7176
    %v8113 = vunpack.c.h.b16 %v7176
    %v8114 = vunpack.c.l.b16 %v7177
    %v8115 = vunpack.c.l.b16 %v7178
    %v8116 = vunpack.c.h.b16 %v7178
    %v8117 = vunpack.c.l.b16 %v7179
    %v8118 = vunpack.c.l.b16 %v7180
    %v8119 = vunpack.c.h.b16 %v7180
    %v8120 = vunpack.c.l.b16 %v7181
    %v8121 = vunpack.c.l.b16 %v7182
    %v8122 = vunpack.c.h.b16 %v7182
    %v8123 = vunpack.c.l.b16 %v7183
    %v8124 = vunpack.c.l.b16 %v7184
    %v8125 = vunpack.c.h.b16 %v7184
    %v8126 = vunpack.c.l.b16 %v7185
    %v8127 = vunpack.c.l.b16 %v7186
    %v8128 = vunpack.c.h.b16 %v7186
    %v8129 = vunpack.c.l.b16 %v7187
    %v8130 = vunpack.c.l.b16 %v7188
    %v8131 = vunpack.c.h.b16 %v7188
    %v8132 = vunpack.c.l.b16 %v7189
    %v8133 = vunpack.c.l.b16 %v7190
    %v8134 = vunpack.c.h.b16 %v7190
    %v8135 = vunpack.c.l.b16 %v7191
    %v8136 = vunpack.c.l.b16 %v7192
    %v8137 = vunpack.c.h.b16 %v7192
    %v8138 = vunpack.c.l.b16 %v7193
    %v8139 = vunpack.c.l.b16 %v7194
    %v8140 = vunpack.c.h.b16 %v7194
    %v8141 = vunpack.c.l.b16 %v7195
    %v8142 = vunpack.c.l.b16 %v7196
    %v8143 = vunpack.c.h.b16 %v7196
    %v8144 = vunpack.c.l.b16 %v7197
    %v8145 = vunpack.c.l.b16 %v7198
    %v8146 = vunpack.c.h.b16 %v7198
    %v8147 = vunpack.c.l.b16 %v7199
    %v8148 = vunpack.c.l.b16 %v7200
    %v8149 = vunpack.c.h.b16 %v7200
    %v8150 = vunpack.c.l.b16 %v7201
    %v8151 = vunpack.c.l.b16 %v7202
    %v8152 = vunpack.c.h.b16 %v7202
    %v8153 = vunpack.c.l.b16 %v7203
    %v8154 = vunpack.c.l.b16 %v7204
    %v8155 = vunpack.c.h.b16 %v7204
    %v8156 = vunpack.c.l.b16 %v7205
    %v8157 = vunpack.c.l.b16 %v7206
    %v8158 = vunpack.c.h.b16 %v7206
    %v8159 = vunpack.c.l.b16 %v7207
    %v8160 = vunpack.c.l.b16 %v7208
    %v8161 = vunpack.c.h.b16 %v7208
    %v8162 = vunpack.c.l.b16 %v7209
    %v8163 = vunpack.c.l.b16 %v7210
    %v8164 = vunpack.c.h.b16 %v7210
    %v8165 = vunpack.c.l.b16 %v7211
    %v8166 = vunpack.c.l.b16 %v7212
    %v8167 = vunpack.c.h.b16 %v7212
    %v8168 = vunpack.c.l.b16 %v7213
    %v8169 = vunpack.c.l.b16 %v7214
    %v8170 = vunpack.c.h.b16 %v7214
    %v8171 = vunpack.c.l.b16 %v7215
    %v8172 = vunpack.c.l.b16 %v7216
    %v8173 = vunpack.c.h.b16 %v7216
    %v8174 = vunpack.c.l.b16 %v7217
    %v8175 = vunpack.c.l.b16 %v7218
    %v8176 = vunpack.c.h.b16 %v7218
    %v8177 = vunpack.c.l.b16 %v7219
    %v8178 = vunpack.c.l.b16 %v7220
    %v8179 = vunpack.c.h.b16 %v7220
    %v8180 = vunpack.c.l.b16 %v7221
    %v8181 = vunpack.c.l.b16 %v7222
    %v8182 = vunpack.c.h.b16 %v7222
    %v8183 = vunpack.c.l.b16 %v7223
    %v8184 = vpack.c.b16 %v7611, %v7608
    %v8185 = vpack.c.b16 %v7612, %v7609
    %v8186 = vpack.c.b16 %v7613, %v7610
    %v8187 = vpack.c.b16 %v7617, %v7614
    %v8188 = vpack.c.b16 %v7618, %v7615
    %v8189 = vpack.c.b16 %v7619, %v7616
    %v8190 = vpack.c.b16 %v7623, %v7620
    %v8191 = vpack.c.b16 %v7624, %v7621
    %v8192 = vpack.c.b16 %v7625, %v7622
    %v8193 = vpack.c.b16 %v7629, %v7626
    %v8194 = vpack.c.b16 %v7630, %v7627
    %v8195 = vpack.c.b16 %v7631, %v7628
    %v8196 = vpack.c.b16 %v7635, %v7632
    %v8197 = vpack.c.b16 %v7636, %v7633
    %v8198 = vpack.c.b16 %v7637, %v7634
    %v8199 = vpack.c.b16 %v7641, %v7638
    %v8200 = vpack.c.b16 %v7642, %v7639
    %v8201 = vpack.c.b16 %v7643, %v7640
    %v8202 = vpack.c.b16 %v7647, %v7644
    %v8203 = vpack.c.b16 %v7648, %v7645
    %v8204 = vpack.c.b16 %v7649, %v7646
    %v8205 = vpack.c.b16 %v7653, %v7650
    %v8206 = vpack.c.b16 %v7654, %v7651
    %v8207 = vpack.c.b16 %v7655, %v7652
    %v8208 = vpack.c.b16 %v7659, %v7656
    %v8209 = vpack.c.b16 %v7660, %v7657
    %v8210 = vpack.c.b16 %v7661, %v7658
    %v8211 = vpack.c.b16 %v7665, %v7662
    %v8212 = vpack.c.b16 %v7666, %v7663
    %v8213 = vpack.c.b16 %v7667, %v7664
    %v8214 = vpack.c.b16 %v7671, %v7668
    %v8215 = vpack.c.b16 %v7672, %v7669
    %v8216 = vpack.c.b16 %v7673, %v7670
    %v8217 = vpack.c.b16 %v7677, %v7674
    %v8218 = vpack.c.b16 %v7678, %v7675
    %v8219 = vpack.c.b16 %v7679, %v7676
    %v8220 = vpack.c.b16 %v7683, %v7680
    %v8221 = vpack.c.b16 %v7684, %v7681
    %v8222 = vpack.c.b16 %v7685, %v7682
    %v8223 = vpack.c.b16 %v7689, %v7686
    %v8224 = vpack.c.b16 %v7690, %v7687
    %v8225 = vpack.c.b16 %v7691, %v7688
    %v8226 = vpack.c.b16 %v7695, %v7692
    %v8227 = vpack.c.b16 %v7696, %v7693
    %v8228 = vpack.c.b16 %v7697, %v7694
    %v8229 = vpack.c.b16 %v7701, %v7698
    %v8230 = vpack.c.b16 %v7702, %v7699
    %v8231 = vpack.c.b16 %v7703, %v7700
    %v8232 = vpack.c.b16 %v7707, %v7704
    %v8233 = vpack.c.b16 %v7708, %v7705
    %v8234 = vpack.c.b16 %v7709, %v7706
    %v8235 = vpack.c.b16 %v7713, %v7710
    %v8236 = vpack.c.b16 %v7714, %v7711
    %v8237 = vpack.c.b16 %v7715, %v7712
    %v8238 = vpack.c.b16 %v7719, %v7716
    %v8239 = vpack.c.b16 %v7720, %v7717
    %v8240 = vpack.c.b16 %v7721, %v7718
    %v8241 = vpack.c.b16 %v7725, %v7722
    %v8242 = vpack.c.b16 %v7726, %v7723
    %v8243 = vpack.c.b16 %v7727, %v7724
    %v8244 = vpack.c.b16 %v7731, %v7728
    %v8245 = vpack.c.b16 %v7732, %v7729
    %v8246 = vpack.c.b16 %v7733, %v7730
    %v8247 = vpack.c.b16 %v7737, %v7734
    %v8248 = vpack.c.b16 %v7738, %v7735
    %v8249 = vpack.c.b16 %v7739, %v7736
    %v8250 = vpack.c.b16 %v7743, %v7740
    %v8251 = vpack.c.b16 %v7744, %v7741
    %v8252 = vpack.c.b16 %v7745, %v7742
    %v8253 = vpack.c.b16 %v7749, %v7746
    %v8254 = vpack.c.b16 %v7750, %v7747
    %v8255 = vpack.c.b16 %v7751, %v7748
    %v8256 = vpack.c.b16 %v7755, %v7752
    %v8257 = vpack.c.b16 %v7756, %v7753
    %v8258 = vpack.c.b16 %v7757, %v7754
    %v8259 = vpack.c.b16 %v7761, %v7758
    %v8260 = vpack.c.b16 %v7762, %v7759
    %v8261 = vpack.c.b16 %v7763, %v7760
    %v8262 = vpack.c.b16 %v7767, %v7764
    %v8263 = vpack.c.b16 %v7768, %v7765
    %v8264 = vpack.c.b16 %v7769, %v7766
    %v8265 = vpack.c.b16 %v7773, %v7770
    %v8266 = vpack.c.b16 %v7774, %v7771
    %v8267 = vpack.c.b16 %v7775, %v7772
    %v8268 = vpack.c.b16 %v7779, %v7776
    %v8269 = vpack.c.b16 %v7780, %v7777
    %v8270 = vpack.c.b16 %v7781, %v7778
    %v8271 = vpack.c.b16 %v7785, %v7782
    %v8272 = vpack.c.b16 %v7786, %v7783
    %v8273 = vpack.c.b16 %v7787, %v7784
    %v8274 = vpack.c.b16 %v7791, %v7788
    %v8275 = vpack.c.b16 %v7792, %v7789
    %v8276 = vpack.c.b16 %v7793, %v7790
    %v8277 = vpack.c.b16 %v7797, %v7794
    %v8278 = vpack.c.b16 %v7798, %v7795
    %v8279 = vpack.c.b16 %v7799, %v7796
    %v8280 = vpack.c.b16 %v7803, %v7800
    %v8281 = vpack.c.b16 %v7804, %v7801
    %v8282 = vpack.c.b16 %v7805, %v7802
    %v8283 = vpack.c.b16 %v7809, %v7806
    %v8284 = vpack.c.b16 %v7810, %v7807
    %v8285 = vpack.c.b16 %v7811, %v7808
    %v8286 = vpack.c.b16 %v7815, %v7812
    %v8287 = vpack.c.b16 %v7816, %v7813
    %v8288 = vpack.c.b16 %v7817, %v7814
    %v8289 = vpack.c.b16 %v7821, %v7818
    %v8290 = vpack.c.b16 %v7822, %v7819
    %v8291 = vpack.c.b16 %v7823, %v7820
    %v8292 = vpack.c.b16 %v7827, %v7824
    %v8293 = vpack.c.b16 %v7828, %v7825
    %v8294 = vpack.c.b16 %v7829, %v7826
    %v8295 = vpack.c.b16 %v7833, %v7830
    %v8296 = vpack.c.b16 %v7834, %v7831
    %v8297 = vpack.c.b16 %v7835, %v7832
    %v8298 = vpack.c.b16 %v7839, %v7836
    %v8299 = vpack.c.b16 %v7840, %v7837
    %v8300 = vpack.c.b16 %v7841, %v7838
    %v8301 = vpack.c.b16 %v7845, %v7842
    %v8302 = vpack.c.b16 %v7846, %v7843
    %v8303 = vpack.c.b16 %v7847, %v7844
    %v8304 = vpack.c.b16 %v7851, %v7848
    %v8305 = vpack.c.b16 %v7852, %v7849
    %v8306 = vpack.c.b16 %v7853, %v7850
    %v8307 = vpack.c.b16 %v7857, %v7854
    %v8308 = vpack.c.b16 %v7858, %v7855
    %v8309 = vpack.c.b16 %v7859, %v7856
    %v8310 = vpack.c.b16 %v7863, %v7860
    %v8311 = vpack.c.b16 %v7864, %v7861
    %v8312 = vpack.c.b16 %v7865, %v7862
    %v8313 = vpack.c.b16 %v7869, %v7866
    %v8314 = vpack.c.b16 %v7870, %v7867
    %v8315 = vpack.c.b16 %v7871, %v7868
    %v8316 = vpack.c.b16 %v7875, %v7872
    %v8317 = vpack.c.b16 %v7876, %v7873
    %v8318 = vpack.c.b16 %v7877, %v7874
    %v8319 = vpack.c.b16 %v7881, %v7878
    %v8320 = vpack.c.b16 %v7882, %v7879
    %v8321 = vpack.c.b16 %v7883, %v7880
    %v8322 = vpack.c.b16 %v7887, %v7884
    %v8323 = vpack.c.b16 %v7888, %v7885
    %v8324 = vpack.c.b16 %v7889, %v7886
    %v8325 = vpack.c.b16 %v7893, %v7890
    %v8326 = vpack.c.b16 %v7894, %v7891
    %v8327 = vpack.c.b16 %v7895, %v7892
    %v8328 = vpack.c.b16 %v7899, %v7896
    %v8329 = vpack.c.b16 %v7900, %v7897
    %v8330 = vpack.c.b16 %v7901, %v7898
    %v8331 = vpack.c.b16 %v7905, %v7902
    %v8332 = vpack.c.b16 %v7906, %v7903
    %v8333 = vpack.c.b16 %v7907, %v7904
    %v8334 = vpack.c.b16 %v7911, %v7908
    %v8335 = vpack.c.b16 %v7912, %v7909
    %v8336 = vpack.c.b16 %v7913, %v7910
    %v8337 = vpack.c.b16 %v7917, %v7914
    %v8338 = vpack.c.b16 %v7918, %v7915
    %v8339 = vpack.c.b16 %v7919, %v7916
    %v8340 = vpack.c.b16 %v7923, %v7920
    %v8341 = vpack.c.b16 %v7924, %v7921
    %v8342 = vpack.c.b16 %v7925, %v7922
    %v8343 = vpack.c.b16 %v7929, %v7926
    %v8344 = vpack.c.b16 %v7930, %v7927
    %v8345 = vpack.c.b16 %v7931, %v7928
    %v8346 = vpack.c.b16 %v7935, %v7932
    %v8347 = vpack.c.b16 %v7936, %v7933
    %v8348 = vpack.c.b16 %v7937, %v7934
    %v8349 = vpack.c.b16 %v7941, %v7938
    %v8350 = vpack.c.b16 %v7942, %v7939
    %v8351 = vpack.c.b16 %v7943, %v7940
    %v8352 = vpack.c.b16 %v7947, %v7944
    %v8353 = vpack.c.b16 %v7948, %v7945
    %v8354 = vpack.c.b16 %v7949, %v7946
    %v8355 = vpack.c.b16 %v7953, %v7950
    %v8356 = vpack.c.b16 %v7954, %v7951
    %v8357 = vpack.c.b16 %v7955, %v7952
    %v8358 = vpack.c.b16 %v7959, %v7956
    %v8359 = vpack.c.b16 %v7960, %v7957
    %v8360 = vpack.c.b16 %v7961, %v7958
    %v8361 = vpack.c.b16 %v7965, %v7962
    %v8362 = vpack.c.b16 %v7966, %v7963
    %v8363 = vpack.c.b16 %v7967, %v7964
    %v8364 = vpack.c.b16 %v7971, %v7968
    %v8365 = vpack.c.b16 %v7972, %v7969
    %v8366 = vpack.c.b16 %v7973, %v7970
    %v8367 = vpack.c.b16 %v7977, %v7974
    %v8368 = vpack.c.b16 %v7978, %v7975
    %v8369 = vpack.c.b16 %v7979, %v7976
    %v8370 = vpack.c.b16 %v7983, %v7980
    %v8371 = vpack.c.b16 %v7984, %v7981
    %v8372 = vpack.c.b16 %v7985, %v7982
    %v8373 = vpack.c.b16 %v7989, %v7986
    %v8374 = vpack.c.b16 %v7990, %v7987
    %v8375 = vpack.c.b16 %v7991, %v7988
    %v8376 = vpack.c.b16 %v7995, %v7992
    %v8377 = vpack.c.b16 %v7996, %v7993
    %v8378 = vpack.c.b16 %v7997, %v7994
    %v8379 = vpack.c.b16 %v8001, %v7998
    %v8380 = vpack.c.b16 %v8002, %v7999
    %v8381 = vpack.c.b16 %v8003, %v8000
    %v8382 = vpack.c.b16 %v8007, %v8004
    %v8383 = vpack.c.b16 %v8008, %v8005
    %v8384 = vpack.c.b16 %v8009, %v8006
    %v8385 = vpack.c.b16 %v8013, %v8010
    %v8386 = vpack.c.b16 %v8014, %v8011
    %v8387 = vpack.c.b16 %v8015, %v8012
    %v8388 = vpack.c.b16 %v8019, %v8016
    %v8389 = vpack.c.b16 %v8020, %v8017
    %v8390 = vpack.c.b16 %v8021, %v8018
    %v8391 = vpack.c.b16 %v8025, %v8022
    %v8392 = vpack.c.b16 %v8026, %v8023
    %v8393 = vpack.c.b16 %v8027, %v8024
    %v8394 = vpack.c.b16 %v8031, %v8028
    %v8395 = vpack.c.b16 %v8032, %v8029
    %v8396 = vpack.c.b16 %v8033, %v8030
    %v8397 = vpack.c.b16 %v8037, %v8034
    %v8398 = vpack.c.b16 %v8038, %v8035
    %v8399 = vpack.c.b16 %v8039, %v8036
    %v8400 = vpack.c.b16 %v8043, %v8040
    %v8401 = vpack.c.b16 %v8044, %v8041
    %v8402 = vpack.c.b16 %v8045, %v8042
    %v8403 = vpack.c.b16 %v8049, %v8046
    %v8404 = vpack.c.b16 %v8050, %v8047
    %v8405 = vpack.c.b16 %v8051, %v8048
    %v8406 = vpack.c.b16 %v8055, %v8052
    %v8407 = vpack.c.b16 %v8056, %v8053
    %v8408 = vpack.c.b16 %v8057, %v8054
    %v8409 = vpack.c.b16 %v8061, %v8058
    %v8410 = vpack.c.b16 %v8062, %v8059
    %v8411 = vpack.c.b16 %v8063, %v8060
    %v8412 = vpack.c.b16 %v8067, %v8064
    %v8413 = vpack.c.b16 %v8068, %v8065
    %v8414 = vpack.c.b16 %v8069, %v8066
    %v8415 = vpack.c.b16 %v8073, %v8070
    %v8416 = vpack.c.b16 %v8074, %v8071
    %v8417 = vpack.c.b16 %v8075, %v8072
    %v8418 = vpack.c.b16 %v8079, %v8076
    %v8419 = vpack.c.b16 %v8080, %v8077
    %v8420 = vpack.c.b16 %v8081, %v8078
    %v8421 = vpack.c.b16 %v8085, %v8082
    %v8422 = vpack.c.b16 %v8086, %v8083
    %v8423 = vpack.c.b16 %v8087, %v8084
    %v8424 = vpack.c.b16 %v8091, %v8088
    %v8425 = vpack.c.b16 %v8092, %v8089
    %v8426 = vpack.c.b16 %v8093, %v8090
    %v8427 = vpack.c.b16 %v8097, %v8094
    %v8428 = vpack.c.b16 %v8098, %v8095
    %v8429 = vpack.c.b16 %v8099, %v8096
    %v8430 = vpack.c.b16 %v8103, %v8100
    %v8431 = vpack.c.b16 %v8104, %v8101
    %v8432 = vpack.c.b16 %v8105, %v8102
    %v8433 = vpack.c.b16 %v8109, %v8106
    %v8434 = vpack.c.b16 %v8110, %v8107
    %v8435 = vpack.c.b16 %v8111, %v8108
    %v8436 = vpack.c.b16 %v8115, %v8112
    %v8437 = vpack.c.b16 %v8116, %v8113
    %v8438 = vpack.c.b16 %v8117, %v8114
    %v8439 = vpack.c.b16 %v8121, %v8118
    %v8440 = vpack.c.b16 %v8122, %v8119
    %v8441 = vpack.c.b16 %v8123, %v8120
    %v8442 = vpack.c.b16 %v8127, %v8124
    %v8443 = vpack.c.b16 %v8128, %v8125
    %v8444 = vpack.c.b16 %v8129, %v8126
    %v8445 = vpack.c.b16 %v8133, %v8130
    %v8446 = vpack.c.b16 %v8134, %v8131
    %v8447 = vpack.c.b16 %v8135, %v8132
    %v8448 = vpack.c.b16 %v8139, %v8136
    %v8449 = vpack.c.b16 %v8140, %v8137
    %v8450 = vpack.c.b16 %v8141, %v8138
    %v8451 = vpack.c.b16 %v8145, %v8142
    %v8452 = vpack.c.b16 %v8146, %v8143
    %v8453 = vpack.c.b16 %v8147, %v8144
    %v8454 = vpack.c.b16 %v8151, %v8148
    %v8455 = vpack.c.b16 %v8152, %v8149
    %v8456 = vpack.c.b16 %v8153, %v8150
    %v8457 = vpack.c.b16 %v8157, %v8154
    %v8458 = vpack.c.b16 %v8158, %v8155
    %v8459 = vpack.c.b16 %v8159, %v8156
    %v8460 = vpack.c.b16 %v8163, %v8160
    %v8461 = vpack.c.b16 %v8164, %v8161
    %v8462 = vpack.c.b16 %v8165, %v8162
    %v8463 = vpack.c.b16 %v8169, %v8166
    %v8464 = vpack.c.b16 %v8170, %v8167
    %v8465 = vpack.c.b16 %v8171, %v8168
    %v8466 = vpack.c.b16 %v8175, %v8172
    %v8467 = vpack.c.b16 %v8176, %v8173
    %v8468 = vpack.c.b16 %v8177, %v8174
    %v8469 = vpack.c.b16 %v8181, %v8178
    %v8470 = vpack.c.b16 %v8182, %v8179
    %v8471 = vpack.c.b16 %v8183, %v8180
    %8760 = vmatprep.subr.bf16.mxu0 %v8206
    %8761 = vmatpush1.bf16.msra.mxu0 %v8205
    %8762 = vmatprep.subr.bf16.mxu0 %v8203
    %8763 = vmatpush1.bf16.msra.mxu0 %v8202
    %8764 = vmatprep.subr.bf16.mxu0 %v8200
    %8765 = vmatpush1.bf16.msra.mxu0 %v8199
    %8766 = vmatprep.subr.bf16.mxu0 %v8197
    %8767 = vmatpush1.bf16.msra.mxu0 %v8196
    %8768 = vmatprep.subr.bf16.mxu0 %v8194
    %8769 = vmatpush1.bf16.msra.mxu0 %v8193
    %8770 = vmatprep.subr.bf16.mxu0 %v8191
    %8771 = vmatpush1.bf16.msra.mxu0 %v8190
    %8772 = vmatprep.subr.bf16.mxu0 %v8188
    %8773 = vmatpush1.bf16.msra.mxu0 %v8187
    %8774 = vmatprep.subr.bf16.mxu0 %v8185
    %8775 = vmatpush1.bf16.msra.mxu0 %v8184
    %8776 = vmatprep.subr.bf16.mxu0 %v8230
    %8777 = vmatpush2.bf16.msra.mxu0 %v8229
    %8778 = vmatprep.subr.bf16.mxu0 %v8227
    %8779 = vmatpush2.bf16.msra.mxu0 %v8226
    %8780 = vmatprep.subr.bf16.mxu0 %v8224
    %8781 = vmatpush2.bf16.msra.mxu0 %v8223
    %8782 = vmatprep.subr.bf16.mxu0 %v8221
    %8783 = vmatpush2.bf16.msra.mxu0 %v8220
    %8784 = vmatprep.subr.bf16.mxu0 %v8218
    %8785 = vmatpush2.bf16.msra.mxu0 %v8217
    %8786 = vmatprep.subr.bf16.mxu0 %v8215
    %8787 = vmatpush2.bf16.msra.mxu0 %v8214
    %8788 = vmatprep.subr.bf16.mxu0 %v8212
    %8789 = vmatpush2.bf16.msra.mxu0 %v8211
    %8790 = vmatprep.subr.bf16.mxu0 %v8209
    %8791 = vmatpush2.bf16.msra.mxu0 %v8208
    %8792 = vmatprep.mubr.bf16.mxu0 %v2347
    %8793 = vmatmul.mubr.bf16.gmra.mxu0 %v2346
    %v8794 = vpop.f32.mrf.mxu0
    %v8795 = vadd.f32 0.0, %v8794
    %v8796 = vpop.f32.mrf.mxu0
    %v8797 = vadd.f32 0.0, %v8796
    %v8798 = vpop.f32.mrf.mxu0
    %v8799 = vadd.f32 0.0, %v8798
    %v8800 = vpop.f32.mrf.mxu0
    %v8801 = vadd.f32 0.0, %v8800
    %8802 = vdwg.mxu0
    %8803 = vmatprep.subr.bf16.mxu0 %v8254
    %8804 = vmatpush1.bf16.msra.mxu0 %v8253
    %8805 = vmatprep.subr.bf16.mxu0 %v8251
    %8806 = vmatpush1.bf16.msra.mxu0 %v8250
    %8807 = vmatprep.subr.bf16.mxu0 %v8248
    %8808 = vmatpush1.bf16.msra.mxu0 %v8247
    %8809 = vmatprep.subr.bf16.mxu0 %v8245
    %8810 = vmatpush1.bf16.msra.mxu0 %v8244
    %8811 = vmatprep.subr.bf16.mxu0 %v8242
    %8812 = vmatpush1.bf16.msra.mxu0 %v8241
    %8813 = vmatprep.subr.bf16.mxu0 %v8239
    %8814 = vmatpush1.bf16.msra.mxu0 %v8238
    %8815 = vmatprep.subr.bf16.mxu0 %v8236
    %8816 = vmatpush1.bf16.msra.mxu0 %v8235
    %8817 = vmatprep.subr.bf16.mxu0 %v8233
    %8818 = vmatpush1.bf16.msra.mxu0 %v8232
    %8819 = vmatprep.subr.bf16.mxu0 %v8278
    %8820 = vmatpush2.bf16.msra.mxu0 %v8277
    %8821 = vmatprep.subr.bf16.mxu0 %v8275
    %8822 = vmatpush2.bf16.msra.mxu0 %v8274
    %8823 = vmatprep.subr.bf16.mxu0 %v8272
    %8824 = vmatpush2.bf16.msra.mxu0 %v8271
    %8825 = vmatprep.subr.bf16.mxu0 %v8269
    %8826 = vmatpush2.bf16.msra.mxu0 %v8268
    %8827 = vmatprep.subr.bf16.mxu0 %v8266
    %8828 = vmatpush2.bf16.msra.mxu0 %v8265
    %8829 = vmatprep.subr.bf16.mxu0 %v8263
    %8830 = vmatpush2.bf16.msra.mxu0 %v8262
    %8831 = vmatprep.subr.bf16.mxu0 %v8260
    %8832 = vmatpush2.bf16.msra.mxu0 %v8259
    %8833 = vmatprep.subr.bf16.mxu0 %v8257
    %8834 = vmatpush2.bf16.msra.mxu0 %v8256
    %8835 = vmatprep.mubr.bf16.mxu0 %v2349
    %8836 = vmatmul.mubr.bf16.gmra.mxu0 %v2348
    %v8837 = vpop.f32.mrf.mxu0
    %v8838 = vadd.f32 %v8795, %v8837
    %v8839 = vpop.f32.mrf.mxu0
    %v8840 = vadd.f32 %v8797, %v8839
    %v8841 = vpop.f32.mrf.mxu0
    %v8842 = vadd.f32 %v8799, %v8841
    %v8843 = vpop.f32.mrf.mxu0
    %v8844 = vadd.f32 %v8801, %v8843
    %8845 = vdwg.mxu0
    %8846 = vmatprep.subr.bf16.mxu0 %v8302
    %8847 = vmatpush1.bf16.msra.mxu0 %v8301
    %8848 = vmatprep.subr.bf16.mxu0 %v8299
    %8849 = vmatpush1.bf16.msra.mxu0 %v8298
    %8850 = vmatprep.subr.bf16.mxu0 %v8296
    %8851 = vmatpush1.bf16.msra.mxu0 %v8295
    %8852 = vmatprep.subr.bf16.mxu0 %v8293
    %8853 = vmatpush1.bf16.msra.mxu0 %v8292
    %8854 = vmatprep.subr.bf16.mxu0 %v8290
    %8855 = vmatpush1.bf16.msra.mxu0 %v8289
    %8856 = vmatprep.subr.bf16.mxu0 %v8287
    %8857 = vmatpush1.bf16.msra.mxu0 %v8286
    %8858 = vmatprep.subr.bf16.mxu0 %v8284
    %8859 = vmatpush1.bf16.msra.mxu0 %v8283
    %8860 = vmatprep.subr.bf16.mxu0 %v8281
    %8861 = vmatpush1.bf16.msra.mxu0 %v8280
    %8862 = vmatprep.subr.bf16.mxu0 %v8326
    %8863 = vmatpush2.bf16.msra.mxu0 %v8325
    %8864 = vmatprep.subr.bf16.mxu0 %v8323
    %8865 = vmatpush2.bf16.msra.mxu0 %v8322
    %8866 = vmatprep.subr.bf16.mxu0 %v8320
    %8867 = vmatpush2.bf16.msra.mxu0 %v8319
    %8868 = vmatprep.subr.bf16.mxu0 %v8317
    %8869 = vmatpush2.bf16.msra.mxu0 %v8316
    %8870 = vmatprep.subr.bf16.mxu0 %v8314
    %8871 = vmatpush2.bf16.msra.mxu0 %v8313
    %8872 = vmatprep.subr.bf16.mxu0 %v8311
    %8873 = vmatpush2.bf16.msra.mxu0 %v8310
    %8874 = vmatprep.subr.bf16.mxu0 %v8308
    %8875 = vmatpush2.bf16.msra.mxu0 %v8307
    %8876 = vmatprep.subr.bf16.mxu0 %v8305
    %8877 = vmatpush2.bf16.msra.mxu0 %v8304
    %8878 = vmatprep.mubr.bf16.mxu0 %v2351
    %8879 = vmatmul.mubr.bf16.gmra.mxu0 %v2350
    %v8880 = vpop.f32.mrf.mxu0
    %v8881 = vadd.f32 %v8838, %v8880
    %v8882 = vpop.f32.mrf.mxu0
    %v8883 = vadd.f32 %v8840, %v8882
    %v8884 = vpop.f32.mrf.mxu0
    %v8885 = vadd.f32 %v8842, %v8884
    %v8886 = vpop.f32.mrf.mxu0
    %v8887 = vadd.f32 %v8844, %v8886
    %8888 = vdwg.mxu0
    %8889 = vmatprep.subr.bf16.mxu0 %v8350
    %8890 = vmatpush1.bf16.msra.mxu0 %v8349
    %8891 = vmatprep.subr.bf16.mxu0 %v8347
    %8892 = vmatpush1.bf16.msra.mxu0 %v8346
    %8893 = vmatprep.subr.bf16.mxu0 %v8344
    %8894 = vmatpush1.bf16.msra.mxu0 %v8343
    %8895 = vmatprep.subr.bf16.mxu0 %v8341
    %8896 = vmatpush1.bf16.msra.mxu0 %v8340
    %8897 = vmatprep.subr.bf16.mxu0 %v8338
    %8898 = vmatpush1.bf16.msra.mxu0 %v8337
    %8899 = vmatprep.subr.bf16.mxu0 %v8335
    %8900 = vmatpush1.bf16.msra.mxu0 %v8334
    %8901 = vmatprep.subr.bf16.mxu0 %v8332
    %8902 = vmatpush1.bf16.msra.mxu0 %v8331
    %8903 = vmatprep.subr.bf16.mxu0 %v8329
    %8904 = vmatpush1.bf16.msra.mxu0 %v8328
    %8905 = vmatprep.subr.bf16.mxu0 %v8374
    %8906 = vmatpush2.bf16.msra.mxu0 %v8373
    %8907 = vmatprep.subr.bf16.mxu0 %v8371
    %8908 = vmatpush2.bf16.msra.mxu0 %v8370
    %8909 = vmatprep.subr.bf16.mxu0 %v8368
    %8910 = vmatpush2.bf16.msra.mxu0 %v8367
    %8911 = vmatprep.subr.bf16.mxu0 %v8365
    %8912 = vmatpush2.bf16.msra.mxu0 %v8364
    %8913 = vmatprep.subr.bf16.mxu0 %v8362
    %8914 = vmatpush2.bf16.msra.mxu0 %v8361
    %8915 = vmatprep.subr.bf16.mxu0 %v8359
    %8916 = vmatpush2.bf16.msra.mxu0 %v8358
    %8917 = vmatprep.subr.bf16.mxu0 %v8356
    %8918 = vmatpush2.bf16.msra.mxu0 %v8355
    %8919 = vmatprep.subr.bf16.mxu0 %v8353
    %8920 = vmatpush2.bf16.msra.mxu0 %v8352
    %8921 = vmatprep.mubr.bf16.mxu0 %v2353
    %8922 = vmatmul.mubr.bf16.gmra.mxu0 %v2352
    %v8923 = vpop.f32.mrf.mxu0
    %v8924 = vadd.f32 %v8881, %v8923
    %v8925 = vpop.f32.mrf.mxu0
    %v8926 = vadd.f32 %v8883, %v8925
    %v8927 = vpop.f32.mrf.mxu0
    %v8928 = vadd.f32 %v8885, %v8927
    %v8929 = vpop.f32.mrf.mxu0
    %v8930 = vadd.f32 %v8887, %v8929
    %8931 = vdwg.mxu0
    %8932 = vmatprep.subr.bf16.mxu0 %v8398
    %8933 = vmatpush1.bf16.msra.mxu0 %v8397
    %8934 = vmatprep.subr.bf16.mxu0 %v8395
    %8935 = vmatpush1.bf16.msra.mxu0 %v8394
    %8936 = vmatprep.subr.bf16.mxu0 %v8392
    %8937 = vmatpush1.bf16.msra.mxu0 %v8391
    %8938 = vmatprep.subr.bf16.mxu0 %v8389
    %8939 = vmatpush1.bf16.msra.mxu0 %v8388
    %8940 = vmatprep.subr.bf16.mxu0 %v8386
    %8941 = vmatpush1.bf16.msra.mxu0 %v8385
    %8942 = vmatprep.subr.bf16.mxu0 %v8383
    %8943 = vmatpush1.bf16.msra.mxu0 %v8382
    %8944 = vmatprep.subr.bf16.mxu0 %v8380
    %8945 = vmatpush1.bf16.msra.mxu0 %v8379
    %8946 = vmatprep.subr.bf16.mxu0 %v8377
    %8947 = vmatpush1.bf16.msra.mxu0 %v8376
    %8948 = vmatprep.subr.bf16.mxu0 %v8422
    %8949 = vmatpush2.bf16.msra.mxu0 %v8421
    %8950 = vmatprep.subr.bf16.mxu0 %v8419
    %8951 = vmatpush2.bf16.msra.mxu0 %v8418
    %8952 = vmatprep.subr.bf16.mxu0 %v8416
    %8953 = vmatpush2.bf16.msra.mxu0 %v8415
    %8954 = vmatprep.subr.bf16.mxu0 %v8413
    %8955 = vmatpush2.bf16.msra.mxu0 %v8412
    %8956 = vmatprep.subr.bf16.mxu0 %v8410
    %8957 = vmatpush2.bf16.msra.mxu0 %v8409
    %8958 = vmatprep.subr.bf16.mxu0 %v8407
    %8959 = vmatpush2.bf16.msra.mxu0 %v8406
    %8960 = vmatprep.subr.bf16.mxu0 %v8404
    %8961 = vmatpush2.bf16.msra.mxu0 %v8403
    %8962 = vmatprep.subr.bf16.mxu0 %v8401
    %8963 = vmatpush2.bf16.msra.mxu0 %v8400
    %8964 = vmatprep.mubr.bf16.mxu0 %v2355
    %8965 = vmatmul.mubr.bf16.gmra.mxu0 %v2354
    %v8966 = vpop.f32.mrf.mxu0
    %v8967 = vadd.f32 %v8924, %v8966
    %v8968 = vpop.f32.mrf.mxu0
    %v8969 = vadd.f32 %v8926, %v8968
    %v8970 = vpop.f32.mrf.mxu0
    %v8971 = vadd.f32 %v8928, %v8970
    %v8972 = vpop.f32.mrf.mxu0
    %v8973 = vadd.f32 %v8930, %v8972
    %8974 = vdwg.mxu0
    %8975 = vmatprep.subr.bf16.mxu0 %v8446
    %8976 = vmatpush1.bf16.msra.mxu0 %v8445
    %8977 = vmatprep.subr.bf16.mxu0 %v8443
    %8978 = vmatpush1.bf16.msra.mxu0 %v8442
    %8979 = vmatprep.subr.bf16.mxu0 %v8440
    %8980 = vmatpush1.bf16.msra.mxu0 %v8439
    %8981 = vmatprep.subr.bf16.mxu0 %v8437
    %8982 = vmatpush1.bf16.msra.mxu0 %v8436
    %8983 = vmatprep.subr.bf16.mxu0 %v8434
    %8984 = vmatpush1.bf16.msra.mxu0 %v8433
    %8985 = vmatprep.subr.bf16.mxu0 %v8431
    %8986 = vmatpush1.bf16.msra.mxu0 %v8430
    %8987 = vmatprep.subr.bf16.mxu0 %v8428
    %8988 = vmatpush1.bf16.msra.mxu0 %v8427
    %8989 = vmatprep.subr.bf16.mxu0 %v8425
    %8990 = vmatpush1.bf16.msra.mxu0 %v8424
    %8991 = vmatprep.subr.bf16.mxu0 %v8470
    %8992 = vmatpush2.bf16.msra.mxu0 %v8469
    %8993 = vmatprep.subr.bf16.mxu0 %v8467
    %8994 = vmatpush2.bf16.msra.mxu0 %v8466
    %8995 = vmatprep.subr.bf16.mxu0 %v8464
    %8996 = vmatpush2.bf16.msra.mxu0 %v8463
    %8997 = vmatprep.subr.bf16.mxu0 %v8461
    %8998 = vmatpush2.bf16.msra.mxu0 %v8460
    %8999 = vmatprep.subr.bf16.mxu0 %v8458
    %9000 = vmatpush2.bf16.msra.mxu0 %v8457
    %9001 = vmatprep.subr.bf16.mxu0 %v8455
    %9002 = vmatpush2.bf16.msra.mxu0 %v8454
    %9003 = vmatprep.subr.bf16.mxu0 %v8452
    %9004 = vmatpush2.bf16.msra.mxu0 %v8451
    %9005 = vmatprep.subr.bf16.mxu0 %v8449
    %9006 = vmatpush2.bf16.msra.mxu0 %v8448
    %9007 = vmatprep.mubr.bf16.mxu0 %v2357
    %9008 = vmatmul.mubr.bf16.gmra.mxu0 %v2356
    %v9009 = vpop.f32.mrf.mxu0
    %v9010 = vadd.f32 %v8967, %v9009
    %v9011 = vpop.f32.mrf.mxu0
    %v9012 = vadd.f32 %v8969, %v9011
    %v9013 = vpop.f32.mrf.mxu0
    %v9014 = vadd.f32 %v8971, %v9013
    %v9015 = vpop.f32.mrf.mxu0
    %v9016 = vadd.f32 %v8973, %v9015
    %9017 = vdwg.mxu0
    %9018 = vmatprep.subr.bf16.mxu0 0
    %9019 = vmatpush1.bf16.msra.mxu0 %v8207
    %9020 = vmatprep.subr.bf16.mxu0 0
    %9021 = vmatpush1.bf16.msra.mxu0 %v8204
    %9022 = vmatprep.subr.bf16.mxu0 0
    %9023 = vmatpush1.bf16.msra.mxu0 %v8201
    %9024 = vmatprep.subr.bf16.mxu0 0
    %9025 = vmatpush1.bf16.msra.mxu0 %v8198
    %9026 = vmatprep.subr.bf16.mxu0 0
    %9027 = vmatpush1.bf16.msra.mxu0 %v8195
    %9028 = vmatprep.subr.bf16.mxu0 0
    %9029 = vmatpush1.bf16.msra.mxu0 %v8192
    %9030 = vmatprep.subr.bf16.mxu0 0
    %9031 = vmatpush1.bf16.msra.mxu0 %v8189
    %9032 = vmatprep.subr.bf16.mxu0 0
    %9033 = vmatpush1.bf16.msra.mxu0 %v8186
    %9034 = vmatprep.subr.bf16.mxu0 0
    %9035 = vmatpush2.bf16.msra.mxu0 %v8231
    %9036 = vmatprep.subr.bf16.mxu0 0
    %9037 = vmatpush2.bf16.msra.mxu0 %v8228
    %9038 = vmatprep.subr.bf16.mxu0 0
    %9039 = vmatpush2.bf16.msra.mxu0 %v8225
    %9040 = vmatprep.subr.bf16.mxu0 0
    %9041 = vmatpush2.bf16.msra.mxu0 %v8222
    %9042 = vmatprep.subr.bf16.mxu0 0
    %9043 = vmatpush2.bf16.msra.mxu0 %v8219
    %9044 = vmatprep.subr.bf16.mxu0 0
    %9045 = vmatpush2.bf16.msra.mxu0 %v8216
    %9046 = vmatprep.subr.bf16.mxu0 0
    %9047 = vmatpush2.bf16.msra.mxu0 %v8213
    %9048 = vmatprep.subr.bf16.mxu0 0
    %9049 = vmatpush2.bf16.msra.mxu0 %v8210
    %9050 = vmatprep.mubr.bf16.mxu0 %v2347
    %9051 = vmatmul.mubr.bf16.gmra.mxu0 %v2346
    %v9052 = vpop.f32.mrf.mxu0
    %v9053 = vadd.f32 0.0, %v9052
    %v9054 = vpop.f32.mrf.mxu0
    %v9055 = vpop.f32.mrf.mxu0
    %v9056 = vadd.f32 0.0, %v9055
    %v9057 = vpop.f32.mrf.mxu0
    %9058 = vdwg.mxu0
    %9059 = vmatprep.subr.bf16.mxu0 0
    %9060 = vmatpush1.bf16.msra.mxu0 %v8255
    %9061 = vmatprep.subr.bf16.mxu0 0
    %9062 = vmatpush1.bf16.msra.mxu0 %v8252
    %9063 = vmatprep.subr.bf16.mxu0 0
    %9064 = vmatpush1.bf16.msra.mxu0 %v8249
    %9065 = vmatprep.subr.bf16.mxu0 0
    %9066 = vmatpush1.bf16.msra.mxu0 %v8246
    %9067 = vmatprep.subr.bf16.mxu0 0
    %9068 = vmatpush1.bf16.msra.mxu0 %v8243
    %9069 = vmatprep.subr.bf16.mxu0 0
    %9070 = vmatpush1.bf16.msra.mxu0 %v8240
    %9071 = vmatprep.subr.bf16.mxu0 0
    %9072 = vmatpush1.bf16.msra.mxu0 %v8237
    %9073 = vmatprep.subr.bf16.mxu0 0
    %9074 = vmatpush1.bf16.msra.mxu0 %v8234
    %9075 = vmatprep.subr.bf16.mxu0 0
    %9076 = vmatpush2.bf16.msra.mxu0 %v8279
    %9077 = vmatprep.subr.bf16.mxu0 0
    %9078 = vmatpush2.bf16.msra.mxu0 %v8276
    %9079 = vmatprep.subr.bf16.mxu0 0
    %9080 = vmatpush2.bf16.msra.mxu0 %v8273
    %9081 = vmatprep.subr.bf16.mxu0 0
    %9082 = vmatpush2.bf16.msra.mxu0 %v8270
    %9083 = vmatprep.subr.bf16.mxu0 0
    %9084 = vmatpush2.bf16.msra.mxu0 %v8267
    %9085 = vmatprep.subr.bf16.mxu0 0
    %9086 = vmatpush2.bf16.msra.mxu0 %v8264
    %9087 = vmatprep.subr.bf16.mxu0 0
    %9088 = vmatpush2.bf16.msra.mxu0 %v8261
    %9089 = vmatprep.subr.bf16.mxu0 0
    %9090 = vmatpush2.bf16.msra.mxu0 %v8258
    %9091 = vmatprep.mubr.bf16.mxu0 %v2349
    %9092 = vmatmul.mubr.bf16.gmra.mxu0 %v2348
    %v9093 = vpop.f32.mrf.mxu0
    %v9094 = vadd.f32 %v9053, %v9093
    %v9095 = vpop.f32.mrf.mxu0
    %v9096 = vpop.f32.mrf.mxu0
    %v9097 = vadd.f32 %v9056, %v9096
    %v9098 = vpop.f32.mrf.mxu0
    %9099 = vdwg.mxu0
    %9100 = vmatprep.subr.bf16.mxu0 0
    %9101 = vmatpush1.bf16.msra.mxu0 %v8303
    %9102 = vmatprep.subr.bf16.mxu0 0
    %9103 = vmatpush1.bf16.msra.mxu0 %v8300
    %9104 = vmatprep.subr.bf16.mxu0 0
    %9105 = vmatpush1.bf16.msra.mxu0 %v8297
    %9106 = vmatprep.subr.bf16.mxu0 0
    %9107 = vmatpush1.bf16.msra.mxu0 %v8294
    %9108 = vmatprep.subr.bf16.mxu0 0
    %9109 = vmatpush1.bf16.msra.mxu0 %v8291
    %9110 = vmatprep.subr.bf16.mxu0 0
    %9111 = vmatpush1.bf16.msra.mxu0 %v8288
    %9112 = vmatprep.subr.bf16.mxu0 0
    %9113 = vmatpush1.bf16.msra.mxu0 %v8285
    %9114 = vmatprep.subr.bf16.mxu0 0
    %9115 = vmatpush1.bf16.msra.mxu0 %v8282
    %9116 = vmatprep.subr.bf16.mxu0 0
    %9117 = vmatpush2.bf16.msra.mxu0 %v8327
    %9118 = vmatprep.subr.bf16.mxu0 0
    %9119 = vmatpush2.bf16.msra.mxu0 %v8324
    %9120 = vmatprep.subr.bf16.mxu0 0
    %9121 = vmatpush2.bf16.msra.mxu0 %v8321
    %9122 = vmatprep.subr.bf16.mxu0 0
    %9123 = vmatpush2.bf16.msra.mxu0 %v8318
    %9124 = vmatprep.subr.bf16.mxu0 0
    %9125 = vmatpush2.bf16.msra.mxu0 %v8315
    %9126 = vmatprep.subr.bf16.mxu0 0
    %9127 = vmatpush2.bf16.msra.mxu0 %v8312
    %9128 = vmatprep.subr.bf16.mxu0 0
    %9129 = vmatpush2.bf16.msra.mxu0 %v8309
    %9130 = vmatprep.subr.bf16.mxu0 0
    %9131 = vmatpush2.bf16.msra.mxu0 %v8306
    %9132 = vmatprep.mubr.bf16.mxu0 %v2351
    %9133 = vmatmul.mubr.bf16.gmra.mxu0 %v2350
    %v9134 = vpop.f32.mrf.mxu0
    %v9135 = vadd.f32 %v9094, %v9134
    %v9136 = vpop.f32.mrf.mxu0
    %v9137 = vpop.f32.mrf.mxu0
    %v9138 = vadd.f32 %v9097, %v9137
    %v9139 = vpop.f32.mrf.mxu0
    %9140 = vdwg.mxu0
    %9141 = vmatprep.subr.bf16.mxu0 0
    %9142 = vmatpush1.bf16.msra.mxu0 %v8351
    %9143 = vmatprep.subr.bf16.mxu0 0
    %9144 = vmatpush1.bf16.msra.mxu0 %v8348
    %9145 = vmatprep.subr.bf16.mxu0 0
    %9146 = vmatpush1.bf16.msra.mxu0 %v8345
    %9147 = vmatprep.subr.bf16.mxu0 0
    %9148 = vmatpush1.bf16.msra.mxu0 %v8342
    %9149 = vmatprep.subr.bf16.mxu0 0
    %9150 = vmatpush1.bf16.msra.mxu0 %v8339
    %9151 = vmatprep.subr.bf16.mxu0 0
    %9152 = vmatpush1.bf16.msra.mxu0 %v8336
    %9153 = vmatprep.subr.bf16.mxu0 0
    %9154 = vmatpush1.bf16.msra.mxu0 %v8333
    %9155 = vmatprep.subr.bf16.mxu0 0
    %9156 = vmatpush1.bf16.msra.mxu0 %v8330
    %9157 = vmatprep.subr.bf16.mxu0 0
    %9158 = vmatpush2.bf16.msra.mxu0 %v8375
    %9159 = vmatprep.subr.bf16.mxu0 0
    %9160 = vmatpush2.bf16.msra.mxu0 %v8372
    %9161 = vmatprep.subr.bf16.mxu0 0
    %9162 = vmatpush2.bf16.msra.mxu0 %v8369
    %9163 = vmatprep.subr.bf16.mxu0 0
    %9164 = vmatpush2.bf16.msra.mxu0 %v8366
    %9165 = vmatprep.subr.bf16.mxu0 0
    %9166 = vmatpush2.bf16.msra.mxu0 %v8363
    %9167 = vmatprep.subr.bf16.mxu0 0
    %9168 = vmatpush2.bf16.msra.mxu0 %v8360
    %9169 = vmatprep.subr.bf16.mxu0 0
    %9170 = vmatpush2.bf16.msra.mxu0 %v8357
    %9171 = vmatprep.subr.bf16.mxu0 0
    %9172 = vmatpush2.bf16.msra.mxu0 %v8354
    %9173 = vmatprep.mubr.bf16.mxu0 %v2353
    %9174 = vmatmul.mubr.bf16.gmra.mxu0 %v2352
    %v9175 = vpop.f32.mrf.mxu0
    %v9176 = vadd.f32 %v9135, %v9175
    %v9177 = vpop.f32.mrf.mxu0
    %v9178 = vpop.f32.mrf.mxu0
    %v9179 = vadd.f32 %v9138, %v9178
    %v9180 = vpop.f32.mrf.mxu0
    %9181 = vdwg.mxu0
    %9182 = vmatprep.subr.bf16.mxu0 0
    %9183 = vmatpush1.bf16.msra.mxu0 %v8399
    %9184 = vmatprep.subr.bf16.mxu0 0
    %9185 = vmatpush1.bf16.msra.mxu0 %v8396
    %9186 = vmatprep.subr.bf16.mxu0 0
    %9187 = vmatpush1.bf16.msra.mxu0 %v8393
    %9188 = vmatprep.subr.bf16.mxu0 0
    %9189 = vmatpush1.bf16.msra.mxu0 %v8390
    %9190 = vmatprep.subr.bf16.mxu0 0
    %9191 = vmatpush1.bf16.msra.mxu0 %v8387
    %9192 = vmatprep.subr.bf16.mxu0 0
    %9193 = vmatpush1.bf16.msra.mxu0 %v8384
    %9194 = vmatprep.subr.bf16.mxu0 0
    %9195 = vmatpush1.bf16.msra.mxu0 %v8381
    %9196 = vmatprep.subr.bf16.mxu0 0
    %9197 = vmatpush1.bf16.msra.mxu0 %v8378
    %9198 = vmatprep.subr.bf16.mxu0 0
    %9199 = vmatpush2.bf16.msra.mxu0 %v8423
    %9200 = vmatprep.subr.bf16.mxu0 0
    %9201 = vmatpush2.bf16.msra.mxu0 %v8420
    %9202 = vmatprep.subr.bf16.mxu0 0
    %9203 = vmatpush2.bf16.msra.mxu0 %v8417
    %9204 = vmatprep.subr.bf16.mxu0 0
    %9205 = vmatpush2.bf16.msra.mxu0 %v8414
    %9206 = vmatprep.subr.bf16.mxu0 0
    %9207 = vmatpush2.bf16.msra.mxu0 %v8411
    %9208 = vmatprep.subr.bf16.mxu0 0
    %9209 = vmatpush2.bf16.msra.mxu0 %v8408
    %9210 = vmatprep.subr.bf16.mxu0 0
    %9211 = vmatpush2.bf16.msra.mxu0 %v8405
    %9212 = vmatprep.subr.bf16.mxu0 0
    %9213 = vmatpush2.bf16.msra.mxu0 %v8402
    %9214 = vmatprep.mubr.bf16.mxu0 %v2355
    %9215 = vmatmul.mubr.bf16.gmra.mxu0 %v2354
    %v9216 = vpop.f32.mrf.mxu0
    %v9217 = vadd.f32 %v9176, %v9216
    %v9218 = vpop.f32.mrf.mxu0
    %v9219 = vpop.f32.mrf.mxu0
    %v9220 = vadd.f32 %v9179, %v9219
    %v9221 = vpop.f32.mrf.mxu0
    %9222 = vdwg.mxu0
    %9223 = vmatprep.subr.bf16.mxu0 0
    %9224 = vmatpush1.bf16.msra.mxu0 %v8447
    %9225 = vmatprep.subr.bf16.mxu0 0
    %9226 = vmatpush1.bf16.msra.mxu0 %v8444
    %9227 = vmatprep.subr.bf16.mxu0 0
    %9228 = vmatpush1.bf16.msra.mxu0 %v8441
    %9229 = vmatprep.subr.bf16.mxu0 0
    %9230 = vmatpush1.bf16.msra.mxu0 %v8438
    %9231 = vmatprep.subr.bf16.mxu0 0
    %9232 = vmatpush1.bf16.msra.mxu0 %v8435
    %9233 = vmatprep.subr.bf16.mxu0 0
    %9234 = vmatpush1.bf16.msra.mxu0 %v8432
    %9235 = vmatprep.subr.bf16.mxu0 0
    %9236 = vmatpush1.bf16.msra.mxu0 %v8429
    %9237 = vmatprep.subr.bf16.mxu0 0
    %9238 = vmatpush1.bf16.msra.mxu0 %v8426
    %9239 = vmatprep.subr.bf16.mxu0 0
    %9240 = vmatpush2.bf16.msra.mxu0 %v8471
    %9241 = vmatprep.subr.bf16.mxu0 0
    %9242 = vmatpush2.bf16.msra.mxu0 %v8468
    %9243 = vmatprep.subr.bf16.mxu0 0
    %9244 = vmatpush2.bf16.msra.mxu0 %v8465
    %9245 = vmatprep.subr.bf16.mxu0 0
    %9246 = vmatpush2.bf16.msra.mxu0 %v8462
    %9247 = vmatprep.subr.bf16.mxu0 0
    %9248 = vmatpush2.bf16.msra.mxu0 %v8459
    %9249 = vmatprep.subr.bf16.mxu0 0
    %9250 = vmatpush2.bf16.msra.mxu0 %v8456
    %9251 = vmatprep.subr.bf16.mxu0 0
    %9252 = vmatpush2.bf16.msra.mxu0 %v8453
    %9253 = vmatprep.subr.bf16.mxu0 0
    %9254 = vmatpush2.bf16.msra.mxu0 %v8450
    %9255 = vmatprep.mubr.bf16.mxu0 %v2357
    %9256 = vmatmul.mubr.bf16.gmra.mxu0 %v2356
    %v9257 = vpop.f32.mrf.mxu0
    %v9258 = vadd.f32 %v9217, %v9257
    %v9259 = vpop.f32.mrf.mxu0
    %v9260 = vpop.f32.mrf.mxu0
    %v9261 = vadd.f32 %v9220, %v9260
    %v9262 = vpop.f32.mrf.mxu0
    %9263 = vdwg.mxu0
    %v9264 = vmax.f32 %v6834, %v9010
    %v9265 = vmax.f32 %v6835, %v9012
    %v9266 = vmax.f32 %v6836, %v9258
    %v9267 = vmax.f32 %v6837, %v9014
    %v9268 = vmax.f32 %v6838, %v9016
    %v9269 = vmax.f32 %v6839, %v9261
    %v9270 = vld [vmem:[#allocation7 + $0x24] sm:$0xff]
    %v9271 = vld [vmem:[#allocation7 + $0x2c] sm:$0xf]
    %v9272 = vld [vmem:[#allocation7 + $0x54] sm:$0xff]
    %v9273 = vld [vmem:[#allocation7 + $0x5c] sm:$0xf]
    %v9274 = vld [vmem:[#allocation7 + $0x84] sm:$0xff]
    %v9275 = vld [vmem:[#allocation7 + $0x8c] sm:$0xf]
    %v9276 = vld [vmem:[#allocation7 + $0xb4] sm:$0xff]
    %v9277 = vld [vmem:[#allocation7 + $0xbc] sm:$0xf]
    %v9278 = vld [vmem:[#allocation7 + $0xe4] sm:$0xff]
    %v9279 = vld [vmem:[#allocation7 + $0xec] sm:$0xf]
    %v9280 = vld [vmem:[#allocation7 + $0x114] sm:$0xff]
    %v9281 = vld [vmem:[#allocation7 + $0x11c] sm:$0xf]
    %v9282 = vld [vmem:[#allocation7 + $0x144] sm:$0xff]
    %v9283 = vld [vmem:[#allocation7 + $0x14c] sm:$0xf]
    %v9284 = vld [vmem:[#allocation7 + $0x174] sm:$0xff]
    %v9285 = vld [vmem:[#allocation7 + $0x17c] sm:$0xf]
    %v9286 = vld [vmem:[#allocation7 + $0x1a4] sm:$0xff]
    %v9287 = vld [vmem:[#allocation7 + $0x1ac] sm:$0xf]
    %v9288 = vld [vmem:[#allocation7 + $0x1d4] sm:$0xff]
    %v9289 = vld [vmem:[#allocation7 + $0x1dc] sm:$0xf]
    %v9290 = vld [vmem:[#allocation7 + $0x204] sm:$0xff]
    %v9291 = vld [vmem:[#allocation7 + $0x20c] sm:$0xf]
    %v9292 = vld [vmem:[#allocation7 + $0x234] sm:$0xff]
    %v9293 = vld [vmem:[#allocation7 + $0x23c] sm:$0xf]
    %v9294 = vld [vmem:[#allocation7 + $0x264] sm:$0xff]
    %v9295 = vld [vmem:[#allocation7 + $0x26c] sm:$0xf]
    %v9296 = vld [vmem:[#allocation7 + $0x294] sm:$0xff]
    %v9297 = vld [vmem:[#allocation7 + $0x29c] sm:$0xf]
    %v9298 = vld [vmem:[#allocation7 + $0x2c4] sm:$0xff]
    %v9299 = vld [vmem:[#allocation7 + $0x2cc] sm:$0xf]
    %v9300 = vld [vmem:[#allocation7 + $0x2f4] sm:$0xff]
    %v9301 = vld [vmem:[#allocation7 + $0x2fc] sm:$0xf]
    %v9302 = vld [vmem:[#allocation7 + $0x324] sm:$0xff]
    %v9303 = vld [vmem:[#allocation7 + $0x32c] sm:$0xf]
    %v9304 = vld [vmem:[#allocation7 + $0x354] sm:$0xff]
    %v9305 = vld [vmem:[#allocation7 + $0x35c] sm:$0xf]
    %v9306 = vld [vmem:[#allocation7 + $0x384] sm:$0xff]
    %v9307 = vld [vmem:[#allocation7 + $0x38c] sm:$0xf]
    %v9308 = vld [vmem:[#allocation7 + $0x3b4] sm:$0xff]
    %v9309 = vld [vmem:[#allocation7 + $0x3bc] sm:$0xf]
    %v9310 = vld [vmem:[#allocation7 + $0x3e4] sm:$0xff]
    %v9311 = vld [vmem:[#allocation7 + $0x3ec] sm:$0xf]
    %v9312 = vld [vmem:[#allocation7 + $0x414] sm:$0xff]
    %v9313 = vld [vmem:[#allocation7 + $0x41c] sm:$0xf]
    %v9314 = vld [vmem:[#allocation7 + $0x444] sm:$0xff]
    %v9315 = vld [vmem:[#allocation7 + $0x44c] sm:$0xf]
    %v9316 = vld [vmem:[#allocation7 + $0x474] sm:$0xff]
    %v9317 = vld [vmem:[#allocation7 + $0x47c] sm:$0xf]
    %v9318 = vld [vmem:[#allocation7 + $0x4a4] sm:$0xff]
    %v9319 = vld [vmem:[#allocation7 + $0x4ac] sm:$0xf]
    %v9320 = vld [vmem:[#allocation7 + $0x4d4] sm:$0xff]
    %v9321 = vld [vmem:[#allocation7 + $0x4dc] sm:$0xf]
    %v9322 = vld [vmem:[#allocation7 + $0x504] sm:$0xff]
    %v9323 = vld [vmem:[#allocation7 + $0x50c] sm:$0xf]
    %v9324 = vld [vmem:[#allocation7 + $0x534] sm:$0xff]
    %v9325 = vld [vmem:[#allocation7 + $0x53c] sm:$0xf]
    %v9326 = vld [vmem:[#allocation7 + $0x564] sm:$0xff]
    %v9327 = vld [vmem:[#allocation7 + $0x56c] sm:$0xf]
    %v9328 = vld [vmem:[#allocation7 + $0x594] sm:$0xff]
    %v9329 = vld [vmem:[#allocation7 + $0x59c] sm:$0xf]
    %v9330 = vld [vmem:[#allocation7 + $0x5c4] sm:$0xff]
    %v9331 = vld [vmem:[#allocation7 + $0x5cc] sm:$0xf]
    %v9332 = vld [vmem:[#allocation7 + $0x5f4] sm:$0xff]
    %v9333 = vld [vmem:[#allocation7 + $0x5fc] sm:$0xf]
    %v9334 = vld [vmem:[#allocation7 + $0x624] sm:$0xff]
    %v9335 = vld [vmem:[#allocation7 + $0x62c] sm:$0xf]
    %v9336 = vld [vmem:[#allocation7 + $0x654] sm:$0xff]
    %v9337 = vld [vmem:[#allocation7 + $0x65c] sm:$0xf]
    %v9338 = vld [vmem:[#allocation7 + $0x684] sm:$0xff]
    %v9339 = vld [vmem:[#allocation7 + $0x68c] sm:$0xf]
    %v9340 = vld [vmem:[#allocation7 + $0x6b4] sm:$0xff]
    %v9341 = vld [vmem:[#allocation7 + $0x6bc] sm:$0xf]
    %v9342 = vld [vmem:[#allocation7 + $0x6e4] sm:$0xff]
    %v9343 = vld [vmem:[#allocation7 + $0x6ec] sm:$0xf]
    %v9344 = vld [vmem:[#allocation7 + $0x714] sm:$0xff]
    %v9345 = vld [vmem:[#allocation7 + $0x71c] sm:$0xf]
    %v9346 = vld [vmem:[#allocation7 + $0x744] sm:$0xff]
    %v9347 = vld [vmem:[#allocation7 + $0x74c] sm:$0xf]
    %v9348 = vld [vmem:[#allocation7 + $0x774] sm:$0xff]
    %v9349 = vld [vmem:[#allocation7 + $0x77c] sm:$0xf]
    %v9350 = vld [vmem:[#allocation7 + $0x7a4] sm:$0xff]
    %v9351 = vld [vmem:[#allocation7 + $0x7ac] sm:$0xf]
    %v9352 = vld [vmem:[#allocation7 + $0x7d4] sm:$0xff]
    %v9353 = vld [vmem:[#allocation7 + $0x7dc] sm:$0xf]
    %v9354 = vld [vmem:[#allocation7 + $0x804] sm:$0xff]
    %v9355 = vld [vmem:[#allocation7 + $0x80c] sm:$0xf]
    %v9356 = vld [vmem:[#allocation7 + $0x834] sm:$0xff]
    %v9357 = vld [vmem:[#allocation7 + $0x83c] sm:$0xf]
    %v9358 = vld [vmem:[#allocation7 + $0x864] sm:$0xff]
    %v9359 = vld [vmem:[#allocation7 + $0x86c] sm:$0xf]
    %v9360 = vld [vmem:[#allocation7 + $0x894] sm:$0xff]
    %v9361 = vld [vmem:[#allocation7 + $0x89c] sm:$0xf]
    %v9362 = vld [vmem:[#allocation7 + $0x8c4] sm:$0xff]
    %v9363 = vld [vmem:[#allocation7 + $0x8cc] sm:$0xf]
    %v9364 = vld [vmem:[#allocation7 + $0x8f4] sm:$0xff]
    %v9365 = vld [vmem:[#allocation7 + $0x8fc] sm:$0xf]
    %v9366 = vld [vmem:[#allocation7 + $0x924] sm:$0xff]
    %v9367 = vld [vmem:[#allocation7 + $0x92c] sm:$0xf]
    %v9368 = vld [vmem:[#allocation7 + $0x954] sm:$0xff]
    %v9369 = vld [vmem:[#allocation7 + $0x95c] sm:$0xf]
    %v9370 = vld [vmem:[#allocation7 + $0x984] sm:$0xff]
    %v9371 = vld [vmem:[#allocation7 + $0x98c] sm:$0xf]
    %v9372 = vld [vmem:[#allocation7 + $0x9b4] sm:$0xff]
    %v9373 = vld [vmem:[#allocation7 + $0x9bc] sm:$0xf]
    %v9374 = vld [vmem:[#allocation7 + $0x9e4] sm:$0xff]
    %v9375 = vld [vmem:[#allocation7 + $0x9ec] sm:$0xf]
    %v9376 = vld [vmem:[#allocation7 + $0xa14] sm:$0xff]
    %v9377 = vld [vmem:[#allocation7 + $0xa1c] sm:$0xf]
    %v9378 = vld [vmem:[#allocation7 + $0xa44] sm:$0xff]
    %v9379 = vld [vmem:[#allocation7 + $0xa4c] sm:$0xf]
    %v9380 = vld [vmem:[#allocation7 + $0xa74] sm:$0xff]
    %v9381 = vld [vmem:[#allocation7 + $0xa7c] sm:$0xf]
    %v9382 = vld [vmem:[#allocation7 + $0xaa4] sm:$0xff]
    %v9383 = vld [vmem:[#allocation7 + $0xaac] sm:$0xf]
    %v9384 = vld [vmem:[#allocation7 + $0xad4] sm:$0xff]
    %v9385 = vld [vmem:[#allocation7 + $0xadc] sm:$0xf]
    %v9386 = vld [vmem:[#allocation7 + $0xb04] sm:$0xff]
    %v9387 = vld [vmem:[#allocation7 + $0xb0c] sm:$0xf]
    %v9388 = vld [vmem:[#allocation7 + $0xb34] sm:$0xff]
    %v9389 = vld [vmem:[#allocation7 + $0xb3c] sm:$0xf]
    %v9390 = vld [vmem:[#allocation7 + $0xb64] sm:$0xff]
    %v9391 = vld [vmem:[#allocation7 + $0xb6c] sm:$0xf]
    %v9392 = vld [vmem:[#allocation7 + $0xb94] sm:$0xff]
    %v9393 = vld [vmem:[#allocation7 + $0xb9c] sm:$0xf]
    %v9394 = vld [vmem:[#allocation7 + $0xbc4] sm:$0xff]
    %v9395 = vld [vmem:[#allocation7 + $0xbcc] sm:$0xf]
    %v9396 = vld [vmem:[#allocation7 + $0xbf4] sm:$0xff]
    %v9397 = vld [vmem:[#allocation7 + $0xbfc] sm:$0xf]
    %v9398 = vld [vmem:[#allocation7 + $0xc24] sm:$0xff]
    %v9399 = vld [vmem:[#allocation7 + $0xc2c] sm:$0xf]
    %v9400 = vld [vmem:[#allocation7 + $0xc54] sm:$0xff]
    %v9401 = vld [vmem:[#allocation7 + $0xc5c] sm:$0xf]
    %v9402 = vld [vmem:[#allocation7 + $0xc84] sm:$0xff]
    %v9403 = vld [vmem:[#allocation7 + $0xc8c] sm:$0xf]
    %v9404 = vld [vmem:[#allocation7 + $0xcb4] sm:$0xff]
    %v9405 = vld [vmem:[#allocation7 + $0xcbc] sm:$0xf]
    %v9406 = vld [vmem:[#allocation7 + $0xce4] sm:$0xff]
    %v9407 = vld [vmem:[#allocation7 + $0xcec] sm:$0xf]
    %v9408 = vld [vmem:[#allocation7 + $0xd14] sm:$0xff]
    %v9409 = vld [vmem:[#allocation7 + $0xd1c] sm:$0xf]
    %v9410 = vld [vmem:[#allocation7 + $0xd44] sm:$0xff]
    %v9411 = vld [vmem:[#allocation7 + $0xd4c] sm:$0xf]
    %v9412 = vld [vmem:[#allocation7 + $0xd74] sm:$0xff]
    %v9413 = vld [vmem:[#allocation7 + $0xd7c] sm:$0xf]
    %v9414 = vld [vmem:[#allocation7 + $0xda4] sm:$0xff]
    %v9415 = vld [vmem:[#allocation7 + $0xdac] sm:$0xf]
    %v9416 = vld [vmem:[#allocation7 + $0xdd4] sm:$0xff]
    %v9417 = vld [vmem:[#allocation7 + $0xddc] sm:$0xf]
    %v9418 = vld [vmem:[#allocation7 + $0xe04] sm:$0xff]
    %v9419 = vld [vmem:[#allocation7 + $0xe0c] sm:$0xf]
    %v9420 = vld [vmem:[#allocation7 + $0xe34] sm:$0xff]
    %v9421 = vld [vmem:[#allocation7 + $0xe3c] sm:$0xf]
    %v9422 = vld [vmem:[#allocation7 + $0xe64] sm:$0xff]
    %v9423 = vld [vmem:[#allocation7 + $0xe6c] sm:$0xf]
    %v9424 = vld [vmem:[#allocation7 + $0xe94] sm:$0xff]
    %v9425 = vld [vmem:[#allocation7 + $0xe9c] sm:$0xf]
    %v9426 = vld [vmem:[#allocation7 + $0xec4] sm:$0xff]
    %v9427 = vld [vmem:[#allocation7 + $0xecc] sm:$0xf]
    %v9428 = vld [vmem:[#allocation7 + $0xef4] sm:$0xff]
    %v9429 = vld [vmem:[#allocation7 + $0xefc] sm:$0xf]
    %v9430 = vld [vmem:[#allocation7 + $0xf24] sm:$0xff]
    %v9431 = vld [vmem:[#allocation7 + $0xf2c] sm:$0xf]
    %v9432 = vld [vmem:[#allocation7 + $0xf54] sm:$0xff]
    %v9433 = vld [vmem:[#allocation7 + $0xf5c] sm:$0xf]
    %v9434 = vld [vmem:[#allocation7 + $0xf84] sm:$0xff]
    %v9435 = vld [vmem:[#allocation7 + $0xf8c] sm:$0xf]
    %v9436 = vld [vmem:[#allocation7 + $0xfb4] sm:$0xff]
    %v9437 = vld [vmem:[#allocation7 + $0xfbc] sm:$0xf]
    %v9438 = vld [vmem:[#allocation7 + $0xfe4] sm:$0xff]
    %v9439 = vld [vmem:[#allocation7 + $0xfec] sm:$0xf]
    %v9440 = vld [vmem:[#allocation7 + $0x1014] sm:$0xff]
    %v9441 = vld [vmem:[#allocation7 + $0x101c] sm:$0xf]
    %v9442 = vld [vmem:[#allocation7 + $0x1044] sm:$0xff]
    %v9443 = vld [vmem:[#allocation7 + $0x104c] sm:$0xf]
    %v9444 = vld [vmem:[#allocation7 + $0x1074] sm:$0xff]
    %v9445 = vld [vmem:[#allocation7 + $0x107c] sm:$0xf]
    %v9446 = vld [vmem:[#allocation7 + $0x10a4] sm:$0xff]
    %v9447 = vld [vmem:[#allocation7 + $0x10ac] sm:$0xf]
    %v9448 = vld [vmem:[#allocation7 + $0x10d4] sm:$0xff]
    %v9449 = vld [vmem:[#allocation7 + $0x10dc] sm:$0xf]
    %v9450 = vld [vmem:[#allocation7 + $0x1104] sm:$0xff]
    %v9451 = vld [vmem:[#allocation7 + $0x110c] sm:$0xf]
    %v9452 = vld [vmem:[#allocation7 + $0x1134] sm:$0xff]
    %v9453 = vld [vmem:[#allocation7 + $0x113c] sm:$0xf]
    %v9454 = vld [vmem:[#allocation7 + $0x1164] sm:$0xff]
    %v9455 = vld [vmem:[#allocation7 + $0x116c] sm:$0xf]
    %v9456 = vld [vmem:[#allocation7 + $0x1194] sm:$0xff]
    %v9457 = vld [vmem:[#allocation7 + $0x119c] sm:$0xf]
    %v9458 = vld [vmem:[#allocation7 + $0x11c4] sm:$0xff]
    %v9459 = vld [vmem:[#allocation7 + $0x11cc] sm:$0xf]
    %v9460 = vld [vmem:[#allocation7 + $0x11f4] sm:$0xff]
    %v9461 = vld [vmem:[#allocation7 + $0x11fc] sm:$0xf]
    %v9462 = vld [vmem:[#allocation7 + $0x1224] sm:$0xff]
    %v9463 = vld [vmem:[#allocation7 + $0x122c] sm:$0xf]
    %v9464 = vld [vmem:[#allocation7 + $0x1254] sm:$0xff]
    %v9465 = vld [vmem:[#allocation7 + $0x125c] sm:$0xf]
    %v9466 = vld [vmem:[#allocation7 + $0x1284] sm:$0xff]
    %v9467 = vld [vmem:[#allocation7 + $0x128c] sm:$0xf]
    %v9468 = vld [vmem:[#allocation7 + $0x12b4] sm:$0xff]
    %v9469 = vld [vmem:[#allocation7 + $0x12bc] sm:$0xf]
    %v9470 = vld [vmem:[#allocation7 + $0x12e4] sm:$0xff]
    %v9471 = vld [vmem:[#allocation7 + $0x12ec] sm:$0xf]
    %v9472 = vld [vmem:[#allocation7 + $0x1314] sm:$0xff]
    %v9473 = vld [vmem:[#allocation7 + $0x131c] sm:$0xf]
    %v9474 = vld [vmem:[#allocation7 + $0x1344] sm:$0xff]
    %v9475 = vld [vmem:[#allocation7 + $0x134c] sm:$0xf]
    %v9476 = vld [vmem:[#allocation7 + $0x1374] sm:$0xff]
    %v9477 = vld [vmem:[#allocation7 + $0x137c] sm:$0xf]
    %v9478 = vld [vmem:[#allocation7 + $0x13a4] sm:$0xff]
    %v9479 = vld [vmem:[#allocation7 + $0x13ac] sm:$0xf]
    %v9480 = vld [vmem:[#allocation7 + $0x13d4] sm:$0xff]
    %v9481 = vld [vmem:[#allocation7 + $0x13dc] sm:$0xf]
    %v9482 = vld [vmem:[#allocation7 + $0x1404] sm:$0xff]
    %v9483 = vld [vmem:[#allocation7 + $0x140c] sm:$0xf]
    %v9484 = vld [vmem:[#allocation7 + $0x1434] sm:$0xff]
    %v9485 = vld [vmem:[#allocation7 + $0x143c] sm:$0xf]
    %v9486 = vld [vmem:[#allocation7 + $0x1464] sm:$0xff]
    %v9487 = vld [vmem:[#allocation7 + $0x146c] sm:$0xf]
    %v9488 = vld [vmem:[#allocation7 + $0x1494] sm:$0xff]
    %v9489 = vld [vmem:[#allocation7 + $0x149c] sm:$0xf]
    %v9490 = vld [vmem:[#allocation7 + $0x14c4] sm:$0xff]
    %v9491 = vld [vmem:[#allocation7 + $0x14cc] sm:$0xf]
    %v9492 = vld [vmem:[#allocation7 + $0x14f4] sm:$0xff]
    %v9493 = vld [vmem:[#allocation7 + $0x14fc] sm:$0xf]
    %v9494 = vld [vmem:[#allocation7 + $0x1524] sm:$0xff]
    %v9495 = vld [vmem:[#allocation7 + $0x152c] sm:$0xf]
    %v9496 = vld [vmem:[#allocation7 + $0x1554] sm:$0xff]
    %v9497 = vld [vmem:[#allocation7 + $0x155c] sm:$0xf]
    %v9498 = vld [vmem:[#allocation7 + $0x1584] sm:$0xff]
    %v9499 = vld [vmem:[#allocation7 + $0x158c] sm:$0xf]
    %v9500 = vld [vmem:[#allocation7 + $0x15b4] sm:$0xff]
    %v9501 = vld [vmem:[#allocation7 + $0x15bc] sm:$0xf]
    %v9502 = vld [vmem:[#allocation7 + $0x15e4] sm:$0xff]
    %v9503 = vld [vmem:[#allocation7 + $0x15ec] sm:$0xf]
    %v9504 = vld [vmem:[#allocation7 + $0x1614] sm:$0xff]
    %v9505 = vld [vmem:[#allocation7 + $0x161c] sm:$0xf]
    %v9506 = vld [vmem:[#allocation7 + $0x1644] sm:$0xff]
    %v9507 = vld [vmem:[#allocation7 + $0x164c] sm:$0xf]
    %v9508 = vld [vmem:[#allocation7 + $0x1674] sm:$0xff]
    %v9509 = vld [vmem:[#allocation7 + $0x167c] sm:$0xf]
    %v9510 = vld [vmem:[#allocation7 + $0x16a4] sm:$0xff]
    %v9511 = vld [vmem:[#allocation7 + $0x16ac] sm:$0xf]
    %v9512 = vld [vmem:[#allocation7 + $0x16d4] sm:$0xff]
    %v9513 = vld [vmem:[#allocation7 + $0x16dc] sm:$0xf]
    %v9514 = vld [vmem:[#allocation7 + $0x1704] sm:$0xff]
    %v9515 = vld [vmem:[#allocation7 + $0x170c] sm:$0xf]
    %v9516 = vld [vmem:[#allocation7 + $0x1734] sm:$0xff]
    %v9517 = vld [vmem:[#allocation7 + $0x173c] sm:$0xf]
    %v9518 = vld [vmem:[#allocation7 + $0x1764] sm:$0xff]
    %v9519 = vld [vmem:[#allocation7 + $0x176c] sm:$0xf]
    %v9520 = vld [vmem:[#allocation7 + $0x1794] sm:$0xff]
    %v9521 = vld [vmem:[#allocation7 + $0x179c] sm:$0xf]
    %v9522 = vld [vmem:[#allocation7 + $0x17c4] sm:$0xff]
    %v9523 = vld [vmem:[#allocation7 + $0x17cc] sm:$0xf]
    %v9524 = vld [vmem:[#allocation7 + $0x17f4] sm:$0xff]
    %v9525 = vld [vmem:[#allocation7 + $0x17fc] sm:$0xf]
    %v9526 = vld [vmem:[#allocation7 + $0x1824] sm:$0xff]
    %v9527 = vld [vmem:[#allocation7 + $0x182c] sm:$0xf]
    %v9528 = vld [vmem:[#allocation7 + $0x1854] sm:$0xff]
    %v9529 = vld [vmem:[#allocation7 + $0x185c] sm:$0xf]
    %v9530 = vld [vmem:[#allocation7 + $0x1884] sm:$0xff]
    %v9531 = vld [vmem:[#allocation7 + $0x188c] sm:$0xf]
    %v9532 = vld [vmem:[#allocation7 + $0x18b4] sm:$0xff]
    %v9533 = vld [vmem:[#allocation7 + $0x18bc] sm:$0xf]
    %v9534 = vld [vmem:[#allocation7 + $0x18e4] sm:$0xff]
    %v9535 = vld [vmem:[#allocation7 + $0x18ec] sm:$0xf]
    %v9536 = vld [vmem:[#allocation7 + $0x1914] sm:$0xff]
    %v9537 = vld [vmem:[#allocation7 + $0x191c] sm:$0xf]
    %v9538 = vld [vmem:[#allocation7 + $0x1944] sm:$0xff]
    %v9539 = vld [vmem:[#allocation7 + $0x194c] sm:$0xf]
    %v9540 = vld [vmem:[#allocation7 + $0x1974] sm:$0xff]
    %v9541 = vld [vmem:[#allocation7 + $0x197c] sm:$0xf]
    %v9542 = vld [vmem:[#allocation7 + $0x19a4] sm:$0xff]
    %v9543 = vld [vmem:[#allocation7 + $0x19ac] sm:$0xf]
    %v9544 = vld [vmem:[#allocation7 + $0x19d4] sm:$0xff]
    %v9545 = vld [vmem:[#allocation7 + $0x19dc] sm:$0xf]
    %v9546 = vld [vmem:[#allocation7 + $0x1a04] sm:$0xff]
    %v9547 = vld [vmem:[#allocation7 + $0x1a0c] sm:$0xf]
    %v9548 = vld [vmem:[#allocation7 + $0x1a34] sm:$0xff]
    %v9549 = vld [vmem:[#allocation7 + $0x1a3c] sm:$0xf]
    %v9550 = vld [vmem:[#allocation7 + $0x1a64] sm:$0xff]
    %v9551 = vld [vmem:[#allocation7 + $0x1a6c] sm:$0xf]
    %v9552 = vld [vmem:[#allocation7 + $0x1a94] sm:$0xff]
    %v9553 = vld [vmem:[#allocation7 + $0x1a9c] sm:$0xf]
    %v9554 = vld [vmem:[#allocation7 + $0x1ac4] sm:$0xff]
    %v9555 = vld [vmem:[#allocation7 + $0x1acc] sm:$0xf]
    %v9556 = vld [vmem:[#allocation7 + $0x1af4] sm:$0xff]
    %v9557 = vld [vmem:[#allocation7 + $0x1afc] sm:$0xf]
    %v9558 = vld [vmem:[#allocation7 + $0x1b24] sm:$0xff]
    %v9559 = vld [vmem:[#allocation7 + $0x1b2c] sm:$0xf]
    %v9560 = vld [vmem:[#allocation7 + $0x1b54] sm:$0xff]
    %v9561 = vld [vmem:[#allocation7 + $0x1b5c] sm:$0xf]
    %v9562 = vld [vmem:[#allocation7 + $0x1b84] sm:$0xff]
    %v9563 = vld [vmem:[#allocation7 + $0x1b8c] sm:$0xf]
    %v9564 = vld [vmem:[#allocation7 + $0x1bb4] sm:$0xff]
    %v9565 = vld [vmem:[#allocation7 + $0x1bbc] sm:$0xf]
    %v9566 = vld [vmem:[#allocation7 + $0x1be4] sm:$0xff]
    %v9567 = vld [vmem:[#allocation7 + $0x1bec] sm:$0xf]
    %v9568 = vld [vmem:[#allocation7 + $0x1c14] sm:$0xff]
    %v9569 = vld [vmem:[#allocation7 + $0x1c1c] sm:$0xf]
    %v9570 = vld [vmem:[#allocation7 + $0x1c44] sm:$0xff]
    %v9571 = vld [vmem:[#allocation7 + $0x1c4c] sm:$0xf]
    %v9572 = vld [vmem:[#allocation7 + $0x1c74] sm:$0xff]
    %v9573 = vld [vmem:[#allocation7 + $0x1c7c] sm:$0xf]
    %v9574 = vld [vmem:[#allocation7 + $0x1ca4] sm:$0xff]
    %v9575 = vld [vmem:[#allocation7 + $0x1cac] sm:$0xf]
    %v9576 = vld [vmem:[#allocation7 + $0x1cd4] sm:$0xff]
    %v9577 = vld [vmem:[#allocation7 + $0x1cdc] sm:$0xf]
    %v9578 = vld [vmem:[#allocation7 + $0x1d04] sm:$0xff]
    %v9579 = vld [vmem:[#allocation7 + $0x1d0c] sm:$0xf]
    %v9580 = vld [vmem:[#allocation7 + $0x1d34] sm:$0xff]
    %v9581 = vld [vmem:[#allocation7 + $0x1d3c] sm:$0xf]
    %v9582 = vld [vmem:[#allocation7 + $0x1d64] sm:$0xff]
    %v9583 = vld [vmem:[#allocation7 + $0x1d6c] sm:$0xf]
    %v9584 = vld [vmem:[#allocation7 + $0x1d94] sm:$0xff]
    %v9585 = vld [vmem:[#allocation7 + $0x1d9c] sm:$0xf]
    %v9586 = vld [vmem:[#allocation7 + $0x1dc4] sm:$0xff]
    %v9587 = vld [vmem:[#allocation7 + $0x1dcc] sm:$0xf]
    %v9588 = vld [vmem:[#allocation7 + $0x1df4] sm:$0xff]
    %v9589 = vld [vmem:[#allocation7 + $0x1dfc] sm:$0xf]
    %v9590 = vld [vmem:[#allocation7 + $0x1e24] sm:$0xff]
    %v9591 = vld [vmem:[#allocation7 + $0x1e2c] sm:$0xf]
    %v9592 = vld [vmem:[#allocation7 + $0x1e54] sm:$0xff]
    %v9593 = vld [vmem:[#allocation7 + $0x1e5c] sm:$0xf]
    %v9594 = vld [vmem:[#allocation7 + $0x1e84] sm:$0xff]
    %v9595 = vld [vmem:[#allocation7 + $0x1e8c] sm:$0xf]
    %v9596 = vld [vmem:[#allocation7 + $0x1eb4] sm:$0xff]
    %v9597 = vld [vmem:[#allocation7 + $0x1ebc] sm:$0xf]
    %v9598 = vld [vmem:[#allocation7 + $0x1ee4] sm:$0xff]
    %v9599 = vld [vmem:[#allocation7 + $0x1eec] sm:$0xf]
    %v9600 = vld [vmem:[#allocation7 + $0x1f14] sm:$0xff]
    %v9601 = vld [vmem:[#allocation7 + $0x1f1c] sm:$0xf]
    %v9602 = vld [vmem:[#allocation7 + $0x1f44] sm:$0xff]
    %v9603 = vld [vmem:[#allocation7 + $0x1f4c] sm:$0xf]
    %v9604 = vld [vmem:[#allocation7 + $0x1f74] sm:$0xff]
    %v9605 = vld [vmem:[#allocation7 + $0x1f7c] sm:$0xf]
    %v9606 = vld [vmem:[#allocation7 + $0x1fa4] sm:$0xff]
    %v9607 = vld [vmem:[#allocation7 + $0x1fac] sm:$0xf]
    %v9608 = vld [vmem:[#allocation7 + $0x1fd4] sm:$0xff]
    %v9609 = vld [vmem:[#allocation7 + $0x1fdc] sm:$0xf]
    %v9610 = vld [vmem:[#allocation7 + $0x2004] sm:$0xff]
    %v9611 = vld [vmem:[#allocation7 + $0x200c] sm:$0xf]
    %v9612 = vld [vmem:[#allocation7 + $0x2034] sm:$0xff]
    %v9613 = vld [vmem:[#allocation7 + $0x203c] sm:$0xf]
    %v9614 = vld [vmem:[#allocation7 + $0x2064] sm:$0xff]
    %v9615 = vld [vmem:[#allocation7 + $0x206c] sm:$0xf]
    %v9616 = vld [vmem:[#allocation7 + $0x2094] sm:$0xff]
    %v9617 = vld [vmem:[#allocation7 + $0x209c] sm:$0xf]
    %v9618 = vld [vmem:[#allocation7 + $0x20c4] sm:$0xff]
    %v9619 = vld [vmem:[#allocation7 + $0x20cc] sm:$0xf]
    %v9620 = vld [vmem:[#allocation7 + $0x20f4] sm:$0xff]
    %v9621 = vld [vmem:[#allocation7 + $0x20fc] sm:$0xf]
    %v9622 = vld [vmem:[#allocation7 + $0x2124] sm:$0xff]
    %v9623 = vld [vmem:[#allocation7 + $0x212c] sm:$0xf]
    %v9624 = vld [vmem:[#allocation7 + $0x2154] sm:$0xff]
    %v9625 = vld [vmem:[#allocation7 + $0x215c] sm:$0xf]
    %v9626 = vld [vmem:[#allocation7 + $0x2184] sm:$0xff]
    %v9627 = vld [vmem:[#allocation7 + $0x218c] sm:$0xf]
    %v9628 = vld [vmem:[#allocation7 + $0x21b4] sm:$0xff]
    %v9629 = vld [vmem:[#allocation7 + $0x21bc] sm:$0xf]
    %v9630 = vld [vmem:[#allocation7 + $0x21e4] sm:$0xff]
    %v9631 = vld [vmem:[#allocation7 + $0x21ec] sm:$0xf]
    %v9632 = vld [vmem:[#allocation7 + $0x2214] sm:$0xff]
    %v9633 = vld [vmem:[#allocation7 + $0x221c] sm:$0xf]
    %v9634 = vld [vmem:[#allocation7 + $0x2244] sm:$0xff]
    %v9635 = vld [vmem:[#allocation7 + $0x224c] sm:$0xf]
    %v9636 = vld [vmem:[#allocation7 + $0x2274] sm:$0xff]
    %v9637 = vld [vmem:[#allocation7 + $0x227c] sm:$0xf]
    %v9638 = vld [vmem:[#allocation7 + $0x22a4] sm:$0xff]
    %v9639 = vld [vmem:[#allocation7 + $0x22ac] sm:$0xf]
    %v9640 = vld [vmem:[#allocation7 + $0x22d4] sm:$0xff]
    %v9641 = vld [vmem:[#allocation7 + $0x22dc] sm:$0xf]
    %v9642 = vld [vmem:[#allocation7 + $0x2304] sm:$0xff]
    %v9643 = vld [vmem:[#allocation7 + $0x230c] sm:$0xf]
    %v9644 = vld [vmem:[#allocation7 + $0x2334] sm:$0xff]
    %v9645 = vld [vmem:[#allocation7 + $0x233c] sm:$0xf]
    %v9646 = vld [vmem:[#allocation7 + $0x2364] sm:$0xff]
    %v9647 = vld [vmem:[#allocation7 + $0x236c] sm:$0xf]
    %v9648 = vld [vmem:[#allocation7 + $0x2394] sm:$0xff]
    %v9649 = vld [vmem:[#allocation7 + $0x239c] sm:$0xf]
    %v9650 = vld [vmem:[#allocation7 + $0x23c4] sm:$0xff]
    %v9651 = vld [vmem:[#allocation7 + $0x23cc] sm:$0xf]
    %v9652 = vld [vmem:[#allocation7 + $0x23f4] sm:$0xff]
    %v9653 = vld [vmem:[#allocation7 + $0x23fc] sm:$0xf]
    %v10038 = vunpack.c.l.b16 %v9270
    %v10039 = vunpack.c.h.b16 %v9270
    %v10040 = vunpack.c.l.b16 %v9271
    %v10041 = vunpack.c.l.b16 %v9272
    %v10042 = vunpack.c.h.b16 %v9272
    %v10043 = vunpack.c.l.b16 %v9273
    %v10044 = vunpack.c.l.b16 %v9274
    %v10045 = vunpack.c.h.b16 %v9274
    %v10046 = vunpack.c.l.b16 %v9275
    %v10047 = vunpack.c.l.b16 %v9276
    %v10048 = vunpack.c.h.b16 %v9276
    %v10049 = vunpack.c.l.b16 %v9277
    %v10050 = vunpack.c.l.b16 %v9278
    %v10051 = vunpack.c.h.b16 %v9278
    %v10052 = vunpack.c.l.b16 %v9279
    %v10053 = vunpack.c.l.b16 %v9280
    %v10054 = vunpack.c.h.b16 %v9280
    %v10055 = vunpack.c.l.b16 %v9281
    %v10056 = vunpack.c.l.b16 %v9282
    %v10057 = vunpack.c.h.b16 %v9282
    %v10058 = vunpack.c.l.b16 %v9283
    %v10059 = vunpack.c.l.b16 %v9284
    %v10060 = vunpack.c.h.b16 %v9284
    %v10061 = vunpack.c.l.b16 %v9285
    %v10062 = vunpack.c.l.b16 %v9286
    %v10063 = vunpack.c.h.b16 %v9286
    %v10064 = vunpack.c.l.b16 %v9287
    %v10065 = vunpack.c.l.b16 %v9288
    %v10066 = vunpack.c.h.b16 %v9288
    %v10067 = vunpack.c.l.b16 %v9289
    %v10068 = vunpack.c.l.b16 %v9290
    %v10069 = vunpack.c.h.b16 %v9290
    %v10070 = vunpack.c.l.b16 %v9291
    %v10071 = vunpack.c.l.b16 %v9292
    %v10072 = vunpack.c.h.b16 %v9292
    %v10073 = vunpack.c.l.b16 %v9293
    %v10074 = vunpack.c.l.b16 %v9294
    %v10075 = vunpack.c.h.b16 %v9294
    %v10076 = vunpack.c.l.b16 %v9295
    %v10077 = vunpack.c.l.b16 %v9296
    %v10078 = vunpack.c.h.b16 %v9296
    %v10079 = vunpack.c.l.b16 %v9297
    %v10080 = vunpack.c.l.b16 %v9298
    %v10081 = vunpack.c.h.b16 %v9298
    %v10082 = vunpack.c.l.b16 %v9299
    %v10083 = vunpack.c.l.b16 %v9300
    %v10084 = vunpack.c.h.b16 %v9300
    %v10085 = vunpack.c.l.b16 %v9301
    %v10086 = vunpack.c.l.b16 %v9302
    %v10087 = vunpack.c.h.b16 %v9302
    %v10088 = vunpack.c.l.b16 %v9303
    %v10089 = vunpack.c.l.b16 %v9304
    %v10090 = vunpack.c.h.b16 %v9304
    %v10091 = vunpack.c.l.b16 %v9305
    %v10092 = vunpack.c.l.b16 %v9306
    %v10093 = vunpack.c.h.b16 %v9306
    %v10094 = vunpack.c.l.b16 %v9307
    %v10095 = vunpack.c.l.b16 %v9308
    %v10096 = vunpack.c.h.b16 %v9308
    %v10097 = vunpack.c.l.b16 %v9309
    %v10098 = vunpack.c.l.b16 %v9310
    %v10099 = vunpack.c.h.b16 %v9310
    %v10100 = vunpack.c.l.b16 %v9311
    %v10101 = vunpack.c.l.b16 %v9312
    %v10102 = vunpack.c.h.b16 %v9312
    %v10103 = vunpack.c.l.b16 %v9313
    %v10104 = vunpack.c.l.b16 %v9314
    %v10105 = vunpack.c.h.b16 %v9314
    %v10106 = vunpack.c.l.b16 %v9315
    %v10107 = vunpack.c.l.b16 %v9316
    %v10108 = vunpack.c.h.b16 %v9316
    %v10109 = vunpack.c.l.b16 %v9317
    %v10110 = vunpack.c.l.b16 %v9318
    %v10111 = vunpack.c.h.b16 %v9318
    %v10112 = vunpack.c.l.b16 %v9319
    %v10113 = vunpack.c.l.b16 %v9320
    %v10114 = vunpack.c.h.b16 %v9320
    %v10115 = vunpack.c.l.b16 %v9321
    %v10116 = vunpack.c.l.b16 %v9322
    %v10117 = vunpack.c.h.b16 %v9322
    %v10118 = vunpack.c.l.b16 %v9323
    %v10119 = vunpack.c.l.b16 %v9324
    %v10120 = vunpack.c.h.b16 %v9324
    %v10121 = vunpack.c.l.b16 %v9325
    %v10122 = vunpack.c.l.b16 %v9326
    %v10123 = vunpack.c.h.b16 %v9326
    %v10124 = vunpack.c.l.b16 %v9327
    %v10125 = vunpack.c.l.b16 %v9328
    %v10126 = vunpack.c.h.b16 %v9328
    %v10127 = vunpack.c.l.b16 %v9329
    %v10128 = vunpack.c.l.b16 %v9330
    %v10129 = vunpack.c.h.b16 %v9330
    %v10130 = vunpack.c.l.b16 %v9331
    %v10131 = vunpack.c.l.b16 %v9332
    %v10132 = vunpack.c.h.b16 %v9332
    %v10133 = vunpack.c.l.b16 %v9333
    %v10134 = vunpack.c.l.b16 %v9334
    %v10135 = vunpack.c.h.b16 %v9334
    %v10136 = vunpack.c.l.b16 %v9335
    %v10137 = vunpack.c.l.b16 %v9336
    %v10138 = vunpack.c.h.b16 %v9336
    %v10139 = vunpack.c.l.b16 %v9337
    %v10140 = vunpack.c.l.b16 %v9338
    %v10141 = vunpack.c.h.b16 %v9338
    %v10142 = vunpack.c.l.b16 %v9339
    %v10143 = vunpack.c.l.b16 %v9340
    %v10144 = vunpack.c.h.b16 %v9340
    %v10145 = vunpack.c.l.b16 %v9341
    %v10146 = vunpack.c.l.b16 %v9342
    %v10147 = vunpack.c.h.b16 %v9342
    %v10148 = vunpack.c.l.b16 %v9343
    %v10149 = vunpack.c.l.b16 %v9344
    %v10150 = vunpack.c.h.b16 %v9344
    %v10151 = vunpack.c.l.b16 %v9345
    %v10152 = vunpack.c.l.b16 %v9346
    %v10153 = vunpack.c.h.b16 %v9346
    %v10154 = vunpack.c.l.b16 %v9347
    %v10155 = vunpack.c.l.b16 %v9348
    %v10156 = vunpack.c.h.b16 %v9348
    %v10157 = vunpack.c.l.b16 %v9349
    %v10158 = vunpack.c.l.b16 %v9350
    %v10159 = vunpack.c.h.b16 %v9350
    %v10160 = vunpack.c.l.b16 %v9351
    %v10161 = vunpack.c.l.b16 %v9352
    %v10162 = vunpack.c.h.b16 %v9352
    %v10163 = vunpack.c.l.b16 %v9353
    %v10164 = vunpack.c.l.b16 %v9354
    %v10165 = vunpack.c.h.b16 %v9354
    %v10166 = vunpack.c.l.b16 %v9355
    %v10167 = vunpack.c.l.b16 %v9356
    %v10168 = vunpack.c.h.b16 %v9356
    %v10169 = vunpack.c.l.b16 %v9357
    %v10170 = vunpack.c.l.b16 %v9358
    %v10171 = vunpack.c.h.b16 %v9358
    %v10172 = vunpack.c.l.b16 %v9359
    %v10173 = vunpack.c.l.b16 %v9360
    %v10174 = vunpack.c.h.b16 %v9360
    %v10175 = vunpack.c.l.b16 %v9361
    %v10176 = vunpack.c.l.b16 %v9362
    %v10177 = vunpack.c.h.b16 %v9362
    %v10178 = vunpack.c.l.b16 %v9363
    %v10179 = vunpack.c.l.b16 %v9364
    %v10180 = vunpack.c.h.b16 %v9364
    %v10181 = vunpack.c.l.b16 %v9365
    %v10182 = vunpack.c.l.b16 %v9366
    %v10183 = vunpack.c.h.b16 %v9366
    %v10184 = vunpack.c.l.b16 %v9367
    %v10185 = vunpack.c.l.b16 %v9368
    %v10186 = vunpack.c.h.b16 %v9368
    %v10187 = vunpack.c.l.b16 %v9369
    %v10188 = vunpack.c.l.b16 %v9370
    %v10189 = vunpack.c.h.b16 %v9370
    %v10190 = vunpack.c.l.b16 %v9371
    %v10191 = vunpack.c.l.b16 %v9372
    %v10192 = vunpack.c.h.b16 %v9372
    %v10193 = vunpack.c.l.b16 %v9373
    %v10194 = vunpack.c.l.b16 %v9374
    %v10195 = vunpack.c.h.b16 %v9374
    %v10196 = vunpack.c.l.b16 %v9375
    %v10197 = vunpack.c.l.b16 %v9376
    %v10198 = vunpack.c.h.b16 %v9376
    %v10199 = vunpack.c.l.b16 %v9377
    %v10200 = vunpack.c.l.b16 %v9378
    %v10201 = vunpack.c.h.b16 %v9378
    %v10202 = vunpack.c.l.b16 %v9379
    %v10203 = vunpack.c.l.b16 %v9380
    %v10204 = vunpack.c.h.b16 %v9380
    %v10205 = vunpack.c.l.b16 %v9381
    %v10206 = vunpack.c.l.b16 %v9382
    %v10207 = vunpack.c.h.b16 %v9382
    %v10208 = vunpack.c.l.b16 %v9383
    %v10209 = vunpack.c.l.b16 %v9384
    %v10210 = vunpack.c.h.b16 %v9384
    %v10211 = vunpack.c.l.b16 %v9385
    %v10212 = vunpack.c.l.b16 %v9386
    %v10213 = vunpack.c.h.b16 %v9386
    %v10214 = vunpack.c.l.b16 %v9387
    %v10215 = vunpack.c.l.b16 %v9388
    %v10216 = vunpack.c.h.b16 %v9388
    %v10217 = vunpack.c.l.b16 %v9389
    %v10218 = vunpack.c.l.b16 %v9390
    %v10219 = vunpack.c.h.b16 %v9390
    %v10220 = vunpack.c.l.b16 %v9391
    %v10221 = vunpack.c.l.b16 %v9392
    %v10222 = vunpack.c.h.b16 %v9392
    %v10223 = vunpack.c.l.b16 %v9393
    %v10224 = vunpack.c.l.b16 %v9394
    %v10225 = vunpack.c.h.b16 %v9394
    %v10226 = vunpack.c.l.b16 %v9395
    %v10227 = vunpack.c.l.b16 %v9396
    %v10228 = vunpack.c.h.b16 %v9396
    %v10229 = vunpack.c.l.b16 %v9397
    %v10230 = vunpack.c.l.b16 %v9398
    %v10231 = vunpack.c.h.b16 %v9398
    %v10232 = vunpack.c.l.b16 %v9399
    %v10233 = vunpack.c.l.b16 %v9400
    %v10234 = vunpack.c.h.b16 %v9400
    %v10235 = vunpack.c.l.b16 %v9401
    %v10236 = vunpack.c.l.b16 %v9402
    %v10237 = vunpack.c.h.b16 %v9402
    %v10238 = vunpack.c.l.b16 %v9403
    %v10239 = vunpack.c.l.b16 %v9404
    %v10240 = vunpack.c.h.b16 %v9404
    %v10241 = vunpack.c.l.b16 %v9405
    %v10242 = vunpack.c.l.b16 %v9406
    %v10243 = vunpack.c.h.b16 %v9406
    %v10244 = vunpack.c.l.b16 %v9407
    %v10245 = vunpack.c.l.b16 %v9408
    %v10246 = vunpack.c.h.b16 %v9408
    %v10247 = vunpack.c.l.b16 %v9409
    %v10248 = vunpack.c.l.b16 %v9410
    %v10249 = vunpack.c.h.b16 %v9410
    %v10250 = vunpack.c.l.b16 %v9411
    %v10251 = vunpack.c.l.b16 %v9412
    %v10252 = vunpack.c.h.b16 %v9412
    %v10253 = vunpack.c.l.b16 %v9413
    %v10254 = vunpack.c.l.b16 %v9414
    %v10255 = vunpack.c.h.b16 %v9414
    %v10256 = vunpack.c.l.b16 %v9415
    %v10257 = vunpack.c.l.b16 %v9416
    %v10258 = vunpack.c.h.b16 %v9416
    %v10259 = vunpack.c.l.b16 %v9417
    %v10260 = vunpack.c.l.b16 %v9418
    %v10261 = vunpack.c.h.b16 %v9418
    %v10262 = vunpack.c.l.b16 %v9419
    %v10263 = vunpack.c.l.b16 %v9420
    %v10264 = vunpack.c.h.b16 %v9420
    %v10265 = vunpack.c.l.b16 %v9421
    %v10266 = vunpack.c.l.b16 %v9422
    %v10267 = vunpack.c.h.b16 %v9422
    %v10268 = vunpack.c.l.b16 %v9423
    %v10269 = vunpack.c.l.b16 %v9424
    %v10270 = vunpack.c.h.b16 %v9424
    %v10271 = vunpack.c.l.b16 %v9425
    %v10272 = vunpack.c.l.b16 %v9426
    %v10273 = vunpack.c.h.b16 %v9426
    %v10274 = vunpack.c.l.b16 %v9427
    %v10275 = vunpack.c.l.b16 %v9428
    %v10276 = vunpack.c.h.b16 %v9428
    %v10277 = vunpack.c.l.b16 %v9429
    %v10278 = vunpack.c.l.b16 %v9430
    %v10279 = vunpack.c.h.b16 %v9430
    %v10280 = vunpack.c.l.b16 %v9431
    %v10281 = vunpack.c.l.b16 %v9432
    %v10282 = vunpack.c.h.b16 %v9432
    %v10283 = vunpack.c.l.b16 %v9433
    %v10284 = vunpack.c.l.b16 %v9434
    %v10285 = vunpack.c.h.b16 %v9434
    %v10286 = vunpack.c.l.b16 %v9435
    %v10287 = vunpack.c.l.b16 %v9436
    %v10288 = vunpack.c.h.b16 %v9436
    %v10289 = vunpack.c.l.b16 %v9437
    %v10290 = vunpack.c.l.b16 %v9438
    %v10291 = vunpack.c.h.b16 %v9438
    %v10292 = vunpack.c.l.b16 %v9439
    %v10293 = vunpack.c.l.b16 %v9440
    %v10294 = vunpack.c.h.b16 %v9440
    %v10295 = vunpack.c.l.b16 %v9441
    %v10296 = vunpack.c.l.b16 %v9442
    %v10297 = vunpack.c.h.b16 %v9442
    %v10298 = vunpack.c.l.b16 %v9443
    %v10299 = vunpack.c.l.b16 %v9444
    %v10300 = vunpack.c.h.b16 %v9444
    %v10301 = vunpack.c.l.b16 %v9445
    %v10302 = vunpack.c.l.b16 %v9446
    %v10303 = vunpack.c.h.b16 %v9446
    %v10304 = vunpack.c.l.b16 %v9447
    %v10305 = vunpack.c.l.b16 %v9448
    %v10306 = vunpack.c.h.b16 %v9448
    %v10307 = vunpack.c.l.b16 %v9449
    %v10308 = vunpack.c.l.b16 %v9450
    %v10309 = vunpack.c.h.b16 %v9450
    %v10310 = vunpack.c.l.b16 %v9451
    %v10311 = vunpack.c.l.b16 %v9452
    %v10312 = vunpack.c.h.b16 %v9452
    %v10313 = vunpack.c.l.b16 %v9453
    %v10314 = vunpack.c.l.b16 %v9454
    %v10315 = vunpack.c.h.b16 %v9454
    %v10316 = vunpack.c.l.b16 %v9455
    %v10317 = vunpack.c.l.b16 %v9456
    %v10318 = vunpack.c.h.b16 %v9456
    %v10319 = vunpack.c.l.b16 %v9457
    %v10320 = vunpack.c.l.b16 %v9458
    %v10321 = vunpack.c.h.b16 %v9458
    %v10322 = vunpack.c.l.b16 %v9459
    %v10323 = vunpack.c.l.b16 %v9460
    %v10324 = vunpack.c.h.b16 %v9460
    %v10325 = vunpack.c.l.b16 %v9461
    %v10326 = vunpack.c.l.b16 %v9462
    %v10327 = vunpack.c.h.b16 %v9462
    %v10328 = vunpack.c.l.b16 %v9463
    %v10329 = vunpack.c.l.b16 %v9464
    %v10330 = vunpack.c.h.b16 %v9464
    %v10331 = vunpack.c.l.b16 %v9465
    %v10332 = vunpack.c.l.b16 %v9466
    %v10333 = vunpack.c.h.b16 %v9466
    %v10334 = vunpack.c.l.b16 %v9467
    %v10335 = vunpack.c.l.b16 %v9468
    %v10336 = vunpack.c.h.b16 %v9468
    %v10337 = vunpack.c.l.b16 %v9469
    %v10338 = vunpack.c.l.b16 %v9470
    %v10339 = vunpack.c.h.b16 %v9470
    %v10340 = vunpack.c.l.b16 %v9471
    %v10341 = vunpack.c.l.b16 %v9472
    %v10342 = vunpack.c.h.b16 %v9472
    %v10343 = vunpack.c.l.b16 %v9473
    %v10344 = vunpack.c.l.b16 %v9474
    %v10345 = vunpack.c.h.b16 %v9474
    %v10346 = vunpack.c.l.b16 %v9475
    %v10347 = vunpack.c.l.b16 %v9476
    %v10348 = vunpack.c.h.b16 %v9476
    %v10349 = vunpack.c.l.b16 %v9477
    %v10350 = vunpack.c.l.b16 %v9478
    %v10351 = vunpack.c.h.b16 %v9478
    %v10352 = vunpack.c.l.b16 %v9479
    %v10353 = vunpack.c.l.b16 %v9480
    %v10354 = vunpack.c.h.b16 %v9480
    %v10355 = vunpack.c.l.b16 %v9481
    %v10356 = vunpack.c.l.b16 %v9482
    %v10357 = vunpack.c.h.b16 %v9482
    %v10358 = vunpack.c.l.b16 %v9483
    %v10359 = vunpack.c.l.b16 %v9484
    %v10360 = vunpack.c.h.b16 %v9484
    %v10361 = vunpack.c.l.b16 %v9485
    %v10362 = vunpack.c.l.b16 %v9486
    %v10363 = vunpack.c.h.b16 %v9486
    %v10364 = vunpack.c.l.b16 %v9487
    %v10365 = vunpack.c.l.b16 %v9488
    %v10366 = vunpack.c.h.b16 %v9488
    %v10367 = vunpack.c.l.b16 %v9489
    %v10368 = vunpack.c.l.b16 %v9490
    %v10369 = vunpack.c.h.b16 %v9490
    %v10370 = vunpack.c.l.b16 %v9491
    %v10371 = vunpack.c.l.b16 %v9492
    %v10372 = vunpack.c.h.b16 %v9492
    %v10373 = vunpack.c.l.b16 %v9493
    %v10374 = vunpack.c.l.b16 %v9494
    %v10375 = vunpack.c.h.b16 %v9494
    %v10376 = vunpack.c.l.b16 %v9495
    %v10377 = vunpack.c.l.b16 %v9496
    %v10378 = vunpack.c.h.b16 %v9496
    %v10379 = vunpack.c.l.b16 %v9497
    %v10380 = vunpack.c.l.b16 %v9498
    %v10381 = vunpack.c.h.b16 %v9498
    %v10382 = vunpack.c.l.b16 %v9499
    %v10383 = vunpack.c.l.b16 %v9500
    %v10384 = vunpack.c.h.b16 %v9500
    %v10385 = vunpack.c.l.b16 %v9501
    %v10386 = vunpack.c.l.b16 %v9502
    %v10387 = vunpack.c.h.b16 %v9502
    %v10388 = vunpack.c.l.b16 %v9503
    %v10389 = vunpack.c.l.b16 %v9504
    %v10390 = vunpack.c.h.b16 %v9504
    %v10391 = vunpack.c.l.b16 %v9505
    %v10392 = vunpack.c.l.b16 %v9506
    %v10393 = vunpack.c.h.b16 %v9506
    %v10394 = vunpack.c.l.b16 %v9507
    %v10395 = vunpack.c.l.b16 %v9508
    %v10396 = vunpack.c.h.b16 %v9508
    %v10397 = vunpack.c.l.b16 %v9509
    %v10398 = vunpack.c.l.b16 %v9510
    %v10399 = vunpack.c.h.b16 %v9510
    %v10400 = vunpack.c.l.b16 %v9511
    %v10401 = vunpack.c.l.b16 %v9512
    %v10402 = vunpack.c.h.b16 %v9512
    %v10403 = vunpack.c.l.b16 %v9513
    %v10404 = vunpack.c.l.b16 %v9514
    %v10405 = vunpack.c.h.b16 %v9514
    %v10406 = vunpack.c.l.b16 %v9515
    %v10407 = vunpack.c.l.b16 %v9516
    %v10408 = vunpack.c.h.b16 %v9516
    %v10409 = vunpack.c.l.b16 %v9517
    %v10410 = vunpack.c.l.b16 %v9518
    %v10411 = vunpack.c.h.b16 %v9518
    %v10412 = vunpack.c.l.b16 %v9519
    %v10413 = vunpack.c.l.b16 %v9520
    %v10414 = vunpack.c.h.b16 %v9520
    %v10415 = vunpack.c.l.b16 %v9521
    %v10416 = vunpack.c.l.b16 %v9522
    %v10417 = vunpack.c.h.b16 %v9522
    %v10418 = vunpack.c.l.b16 %v9523
    %v10419 = vunpack.c.l.b16 %v9524
    %v10420 = vunpack.c.h.b16 %v9524
    %v10421 = vunpack.c.l.b16 %v9525
    %v10422 = vunpack.c.l.b16 %v9526
    %v10423 = vunpack.c.h.b16 %v9526
    %v10424 = vunpack.c.l.b16 %v9527
    %v10425 = vunpack.c.l.b16 %v9528
    %v10426 = vunpack.c.h.b16 %v9528
    %v10427 = vunpack.c.l.b16 %v9529
    %v10428 = vunpack.c.l.b16 %v9530
    %v10429 = vunpack.c.h.b16 %v9530
    %v10430 = vunpack.c.l.b16 %v9531
    %v10431 = vunpack.c.l.b16 %v9532
    %v10432 = vunpack.c.h.b16 %v9532
    %v10433 = vunpack.c.l.b16 %v9533
    %v10434 = vunpack.c.l.b16 %v9534
    %v10435 = vunpack.c.h.b16 %v9534
    %v10436 = vunpack.c.l.b16 %v9535
    %v10437 = vunpack.c.l.b16 %v9536
    %v10438 = vunpack.c.h.b16 %v9536
    %v10439 = vunpack.c.l.b16 %v9537
    %v10440 = vunpack.c.l.b16 %v9538
    %v10441 = vunpack.c.h.b16 %v9538
    %v10442 = vunpack.c.l.b16 %v9539
    %v10443 = vunpack.c.l.b16 %v9540
    %v10444 = vunpack.c.h.b16 %v9540
    %v10445 = vunpack.c.l.b16 %v9541
    %v10446 = vunpack.c.l.b16 %v9542
    %v10447 = vunpack.c.h.b16 %v9542
    %v10448 = vunpack.c.l.b16 %v9543
    %v10449 = vunpack.c.l.b16 %v9544
    %v10450 = vunpack.c.h.b16 %v9544
    %v10451 = vunpack.c.l.b16 %v9545
    %v10452 = vunpack.c.l.b16 %v9546
    %v10453 = vunpack.c.h.b16 %v9546
    %v10454 = vunpack.c.l.b16 %v9547
    %v10455 = vunpack.c.l.b16 %v9548
    %v10456 = vunpack.c.h.b16 %v9548
    %v10457 = vunpack.c.l.b16 %v9549
    %v10458 = vunpack.c.l.b16 %v9550
    %v10459 = vunpack.c.h.b16 %v9550
    %v10460 = vunpack.c.l.b16 %v9551
    %v10461 = vunpack.c.l.b16 %v9552
    %v10462 = vunpack.c.h.b16 %v9552
    %v10463 = vunpack.c.l.b16 %v9553
    %v10464 = vunpack.c.l.b16 %v9554
    %v10465 = vunpack.c.h.b16 %v9554
    %v10466 = vunpack.c.l.b16 %v9555
    %v10467 = vunpack.c.l.b16 %v9556
    %v10468 = vunpack.c.h.b16 %v9556
    %v10469 = vunpack.c.l.b16 %v9557
    %v10470 = vunpack.c.l.b16 %v9558
    %v10471 = vunpack.c.h.b16 %v9558
    %v10472 = vunpack.c.l.b16 %v9559
    %v10473 = vunpack.c.l.b16 %v9560
    %v10474 = vunpack.c.h.b16 %v9560
    %v10475 = vunpack.c.l.b16 %v9561
    %v10476 = vunpack.c.l.b16 %v9562
    %v10477 = vunpack.c.h.b16 %v9562
    %v10478 = vunpack.c.l.b16 %v9563
    %v10479 = vunpack.c.l.b16 %v9564
    %v10480 = vunpack.c.h.b16 %v9564
    %v10481 = vunpack.c.l.b16 %v9565
    %v10482 = vunpack.c.l.b16 %v9566
    %v10483 = vunpack.c.h.b16 %v9566
    %v10484 = vunpack.c.l.b16 %v9567
    %v10485 = vunpack.c.l.b16 %v9568
    %v10486 = vunpack.c.h.b16 %v9568
    %v10487 = vunpack.c.l.b16 %v9569
    %v10488 = vunpack.c.l.b16 %v9570
    %v10489 = vunpack.c.h.b16 %v9570
    %v10490 = vunpack.c.l.b16 %v9571
    %v10491 = vunpack.c.l.b16 %v9572
    %v10492 = vunpack.c.h.b16 %v9572
    %v10493 = vunpack.c.l.b16 %v9573
    %v10494 = vunpack.c.l.b16 %v9574
    %v10495 = vunpack.c.h.b16 %v9574
    %v10496 = vunpack.c.l.b16 %v9575
    %v10497 = vunpack.c.l.b16 %v9576
    %v10498 = vunpack.c.h.b16 %v9576
    %v10499 = vunpack.c.l.b16 %v9577
    %v10500 = vunpack.c.l.b16 %v9578
    %v10501 = vunpack.c.h.b16 %v9578
    %v10502 = vunpack.c.l.b16 %v9579
    %v10503 = vunpack.c.l.b16 %v9580
    %v10504 = vunpack.c.h.b16 %v9580
    %v10505 = vunpack.c.l.b16 %v9581
    %v10506 = vunpack.c.l.b16 %v9582
    %v10507 = vunpack.c.h.b16 %v9582
    %v10508 = vunpack.c.l.b16 %v9583
    %v10509 = vunpack.c.l.b16 %v9584
    %v10510 = vunpack.c.h.b16 %v9584
    %v10511 = vunpack.c.l.b16 %v9585
    %v10512 = vunpack.c.l.b16 %v9586
    %v10513 = vunpack.c.h.b16 %v9586
    %v10514 = vunpack.c.l.b16 %v9587
    %v10515 = vunpack.c.l.b16 %v9588
    %v10516 = vunpack.c.h.b16 %v9588
    %v10517 = vunpack.c.l.b16 %v9589
    %v10518 = vunpack.c.l.b16 %v9590
    %v10519 = vunpack.c.h.b16 %v9590
    %v10520 = vunpack.c.l.b16 %v9591
    %v10521 = vunpack.c.l.b16 %v9592
    %v10522 = vunpack.c.h.b16 %v9592
    %v10523 = vunpack.c.l.b16 %v9593
    %v10524 = vunpack.c.l.b16 %v9594
    %v10525 = vunpack.c.h.b16 %v9594
    %v10526 = vunpack.c.l.b16 %v9595
    %v10527 = vunpack.c.l.b16 %v9596
    %v10528 = vunpack.c.h.b16 %v9596
    %v10529 = vunpack.c.l.b16 %v9597
    %v10530 = vunpack.c.l.b16 %v9598
    %v10531 = vunpack.c.h.b16 %v9598
    %v10532 = vunpack.c.l.b16 %v9599
    %v10533 = vunpack.c.l.b16 %v9600
    %v10534 = vunpack.c.h.b16 %v9600
    %v10535 = vunpack.c.l.b16 %v9601
    %v10536 = vunpack.c.l.b16 %v9602
    %v10537 = vunpack.c.h.b16 %v9602
    %v10538 = vunpack.c.l.b16 %v9603
    %v10539 = vunpack.c.l.b16 %v9604
    %v10540 = vunpack.c.h.b16 %v9604
    %v10541 = vunpack.c.l.b16 %v9605
    %v10542 = vunpack.c.l.b16 %v9606
    %v10543 = vunpack.c.h.b16 %v9606
    %v10544 = vunpack.c.l.b16 %v9607
    %v10545 = vunpack.c.l.b16 %v9608
    %v10546 = vunpack.c.h.b16 %v9608
    %v10547 = vunpack.c.l.b16 %v9609
    %v10548 = vunpack.c.l.b16 %v9610
    %v10549 = vunpack.c.h.b16 %v9610
    %v10550 = vunpack.c.l.b16 %v9611
    %v10551 = vunpack.c.l.b16 %v9612
    %v10552 = vunpack.c.h.b16 %v9612
    %v10553 = vunpack.c.l.b16 %v9613
    %v10554 = vunpack.c.l.b16 %v9614
    %v10555 = vunpack.c.h.b16 %v9614
    %v10556 = vunpack.c.l.b16 %v9615
    %v10557 = vunpack.c.l.b16 %v9616
    %v10558 = vunpack.c.h.b16 %v9616
    %v10559 = vunpack.c.l.b16 %v9617
    %v10560 = vunpack.c.l.b16 %v9618
    %v10561 = vunpack.c.h.b16 %v9618
    %v10562 = vunpack.c.l.b16 %v9619
    %v10563 = vunpack.c.l.b16 %v9620
    %v10564 = vunpack.c.h.b16 %v9620
    %v10565 = vunpack.c.l.b16 %v9621
    %v10566 = vunpack.c.l.b16 %v9622
    %v10567 = vunpack.c.h.b16 %v9622
    %v10568 = vunpack.c.l.b16 %v9623
    %v10569 = vunpack.c.l.b16 %v9624
    %v10570 = vunpack.c.h.b16 %v9624
    %v10571 = vunpack.c.l.b16 %v9625
    %v10572 = vunpack.c.l.b16 %v9626
    %v10573 = vunpack.c.h.b16 %v9626
    %v10574 = vunpack.c.l.b16 %v9627
    %v10575 = vunpack.c.l.b16 %v9628
    %v10576 = vunpack.c.h.b16 %v9628
    %v10577 = vunpack.c.l.b16 %v9629
    %v10578 = vunpack.c.l.b16 %v9630
    %v10579 = vunpack.c.h.b16 %v9630
    %v10580 = vunpack.c.l.b16 %v9631
    %v10581 = vunpack.c.l.b16 %v9632
    %v10582 = vunpack.c.h.b16 %v9632
    %v10583 = vunpack.c.l.b16 %v9633
    %v10584 = vunpack.c.l.b16 %v9634
    %v10585 = vunpack.c.h.b16 %v9634
    %v10586 = vunpack.c.l.b16 %v9635
    %v10587 = vunpack.c.l.b16 %v9636
    %v10588 = vunpack.c.h.b16 %v9636
    %v10589 = vunpack.c.l.b16 %v9637
    %v10590 = vunpack.c.l.b16 %v9638
    %v10591 = vunpack.c.h.b16 %v9638
    %v10592 = vunpack.c.l.b16 %v9639
    %v10593 = vunpack.c.l.b16 %v9640
    %v10594 = vunpack.c.h.b16 %v9640
    %v10595 = vunpack.c.l.b16 %v9641
    %v10596 = vunpack.c.l.b16 %v9642
    %v10597 = vunpack.c.h.b16 %v9642
    %v10598 = vunpack.c.l.b16 %v9643
    %v10599 = vunpack.c.l.b16 %v9644
    %v10600 = vunpack.c.h.b16 %v9644
    %v10601 = vunpack.c.l.b16 %v9645
    %v10602 = vunpack.c.l.b16 %v9646
    %v10603 = vunpack.c.h.b16 %v9646
    %v10604 = vunpack.c.l.b16 %v9647
    %v10605 = vunpack.c.l.b16 %v9648
    %v10606 = vunpack.c.h.b16 %v9648
    %v10607 = vunpack.c.l.b16 %v9649
    %v10608 = vunpack.c.l.b16 %v9650
    %v10609 = vunpack.c.h.b16 %v9650
    %v10610 = vunpack.c.l.b16 %v9651
    %v10611 = vunpack.c.l.b16 %v9652
    %v10612 = vunpack.c.h.b16 %v9652
    %v10613 = vunpack.c.l.b16 %v9653
    %v10614 = vpack.c.b16 %v10041, %v10038
    %v10615 = vpack.c.b16 %v10042, %v10039
    %v10616 = vpack.c.b16 %v10043, %v10040
    %v10617 = vpack.c.b16 %v10047, %v10044
    %v10618 = vpack.c.b16 %v10048, %v10045
    %v10619 = vpack.c.b16 %v10049, %v10046
    %v10620 = vpack.c.b16 %v10053, %v10050
    %v10621 = vpack.c.b16 %v10054, %v10051
    %v10622 = vpack.c.b16 %v10055, %v10052
    %v10623 = vpack.c.b16 %v10059, %v10056
    %v10624 = vpack.c.b16 %v10060, %v10057
    %v10625 = vpack.c.b16 %v10061, %v10058
    %v10626 = vpack.c.b16 %v10065, %v10062
    %v10627 = vpack.c.b16 %v10066, %v10063
    %v10628 = vpack.c.b16 %v10067, %v10064
    %v10629 = vpack.c.b16 %v10071, %v10068
    %v10630 = vpack.c.b16 %v10072, %v10069
    %v10631 = vpack.c.b16 %v10073, %v10070
    %v10632 = vpack.c.b16 %v10077, %v10074
    %v10633 = vpack.c.b16 %v10078, %v10075
    %v10634 = vpack.c.b16 %v10079, %v10076
    %v10635 = vpack.c.b16 %v10083, %v10080
    %v10636 = vpack.c.b16 %v10084, %v10081
    %v10637 = vpack.c.b16 %v10085, %v10082
    %v10638 = vpack.c.b16 %v10089, %v10086
    %v10639 = vpack.c.b16 %v10090, %v10087
    %v10640 = vpack.c.b16 %v10091, %v10088
    %v10641 = vpack.c.b16 %v10095, %v10092
    %v10642 = vpack.c.b16 %v10096, %v10093
    %v10643 = vpack.c.b16 %v10097, %v10094
    %v10644 = vpack.c.b16 %v10101, %v10098
    %v10645 = vpack.c.b16 %v10102, %v10099
    %v10646 = vpack.c.b16 %v10103, %v10100
    %v10647 = vpack.c.b16 %v10107, %v10104
    %v10648 = vpack.c.b16 %v10108, %v10105
    %v10649 = vpack.c.b16 %v10109, %v10106
    %v10650 = vpack.c.b16 %v10113, %v10110
    %v10651 = vpack.c.b16 %v10114, %v10111
    %v10652 = vpack.c.b16 %v10115, %v10112
    %v10653 = vpack.c.b16 %v10119, %v10116
    %v10654 = vpack.c.b16 %v10120, %v10117
    %v10655 = vpack.c.b16 %v10121, %v10118
    %v10656 = vpack.c.b16 %v10125, %v10122
    %v10657 = vpack.c.b16 %v10126, %v10123
    %v10658 = vpack.c.b16 %v10127, %v10124
    %v10659 = vpack.c.b16 %v10131, %v10128
    %v10660 = vpack.c.b16 %v10132, %v10129
    %v10661 = vpack.c.b16 %v10133, %v10130
    %v10662 = vpack.c.b16 %v10137, %v10134
    %v10663 = vpack.c.b16 %v10138, %v10135
    %v10664 = vpack.c.b16 %v10139, %v10136
    %v10665 = vpack.c.b16 %v10143, %v10140
    %v10666 = vpack.c.b16 %v10144, %v10141
    %v10667 = vpack.c.b16 %v10145, %v10142
    %v10668 = vpack.c.b16 %v10149, %v10146
    %v10669 = vpack.c.b16 %v10150, %v10147
    %v10670 = vpack.c.b16 %v10151, %v10148
    %v10671 = vpack.c.b16 %v10155, %v10152
    %v10672 = vpack.c.b16 %v10156, %v10153
    %v10673 = vpack.c.b16 %v10157, %v10154
    %v10674 = vpack.c.b16 %v10161, %v10158
    %v10675 = vpack.c.b16 %v10162, %v10159
    %v10676 = vpack.c.b16 %v10163, %v10160
    %v10677 = vpack.c.b16 %v10167, %v10164
    %v10678 = vpack.c.b16 %v10168, %v10165
    %v10679 = vpack.c.b16 %v10169, %v10166
    %v10680 = vpack.c.b16 %v10173, %v10170
    %v10681 = vpack.c.b16 %v10174, %v10171
    %v10682 = vpack.c.b16 %v10175, %v10172
    %v10683 = vpack.c.b16 %v10179, %v10176
    %v10684 = vpack.c.b16 %v10180, %v10177
    %v10685 = vpack.c.b16 %v10181, %v10178
    %v10686 = vpack.c.b16 %v10185, %v10182
    %v10687 = vpack.c.b16 %v10186, %v10183
    %v10688 = vpack.c.b16 %v10187, %v10184
    %v10689 = vpack.c.b16 %v10191, %v10188
    %v10690 = vpack.c.b16 %v10192, %v10189
    %v10691 = vpack.c.b16 %v10193, %v10190
    %v10692 = vpack.c.b16 %v10197, %v10194
    %v10693 = vpack.c.b16 %v10198, %v10195
    %v10694 = vpack.c.b16 %v10199, %v10196
    %v10695 = vpack.c.b16 %v10203, %v10200
    %v10696 = vpack.c.b16 %v10204, %v10201
    %v10697 = vpack.c.b16 %v10205, %v10202
    %v10698 = vpack.c.b16 %v10209, %v10206
    %v10699 = vpack.c.b16 %v10210, %v10207
    %v10700 = vpack.c.b16 %v10211, %v10208
    %v10701 = vpack.c.b16 %v10215, %v10212
    %v10702 = vpack.c.b16 %v10216, %v10213
    %v10703 = vpack.c.b16 %v10217, %v10214
    %v10704 = vpack.c.b16 %v10221, %v10218
    %v10705 = vpack.c.b16 %v10222, %v10219
    %v10706 = vpack.c.b16 %v10223, %v10220
    %v10707 = vpack.c.b16 %v10227, %v10224
    %v10708 = vpack.c.b16 %v10228, %v10225
    %v10709 = vpack.c.b16 %v10229, %v10226
    %v10710 = vpack.c.b16 %v10233, %v10230
    %v10711 = vpack.c.b16 %v10234, %v10231
    %v10712 = vpack.c.b16 %v10235, %v10232
    %v10713 = vpack.c.b16 %v10239, %v10236
    %v10714 = vpack.c.b16 %v10240, %v10237
    %v10715 = vpack.c.b16 %v10241, %v10238
    %v10716 = vpack.c.b16 %v10245, %v10242
    %v10717 = vpack.c.b16 %v10246, %v10243
    %v10718 = vpack.c.b16 %v10247, %v10244
    %v10719 = vpack.c.b16 %v10251, %v10248
    %v10720 = vpack.c.b16 %v10252, %v10249
    %v10721 = vpack.c.b16 %v10253, %v10250
    %v10722 = vpack.c.b16 %v10257, %v10254
    %v10723 = vpack.c.b16 %v10258, %v10255
    %v10724 = vpack.c.b16 %v10259, %v10256
    %v10725 = vpack.c.b16 %v10263, %v10260
    %v10726 = vpack.c.b16 %v10264, %v10261
    %v10727 = vpack.c.b16 %v10265, %v10262
    %v10728 = vpack.c.b16 %v10269, %v10266
    %v10729 = vpack.c.b16 %v10270, %v10267
    %v10730 = vpack.c.b16 %v10271, %v10268
    %v10731 = vpack.c.b16 %v10275, %v10272
    %v10732 = vpack.c.b16 %v10276, %v10273
    %v10733 = vpack.c.b16 %v10277, %v10274
    %v10734 = vpack.c.b16 %v10281, %v10278
    %v10735 = vpack.c.b16 %v10282, %v10279
    %v10736 = vpack.c.b16 %v10283, %v10280
    %v10737 = vpack.c.b16 %v10287, %v10284
    %v10738 = vpack.c.b16 %v10288, %v10285
    %v10739 = vpack.c.b16 %v10289, %v10286
    %v10740 = vpack.c.b16 %v10293, %v10290
    %v10741 = vpack.c.b16 %v10294, %v10291
    %v10742 = vpack.c.b16 %v10295, %v10292
    %v10743 = vpack.c.b16 %v10299, %v10296
    %v10744 = vpack.c.b16 %v10300, %v10297
    %v10745 = vpack.c.b16 %v10301, %v10298
    %v10746 = vpack.c.b16 %v10305, %v10302
    %v10747 = vpack.c.b16 %v10306, %v10303
    %v10748 = vpack.c.b16 %v10307, %v10304
    %v10749 = vpack.c.b16 %v10311, %v10308
    %v10750 = vpack.c.b16 %v10312, %v10309
    %v10751 = vpack.c.b16 %v10313, %v10310
    %v10752 = vpack.c.b16 %v10317, %v10314
    %v10753 = vpack.c.b16 %v10318, %v10315
    %v10754 = vpack.c.b16 %v10319, %v10316
    %v10755 = vpack.c.b16 %v10323, %v10320
    %v10756 = vpack.c.b16 %v10324, %v10321
    %v10757 = vpack.c.b16 %v10325, %v10322
    %v10758 = vpack.c.b16 %v10329, %v10326
    %v10759 = vpack.c.b16 %v10330, %v10327
    %v10760 = vpack.c.b16 %v10331, %v10328
    %v10761 = vpack.c.b16 %v10335, %v10332
    %v10762 = vpack.c.b16 %v10336, %v10333
    %v10763 = vpack.c.b16 %v10337, %v10334
    %v10764 = vpack.c.b16 %v10341, %v10338
    %v10765 = vpack.c.b16 %v10342, %v10339
    %v10766 = vpack.c.b16 %v10343, %v10340
    %v10767 = vpack.c.b16 %v10347, %v10344
    %v10768 = vpack.c.b16 %v10348, %v10345
    %v10769 = vpack.c.b16 %v10349, %v10346
    %v10770 = vpack.c.b16 %v10353, %v10350
    %v10771 = vpack.c.b16 %v10354, %v10351
    %v10772 = vpack.c.b16 %v10355, %v10352
    %v10773 = vpack.c.b16 %v10359, %v10356
    %v10774 = vpack.c.b16 %v10360, %v10357
    %v10775 = vpack.c.b16 %v10361, %v10358
    %v10776 = vpack.c.b16 %v10365, %v10362
    %v10777 = vpack.c.b16 %v10366, %v10363
    %v10778 = vpack.c.b16 %v10367, %v10364
    %v10779 = vpack.c.b16 %v10371, %v10368
    %v10780 = vpack.c.b16 %v10372, %v10369
    %v10781 = vpack.c.b16 %v10373, %v10370
    %v10782 = vpack.c.b16 %v10377, %v10374
    %v10783 = vpack.c.b16 %v10378, %v10375
    %v10784 = vpack.c.b16 %v10379, %v10376
    %v10785 = vpack.c.b16 %v10383, %v10380
    %v10786 = vpack.c.b16 %v10384, %v10381
    %v10787 = vpack.c.b16 %v10385, %v10382
    %v10788 = vpack.c.b16 %v10389, %v10386
    %v10789 = vpack.c.b16 %v10390, %v10387
    %v10790 = vpack.c.b16 %v10391, %v10388
    %v10791 = vpack.c.b16 %v10395, %v10392
    %v10792 = vpack.c.b16 %v10396, %v10393
    %v10793 = vpack.c.b16 %v10397, %v10394
    %v10794 = vpack.c.b16 %v10401, %v10398
    %v10795 = vpack.c.b16 %v10402, %v10399
    %v10796 = vpack.c.b16 %v10403, %v10400
    %v10797 = vpack.c.b16 %v10407, %v10404
    %v10798 = vpack.c.b16 %v10408, %v10405
    %v10799 = vpack.c.b16 %v10409, %v10406
    %v10800 = vpack.c.b16 %v10413, %v10410
    %v10801 = vpack.c.b16 %v10414, %v10411
    %v10802 = vpack.c.b16 %v10415, %v10412
    %v10803 = vpack.c.b16 %v10419, %v10416
    %v10804 = vpack.c.b16 %v10420, %v10417
    %v10805 = vpack.c.b16 %v10421, %v10418
    %v10806 = vpack.c.b16 %v10425, %v10422
    %v10807 = vpack.c.b16 %v10426, %v10423
    %v10808 = vpack.c.b16 %v10427, %v10424
    %v10809 = vpack.c.b16 %v10431, %v10428
    %v10810 = vpack.c.b16 %v10432, %v10429
    %v10811 = vpack.c.b16 %v10433, %v10430
    %v10812 = vpack.c.b16 %v10437, %v10434
    %v10813 = vpack.c.b16 %v10438, %v10435
    %v10814 = vpack.c.b16 %v10439, %v10436
    %v10815 = vpack.c.b16 %v10443, %v10440
    %v10816 = vpack.c.b16 %v10444, %v10441
    %v10817 = vpack.c.b16 %v10445, %v10442
    %v10818 = vpack.c.b16 %v10449, %v10446
    %v10819 = vpack.c.b16 %v10450, %v10447
    %v10820 = vpack.c.b16 %v10451, %v10448
    %v10821 = vpack.c.b16 %v10455, %v10452
    %v10822 = vpack.c.b16 %v10456, %v10453
    %v10823 = vpack.c.b16 %v10457, %v10454
    %v10824 = vpack.c.b16 %v10461, %v10458
    %v10825 = vpack.c.b16 %v10462, %v10459
    %v10826 = vpack.c.b16 %v10463, %v10460
    %v10827 = vpack.c.b16 %v10467, %v10464
    %v10828 = vpack.c.b16 %v10468, %v10465
    %v10829 = vpack.c.b16 %v10469, %v10466
    %v10830 = vpack.c.b16 %v10473, %v10470
    %v10831 = vpack.c.b16 %v10474, %v10471
    %v10832 = vpack.c.b16 %v10475, %v10472
    %v10833 = vpack.c.b16 %v10479, %v10476
    %v10834 = vpack.c.b16 %v10480, %v10477
    %v10835 = vpack.c.b16 %v10481, %v10478
    %v10836 = vpack.c.b16 %v10485, %v10482
    %v10837 = vpack.c.b16 %v10486, %v10483
    %v10838 = vpack.c.b16 %v10487, %v10484
    %v10839 = vpack.c.b16 %v10491, %v10488
    %v10840 = vpack.c.b16 %v10492, %v10489
    %v10841 = vpack.c.b16 %v10493, %v10490
    %v10842 = vpack.c.b16 %v10497, %v10494
    %v10843 = vpack.c.b16 %v10498, %v10495
    %v10844 = vpack.c.b16 %v10499, %v10496
    %v10845 = vpack.c.b16 %v10503, %v10500
    %v10846 = vpack.c.b16 %v10504, %v10501
    %v10847 = vpack.c.b16 %v10505, %v10502
    %v10848 = vpack.c.b16 %v10509, %v10506
    %v10849 = vpack.c.b16 %v10510, %v10507
    %v10850 = vpack.c.b16 %v10511, %v10508
    %v10851 = vpack.c.b16 %v10515, %v10512
    %v10852 = vpack.c.b16 %v10516, %v10513
    %v10853 = vpack.c.b16 %v10517, %v10514
    %v10854 = vpack.c.b16 %v10521, %v10518
    %v10855 = vpack.c.b16 %v10522, %v10519
    %v10856 = vpack.c.b16 %v10523, %v10520
    %v10857 = vpack.c.b16 %v10527, %v10524
    %v10858 = vpack.c.b16 %v10528, %v10525
    %v10859 = vpack.c.b16 %v10529, %v10526
    %v10860 = vpack.c.b16 %v10533, %v10530
    %v10861 = vpack.c.b16 %v10534, %v10531
    %v10862 = vpack.c.b16 %v10535, %v10532
    %v10863 = vpack.c.b16 %v10539, %v10536
    %v10864 = vpack.c.b16 %v10540, %v10537
    %v10865 = vpack.c.b16 %v10541, %v10538
    %v10866 = vpack.c.b16 %v10545, %v10542
    %v10867 = vpack.c.b16 %v10546, %v10543
    %v10868 = vpack.c.b16 %v10547, %v10544
    %v10869 = vpack.c.b16 %v10551, %v10548
    %v10870 = vpack.c.b16 %v10552, %v10549
    %v10871 = vpack.c.b16 %v10553, %v10550
    %v10872 = vpack.c.b16 %v10557, %v10554
    %v10873 = vpack.c.b16 %v10558, %v10555
    %v10874 = vpack.c.b16 %v10559, %v10556
    %v10875 = vpack.c.b16 %v10563, %v10560
    %v10876 = vpack.c.b16 %v10564, %v10561
    %v10877 = vpack.c.b16 %v10565, %v10562
    %v10878 = vpack.c.b16 %v10569, %v10566
    %v10879 = vpack.c.b16 %v10570, %v10567
    %v10880 = vpack.c.b16 %v10571, %v10568
    %v10881 = vpack.c.b16 %v10575, %v10572
    %v10882 = vpack.c.b16 %v10576, %v10573
    %v10883 = vpack.c.b16 %v10577, %v10574
    %v10884 = vpack.c.b16 %v10581, %v10578
    %v10885 = vpack.c.b16 %v10582, %v10579
    %v10886 = vpack.c.b16 %v10583, %v10580
    %v10887 = vpack.c.b16 %v10587, %v10584
    %v10888 = vpack.c.b16 %v10588, %v10585
    %v10889 = vpack.c.b16 %v10589, %v10586
    %v10890 = vpack.c.b16 %v10593, %v10590
    %v10891 = vpack.c.b16 %v10594, %v10591
    %v10892 = vpack.c.b16 %v10595, %v10592
    %v10893 = vpack.c.b16 %v10599, %v10596
    %v10894 = vpack.c.b16 %v10600, %v10597
    %v10895 = vpack.c.b16 %v10601, %v10598
    %v10896 = vpack.c.b16 %v10605, %v10602
    %v10897 = vpack.c.b16 %v10606, %v10603
    %v10898 = vpack.c.b16 %v10607, %v10604
    %v10899 = vpack.c.b16 %v10611, %v10608
    %v10900 = vpack.c.b16 %v10612, %v10609
    %v10901 = vpack.c.b16 %v10613, %v10610
    %11190 = vmatprep.subr.bf16.mxu0 %v10636
    %11191 = vmatpush1.bf16.msra.mxu0 %v10635
    %11192 = vmatprep.subr.bf16.mxu0 %v10633
    %11193 = vmatpush1.bf16.msra.mxu0 %v10632
    %11194 = vmatprep.subr.bf16.mxu0 %v10630
    %11195 = vmatpush1.bf16.msra.mxu0 %v10629
    %11196 = vmatprep.subr.bf16.mxu0 %v10627
    %11197 = vmatpush1.bf16.msra.mxu0 %v10626
    %11198 = vmatprep.subr.bf16.mxu0 %v10624
    %11199 = vmatpush1.bf16.msra.mxu0 %v10623
    %11200 = vmatprep.subr.bf16.mxu0 %v10621
    %11201 = vmatpush1.bf16.msra.mxu0 %v10620
    %11202 = vmatprep.subr.bf16.mxu0 %v10618
    %11203 = vmatpush1.bf16.msra.mxu0 %v10617
    %11204 = vmatprep.subr.bf16.mxu0 %v10615
    %11205 = vmatpush1.bf16.msra.mxu0 %v10614
    %11206 = vmatprep.subr.bf16.mxu0 %v10660
    %11207 = vmatpush2.bf16.msra.mxu0 %v10659
    %11208 = vmatprep.subr.bf16.mxu0 %v10657
    %11209 = vmatpush2.bf16.msra.mxu0 %v10656
    %11210 = vmatprep.subr.bf16.mxu0 %v10654
    %11211 = vmatpush2.bf16.msra.mxu0 %v10653
    %11212 = vmatprep.subr.bf16.mxu0 %v10651
    %11213 = vmatpush2.bf16.msra.mxu0 %v10650
    %11214 = vmatprep.subr.bf16.mxu0 %v10648
    %11215 = vmatpush2.bf16.msra.mxu0 %v10647
    %11216 = vmatprep.subr.bf16.mxu0 %v10645
    %11217 = vmatpush2.bf16.msra.mxu0 %v10644
    %11218 = vmatprep.subr.bf16.mxu0 %v10642
    %11219 = vmatpush2.bf16.msra.mxu0 %v10641
    %11220 = vmatprep.subr.bf16.mxu0 %v10639
    %11221 = vmatpush2.bf16.msra.mxu0 %v10638
    %11222 = vmatprep.mubr.bf16.mxu0 %v2347
    %11223 = vmatmul.mubr.bf16.gmra.mxu0 %v2346
    %v11224 = vpop.f32.mrf.mxu0
    %v11225 = vadd.f32 0.0, %v11224
    %v11226 = vpop.f32.mrf.mxu0
    %v11227 = vadd.f32 0.0, %v11226
    %v11228 = vpop.f32.mrf.mxu0
    %v11229 = vadd.f32 0.0, %v11228
    %v11230 = vpop.f32.mrf.mxu0
    %v11231 = vadd.f32 0.0, %v11230
    %11232 = vdwg.mxu0
    %11233 = vmatprep.subr.bf16.mxu0 %v10684
    %11234 = vmatpush1.bf16.msra.mxu0 %v10683
    %11235 = vmatprep.subr.bf16.mxu0 %v10681
    %11236 = vmatpush1.bf16.msra.mxu0 %v10680
    %11237 = vmatprep.subr.bf16.mxu0 %v10678
    %11238 = vmatpush1.bf16.msra.mxu0 %v10677
    %11239 = vmatprep.subr.bf16.mxu0 %v10675
    %11240 = vmatpush1.bf16.msra.mxu0 %v10674
    %11241 = vmatprep.subr.bf16.mxu0 %v10672
    %11242 = vmatpush1.bf16.msra.mxu0 %v10671
    %11243 = vmatprep.subr.bf16.mxu0 %v10669
    %11244 = vmatpush1.bf16.msra.mxu0 %v10668
    %11245 = vmatprep.subr.bf16.mxu0 %v10666
    %11246 = vmatpush1.bf16.msra.mxu0 %v10665
    %11247 = vmatprep.subr.bf16.mxu0 %v10663
    %11248 = vmatpush1.bf16.msra.mxu0 %v10662
    %11249 = vmatprep.subr.bf16.mxu0 %v10708
    %11250 = vmatpush2.bf16.msra.mxu0 %v10707
    %11251 = vmatprep.subr.bf16.mxu0 %v10705
    %11252 = vmatpush2.bf16.msra.mxu0 %v10704
    %11253 = vmatprep.subr.bf16.mxu0 %v10702
    %11254 = vmatpush2.bf16.msra.mxu0 %v10701
    %11255 = vmatprep.subr.bf16.mxu0 %v10699
    %11256 = vmatpush2.bf16.msra.mxu0 %v10698
    %11257 = vmatprep.subr.bf16.mxu0 %v10696
    %11258 = vmatpush2.bf16.msra.mxu0 %v10695
    %11259 = vmatprep.subr.bf16.mxu0 %v10693
    %11260 = vmatpush2.bf16.msra.mxu0 %v10692
    %11261 = vmatprep.subr.bf16.mxu0 %v10690
    %11262 = vmatpush2.bf16.msra.mxu0 %v10689
    %11263 = vmatprep.subr.bf16.mxu0 %v10687
    %11264 = vmatpush2.bf16.msra.mxu0 %v10686
    %11265 = vmatprep.mubr.bf16.mxu0 %v2349
    %11266 = vmatmul.mubr.bf16.gmra.mxu0 %v2348
    %v11267 = vpop.f32.mrf.mxu0
    %v11268 = vadd.f32 %v11225, %v11267
    %v11269 = vpop.f32.mrf.mxu0
    %v11270 = vadd.f32 %v11227, %v11269
    %v11271 = vpop.f32.mrf.mxu0
    %v11272 = vadd.f32 %v11229, %v11271
    %v11273 = vpop.f32.mrf.mxu0
    %v11274 = vadd.f32 %v11231, %v11273
    %11275 = vdwg.mxu0
    %11276 = vmatprep.subr.bf16.mxu0 %v10732
    %11277 = vmatpush1.bf16.msra.mxu0 %v10731
    %11278 = vmatprep.subr.bf16.mxu0 %v10729
    %11279 = vmatpush1.bf16.msra.mxu0 %v10728
    %11280 = vmatprep.subr.bf16.mxu0 %v10726
    %11281 = vmatpush1.bf16.msra.mxu0 %v10725
    %11282 = vmatprep.subr.bf16.mxu0 %v10723
    %11283 = vmatpush1.bf16.msra.mxu0 %v10722
    %11284 = vmatprep.subr.bf16.mxu0 %v10720
    %11285 = vmatpush1.bf16.msra.mxu0 %v10719
    %11286 = vmatprep.subr.bf16.mxu0 %v10717
    %11287 = vmatpush1.bf16.msra.mxu0 %v10716
    %11288 = vmatprep.subr.bf16.mxu0 %v10714
    %11289 = vmatpush1.bf16.msra.mxu0 %v10713
    %11290 = vmatprep.subr.bf16.mxu0 %v10711
    %11291 = vmatpush1.bf16.msra.mxu0 %v10710
    %11292 = vmatprep.subr.bf16.mxu0 %v10756
    %11293 = vmatpush2.bf16.msra.mxu0 %v10755
    %11294 = vmatprep.subr.bf16.mxu0 %v10753
    %11295 = vmatpush2.bf16.msra.mxu0 %v10752
    %11296 = vmatprep.subr.bf16.mxu0 %v10750
    %11297 = vmatpush2.bf16.msra.mxu0 %v10749
    %11298 = vmatprep.subr.bf16.mxu0 %v10747
    %11299 = vmatpush2.bf16.msra.mxu0 %v10746
    %11300 = vmatprep.subr.bf16.mxu0 %v10744
    %11301 = vmatpush2.bf16.msra.mxu0 %v10743
    %11302 = vmatprep.subr.bf16.mxu0 %v10741
    %11303 = vmatpush2.bf16.msra.mxu0 %v10740
    %11304 = vmatprep.subr.bf16.mxu0 %v10738
    %11305 = vmatpush2.bf16.msra.mxu0 %v10737
    %11306 = vmatprep.subr.bf16.mxu0 %v10735
    %11307 = vmatpush2.bf16.msra.mxu0 %v10734
    %11308 = vmatprep.mubr.bf16.mxu0 %v2351
    %11309 = vmatmul.mubr.bf16.gmra.mxu0 %v2350
    %v11310 = vpop.f32.mrf.mxu0
    %v11311 = vadd.f32 %v11268, %v11310
    %v11312 = vpop.f32.mrf.mxu0
    %v11313 = vadd.f32 %v11270, %v11312
    %v11314 = vpop.f32.mrf.mxu0
    %v11315 = vadd.f32 %v11272, %v11314
    %v11316 = vpop.f32.mrf.mxu0
    %v11317 = vadd.f32 %v11274, %v11316
    %11318 = vdwg.mxu0
    %11319 = vmatprep.subr.bf16.mxu0 %v10780
    %11320 = vmatpush1.bf16.msra.mxu0 %v10779
    %11321 = vmatprep.subr.bf16.mxu0 %v10777
    %11322 = vmatpush1.bf16.msra.mxu0 %v10776
    %11323 = vmatprep.subr.bf16.mxu0 %v10774
    %11324 = vmatpush1.bf16.msra.mxu0 %v10773
    %11325 = vmatprep.subr.bf16.mxu0 %v10771
    %11326 = vmatpush1.bf16.msra.mxu0 %v10770
    %11327 = vmatprep.subr.bf16.mxu0 %v10768
    %11328 = vmatpush1.bf16.msra.mxu0 %v10767
    %11329 = vmatprep.subr.bf16.mxu0 %v10765
    %11330 = vmatpush1.bf16.msra.mxu0 %v10764
    %11331 = vmatprep.subr.bf16.mxu0 %v10762
    %11332 = vmatpush1.bf16.msra.mxu0 %v10761
    %11333 = vmatprep.subr.bf16.mxu0 %v10759
    %11334 = vmatpush1.bf16.msra.mxu0 %v10758
    %11335 = vmatprep.subr.bf16.mxu0 %v10804
    %11336 = vmatpush2.bf16.msra.mxu0 %v10803
    %11337 = vmatprep.subr.bf16.mxu0 %v10801
    %11338 = vmatpush2.bf16.msra.mxu0 %v10800
    %11339 = vmatprep.subr.bf16.mxu0 %v10798
    %11340 = vmatpush2.bf16.msra.mxu0 %v10797
    %11341 = vmatprep.subr.bf16.mxu0 %v10795
    %11342 = vmatpush2.bf16.msra.mxu0 %v10794
    %11343 = vmatprep.subr.bf16.mxu0 %v10792
    %11344 = vmatpush2.bf16.msra.mxu0 %v10791
    %11345 = vmatprep.subr.bf16.mxu0 %v10789
    %11346 = vmatpush2.bf16.msra.mxu0 %v10788
    %11347 = vmatprep.subr.bf16.mxu0 %v10786
    %11348 = vmatpush2.bf16.msra.mxu0 %v10785
    %11349 = vmatprep.subr.bf16.mxu0 %v10783
    %11350 = vmatpush2.bf16.msra.mxu0 %v10782
    %11351 = vmatprep.mubr.bf16.mxu0 %v2353
    %11352 = vmatmul.mubr.bf16.gmra.mxu0 %v2352
    %v11353 = vpop.f32.mrf.mxu0
    %v11354 = vadd.f32 %v11311, %v11353
    %v11355 = vpop.f32.mrf.mxu0
    %v11356 = vadd.f32 %v11313, %v11355
    %v11357 = vpop.f32.mrf.mxu0
    %v11358 = vadd.f32 %v11315, %v11357
    %v11359 = vpop.f32.mrf.mxu0
    %v11360 = vadd.f32 %v11317, %v11359
    %11361 = vdwg.mxu0
    %11362 = vmatprep.subr.bf16.mxu0 %v10828
    %11363 = vmatpush1.bf16.msra.mxu0 %v10827
    %11364 = vmatprep.subr.bf16.mxu0 %v10825
    %11365 = vmatpush1.bf16.msra.mxu0 %v10824
    %11366 = vmatprep.subr.bf16.mxu0 %v10822
    %11367 = vmatpush1.bf16.msra.mxu0 %v10821
    %11368 = vmatprep.subr.bf16.mxu0 %v10819
    %11369 = vmatpush1.bf16.msra.mxu0 %v10818
    %11370 = vmatprep.subr.bf16.mxu0 %v10816
    %11371 = vmatpush1.bf16.msra.mxu0 %v10815
    %11372 = vmatprep.subr.bf16.mxu0 %v10813
    %11373 = vmatpush1.bf16.msra.mxu0 %v10812
    %11374 = vmatprep.subr.bf16.mxu0 %v10810
    %11375 = vmatpush1.bf16.msra.mxu0 %v10809
    %11376 = vmatprep.subr.bf16.mxu0 %v10807
    %11377 = vmatpush1.bf16.msra.mxu0 %v10806
    %11378 = vmatprep.subr.bf16.mxu0 %v10852
    %11379 = vmatpush2.bf16.msra.mxu0 %v10851
    %11380 = vmatprep.subr.bf16.mxu0 %v10849
    %11381 = vmatpush2.bf16.msra.mxu0 %v10848
    %11382 = vmatprep.subr.bf16.mxu0 %v10846
    %11383 = vmatpush2.bf16.msra.mxu0 %v10845
    %11384 = vmatprep.subr.bf16.mxu0 %v10843
    %11385 = vmatpush2.bf16.msra.mxu0 %v10842
    %11386 = vmatprep.subr.bf16.mxu0 %v10840
    %11387 = vmatpush2.bf16.msra.mxu0 %v10839
    %11388 = vmatprep.subr.bf16.mxu0 %v10837
    %11389 = vmatpush2.bf16.msra.mxu0 %v10836
    %11390 = vmatprep.subr.bf16.mxu0 %v10834
    %11391 = vmatpush2.bf16.msra.mxu0 %v10833
    %11392 = vmatprep.subr.bf16.mxu0 %v10831
    %11393 = vmatpush2.bf16.msra.mxu0 %v10830
    %11394 = vmatprep.mubr.bf16.mxu0 %v2355
    %11395 = vmatmul.mubr.bf16.gmra.mxu0 %v2354
    %v11396 = vpop.f32.mrf.mxu0
    %v11397 = vadd.f32 %v11354, %v11396
    %v11398 = vpop.f32.mrf.mxu0
    %v11399 = vadd.f32 %v11356, %v11398
    %v11400 = vpop.f32.mrf.mxu0
    %v11401 = vadd.f32 %v11358, %v11400
    %v11402 = vpop.f32.mrf.mxu0
    %v11403 = vadd.f32 %v11360, %v11402
    %11404 = vdwg.mxu0
    %11405 = vmatprep.subr.bf16.mxu0 %v10876
    %11406 = vmatpush1.bf16.msra.mxu0 %v10875
    %11407 = vmatprep.subr.bf16.mxu0 %v10873
    %11408 = vmatpush1.bf16.msra.mxu0 %v10872
    %11409 = vmatprep.subr.bf16.mxu0 %v10870
    %11410 = vmatpush1.bf16.msra.mxu0 %v10869
    %11411 = vmatprep.subr.bf16.mxu0 %v10867
    %11412 = vmatpush1.bf16.msra.mxu0 %v10866
    %11413 = vmatprep.subr.bf16.mxu0 %v10864
    %11414 = vmatpush1.bf16.msra.mxu0 %v10863
    %11415 = vmatprep.subr.bf16.mxu0 %v10861
    %11416 = vmatpush1.bf16.msra.mxu0 %v10860
    %11417 = vmatprep.subr.bf16.mxu0 %v10858
    %11418 = vmatpush1.bf16.msra.mxu0 %v10857
    %11419 = vmatprep.subr.bf16.mxu0 %v10855
    %11420 = vmatpush1.bf16.msra.mxu0 %v10854
    %11421 = vmatprep.subr.bf16.mxu0 %v10900
    %11422 = vmatpush2.bf16.msra.mxu0 %v10899
    %11423 = vmatprep.subr.bf16.mxu0 %v10897
    %11424 = vmatpush2.bf16.msra.mxu0 %v10896
    %11425 = vmatprep.subr.bf16.mxu0 %v10894
    %11426 = vmatpush2.bf16.msra.mxu0 %v10893
    %11427 = vmatprep.subr.bf16.mxu0 %v10891
    %11428 = vmatpush2.bf16.msra.mxu0 %v10890
    %11429 = vmatprep.subr.bf16.mxu0 %v10888
    %11430 = vmatpush2.bf16.msra.mxu0 %v10887
    %11431 = vmatprep.subr.bf16.mxu0 %v10885
    %11432 = vmatpush2.bf16.msra.mxu0 %v10884
    %11433 = vmatprep.subr.bf16.mxu0 %v10882
    %11434 = vmatpush2.bf16.msra.mxu0 %v10881
    %11435 = vmatprep.subr.bf16.mxu0 %v10879
    %11436 = vmatpush2.bf16.msra.mxu0 %v10878
    %11437 = vmatprep.mubr.bf16.mxu0 %v2357
    %11438 = vmatmul.mubr.bf16.gmra.mxu0 %v2356
    %v11439 = vpop.f32.mrf.mxu0
    %v11440 = vadd.f32 %v11397, %v11439
    %v11441 = vpop.f32.mrf.mxu0
    %v11442 = vadd.f32 %v11399, %v11441
    %v11443 = vpop.f32.mrf.mxu0
    %v11444 = vadd.f32 %v11401, %v11443
    %v11445 = vpop.f32.mrf.mxu0
    %v11446 = vadd.f32 %v11403, %v11445
    %11447 = vdwg.mxu0
    %11448 = vmatprep.subr.bf16.mxu0 0
    %11449 = vmatpush1.bf16.msra.mxu0 %v10637
    %11450 = vmatprep.subr.bf16.mxu0 0
    %11451 = vmatpush1.bf16.msra.mxu0 %v10634
    %11452 = vmatprep.subr.bf16.mxu0 0
    %11453 = vmatpush1.bf16.msra.mxu0 %v10631
    %11454 = vmatprep.subr.bf16.mxu0 0
    %11455 = vmatpush1.bf16.msra.mxu0 %v10628
    %11456 = vmatprep.subr.bf16.mxu0 0
    %11457 = vmatpush1.bf16.msra.mxu0 %v10625
    %11458 = vmatprep.subr.bf16.mxu0 0
    %11459 = vmatpush1.bf16.msra.mxu0 %v10622
    %11460 = vmatprep.subr.bf16.mxu0 0
    %11461 = vmatpush1.bf16.msra.mxu0 %v10619
    %11462 = vmatprep.subr.bf16.mxu0 0
    %11463 = vmatpush1.bf16.msra.mxu0 %v10616
    %11464 = vmatprep.subr.bf16.mxu0 0
    %11465 = vmatpush2.bf16.msra.mxu0 %v10661
    %11466 = vmatprep.subr.bf16.mxu0 0
    %11467 = vmatpush2.bf16.msra.mxu0 %v10658
    %11468 = vmatprep.subr.bf16.mxu0 0
    %11469 = vmatpush2.bf16.msra.mxu0 %v10655
    %11470 = vmatprep.subr.bf16.mxu0 0
    %11471 = vmatpush2.bf16.msra.mxu0 %v10652
    %11472 = vmatprep.subr.bf16.mxu0 0
    %11473 = vmatpush2.bf16.msra.mxu0 %v10649
    %11474 = vmatprep.subr.bf16.mxu0 0
    %11475 = vmatpush2.bf16.msra.mxu0 %v10646
    %11476 = vmatprep.subr.bf16.mxu0 0
    %11477 = vmatpush2.bf16.msra.mxu0 %v10643
    %11478 = vmatprep.subr.bf16.mxu0 0
    %11479 = vmatpush2.bf16.msra.mxu0 %v10640
    %11480 = vmatprep.mubr.bf16.mxu0 %v2347
    %11481 = vmatmul.mubr.bf16.gmra.mxu0 %v2346
    %v11482 = vpop.f32.mrf.mxu0
    %v11483 = vadd.f32 0.0, %v11482
    %v11484 = vpop.f32.mrf.mxu0
    %v11485 = vpop.f32.mrf.mxu0
    %v11486 = vadd.f32 0.0, %v11485
    %v11487 = vpop.f32.mrf.mxu0
    %11488 = vdwg.mxu0
    %11489 = vmatprep.subr.bf16.mxu0 0
    %11490 = vmatpush1.bf16.msra.mxu0 %v10685
    %11491 = vmatprep.subr.bf16.mxu0 0
    %11492 = vmatpush1.bf16.msra.mxu0 %v10682
    %11493 = vmatprep.subr.bf16.mxu0 0
    %11494 = vmatpush1.bf16.msra.mxu0 %v10679
    %11495 = vmatprep.subr.bf16.mxu0 0
    %11496 = vmatpush1.bf16.msra.mxu0 %v10676
    %11497 = vmatprep.subr.bf16.mxu0 0
    %11498 = vmatpush1.bf16.msra.mxu0 %v10673
    %11499 = vmatprep.subr.bf16.mxu0 0
    %11500 = vmatpush1.bf16.msra.mxu0 %v10670
    %11501 = vmatprep.subr.bf16.mxu0 0
    %11502 = vmatpush1.bf16.msra.mxu0 %v10667
    %11503 = vmatprep.subr.bf16.mxu0 0
    %11504 = vmatpush1.bf16.msra.mxu0 %v10664
    %11505 = vmatprep.subr.bf16.mxu0 0
    %11506 = vmatpush2.bf16.msra.mxu0 %v10709
    %11507 = vmatprep.subr.bf16.mxu0 0
    %11508 = vmatpush2.bf16.msra.mxu0 %v10706
    %11509 = vmatprep.subr.bf16.mxu0 0
    %11510 = vmatpush2.bf16.msra.mxu0 %v10703
    %11511 = vmatprep.subr.bf16.mxu0 0
    %11512 = vmatpush2.bf16.msra.mxu0 %v10700
    %11513 = vmatprep.subr.bf16.mxu0 0
    %11514 = vmatpush2.bf16.msra.mxu0 %v10697
    %11515 = vmatprep.subr.bf16.mxu0 0
    %11516 = vmatpush2.bf16.msra.mxu0 %v10694
    %11517 = vmatprep.subr.bf16.mxu0 0
    %11518 = vmatpush2.bf16.msra.mxu0 %v10691
    %11519 = vmatprep.subr.bf16.mxu0 0
    %11520 = vmatpush2.bf16.msra.mxu0 %v10688
    %11521 = vmatprep.mubr.bf16.mxu0 %v2349
    %11522 = vmatmul.mubr.bf16.gmra.mxu0 %v2348
    %v11523 = vpop.f32.mrf.mxu0
    %v11524 = vadd.f32 %v11483, %v11523
    %v11525 = vpop.f32.mrf.mxu0
    %v11526 = vpop.f32.mrf.mxu0
    %v11527 = vadd.f32 %v11486, %v11526
    %v11528 = vpop.f32.mrf.mxu0
    %11529 = vdwg.mxu0
    %11530 = vmatprep.subr.bf16.mxu0 0
    %11531 = vmatpush1.bf16.msra.mxu0 %v10733
    %11532 = vmatprep.subr.bf16.mxu0 0
    %11533 = vmatpush1.bf16.msra.mxu0 %v10730
    %11534 = vmatprep.subr.bf16.mxu0 0
    %11535 = vmatpush1.bf16.msra.mxu0 %v10727
    %11536 = vmatprep.subr.bf16.mxu0 0
    %11537 = vmatpush1.bf16.msra.mxu0 %v10724
    %11538 = vmatprep.subr.bf16.mxu0 0
    %11539 = vmatpush1.bf16.msra.mxu0 %v10721
    %11540 = vmatprep.subr.bf16.mxu0 0
    %11541 = vmatpush1.bf16.msra.mxu0 %v10718
    %11542 = vmatprep.subr.bf16.mxu0 0
    %11543 = vmatpush1.bf16.msra.mxu0 %v10715
    %11544 = vmatprep.subr.bf16.mxu0 0
    %11545 = vmatpush1.bf16.msra.mxu0 %v10712
    %11546 = vmatprep.subr.bf16.mxu0 0
    %11547 = vmatpush2.bf16.msra.mxu0 %v10757
    %11548 = vmatprep.subr.bf16.mxu0 0
    %11549 = vmatpush2.bf16.msra.mxu0 %v10754
    %11550 = vmatprep.subr.bf16.mxu0 0
    %11551 = vmatpush2.bf16.msra.mxu0 %v10751
    %11552 = vmatprep.subr.bf16.mxu0 0
    %11553 = vmatpush2.bf16.msra.mxu0 %v10748
    %11554 = vmatprep.subr.bf16.mxu0 0
    %11555 = vmatpush2.bf16.msra.mxu0 %v10745
    %11556 = vmatprep.subr.bf16.mxu0 0
    %11557 = vmatpush2.bf16.msra.mxu0 %v10742
    %11558 = vmatprep.subr.bf16.mxu0 0
    %11559 = vmatpush2.bf16.msra.mxu0 %v10739
    %11560 = vmatprep.subr.bf16.mxu0 0
    %11561 = vmatpush2.bf16.msra.mxu0 %v10736
    %11562 = vmatprep.mubr.bf16.mxu0 %v2351
    %11563 = vmatmul.mubr.bf16.gmra.mxu0 %v2350
    %v11564 = vpop.f32.mrf.mxu0
    %v11565 = vadd.f32 %v11524, %v11564
    %v11566 = vpop.f32.mrf.mxu0
    %v11567 = vpop.f32.mrf.mxu0
    %v11568 = vadd.f32 %v11527, %v11567
    %v11569 = vpop.f32.mrf.mxu0
    %11570 = vdwg.mxu0
    %11571 = vmatprep.subr.bf16.mxu0 0
    %11572 = vmatpush1.bf16.msra.mxu0 %v10781
    %11573 = vmatprep.subr.bf16.mxu0 0
    %11574 = vmatpush1.bf16.msra.mxu0 %v10778
    %11575 = vmatprep.subr.bf16.mxu0 0
    %11576 = vmatpush1.bf16.msra.mxu0 %v10775
    %11577 = vmatprep.subr.bf16.mxu0 0
    %11578 = vmatpush1.bf16.msra.mxu0 %v10772
    %11579 = vmatprep.subr.bf16.mxu0 0
    %11580 = vmatpush1.bf16.msra.mxu0 %v10769
    %11581 = vmatprep.subr.bf16.mxu0 0
    %11582 = vmatpush1.bf16.msra.mxu0 %v10766
    %11583 = vmatprep.subr.bf16.mxu0 0
    %11584 = vmatpush1.bf16.msra.mxu0 %v10763
    %11585 = vmatprep.subr.bf16.mxu0 0
    %11586 = vmatpush1.bf16.msra.mxu0 %v10760
    %11587 = vmatprep.subr.bf16.mxu0 0
    %11588 = vmatpush2.bf16.msra.mxu0 %v10805
    %11589 = vmatprep.subr.bf16.mxu0 0
    %11590 = vmatpush2.bf16.msra.mxu0 %v10802
    %11591 = vmatprep.subr.bf16.mxu0 0
    %11592 = vmatpush2.bf16.msra.mxu0 %v10799
    %11593 = vmatprep.subr.bf16.mxu0 0
    %11594 = vmatpush2.bf16.msra.mxu0 %v10796
    %11595 = vmatprep.subr.bf16.mxu0 0
    %11596 = vmatpush2.bf16.msra.mxu0 %v10793
    %11597 = vmatprep.subr.bf16.mxu0 0
    %11598 = vmatpush2.bf16.msra.mxu0 %v10790
    %11599 = vmatprep.subr.bf16.mxu0 0
    %11600 = vmatpush2.bf16.msra.mxu0 %v10787
    %11601 = vmatprep.subr.bf16.mxu0 0
    %11602 = vmatpush2.bf16.msra.mxu0 %v10784
    %11603 = vmatprep.mubr.bf16.mxu0 %v2353
    %11604 = vmatmul.mubr.bf16.gmra.mxu0 %v2352
    %v11605 = vpop.f32.mrf.mxu0
    %v11606 = vadd.f32 %v11565, %v11605
    %v11607 = vpop.f32.mrf.mxu0
    %v11608 = vpop.f32.mrf.mxu0
    %v11609 = vadd.f32 %v11568, %v11608
    %v11610 = vpop.f32.mrf.mxu0
    %11611 = vdwg.mxu0
    %11612 = vmatprep.subr.bf16.mxu0 0
    %11613 = vmatpush1.bf16.msra.mxu0 %v10829
    %11614 = vmatprep.subr.bf16.mxu0 0
    %11615 = vmatpush1.bf16.msra.mxu0 %v10826
    %11616 = vmatprep.subr.bf16.mxu0 0
    %11617 = vmatpush1.bf16.msra.mxu0 %v10823
    %11618 = vmatprep.subr.bf16.mxu0 0
    %11619 = vmatpush1.bf16.msra.mxu0 %v10820
    %11620 = vmatprep.subr.bf16.mxu0 0
    %11621 = vmatpush1.bf16.msra.mxu0 %v10817
    %11622 = vmatprep.subr.bf16.mxu0 0
    %11623 = vmatpush1.bf16.msra.mxu0 %v10814
    %11624 = vmatprep.subr.bf16.mxu0 0
    %11625 = vmatpush1.bf16.msra.mxu0 %v10811
    %11626 = vmatprep.subr.bf16.mxu0 0
    %11627 = vmatpush1.bf16.msra.mxu0 %v10808
    %11628 = vmatprep.subr.bf16.mxu0 0
    %11629 = vmatpush2.bf16.msra.mxu0 %v10853
    %11630 = vmatprep.subr.bf16.mxu0 0
    %11631 = vmatpush2.bf16.msra.mxu0 %v10850
    %11632 = vmatprep.subr.bf16.mxu0 0
    %11633 = vmatpush2.bf16.msra.mxu0 %v10847
    %11634 = vmatprep.subr.bf16.mxu0 0
    %11635 = vmatpush2.bf16.msra.mxu0 %v10844
    %11636 = vmatprep.subr.bf16.mxu0 0
    %11637 = vmatpush2.bf16.msra.mxu0 %v10841
    %11638 = vmatprep.subr.bf16.mxu0 0
    %11639 = vmatpush2.bf16.msra.mxu0 %v10838
    %11640 = vmatprep.subr.bf16.mxu0 0
    %11641 = vmatpush2.bf16.msra.mxu0 %v10835
    %11642 = vmatprep.subr.bf16.mxu0 0
    %11643 = vmatpush2.bf16.msra.mxu0 %v10832
    %11644 = vmatprep.mubr.bf16.mxu0 %v2355
    %11645 = vmatmul.mubr.bf16.gmra.mxu0 %v2354
    %v11646 = vpop.f32.mrf.mxu0
    %v11647 = vadd.f32 %v11606, %v11646
    %v11648 = vpop.f32.mrf.mxu0
    %v11649 = vpop.f32.mrf.mxu0
    %v11650 = vadd.f32 %v11609, %v11649
    %v11651 = vpop.f32.mrf.mxu0
    %11652 = vdwg.mxu0
    %11653 = vmatprep.subr.bf16.mxu0 0
    %11654 = vmatpush1.bf16.msra.mxu0 %v10877
    %11655 = vmatprep.subr.bf16.mxu0 0
    %11656 = vmatpush1.bf16.msra.mxu0 %v10874
    %11657 = vmatprep.subr.bf16.mxu0 0
    %11658 = vmatpush1.bf16.msra.mxu0 %v10871
    %11659 = vmatprep.subr.bf16.mxu0 0
    %11660 = vmatpush1.bf16.msra.mxu0 %v10868
    %11661 = vmatprep.subr.bf16.mxu0 0
    %11662 = vmatpush1.bf16.msra.mxu0 %v10865
    %11663 = vmatprep.subr.bf16.mxu0 0
    %11664 = vmatpush1.bf16.msra.mxu0 %v10862
    %11665 = vmatprep.subr.bf16.mxu0 0
    %11666 = vmatpush1.bf16.msra.mxu0 %v10859
    %11667 = vmatprep.subr.bf16.mxu0 0
    %11668 = vmatpush1.bf16.msra.mxu0 %v10856
    %11669 = vmatprep.subr.bf16.mxu0 0
    %11670 = vmatpush2.bf16.msra.mxu0 %v10901
    %11671 = vmatprep.subr.bf16.mxu0 0
    %11672 = vmatpush2.bf16.msra.mxu0 %v10898
    %11673 = vmatprep.subr.bf16.mxu0 0
    %11674 = vmatpush2.bf16.msra.mxu0 %v10895
    %11675 = vmatprep.subr.bf16.mxu0 0
    %11676 = vmatpush2.bf16.msra.mxu0 %v10892
    %11677 = vmatprep.subr.bf16.mxu0 0
    %11678 = vmatpush2.bf16.msra.mxu0 %v10889
    %11679 = vmatprep.subr.bf16.mxu0 0
    %11680 = vmatpush2.bf16.msra.mxu0 %v10886
    %11681 = vmatprep.subr.bf16.mxu0 0
    %11682 = vmatpush2.bf16.msra.mxu0 %v10883
    %11683 = vmatprep.subr.bf16.mxu0 0
    %11684 = vmatpush2.bf16.msra.mxu0 %v10880
    %11685 = vmatprep.mubr.bf16.mxu0 %v2357
    %11686 = vmatmul.mubr.bf16.gmra.mxu0 %v2356
    %v11687 = vpop.f32.mrf.mxu0
    %v11688 = vadd.f32 %v11647, %v11687
    %v11689 = vpop.f32.mrf.mxu0
    %v11690 = vpop.f32.mrf.mxu0
    %v11691 = vadd.f32 %v11650, %v11690
    %v11692 = vpop.f32.mrf.mxu0
    %11693 = vdwg.mxu0
    %v11694 = vmax.f32 %v9264, %v11440
    %v11695 = vmax.f32 %v9265, %v11442
    %v11696 = vmax.f32 %v9266, %v11688
    %v11697 = vmax.f32 %v9267, %v11444
    %v11698 = vmax.f32 %v9268, %v11446
    %v11699 = vmax.f32 %v9269, %v11691
    %v11700 = vld [vmem:[#allocation8] sm:$0x7]
    %v11702 = vlaneseq
    %v11703 = vshrl.u32 %v11702, 7
    %v11704 = vsub.s32 0, %v11703
    %v11705 = vrot.slane %v11700, %v11704
    %v11706 = vlaneseq
    %v11707 = vshrl.u32 %v11706, 7
    %v11708 = vsub.s32 1, %v11707
    %v11709 = vrot.slane %v11700, %v11708
    %v11710 = vlaneseq
    %v11711 = vshrl.u32 %v11710, 7
    %v11712 = vsub.s32 2, %v11711
    %v11713 = vrot.slane %v11700, %v11712
    %v11717 = vadd.f32 %v11694, %v11705
    %v11718 = vadd.f32 %v11695, %v11709
    %v11719 = vadd.f32 %v11696, %v11713
    %v11720 = vadd.f32 %v11697, %v11705
    %v11721 = vadd.f32 %v11698, %v11709
    %v11722 = vadd.f32 %v11699, %v11713
    %v11723 = vmax.f32 %v11717, 0.0
    %v11724 = vmax.f32 %v11718, 0.0
    %v11725 = vmax.f32 %v11719, 0.0
    %v11726 = vmax.f32 %v11720, 0.0
    %v11727 = vmax.f32 %v11721, 0.0
    %v11728 = vmax.f32 %v11722, 0.0
    %v11729 = vpack.c.bf16 %v11726, %v11723
    %v11730 = vpack.c.bf16 %v11727, %v11724
    %v11731 = vpack.c.bf16 %v11728, %v11725
    %v11732 = vld [vmem:[#allocation10] sm:$0xf]
    %v11733 = vld [vmem:[#allocation10 + $0x4] sm:$0xf]
    %v11734 = vld [vmem:[#allocation10 + $0x8] sm:$0xf]
    %v11735 = vld [vmem:[#allocation10 + $0xc] sm:$0xf]
    %v11736 = vld [vmem:[#allocation10 + $0x10] sm:$0xf]
    %v11737 = vld [vmem:[#allocation10 + $0x14] sm:$0xf]
    %v11738 = vld [vmem:[#allocation10 + $0x18] sm:$0xf]
    %v11739 = vld [vmem:[#allocation10 + $0x1c] sm:$0xf]
    %v11740 = vld [vmem:[#allocation10 + $0x20] sm:$0xf]
    %v11741 = vld [vmem:[#allocation10 + $0x24] sm:$0xf]
    %v11742 = vld [vmem:[#allocation10 + $0x28] sm:$0xf]
    %v11743 = vld [vmem:[#allocation10 + $0x2c] sm:$0xf]
    %v11744 = vld [vmem:[#allocation10 + $0x30] sm:$0xf]
    %v11745 = vld [vmem:[#allocation10 + $0x34] sm:$0xf]
    %v11746 = vld [vmem:[#allocation10 + $0x38] sm:$0xf]
    %v11747 = vld [vmem:[#allocation10 + $0x3c] sm:$0xf]
    %v11748 = vld [vmem:[#allocation10 + $0x40] sm:$0xf]
    %v11749 = vld [vmem:[#allocation10 + $0x44] sm:$0xf]
    %v11750 = vld [vmem:[#allocation10 + $0x48] sm:$0xf]
    %v11751 = vld [vmem:[#allocation10 + $0x4c] sm:$0xf]
    %v11752 = vld [vmem:[#allocation10 + $0x50] sm:$0xf]
    %v11753 = vld [vmem:[#allocation10 + $0x54] sm:$0xf]
    %v11754 = vld [vmem:[#allocation10 + $0x58] sm:$0xf]
    %v11755 = vld [vmem:[#allocation10 + $0x5c] sm:$0xf]
    %v11756 = vld [vmem:[#allocation10 + $0x60] sm:$0xf]
    %v11757 = vld [vmem:[#allocation10 + $0x64] sm:$0xf]
    %v11758 = vld [vmem:[#allocation10 + $0x68] sm:$0xf]
    %v11759 = vld [vmem:[#allocation10 + $0x6c] sm:$0xf]
    %v11760 = vld [vmem:[#allocation10 + $0x70] sm:$0xf]
    %v11761 = vld [vmem:[#allocation10 + $0x74] sm:$0xf]
    %v11762 = vld [vmem:[#allocation10 + $0x78] sm:$0xf]
    %v11763 = vld [vmem:[#allocation10 + $0x7c] sm:$0xf]
    %v11764 = vld [vmem:[#allocation10 + $0x80] sm:$0xf]
    %v11765 = vld [vmem:[#allocation10 + $0x84] sm:$0xf]
    %v11766 = vld [vmem:[#allocation10 + $0x88] sm:$0xf]
    %v11767 = vld [vmem:[#allocation10 + $0x8c] sm:$0xf]
    %v11768 = vld [vmem:[#allocation10 + $0x90] sm:$0xf]
    %v11769 = vld [vmem:[#allocation10 + $0x94] sm:$0xf]
    %v11770 = vld [vmem:[#allocation10 + $0x98] sm:$0xf]
    %v11771 = vld [vmem:[#allocation10 + $0x9c] sm:$0xf]
    %v11772 = vld [vmem:[#allocation10 + $0xa0] sm:$0xf]
    %v11773 = vld [vmem:[#allocation10 + $0xa4] sm:$0xf]
    %v11774 = vld [vmem:[#allocation10 + $0xa8] sm:$0xf]
    %v11775 = vld [vmem:[#allocation10 + $0xac] sm:$0xf]
    %v11776 = vld [vmem:[#allocation10 + $0xb0] sm:$0xf]
    %v11777 = vld [vmem:[#allocation10 + $0xb4] sm:$0xf]
    %v11778 = vld [vmem:[#allocation10 + $0xb8] sm:$0xf]
    %v11779 = vld [vmem:[#allocation10 + $0xbc] sm:$0xf]
    %v11780 = vld [vmem:[#allocation11] sm:$0x1]
    %v11782 = vlaneseq
    %v11783 = vshrl.u32 %v11782, 7
    %v11784 = vsub.s32 0, %v11783
    %v11785 = vrot.slane %v11780, %v11784
    %v11835 = vunpack.c.l.b16 %v11732
    %v11836 = vunpack.c.l.b16 %v11733
    %v11837 = vunpack.c.l.b16 %v11734
    %v11838 = vunpack.c.l.b16 %v11735
    %v11839 = vunpack.c.l.b16 %v11736
    %v11840 = vunpack.c.l.b16 %v11737
    %v11841 = vunpack.c.l.b16 %v11738
    %v11842 = vunpack.c.l.b16 %v11739
    %v11843 = vunpack.c.l.b16 %v11740
    %v11844 = vunpack.c.l.b16 %v11741
    %v11845 = vunpack.c.l.b16 %v11742
    %v11846 = vunpack.c.l.b16 %v11743
    %v11847 = vunpack.c.l.b16 %v11744
    %v11848 = vunpack.c.l.b16 %v11745
    %v11849 = vunpack.c.l.b16 %v11746
    %v11850 = vunpack.c.l.b16 %v11747
    %v11851 = vunpack.c.l.b16 %v11748
    %v11852 = vunpack.c.l.b16 %v11749
    %v11853 = vunpack.c.l.b16 %v11750
    %v11854 = vunpack.c.l.b16 %v11751
    %v11855 = vunpack.c.l.b16 %v11752
    %v11856 = vunpack.c.l.b16 %v11753
    %v11857 = vunpack.c.l.b16 %v11754
    %v11858 = vunpack.c.l.b16 %v11755
    %v11859 = vunpack.c.l.b16 %v11756
    %v11860 = vunpack.c.l.b16 %v11757
    %v11861 = vunpack.c.l.b16 %v11758
    %v11862 = vunpack.c.l.b16 %v11759
    %v11863 = vunpack.c.l.b16 %v11760
    %v11864 = vunpack.c.l.b16 %v11761
    %v11865 = vunpack.c.l.b16 %v11762
    %v11866 = vunpack.c.l.b16 %v11763
    %v11867 = vunpack.c.l.b16 %v11764
    %v11868 = vunpack.c.l.b16 %v11765
    %v11869 = vunpack.c.l.b16 %v11766
    %v11870 = vunpack.c.l.b16 %v11767
    %v11871 = vunpack.c.l.b16 %v11768
    %v11872 = vunpack.c.l.b16 %v11769
    %v11873 = vunpack.c.l.b16 %v11770
    %v11874 = vunpack.c.l.b16 %v11771
    %v11875 = vunpack.c.l.b16 %v11772
    %v11876 = vunpack.c.l.b16 %v11773
    %v11877 = vunpack.c.l.b16 %v11774
    %v11878 = vunpack.c.l.b16 %v11775
    %v11879 = vunpack.c.l.b16 %v11776
    %v11880 = vunpack.c.l.b16 %v11777
    %v11881 = vunpack.c.l.b16 %v11778
    %v11882 = vunpack.c.l.b16 %v11779
    %v11883 = vpack.c.b16 %v11836, %v11835
    %v11884 = vpack.c.b16 %v11838, %v11837
    %v11885 = vpack.c.b16 %v11840, %v11839
    %v11886 = vpack.c.b16 %v11842, %v11841
    %v11887 = vpack.c.b16 %v11844, %v11843
    %v11888 = vpack.c.b16 %v11846, %v11845
    %v11889 = vpack.c.b16 %v11848, %v11847
    %v11890 = vpack.c.b16 %v11850, %v11849
    %v11891 = vpack.c.b16 %v11852, %v11851
    %v11892 = vpack.c.b16 %v11854, %v11853
    %v11893 = vpack.c.b16 %v11856, %v11855
    %v11894 = vpack.c.b16 %v11858, %v11857
    %v11895 = vpack.c.b16 %v11860, %v11859
    %v11896 = vpack.c.b16 %v11862, %v11861
    %v11897 = vpack.c.b16 %v11864, %v11863
    %v11898 = vpack.c.b16 %v11866, %v11865
    %v11899 = vpack.c.b16 %v11868, %v11867
    %v11900 = vpack.c.b16 %v11870, %v11869
    %v11901 = vpack.c.b16 %v11872, %v11871
    %v11902 = vpack.c.b16 %v11874, %v11873
    %v11903 = vpack.c.b16 %v11876, %v11875
    %v11904 = vpack.c.b16 %v11878, %v11877
    %v11905 = vpack.c.b16 %v11880, %v11879
    %v11906 = vpack.c.b16 %v11882, %v11881
    %11931 = vmatprep.subr.bf16.mxu0 0
    %11932 = vmatpush1.bf16.msra.mxu0 %v11890
    %11933 = vmatprep.subr.bf16.mxu0 0
    %11934 = vmatpush1.bf16.msra.mxu0 %v11889
    %11935 = vmatprep.subr.bf16.mxu0 0
    %11936 = vmatpush1.bf16.msra.mxu0 %v11888
    %11937 = vmatprep.subr.bf16.mxu0 0
    %11938 = vmatpush1.bf16.msra.mxu0 %v11887
    %11939 = vmatprep.subr.bf16.mxu0 0
    %11940 = vmatpush1.bf16.msra.mxu0 %v11886
    %11941 = vmatprep.subr.bf16.mxu0 0
    %11942 = vmatpush1.bf16.msra.mxu0 %v11885
    %11943 = vmatprep.subr.bf16.mxu0 0
    %11944 = vmatpush1.bf16.msra.mxu0 %v11884
    %11945 = vmatprep.subr.bf16.mxu0 0
    %11946 = vmatpush1.bf16.msra.mxu0 %v11883
    %11947 = vmatprep.subr.bf16.mxu0 0
    %11948 = vmatpush2.bf16.msra.mxu0 %v11898
    %11949 = vmatprep.subr.bf16.mxu0 0
    %11950 = vmatpush2.bf16.msra.mxu0 %v11897
    %11951 = vmatprep.subr.bf16.mxu0 0
    %11952 = vmatpush2.bf16.msra.mxu0 %v11896
    %11953 = vmatprep.subr.bf16.mxu0 0
    %11954 = vmatpush2.bf16.msra.mxu0 %v11895
    %11955 = vmatprep.subr.bf16.mxu0 0
    %11956 = vmatpush2.bf16.msra.mxu0 %v11894
    %11957 = vmatprep.subr.bf16.mxu0 0
    %11958 = vmatpush2.bf16.msra.mxu0 %v11893
    %11959 = vmatprep.subr.bf16.mxu0 0
    %11960 = vmatpush2.bf16.msra.mxu0 %v11892
    %11961 = vmatprep.subr.bf16.mxu0 0
    %11962 = vmatpush2.bf16.msra.mxu0 %v11891
    %11963 = vmatprep.mubr.bf16.mxu0 %v11730
    %11964 = vmatmul.mubr.bf16.gmra.mxu0 %v11729
    %v11965 = vpop.f32.mrf.mxu0
    %v11966 = vadd.f32 %v11785, %v11965
    %v11967 = vpop.f32.mrf.mxu0
    %v11968 = vpop.f32.mrf.mxu0
    %v11969 = vadd.f32 %v11785, %v11968
    %v11970 = vpop.f32.mrf.mxu0
    %11971 = vdwg.mxu0
    %11972 = vmatprep.subr.bf16.mxu0 0
    %11973 = vmatpush1.bf16.msra.mxu0 %v11906
    %11974 = vmatprep.subr.bf16.mxu0 0
    %11975 = vmatpush1.bf16.msra.mxu0 %v11905
    %11976 = vmatprep.subr.bf16.mxu0 0
    %11977 = vmatpush1.bf16.msra.mxu0 %v11904
    %11978 = vmatprep.subr.bf16.mxu0 0
    %11979 = vmatpush1.bf16.msra.mxu0 %v11903
    %11980 = vmatprep.subr.bf16.mxu0 0
    %11981 = vmatpush1.bf16.msra.mxu0 %v11902
    %11982 = vmatprep.subr.bf16.mxu0 0
    %11983 = vmatpush1.bf16.msra.mxu0 %v11901
    %11984 = vmatprep.subr.bf16.mxu0 0
    %11985 = vmatpush1.bf16.msra.mxu0 %v11900
    %11986 = vmatprep.subr.bf16.mxu0 0
    %11987 = vmatpush1.bf16.msra.mxu0 %v11899
    %11988 = vmatprep.subr.bf16.mxu0 0
    %11989 = vmatpush2.bf16.msra.mxu0 0
    %11990 = vmatprep.subr.bf16.mxu0 0
    %11991 = vmatpush2.bf16.msra.mxu0 0
    %11992 = vmatprep.subr.bf16.mxu0 0
    %11993 = vmatpush2.bf16.msra.mxu0 0
    %11994 = vmatprep.subr.bf16.mxu0 0
    %11995 = vmatpush2.bf16.msra.mxu0 0
    %11996 = vmatprep.subr.bf16.mxu0 0
    %11997 = vmatpush2.bf16.msra.mxu0 0
    %11998 = vmatprep.subr.bf16.mxu0 0
    %11999 = vmatpush2.bf16.msra.mxu0 0
    %12000 = vmatprep.subr.bf16.mxu0 0
    %12001 = vmatpush2.bf16.msra.mxu0 0
    %12002 = vmatprep.subr.bf16.mxu0 0
    %12003 = vmatpush2.bf16.msra.mxu0 0
    %12004 = vmatprep.mubr.bf16.mxu0 0
    %12005 = vmatmul.mubr.bf16.gmra.mxu0 %v11731
    %v12006 = vpop.f32.mrf.mxu0
    %v12007 = vadd.f32 %v11966, %v12006
    %v12008 = vpop.f32.mrf.mxu0
    %v12009 = vpop.f32.mrf.mxu0
    %v12010 = vadd.f32 %v11969, %v12009
    %v12011 = vpop.f32.mrf.mxu0
    %12012 = vdwg.mxu0
    %v12013 = vmax.f32 %v12007, 0.0
    %v12014 = vmax.f32 %v12010, 0.0
    %v12015 = vpack.c.bf16 %v12014, %v12013
    %v12016 = vld [vmem:[#allocation13] sm:$0xf]
    %v12017 = vld [vmem:[#allocation13 + $0x4] sm:$0xf]
    %v12018 = vld [vmem:[#allocation13 + $0x8] sm:$0xf]
    %v12019 = vld [vmem:[#allocation13 + $0xc] sm:$0xf]
    %v12020 = vld [vmem:[#allocation13 + $0x10] sm:$0xf]
    %v12021 = vld [vmem:[#allocation13 + $0x14] sm:$0xf]
    %v12022 = vld [vmem:[#allocation13 + $0x18] sm:$0xf]
    %v12023 = vld [vmem:[#allocation13 + $0x1c] sm:$0xf]
    %v12024 = vld [vmem:[#allocation13 + $0x20] sm:$0xf]
    %v12025 = vld [vmem:[#allocation13 + $0x24] sm:$0xf]
    %v12026 = vld [vmem:[#allocation13 + $0x28] sm:$0xf]
    %v12027 = vld [vmem:[#allocation13 + $0x2c] sm:$0xf]
    %v12028 = vld [vmem:[#allocation13 + $0x30] sm:$0xf]
    %v12029 = vld [vmem:[#allocation13 + $0x34] sm:$0xf]
    %v12030 = vld [vmem:[#allocation13 + $0x38] sm:$0xf]
    %v12031 = vld [vmem:[#allocation13 + $0x3c] sm:$0xf]
    %v12032 = vld [vmem:[#allocation14] sm:$0x1]
    %v12034 = vlaneseq
    %v12035 = vshrl.u32 %v12034, 7
    %v12036 = vsub.s32 0, %v12035
    %v12037 = vrot.slane %v12032, %v12036
    %v12055 = vunpack.c.l.b16 %v12016
    %v12056 = vunpack.c.l.b16 %v12017
    %v12057 = vunpack.c.l.b16 %v12018
    %v12058 = vunpack.c.l.b16 %v12019
    %v12059 = vunpack.c.l.b16 %v12020
    %v12060 = vunpack.c.l.b16 %v12021
    %v12061 = vunpack.c.l.b16 %v12022
    %v12062 = vunpack.c.l.b16 %v12023
    %v12063 = vunpack.c.l.b16 %v12024
    %v12064 = vunpack.c.l.b16 %v12025
    %v12065 = vunpack.c.l.b16 %v12026
    %v12066 = vunpack.c.l.b16 %v12027
    %v12067 = vunpack.c.l.b16 %v12028
    %v12068 = vunpack.c.l.b16 %v12029
    %v12069 = vunpack.c.l.b16 %v12030
    %v12070 = vunpack.c.l.b16 %v12031
    %v12071 = vpack.c.b16 %v12056, %v12055
    %v12072 = vpack.c.b16 %v12058, %v12057
    %v12073 = vpack.c.b16 %v12060, %v12059
    %v12074 = vpack.c.b16 %v12062, %v12061
    %v12075 = vpack.c.b16 %v12064, %v12063
    %v12076 = vpack.c.b16 %v12066, %v12065
    %v12077 = vpack.c.b16 %v12068, %v12067
    %v12078 = vpack.c.b16 %v12070, %v12069
    %12087 = vmatprep.subr.bf16.mxu0 0
    %12088 = vmatpush1.bf16.msra.mxu0 %v12078
    %12089 = vmatprep.subr.bf16.mxu0 0
    %12090 = vmatpush1.bf16.msra.mxu0 %v12077
    %12091 = vmatprep.subr.bf16.mxu0 0
    %12092 = vmatpush1.bf16.msra.mxu0 %v12076
    %12093 = vmatprep.subr.bf16.mxu0 0
    %12094 = vmatpush1.bf16.msra.mxu0 %v12075
    %12095 = vmatprep.subr.bf16.mxu0 0
    %12096 = vmatpush1.bf16.msra.mxu0 %v12074
    %12097 = vmatprep.subr.bf16.mxu0 0
    %12098 = vmatpush1.bf16.msra.mxu0 %v12073
    %12099 = vmatprep.subr.bf16.mxu0 0
    %12100 = vmatpush1.bf16.msra.mxu0 %v12072
    %12101 = vmatprep.subr.bf16.mxu0 0
    %12102 = vmatpush1.bf16.msra.mxu0 %v12071
    %12103 = vmatprep.subr.bf16.mxu0 0
    %12104 = vmatpush2.bf16.msra.mxu0 0
    %12105 = vmatprep.subr.bf16.mxu0 0
    %12106 = vmatpush2.bf16.msra.mxu0 0
    %12107 = vmatprep.subr.bf16.mxu0 0
    %12108 = vmatpush2.bf16.msra.mxu0 0
    %12109 = vmatprep.subr.bf16.mxu0 0
    %12110 = vmatpush2.bf16.msra.mxu0 0
    %12111 = vmatprep.subr.bf16.mxu0 0
    %12112 = vmatpush2.bf16.msra.mxu0 0
    %12113 = vmatprep.subr.bf16.mxu0 0
    %12114 = vmatpush2.bf16.msra.mxu0 0
    %12115 = vmatprep.subr.bf16.mxu0 0
    %12116 = vmatpush2.bf16.msra.mxu0 0
    %12117 = vmatprep.subr.bf16.mxu0 0
    %12118 = vmatpush2.bf16.msra.mxu0 0
    %12119 = vmatprep.mubr.bf16.mxu0 0
    %12120 = vmatmul.mubr.bf16.gmra.mxu0 %v12015
    %v12121 = vpop.f32.mrf.mxu0
    %v12122 = vadd.f32 %v12037, %v12121
    %v12123 = vpop.f32.mrf.mxu0
    %v12124 = vpop.f32.mrf.mxu0
    %v12125 = vadd.f32 %v12037, %v12124
    %v12126 = vpop.f32.mrf.mxu0
    %12127 = vdwg.mxu0
    %12128 = vmax.xlane.f32.xlu0 %v12122
    %v12129 = vpop.xlane.xlu0 %12128
    %12130 = vmax.xlane.f32.xlu0 %v12125
    %v12131 = vpop.xlane.xlu0 %12130
    %v12132 = vsub.f32 %v12122, %v12129
    %v12133 = vsub.f32 %v12125, %v12131
    %v12134 = vmul.f32 %v12132, 1.442695
    %v12135 = vpow.pop %v12134
    %v12136 = vmul.f32 %v12133, 1.442695
    %v12137 = vpow.pop %v12136
    %12138 = vadd.xlane.f32.xlu0 %v12135
    %v12139 = vpop.xlane.xlu0 %12138
    %12140 = vadd.xlane.f32.xlu0 %v12137
    %v12141 = vpop.xlane.xlu0 %12140
    %v12142 = vlog2.pop %v12139
    %v12143 = vmul.f32 %v12142, 0.6931472
    %v12144 = vlog2.pop %v12141
    %v12145 = vmul.f32 %v12144, 0.6931472
    %v12146 = vsub.f32 %v12132, %v12143
    %v12147 = vsub.f32 %v12133, %v12145
    %12148 = vst [vmem:[%s9] sm:$0xff] %v12146
    %12149 = vst [vmem:[%s9 + $0x8] sm:$0xff] %v12147
    // Predicated region
    $region70: #{forward.1} parent=1 // pred_check
      _
    $region71: #{forward.1} parent=1 // pred_check_branch
      %12151 = sbr.rel (0) target = $region73
    $region72: #{forward.1} parent=1 // pred_region
      _
    $region73: #{forward.1} parent=1 // pred_fallthru
      _
    // Predicated region
    $region74: #{forward.1} parent=1 // pred_check
      _
    $region75: #{forward.1} parent=1 // pred_check_branch
      %12153 = sbr.rel (0) target = $region77
    $region76: #{forward.1} parent=1 // pred_region
      _
    $region77: #{forward.1} parent=1 // pred_fallthru
      _
    %12154 = vsyncpa [#allocation4], 1
    %12155 = vsyncpa [#allocation6], 1
    %12156 = vsyncpa [#allocation9], 1
    %12157 = vsyncpa [#allocation12], 1
    %12158 = vsyncpa [#allocation15], 1

</llo_original>
